<compile_context>
chip_gen: v5e
topology: v5e:2x2
jax: 0.10.0
libtpu: 0.0.40
codegen_flags: <defaults>
</compile_context>

<pallas_src>
import math

import jax
import jax.numpy as jnp
from jax.experimental import pallas as pl
from jax.experimental.pallas import tpu as pltpu

BN_EPS = 1e-5

_vmem = pl.BlockSpec(memory_space=pltpu.MemorySpace.VMEM)


def _vgg_tinyserver_kernel(x_ref, cw_hbm, cs_ref, ct_ref,
                           w1_ref, b1_ref, bs_ref, bt_ref,
                           w2_ref, b2_ref, o_ref,
                           pp_ref, wbuf, wsem):
    """Fused forward pass.

    x_ref : (H=8, W=8, N, 256) bf16  activations in (H, W, N, C) layout
    cw_hbm: (3, 3, 256, 512)   bf16  conv weight, left in HBM (manual DMA)
    cs_ref/ct_ref: (1, 512)    f32   folded conv-bias + BatchNorm2d scale/shift
    w1_ref: (512, 128) bf16,  b1_ref: (1, 128) f32
    bs_ref/bt_ref: (1, 128)    f32   folded BatchNorm1d (eval) scale/shift
    w2_ref: (128, 10)  bf16,  b2_ref: (1, 10)  f32
    o_ref : (N, 10)            f32
    pp_ref: (5, 5, N, 256) bf16 VMEM scratch -- zero-padded pooled map
    wbuf  : (2, 3, 256, 512) bf16 VMEM scratch -- conv-weight double buffer
    wsem  : DMA semaphores (2,)
    """
    H, W, N, Cin = x_ref.shape
    Cout = cs_ref.shape[-1]

    def w_copy(kh, slot):
        return pltpu.make_async_copy(cw_hbm.at[kh], wbuf.at[slot], wsem.at[slot])

    # Kick off the first weight-row DMA immediately; it overlaps the pooling.
    w_copy(0, 0).start()

    # --- MaxPool2d(2, 2): (8, 8, N, C) -> padded pooled map in VMEM --------
    # pp[i, j] = pooled[i-1, j-1]; row/col 0 stay zero (the conv's padding).
    pp_ref[...] = jnp.zeros_like(pp_ref)
    for ph in range(4):
        hm = jnp.maximum(x_ref[2 * ph], x_ref[2 * ph + 1])      # (W, N, Cin)
        hm = hm.reshape(4, 2, N, Cin)
        pp_ref[ph + 1, 1:5] = jnp.maximum(hm[:, 0], hm[:, 1])   # (4, N, Cin)

    # --- Conv 3x3, stride 2, pad 1 on the 4x4 pooled map -> 2x2 output -----
    # Output rows packed as (oh, ow) in [(0,0),(0,1),(1,0),(1,1)] x N.
    # out(oh, ow) tap (kh, kw) reads pp[2*oh + kh, 2*ow + kw] (always valid).
    def tap_block(kh, kw):
        return jnp.concatenate(
            [pp_ref[kh, kw], pp_ref[kh, kw + 2],
             pp_ref[kh + 2, kw], pp_ref[kh + 2, kw + 2]], axis=0)  # (4N, Cin)

    acc = jnp.zeros((4 * N, Cout), jnp.float32)        # register accumulator
    for kh in range(3):
        slot = kh & 1
        if kh + 1 < 3:                                  # prefetch next weight row
            w_copy(kh + 1, 1 - slot).start()
        w_copy(kh, slot).wait()
        # im2col patch for this kh row: lane concat of 3 clean 256-lane chunks.
        patch = jnp.concatenate(
            [tap_block(kh, 0), tap_block(kh, 1), tap_block(kh, 2)], axis=1)
        w_row = wbuf[slot].reshape(3 * Cin, Cout)       # free major-dim collapse
        acc = acc + jnp.dot(patch, w_row, preferred_element_type=jnp.float32)

    # --- folded conv-bias + BatchNorm2d (eval) + ReLU (f32 epilogue) -------
    y = jnp.maximum(acc * cs_ref[...] + ct_ref[...], 0.0)          # (4N, Cout)

    # --- AdaptiveAvgPool2d(1) over the 4 spatial positions + flatten -------
    feat = 0.25 * (y[0:N] + y[N:2 * N] + y[2 * N:3 * N] + y[3 * N:4 * N])

    # --- Linear(512, 128) + ReLU + BatchNorm1d(128) (folded, eval) ---------
    h = jnp.dot(feat.astype(jnp.bfloat16), w1_ref[...],
                preferred_element_type=jnp.float32) + b1_ref[...]
    h = jnp.maximum(h, 0.0)
    h = h * bs_ref[...] + bt_ref[...]

    # --- Linear(128, 10) ----------------------------------------------------
    o_ref[...] = jnp.dot(h.astype(jnp.bfloat16), w2_ref[...],
                         preferred_element_type=jnp.float32) + b2_ref[...]


def vgg_tinyserver_forward(x_nchw, params):
    """x_nchw: (N, 256, 8, 8) -> logits (N, 10)."""
    assert x_nchw.shape[1] == 256 and x_nchw.shape[2] == 8 and x_nchw.shape[3] == 8
    # Cast to bf16 BEFORE the relayout: halves the transpose traffic and the
    # kernel's x DMA.  (Best case: the producer already emits HWNC bf16.)
    x = jnp.transpose(x_nchw.astype(jnp.bfloat16), (2, 3, 0, 1))  # (H, W, N, C)
    N = x.shape[2]
    Cin = x.shape[3]

    c = params['conv']
    Cout = c['w'].shape[-1]
    cscale = c['gamma'] / jnp.sqrt(c['rvar'] + BN_EPS)
    cshift = (c['b'] - c['rmean']) * cscale + c['beta']

    b = params['bn1d']
    bscale = b['gamma'] / jnp.sqrt(b['rvar'] + BN_EPS)
    bshift = b['beta'] - b['rmean'] * bscale

    w1, b1 = params['fc1']
    w2, b2 = params['fc2']

    return pl.pallas_call(
        _vgg_tinyserver_kernel,
        out_shape=jax.ShapeDtypeStruct((N, 10), jnp.float32),
        in_specs=[
            _vmem,                              # x (auto-DMA'd to VMEM)
            pl.BlockSpec(memory_space=pl.ANY),  # conv weight stays in HBM
            _vmem, _vmem,                       # conv BN scale / shift
            _vmem, _vmem,                       # fc1 weight / bias
            _vmem, _vmem,                       # bn1d scale / shift
            _vmem, _vmem,                       # fc2 weight / bias
        ],
        out_specs=_vmem,
        scratch_shapes=[
            pltpu.VMEM((5, 5, N, Cin), jnp.bfloat16),   # zero-padded pooled map
            pltpu.VMEM((2, 3, Cin, Cout), jnp.bfloat16),  # weight double buffer
            pltpu.SemaphoreType.DMA((2,)),
        ],
        # Whole-network residency is ~3.5 MiB; 32 MiB is safe on every
        # generation (incl. v7x's 64 MiB physical VMEM) with wide headroom.
        compiler_params=pltpu.CompilerParams(vmem_limit_bytes=32 * 1024 * 1024),
    )(
        x,
        c['w'].astype(jnp.bfloat16),            # (3, 3, Cin, Cout)
        cscale.reshape(1, Cout), cshift.reshape(1, Cout),
        w1.astype(jnp.bfloat16), b1.reshape(1, -1),
        bscale.reshape(1, -1), bshift.reshape(1, -1),
        w2.astype(jnp.bfloat16), b2.reshape(1, -1),
    )


# ---------------------------------------------------------------------------
# Parameters (deterministic, matching PyTorch _initialize_weights semantics)
# ---------------------------------------------------------------------------
def init_params(key):
    cin, cout = 256, 512
    k_conv, k_fc1, k_fc2 = jax.random.split(key, 3)

    std = math.sqrt(2.0 / (cin * 9))                 # kaiming_normal_, fan_in
    conv = dict(
        w=jax.random.normal(k_conv, (3, 3, cin, cout), jnp.float32) * std,
        b=jnp.zeros((cout,), jnp.float32),           # conv bias -> 0
        gamma=jnp.ones((cout,), jnp.float32),        # BN2d weight -> 1
        beta=jnp.zeros((cout,), jnp.float32),        # BN2d bias -> 0
        rmean=jnp.zeros((cout,), jnp.float32),
        rvar=jnp.ones((cout,), jnp.float32),
    )
    fc1 = (jax.random.normal(k_fc1, (512, 128), jnp.float32) * 0.01,  # N(0,0.01)
           jnp.zeros((128,), jnp.float32))
    bn1d = dict(gamma=jnp.ones((128,), jnp.float32),  # PyTorch BN1d defaults
                beta=jnp.zeros((128,), jnp.float32),
                rmean=jnp.zeros((128,), jnp.float32),
                rvar=jnp.ones((128,), jnp.float32))
    fc2 = (jax.random.normal(k_fc2, (128, 10), jnp.float32) * 0.01,
           jnp.zeros((10,), jnp.float32))
    return dict(conv=conv, fc1=fc1, bn1d=bn1d, fc2=fc2)


if __name__ == "__main__":
    key = jax.random.PRNGKey(0)
    key, kx = jax.random.split(key)
    # batch = 8 (sublane multiple); the module's input is the 256-channel
    # 8x8 feature map the client half of the split VGG produces for 32x32.
    # For serving, raise the batch (N>=32) to amortize MXU weight-tile loads.
    N, C, H, W = 8, 256, 8, 8
    x = jax.random.normal(kx, (N, C, H, W), jnp.float32)
    params = init_params(key)

    fwd = jax.jit(vgg_tinyserver_forward)
    out = fwd(x, params)
    jax.block_until_ready(out)

    assert out.shape == (N, 10), out.shape
    assert out.dtype == jnp.float32
    print("KERNEL_OK")
</pallas_src>

<mosaic_0001>
module attributes {stable_mosaic.version = 11 : i64} {
  func.func @_vgg_tinyserver_kernel(%arg0: memref<8x8x8x256xbf16, #tpu.memory_space<vmem>>, %arg1: memref<3x3x256x512xbf16, #tpu.memory_space<any>>, %arg2: memref<1x512xf32, #tpu.memory_space<vmem>>, %arg3: memref<1x512xf32, #tpu.memory_space<vmem>>, %arg4: memref<512x128xbf16, #tpu.memory_space<vmem>>, %arg5: memref<1x128xf32, #tpu.memory_space<vmem>>, %arg6: memref<1x128xf32, #tpu.memory_space<vmem>>, %arg7: memref<1x128xf32, #tpu.memory_space<vmem>>, %arg8: memref<128x10xbf16, #tpu.memory_space<vmem>>, %arg9: memref<1x10xf32, #tpu.memory_space<vmem>>, %arg10: memref<8x10xf32, #tpu.memory_space<vmem>>, %arg11: memref<5x5x8x256xbf16, #tpu.memory_space<vmem>>, %arg12: memref<2x3x256x512xbf16, #tpu.memory_space<vmem>>, %arg13: memref<2x!tpu.dma_semaphore, #tpu.memory_space<semaphore_mem>>) attributes {dimension_semantics = [], scalar_prefetch = 0 : i64, scratch_operands = 3 : i64, tpu.core_type = #tpu.core_type<tc>} {
    %c0_i32 = arith.constant 0 : i32
    %c0_i32_0 = arith.constant 0 : i32
    %c0_i32_1 = arith.constant 0 : i32
    %c0_i32_2 = arith.constant 0 : i32
    %c0_i32_3 = arith.constant 0 : i32
    %c0_i32_4 = arith.constant 0 : i32
    %0 = tpu.memref_slice %arg1[%c0_i32, %c0_i32_2, %c0_i32_3, %c0_i32_4] : memref<3x3x256x512xbf16, #tpu.memory_space<any>> -> memref<1x3x256x512xbf16, #tpu.memory_space<any>>
    %1 = tpu.memref_squeeze %0 : memref<1x3x256x512xbf16, #tpu.memory_space<any>> -> memref<3x256x512xbf16, #tpu.memory_space<any>>
    %c0_i32_5 = arith.constant 0 : i32
    %c0_i32_6 = arith.constant 0 : i32
    %c0_i32_7 = arith.constant 0 : i32
    %2 = tpu.memref_slice %arg12[%c0_i32_0, %c0_i32_5, %c0_i32_6, %c0_i32_7] : memref<2x3x256x512xbf16, #tpu.memory_space<vmem>> -> memref<1x3x256x512xbf16, #tpu.memory_space<vmem>>
    %3 = tpu.memref_squeeze %2 : memref<1x3x256x512xbf16, #tpu.memory_space<vmem>> -> memref<3x256x512xbf16, #tpu.memory_space<vmem>>
    %4 = tpu.memref_slice %arg13[%c0_i32_1] : memref<2x!tpu.dma_semaphore, #tpu.memory_space<semaphore_mem>> -> memref<1x!tpu.dma_semaphore, #tpu.memory_space<semaphore_mem>>
    %5 = tpu.memref_squeeze %4 : memref<1x!tpu.dma_semaphore, #tpu.memory_space<semaphore_mem>> -> memref<!tpu.dma_semaphore, #tpu.memory_space<semaphore_mem>>
    tpu.enqueue_dma source(%1 : memref<3x256x512xbf16, #tpu.memory_space<any>>) target(%3 : memref<3x256x512xbf16, #tpu.memory_space<vmem>>) target_semaphore(%5 : memref<!tpu.dma_semaphore, #tpu.memory_space<semaphore_mem>>)
    %cst = arith.constant 0.000000e+00 : bf16
    %6 = vector.broadcast %cst : bf16 to vector<5x5x8x256xbf16>
    %c0 = arith.constant 0 : index
    %c0_8 = arith.constant 0 : index
    %c0_9 = arith.constant 0 : index
    %c0_10 = arith.constant 0 : index
    %7 = vector.load %arg11[%c0, %c0_8, %c0_9, %c0_10] : memref<5x5x8x256xbf16, #tpu.memory_space<vmem>>, vector<5x5x8x256xbf16>
    tpu.vector_store %arg11[%c0, %c0_8, %c0_9, %c0_10], %6 {strides = array<i32>} : memref<5x5x8x256xbf16, #tpu.memory_space<vmem>>, vector<5x5x8x256xbf16>,
    %c0_11 = arith.constant 0 : index
    %c0_12 = arith.constant 0 : index
    %c0_13 = arith.constant 0 : index
    %c0_14 = arith.constant 0 : index
    %8 = vector.load %arg0[%c0_11, %c0_12, %c0_13, %c0_14] : memref<8x8x8x256xbf16, #tpu.memory_space<vmem>>, vector<1x8x8x256xbf16>
    %9 = vector.shape_cast %8 : vector<1x8x8x256xbf16> to vector<8x8x256xbf16>
    %c1 = arith.constant 1 : index
    %c0_15 = arith.constant 0 : index
    %c0_16 = arith.constant 0 : index
    %c0_17 = arith.constant 0 : index
    %10 = vector.load %arg0[%c1, %c0_15, %c0_16, %c0_17] : memref<8x8x8x256xbf16, #tpu.memory_space<vmem>>, vector<1x8x8x256xbf16>
    %11 = vector.shape_cast %10 : vector<1x8x8x256xbf16> to vector<8x8x256xbf16>
    %12 = arith.maximumf %9, %11 : vector<8x8x256xbf16>
    %13 = vector.shape_cast %12 : vector<8x8x256xbf16> to vector<4x2x8x256xbf16>
    %14 = vector.extract_strided_slice %13 {offsets = [0, 0, 0, 0], sizes = [4, 1, 8, 256], strides = [1, 1, 1, 1]} : vector<4x2x8x256xbf16> to vector<4x1x8x256xbf16>
    %15 = vector.shape_cast %14 : vector<4x1x8x256xbf16> to vector<4x8x256xbf16>
    %16 = vector.extract_strided_slice %13 {offsets = [0, 1, 0, 0], sizes = [4, 1, 8, 256], strides = [1, 1, 1, 1]} : vector<4x2x8x256xbf16> to vector<4x1x8x256xbf16>
    %17 = vector.shape_cast %16 : vector<4x1x8x256xbf16> to vector<4x8x256xbf16>
    %18 = arith.maximumf %15, %17 : vector<4x8x256xbf16>
    %c1_18 = arith.constant 1 : index
    %c1_19 = arith.constant 1 : index
    %c0_20 = arith.constant 0 : index
    %c0_21 = arith.constant 0 : index
    %19 = vector.load %arg11[%c1_18, %c1_19, %c0_20, %c0_21] : memref<5x5x8x256xbf16, #tpu.memory_space<vmem>>, vector<1x4x8x256xbf16>
    %20 = vector.shape_cast %19 : vector<1x4x8x256xbf16> to vector<4x8x256xbf16>
    %21 = vector.shape_cast %18 : vector<4x8x256xbf16> to vector<1x4x8x256xbf16>
    tpu.vector_store %arg11[%c1_18, %c1_19, %c0_20, %c0_21], %21 {strides = array<i32>} : memref<5x5x8x256xbf16, #tpu.memory_space<vmem>>, vector<1x4x8x256xbf16>,
    %c2 = arith.constant 2 : index
    %c0_22 = arith.constant 0 : index
    %c0_23 = arith.constant 0 : index
    %c0_24 = arith.constant 0 : index
    %22 = vector.load %arg0[%c2, %c0_22, %c0_23, %c0_24] : memref<8x8x8x256xbf16, #tpu.memory_space<vmem>>, vector<1x8x8x256xbf16>
    %23 = vector.shape_cast %22 : vector<1x8x8x256xbf16> to vector<8x8x256xbf16>
    %c3 = arith.constant 3 : index
    %c0_25 = arith.constant 0 : index
    %c0_26 = arith.constant 0 : index
    %c0_27 = arith.constant 0 : index
    %24 = vector.load %arg0[%c3, %c0_25, %c0_26, %c0_27] : memref<8x8x8x256xbf16, #tpu.memory_space<vmem>>, vector<1x8x8x256xbf16>
    %25 = vector.shape_cast %24 : vector<1x8x8x256xbf16> to vector<8x8x256xbf16>
    %26 = arith.maximumf %23, %25 : vector<8x8x256xbf16>
    %27 = vector.shape_cast %26 : vector<8x8x256xbf16> to vector<4x2x8x256xbf16>
    %28 = vector.extract_strided_slice %27 {offsets = [0, 0, 0, 0], sizes = [4, 1, 8, 256], strides = [1, 1, 1, 1]} : vector<4x2x8x256xbf16> to vector<4x1x8x256xbf16>
    %29 = vector.shape_cast %28 : vector<4x1x8x256xbf16> to vector<4x8x256xbf16>
    %30 = vector.extract_strided_slice %27 {offsets = [0, 1, 0, 0], sizes = [4, 1, 8, 256], strides = [1, 1, 1, 1]} : vector<4x2x8x256xbf16> to vector<4x1x8x256xbf16>
    %31 = vector.shape_cast %30 : vector<4x1x8x256xbf16> to vector<4x8x256xbf16>
    %32 = arith.maximumf %29, %31 : vector<4x8x256xbf16>
    %c2_28 = arith.constant 2 : index
    %c1_29 = arith.constant 1 : index
    %c0_30 = arith.constant 0 : index
    %c0_31 = arith.constant 0 : index
    %33 = vector.load %arg11[%c2_28, %c1_29, %c0_30, %c0_31] : memref<5x5x8x256xbf16, #tpu.memory_space<vmem>>, vector<1x4x8x256xbf16>
    %34 = vector.shape_cast %33 : vector<1x4x8x256xbf16> to vector<4x8x256xbf16>
    %35 = vector.shape_cast %32 : vector<4x8x256xbf16> to vector<1x4x8x256xbf16>
    tpu.vector_store %arg11[%c2_28, %c1_29, %c0_30, %c0_31], %35 {strides = array<i32>} : memref<5x5x8x256xbf16, #tpu.memory_space<vmem>>, vector<1x4x8x256xbf16>,
    %c4 = arith.constant 4 : index
    %c0_32 = arith.constant 0 : index
    %c0_33 = arith.constant 0 : index
    %c0_34 = arith.constant 0 : index
    %36 = vector.load %arg0[%c4, %c0_32, %c0_33, %c0_34] : memref<8x8x8x256xbf16, #tpu.memory_space<vmem>>, vector<1x8x8x256xbf16>
    %37 = vector.shape_cast %36 : vector<1x8x8x256xbf16> to vector<8x8x256xbf16>
    %c5 = arith.constant 5 : index
    %c0_35 = arith.constant 0 : index
    %c0_36 = arith.constant 0 : index
    %c0_37 = arith.constant 0 : index
    %38 = vector.load %arg0[%c5, %c0_35, %c0_36, %c0_37] : memref<8x8x8x256xbf16, #tpu.memory_space<vmem>>, vector<1x8x8x256xbf16>
    %39 = vector.shape_cast %38 : vector<1x8x8x256xbf16> to vector<8x8x256xbf16>
    %40 = arith.maximumf %37, %39 : vector<8x8x256xbf16>
    %41 = vector.shape_cast %40 : vector<8x8x256xbf16> to vector<4x2x8x256xbf16>
    %42 = vector.extract_strided_slice %41 {offsets = [0, 0, 0, 0], sizes = [4, 1, 8, 256], strides = [1, 1, 1, 1]} : vector<4x2x8x256xbf16> to vector<4x1x8x256xbf16>
    %43 = vector.shape_cast %42 : vector<4x1x8x256xbf16> to vector<4x8x256xbf16>
    %44 = vector.extract_strided_slice %41 {offsets = [0, 1, 0, 0], sizes = [4, 1, 8, 256], strides = [1, 1, 1, 1]} : vector<4x2x8x256xbf16> to vector<4x1x8x256xbf16>
    %45 = vector.shape_cast %44 : vector<4x1x8x256xbf16> to vector<4x8x256xbf16>
    %46 = arith.maximumf %43, %45 : vector<4x8x256xbf16>
    %c3_38 = arith.constant 3 : index
    %c1_39 = arith.constant 1 : index
    %c0_40 = arith.constant 0 : index
    %c0_41 = arith.constant 0 : index
    %47 = vector.load %arg11[%c3_38, %c1_39, %c0_40, %c0_41] : memref<5x5x8x256xbf16, #tpu.memory_space<vmem>>, vector<1x4x8x256xbf16>
    %48 = vector.shape_cast %47 : vector<1x4x8x256xbf16> to vector<4x8x256xbf16>
    %49 = vector.shape_cast %46 : vector<4x8x256xbf16> to vector<1x4x8x256xbf16>
    tpu.vector_store %arg11[%c3_38, %c1_39, %c0_40, %c0_41], %49 {strides = array<i32>} : memref<5x5x8x256xbf16, #tpu.memory_space<vmem>>, vector<1x4x8x256xbf16>,
    %c6 = arith.constant 6 : index
    %c0_42 = arith.constant 0 : index
    %c0_43 = arith.constant 0 : index
    %c0_44 = arith.constant 0 : index
    %50 = vector.load %arg0[%c6, %c0_42, %c0_43, %c0_44] : memref<8x8x8x256xbf16, #tpu.memory_space<vmem>>, vector<1x8x8x256xbf16>
    %51 = vector.shape_cast %50 : vector<1x8x8x256xbf16> to vector<8x8x256xbf16>
    %c7 = arith.constant 7 : index
    %c0_45 = arith.constant 0 : index
    %c0_46 = arith.constant 0 : index
    %c0_47 = arith.constant 0 : index
    %52 = vector.load %arg0[%c7, %c0_45, %c0_46, %c0_47] : memref<8x8x8x256xbf16, #tpu.memory_space<vmem>>, vector<1x8x8x256xbf16>
    %53 = vector.shape_cast %52 : vector<1x8x8x256xbf16> to vector<8x8x256xbf16>
    %54 = arith.maximumf %51, %53 : vector<8x8x256xbf16>
    %55 = vector.shape_cast %54 : vector<8x8x256xbf16> to vector<4x2x8x256xbf16>
    %56 = vector.extract_strided_slice %55 {offsets = [0, 0, 0, 0], sizes = [4, 1, 8, 256], strides = [1, 1, 1, 1]} : vector<4x2x8x256xbf16> to vector<4x1x8x256xbf16>
    %57 = vector.shape_cast %56 : vector<4x1x8x256xbf16> to vector<4x8x256xbf16>
    %58 = vector.extract_strided_slice %55 {offsets = [0, 1, 0, 0], sizes = [4, 1, 8, 256], strides = [1, 1, 1, 1]} : vector<4x2x8x256xbf16> to vector<4x1x8x256xbf16>
    %59 = vector.shape_cast %58 : vector<4x1x8x256xbf16> to vector<4x8x256xbf16>
    %60 = arith.maximumf %57, %59 : vector<4x8x256xbf16>
    %c4_48 = arith.constant 4 : index
    %c1_49 = arith.constant 1 : index
    %c0_50 = arith.constant 0 : index
    %c0_51 = arith.constant 0 : index
    %61 = vector.load %arg11[%c4_48, %c1_49, %c0_50, %c0_51] : memref<5x5x8x256xbf16, #tpu.memory_space<vmem>>, vector<1x4x8x256xbf16>
    %62 = vector.shape_cast %61 : vector<1x4x8x256xbf16> to vector<4x8x256xbf16>
    %63 = vector.shape_cast %60 : vector<4x8x256xbf16> to vector<1x4x8x256xbf16>
    tpu.vector_store %arg11[%c4_48, %c1_49, %c0_50, %c0_51], %63 {strides = array<i32>} : memref<5x5x8x256xbf16, #tpu.memory_space<vmem>>, vector<1x4x8x256xbf16>,
    %cst_52 = arith.constant 0.000000e+00 : f32
    %64 = vector.broadcast %cst_52 : f32 to vector<32x512xf32>
    %c1_i32 = arith.constant 1 : i32
    %c1_i32_53 = arith.constant 1 : i32
    %c1_i32_54 = arith.constant 1 : i32
    %c0_i32_55 = arith.constant 0 : i32
    %c0_i32_56 = arith.constant 0 : i32
    %c0_i32_57 = arith.constant 0 : i32
    %65 = tpu.memref_slice %arg1[%c1_i32, %c0_i32_55, %c0_i32_56, %c0_i32_57] : memref<3x3x256x512xbf16, #tpu.memory_space<any>> -> memref<1x3x256x512xbf16, #tpu.memory_space<any>>
    %66 = tpu.memref_squeeze %65 : memref<1x3x256x512xbf16, #tpu.memory_space<any>> -> memref<3x256x512xbf16, #tpu.memory_space<any>>
    %c0_i32_58 = arith.constant 0 : i32
    %c0_i32_59 = arith.constant 0 : i32
    %c0_i32_60 = arith.constant 0 : i32
    %67 = tpu.memref_slice %arg12[%c1_i32_53, %c0_i32_58, %c0_i32_59, %c0_i32_60] : memref<2x3x256x512xbf16, #tpu.memory_space<vmem>> -> memref<1x3x256x512xbf16, #tpu.memory_space<vmem>>
    %68 = tpu.memref_squeeze %67 : memref<1x3x256x512xbf16, #tpu.memory_space<vmem>> -> memref<3x256x512xbf16, #tpu.memory_space<vmem>>
    %69 = tpu.memref_slice %arg13[%c1_i32_54] : memref<2x!tpu.dma_semaphore, #tpu.memory_space<semaphore_mem>> -> memref<1x!tpu.dma_semaphore, #tpu.memory_space<semaphore_mem>>
    %70 = tpu.memref_squeeze %69 : memref<1x!tpu.dma_semaphore, #tpu.memory_space<semaphore_mem>> -> memref<!tpu.dma_semaphore, #tpu.memory_space<semaphore_mem>>
    tpu.enqueue_dma source(%66 : memref<3x256x512xbf16, #tpu.memory_space<any>>) target(%68 : memref<3x256x512xbf16, #tpu.memory_space<vmem>>) target_semaphore(%70 : memref<!tpu.dma_semaphore, #tpu.memory_space<semaphore_mem>>)
    %c0_i32_61 = arith.constant 0 : i32
    %c0_i32_62 = arith.constant 0 : i32
    %c0_i32_63 = arith.constant 0 : i32
    %c0_i32_64 = arith.constant 0 : i32
    %c0_i32_65 = arith.constant 0 : i32
    %c0_i32_66 = arith.constant 0 : i32
    %71 = tpu.memref_slice %arg1[%c0_i32_61, %c0_i32_64, %c0_i32_65, %c0_i32_66] : memref<3x3x256x512xbf16, #tpu.memory_space<any>> -> memref<1x3x256x512xbf16, #tpu.memory_space<any>>
    %72 = tpu.memref_squeeze %71 : memref<1x3x256x512xbf16, #tpu.memory_space<any>> -> memref<3x256x512xbf16, #tpu.memory_space<any>>
    %c0_i32_67 = arith.constant 0 : i32
    %c0_i32_68 = arith.constant 0 : i32
    %c0_i32_69 = arith.constant 0 : i32
    %73 = tpu.memref_slice %arg12[%c0_i32_62, %c0_i32_67, %c0_i32_68, %c0_i32_69] : memref<2x3x256x512xbf16, #tpu.memory_space<vmem>> -> memref<1x3x256x512xbf16, #tpu.memory_space<vmem>>
    %74 = tpu.memref_squeeze %73 : memref<1x3x256x512xbf16, #tpu.memory_space<vmem>> -> memref<3x256x512xbf16, #tpu.memory_space<vmem>>
    %75 = tpu.memref_slice %arg13[%c0_i32_63] : memref<2x!tpu.dma_semaphore, #tpu.memory_space<semaphore_mem>> -> memref<1x!tpu.dma_semaphore, #tpu.memory_space<semaphore_mem>>
    %76 = tpu.memref_squeeze %75 : memref<1x!tpu.dma_semaphore, #tpu.memory_space<semaphore_mem>> -> memref<!tpu.dma_semaphore, #tpu.memory_space<semaphore_mem>>
    tpu.wait_dma2 semaphore(%76 : memref<!tpu.dma_semaphore, #tpu.memory_space<semaphore_mem>>) src(%72 : memref<3x256x512xbf16, #tpu.memory_space<any>>) dst(%74 : memref<3x256x512xbf16, #tpu.memory_space<vmem>>)
    %c0_70 = arith.constant 0 : index
    %c0_71 = arith.constant 0 : index
    %c0_72 = arith.constant 0 : index
    %c0_73 = arith.constant 0 : index
    %77 = vector.load %arg11[%c0_70, %c0_71, %c0_72, %c0_73] : memref<5x5x8x256xbf16, #tpu.memory_space<vmem>>, vector<1x1x8x256xbf16>
    %78 = vector.shape_cast %77 : vector<1x1x8x256xbf16> to vector<8x256xbf16>
    %c0_74 = arith.constant 0 : index
    %c2_75 = arith.constant 2 : index
    %c0_76 = arith.constant 0 : index
    %c0_77 = arith.constant 0 : index
    %79 = vector.load %arg11[%c0_74, %c2_75, %c0_76, %c0_77] : memref<5x5x8x256xbf16, #tpu.memory_space<vmem>>, vector<1x1x8x256xbf16>
    %80 = vector.shape_cast %79 : vector<1x1x8x256xbf16> to vector<8x256xbf16>
    %c2_78 = arith.constant 2 : index
    %c0_79 = arith.constant 0 : index
    %c0_80 = arith.constant 0 : index
    %c0_81 = arith.constant 0 : index
    %81 = vector.load %arg11[%c2_78, %c0_79, %c0_80, %c0_81] : memref<5x5x8x256xbf16, #tpu.memory_space<vmem>>, vector<1x1x8x256xbf16>
    %82 = vector.shape_cast %81 : vector<1x1x8x256xbf16> to vector<8x256xbf16>
    %c2_82 = arith.constant 2 : index
    %c2_83 = arith.constant 2 : index
    %c0_84 = arith.constant 0 : index
    %c0_85 = arith.constant 0 : index
    %83 = vector.load %arg11[%c2_82, %c2_83, %c0_84, %c0_85] : memref<5x5x8x256xbf16, #tpu.memory_space<vmem>>, vector<1x1x8x256xbf16>
    %84 = vector.shape_cast %83 : vector<1x1x8x256xbf16> to vector<8x256xbf16>
    %85 = tpu.concatenate %78, %80, %82, %84 in 0 : vector<8x256xbf16>, vector<8x256xbf16>, vector<8x256xbf16>, vector<8x256xbf16> -> vector<32x256xbf16>
    %c0_86 = arith.constant 0 : index
    %c1_87 = arith.constant 1 : index
    %c0_88 = arith.constant 0 : index
    %c0_89 = arith.constant 0 : index
    %86 = vector.load %arg11[%c0_86, %c1_87, %c0_88, %c0_89] : memref<5x5x8x256xbf16, #tpu.memory_space<vmem>>, vector<1x1x8x256xbf16>
    %87 = vector.shape_cast %86 : vector<1x1x8x256xbf16> to vector<8x256xbf16>
    %c0_90 = arith.constant 0 : index
    %c3_91 = arith.constant 3 : index
    %c0_92 = arith.constant 0 : index
    %c0_93 = arith.constant 0 : index
    %88 = vector.load %arg11[%c0_90, %c3_91, %c0_92, %c0_93] : memref<5x5x8x256xbf16, #tpu.memory_space<vmem>>, vector<1x1x8x256xbf16>
    %89 = vector.shape_cast %88 : vector<1x1x8x256xbf16> to vector<8x256xbf16>
    %c2_94 = arith.constant 2 : index
    %c1_95 = arith.constant 1 : index
    %c0_96 = arith.constant 0 : index
    %c0_97 = arith.constant 0 : index
    %90 = vector.load %arg11[%c2_94, %c1_95, %c0_96, %c0_97] : memref<5x5x8x256xbf16, #tpu.memory_space<vmem>>, vector<1x1x8x256xbf16>
    %91 = vector.shape_cast %90 : vector<1x1x8x256xbf16> to vector<8x256xbf16>
    %c2_98 = arith.constant 2 : index
    %c3_99 = arith.constant 3 : index
    %c0_100 = arith.constant 0 : index
    %c0_101 = arith.constant 0 : index
    %92 = vector.load %arg11[%c2_98, %c3_99, %c0_100, %c0_101] : memref<5x5x8x256xbf16, #tpu.memory_space<vmem>>, vector<1x1x8x256xbf16>
    %93 = vector.shape_cast %92 : vector<1x1x8x256xbf16> to vector<8x256xbf16>
    %94 = tpu.concatenate %87, %89, %91, %93 in 0 : vector<8x256xbf16>, vector<8x256xbf16>, vector<8x256xbf16>, vector<8x256xbf16> -> vector<32x256xbf16>
    %c0_102 = arith.constant 0 : index
    %c2_103 = arith.constant 2 : index
    %c0_104 = arith.constant 0 : index
    %c0_105 = arith.constant 0 : index
    %95 = vector.load %arg11[%c0_102, %c2_103, %c0_104, %c0_105] : memref<5x5x8x256xbf16, #tpu.memory_space<vmem>>, vector<1x1x8x256xbf16>
    %96 = vector.shape_cast %95 : vector<1x1x8x256xbf16> to vector<8x256xbf16>
    %c0_106 = arith.constant 0 : index
    %c4_107 = arith.constant 4 : index
    %c0_108 = arith.constant 0 : index
    %c0_109 = arith.constant 0 : index
    %97 = vector.load %arg11[%c0_106, %c4_107, %c0_108, %c0_109] : memref<5x5x8x256xbf16, #tpu.memory_space<vmem>>, vector<1x1x8x256xbf16>
    %98 = vector.shape_cast %97 : vector<1x1x8x256xbf16> to vector<8x256xbf16>
    %c2_110 = arith.constant 2 : index
    %c2_111 = arith.constant 2 : index
    %c0_112 = arith.constant 0 : index
    %c0_113 = arith.constant 0 : index
    %99 = vector.load %arg11[%c2_110, %c2_111, %c0_112, %c0_113] : memref<5x5x8x256xbf16, #tpu.memory_space<vmem>>, vector<1x1x8x256xbf16>
    %100 = vector.shape_cast %99 : vector<1x1x8x256xbf16> to vector<8x256xbf16>
    %c2_114 = arith.constant 2 : index
    %c4_115 = arith.constant 4 : index
    %c0_116 = arith.constant 0 : index
    %c0_117 = arith.constant 0 : index
    %101 = vector.load %arg11[%c2_114, %c4_115, %c0_116, %c0_117] : memref<5x5x8x256xbf16, #tpu.memory_space<vmem>>, vector<1x1x8x256xbf16>
    %102 = vector.shape_cast %101 : vector<1x1x8x256xbf16> to vector<8x256xbf16>
    %103 = tpu.concatenate %96, %98, %100, %102 in 0 : vector<8x256xbf16>, vector<8x256xbf16>, vector<8x256xbf16>, vector<8x256xbf16> -> vector<32x256xbf16>
    %104 = tpu.concatenate %85, %94, %103 in 1 : vector<32x256xbf16>, vector<32x256xbf16>, vector<32x256xbf16> -> vector<32x768xbf16>
    %c0_118 = arith.constant 0 : index
    %c0_119 = arith.constant 0 : index
    %c0_120 = arith.constant 0 : index
    %c0_121 = arith.constant 0 : index
    %105 = vector.load %arg12[%c0_118, %c0_119, %c0_120, %c0_121] : memref<2x3x256x512xbf16, #tpu.memory_space<vmem>>, vector<1x3x256x512xbf16>
    %106 = vector.shape_cast %105 : vector<1x3x256x512xbf16> to vector<3x256x512xbf16>
    %107 = vector.shape_cast %106 : vector<3x256x512xbf16> to vector<768x512xbf16>
    %cst_122 = arith.constant dense<0.000000e+00> : vector<32x512xf32>
    %108 = tpu.matmul %104, %107, %cst_122 {dimension_numbers = #tpu.dot_dimension_numbers<[1], [0], [0], [1], [0, 0, 1, 1], [], []>} : vector<32x768xbf16>, vector<768x512xbf16>, vector<32x512xf32> -> vector<32x512xf32>
    %109 = arith.addf %64, %108 : vector<32x512xf32>
    %c2_i32 = arith.constant 2 : i32
    %c0_i32_123 = arith.constant 0 : i32
    %c0_i32_124 = arith.constant 0 : i32
    %c0_i32_125 = arith.constant 0 : i32
    %c0_i32_126 = arith.constant 0 : i32
    %c0_i32_127 = arith.constant 0 : i32
    %110 = tpu.memref_slice %arg1[%c2_i32, %c0_i32_125, %c0_i32_126, %c0_i32_127] : memref<3x3x256x512xbf16, #tpu.memory_space<any>> -> memref<1x3x256x512xbf16, #tpu.memory_space<any>>
    %111 = tpu.memref_squeeze %110 : memref<1x3x256x512xbf16, #tpu.memory_space<any>> -> memref<3x256x512xbf16, #tpu.memory_space<any>>
    %c0_i32_128 = arith.constant 0 : i32
    %c0_i32_129 = arith.constant 0 : i32
    %c0_i32_130 = arith.constant 0 : i32
    %112 = tpu.memref_slice %arg12[%c0_i32_123, %c0_i32_128, %c0_i32_129, %c0_i32_130] : memref<2x3x256x512xbf16, #tpu.memory_space<vmem>> -> memref<1x3x256x512xbf16, #tpu.memory_space<vmem>>
    %113 = tpu.memref_squeeze %112 : memref<1x3x256x512xbf16, #tpu.memory_space<vmem>> -> memref<3x256x512xbf16, #tpu.memory_space<vmem>>
    %114 = tpu.memref_slice %arg13[%c0_i32_124] : memref<2x!tpu.dma_semaphore, #tpu.memory_space<semaphore_mem>> -> memref<1x!tpu.dma_semaphore, #tpu.memory_space<semaphore_mem>>
    %115 = tpu.memref_squeeze %114 : memref<1x!tpu.dma_semaphore, #tpu.memory_space<semaphore_mem>> -> memref<!tpu.dma_semaphore, #tpu.memory_space<semaphore_mem>>
    tpu.enqueue_dma source(%111 : memref<3x256x512xbf16, #tpu.memory_space<any>>) target(%113 : memref<3x256x512xbf16, #tpu.memory_space<vmem>>) target_semaphore(%115 : memref<!tpu.dma_semaphore, #tpu.memory_space<semaphore_mem>>)
    %c1_i32_131 = arith.constant 1 : i32
    %c1_i32_132 = arith.constant 1 : i32
    %c1_i32_133 = arith.constant 1 : i32
    %c0_i32_134 = arith.constant 0 : i32
    %c0_i32_135 = arith.constant 0 : i32
    %c0_i32_136 = arith.constant 0 : i32
    %116 = tpu.memref_slice %arg1[%c1_i32_131, %c0_i32_134, %c0_i32_135, %c0_i32_136] : memref<3x3x256x512xbf16, #tpu.memory_space<any>> -> memref<1x3x256x512xbf16, #tpu.memory_space<any>>
    %117 = tpu.memref_squeeze %116 : memref<1x3x256x512xbf16, #tpu.memory_space<any>> -> memref<3x256x512xbf16, #tpu.memory_space<any>>
    %c0_i32_137 = arith.constant 0 : i32
    %c0_i32_138 = arith.constant 0 : i32
    %c0_i32_139 = arith.constant 0 : i32
    %118 = tpu.memref_slice %arg12[%c1_i32_132, %c0_i32_137, %c0_i32_138, %c0_i32_139] : memref<2x3x256x512xbf16, #tpu.memory_space<vmem>> -> memref<1x3x256x512xbf16, #tpu.memory_space<vmem>>
    %119 = tpu.memref_squeeze %118 : memref<1x3x256x512xbf16, #tpu.memory_space<vmem>> -> memref<3x256x512xbf16, #tpu.memory_space<vmem>>
    %120 = tpu.memref_slice %arg13[%c1_i32_133] : memref<2x!tpu.dma_semaphore, #tpu.memory_space<semaphore_mem>> -> memref<1x!tpu.dma_semaphore, #tpu.memory_space<semaphore_mem>>
    %121 = tpu.memref_squeeze %120 : memref<1x!tpu.dma_semaphore, #tpu.memory_space<semaphore_mem>> -> memref<!tpu.dma_semaphore, #tpu.memory_space<semaphore_mem>>
    tpu.wait_dma2 semaphore(%121 : memref<!tpu.dma_semaphore, #tpu.memory_space<semaphore_mem>>) src(%117 : memref<3x256x512xbf16, #tpu.memory_space<any>>) dst(%119 : memref<3x256x512xbf16, #tpu.memory_space<vmem>>)
    %c1_140 = arith.constant 1 : index
    %c0_141 = arith.constant 0 : index
    %c0_142 = arith.constant 0 : index
    %c0_143 = arith.constant 0 : index
    %122 = vector.load %arg11[%c1_140, %c0_141, %c0_142, %c0_143] : memref<5x5x8x256xbf16, #tpu.memory_space<vmem>>, vector<1x1x8x256xbf16>
    %123 = vector.shape_cast %122 : vector<1x1x8x256xbf16> to vector<8x256xbf16>
    %c1_144 = arith.constant 1 : index
    %c2_145 = arith.constant 2 : index
    %c0_146 = arith.constant 0 : index
    %c0_147 = arith.constant 0 : index
    %124 = vector.load %arg11[%c1_144, %c2_145, %c0_146, %c0_147] : memref<5x5x8x256xbf16, #tpu.memory_space<vmem>>, vector<1x1x8x256xbf16>
    %125 = vector.shape_cast %124 : vector<1x1x8x256xbf16> to vector<8x256xbf16>
    %c3_148 = arith.constant 3 : index
    %c0_149 = arith.constant 0 : index
    %c0_150 = arith.constant 0 : index
    %c0_151 = arith.constant 0 : index
    %126 = vector.load %arg11[%c3_148, %c0_149, %c0_150, %c0_151] : memref<5x5x8x256xbf16, #tpu.memory_space<vmem>>, vector<1x1x8x256xbf16>
    %127 = vector.shape_cast %126 : vector<1x1x8x256xbf16> to vector<8x256xbf16>
    %c3_152 = arith.constant 3 : index
    %c2_153 = arith.constant 2 : index
    %c0_154 = arith.constant 0 : index
    %c0_155 = arith.constant 0 : index
    %128 = vector.load %arg11[%c3_152, %c2_153, %c0_154, %c0_155] : memref<5x5x8x256xbf16, #tpu.memory_space<vmem>>, vector<1x1x8x256xbf16>
    %129 = vector.shape_cast %128 : vector<1x1x8x256xbf16> to vector<8x256xbf16>
    %130 = tpu.concatenate %123, %125, %127, %129 in 0 : vector<8x256xbf16>, vector<8x256xbf16>, vector<8x256xbf16>, vector<8x256xbf16> -> vector<32x256xbf16>
    %c1_156 = arith.constant 1 : index
    %c1_157 = arith.constant 1 : index
    %c0_158 = arith.constant 0 : index
    %c0_159 = arith.constant 0 : index
    %131 = vector.load %arg11[%c1_156, %c1_157, %c0_158, %c0_159] : memref<5x5x8x256xbf16, #tpu.memory_space<vmem>>, vector<1x1x8x256xbf16>
    %132 = vector.shape_cast %131 : vector<1x1x8x256xbf16> to vector<8x256xbf16>
    %c1_160 = arith.constant 1 : index
    %c3_161 = arith.constant 3 : index
    %c0_162 = arith.constant 0 : index
    %c0_163 = arith.constant 0 : index
    %133 = vector.load %arg11[%c1_160, %c3_161, %c0_162, %c0_163] : memref<5x5x8x256xbf16, #tpu.memory_space<vmem>>, vector<1x1x8x256xbf16>
    %134 = vector.shape_cast %133 : vector<1x1x8x256xbf16> to vector<8x256xbf16>
    %c3_164 = arith.constant 3 : index
    %c1_165 = arith.constant 1 : index
    %c0_166 = arith.constant 0 : index
    %c0_167 = arith.constant 0 : index
    %135 = vector.load %arg11[%c3_164, %c1_165, %c0_166, %c0_167] : memref<5x5x8x256xbf16, #tpu.memory_space<vmem>>, vector<1x1x8x256xbf16>
    %136 = vector.shape_cast %135 : vector<1x1x8x256xbf16> to vector<8x256xbf16>
    %c3_168 = arith.constant 3 : index
    %c3_169 = arith.constant 3 : index
    %c0_170 = arith.constant 0 : index
    %c0_171 = arith.constant 0 : index
    %137 = vector.load %arg11[%c3_168, %c3_169, %c0_170, %c0_171] : memref<5x5x8x256xbf16, #tpu.memory_space<vmem>>, vector<1x1x8x256xbf16>
    %138 = vector.shape_cast %137 : vector<1x1x8x256xbf16> to vector<8x256xbf16>
    %139 = tpu.concatenate %132, %134, %136, %138 in 0 : vector<8x256xbf16>, vector<8x256xbf16>, vector<8x256xbf16>, vector<8x256xbf16> -> vector<32x256xbf16>
    %c1_172 = arith.constant 1 : index
    %c2_173 = arith.constant 2 : index
    %c0_174 = arith.constant 0 : index
    %c0_175 = arith.constant 0 : index
    %140 = vector.load %arg11[%c1_172, %c2_173, %c0_174, %c0_175] : memref<5x5x8x256xbf16, #tpu.memory_space<vmem>>, vector<1x1x8x256xbf16>
    %141 = vector.shape_cast %140 : vector<1x1x8x256xbf16> to vector<8x256xbf16>
    %c1_176 = arith.constant 1 : index
    %c4_177 = arith.constant 4 : index
    %c0_178 = arith.constant 0 : index
    %c0_179 = arith.constant 0 : index
    %142 = vector.load %arg11[%c1_176, %c4_177, %c0_178, %c0_179] : memref<5x5x8x256xbf16, #tpu.memory_space<vmem>>, vector<1x1x8x256xbf16>
    %143 = vector.shape_cast %142 : vector<1x1x8x256xbf16> to vector<8x256xbf16>
    %c3_180 = arith.constant 3 : index
    %c2_181 = arith.constant 2 : index
    %c0_182 = arith.constant 0 : index
    %c0_183 = arith.constant 0 : index
    %144 = vector.load %arg11[%c3_180, %c2_181, %c0_182, %c0_183] : memref<5x5x8x256xbf16, #tpu.memory_space<vmem>>, vector<1x1x8x256xbf16>
    %145 = vector.shape_cast %144 : vector<1x1x8x256xbf16> to vector<8x256xbf16>
    %c3_184 = arith.constant 3 : index
    %c4_185 = arith.constant 4 : index
    %c0_186 = arith.constant 0 : index
    %c0_187 = arith.constant 0 : index
    %146 = vector.load %arg11[%c3_184, %c4_185, %c0_186, %c0_187] : memref<5x5x8x256xbf16, #tpu.memory_space<vmem>>, vector<1x1x8x256xbf16>
    %147 = vector.shape_cast %146 : vector<1x1x8x256xbf16> to vector<8x256xbf16>
    %148 = tpu.concatenate %141, %143, %145, %147 in 0 : vector<8x256xbf16>, vector<8x256xbf16>, vector<8x256xbf16>, vector<8x256xbf16> -> vector<32x256xbf16>
    %149 = tpu.concatenate %130, %139, %148 in 1 : vector<32x256xbf16>, vector<32x256xbf16>, vector<32x256xbf16> -> vector<32x768xbf16>
    %c1_188 = arith.constant 1 : index
    %c0_189 = arith.constant 0 : index
    %c0_190 = arith.constant 0 : index
    %c0_191 = arith.constant 0 : index
    %150 = vector.load %arg12[%c1_188, %c0_189, %c0_190, %c0_191] : memref<2x3x256x512xbf16, #tpu.memory_space<vmem>>, vector<1x3x256x512xbf16>
    %151 = vector.shape_cast %150 : vector<1x3x256x512xbf16> to vector<3x256x512xbf16>
    %152 = vector.shape_cast %151 : vector<3x256x512xbf16> to vector<768x512xbf16>
    %cst_192 = arith.constant dense<0.000000e+00> : vector<32x512xf32>
    %153 = tpu.matmul %149, %152, %cst_192 {dimension_numbers = #tpu.dot_dimension_numbers<[1], [0], [0], [1], [0, 0, 1, 1], [], []>} : vector<32x768xbf16>, vector<768x512xbf16>, vector<32x512xf32> -> vector<32x512xf32>
    %154 = arith.addf %109, %153 : vector<32x512xf32>
    %c2_i32_193 = arith.constant 2 : i32
    %c0_i32_194 = arith.constant 0 : i32
    %c0_i32_195 = arith.constant 0 : i32
    %c0_i32_196 = arith.constant 0 : i32
    %c0_i32_197 = arith.constant 0 : i32
    %c0_i32_198 = arith.constant 0 : i32
    %155 = tpu.memref_slice %arg1[%c2_i32_193, %c0_i32_196, %c0_i32_197, %c0_i32_198] : memref<3x3x256x512xbf16, #tpu.memory_space<any>> -> memref<1x3x256x512xbf16, #tpu.memory_space<any>>
    %156 = tpu.memref_squeeze %155 : memref<1x3x256x512xbf16, #tpu.memory_space<any>> -> memref<3x256x512xbf16, #tpu.memory_space<any>>
    %c0_i32_199 = arith.constant 0 : i32
    %c0_i32_200 = arith.constant 0 : i32
    %c0_i32_201 = arith.constant 0 : i32
    %157 = tpu.memref_slice %arg12[%c0_i32_194, %c0_i32_199, %c0_i32_200, %c0_i32_201] : memref<2x3x256x512xbf16, #tpu.memory_space<vmem>> -> memref<1x3x256x512xbf16, #tpu.memory_space<vmem>>
    %158 = tpu.memref_squeeze %157 : memref<1x3x256x512xbf16, #tpu.memory_space<vmem>> -> memref<3x256x512xbf16, #tpu.memory_space<vmem>>
    %159 = tpu.memref_slice %arg13[%c0_i32_195] : memref<2x!tpu.dma_semaphore, #tpu.memory_space<semaphore_mem>> -> memref<1x!tpu.dma_semaphore, #tpu.memory_space<semaphore_mem>>
    %160 = tpu.memref_squeeze %159 : memref<1x!tpu.dma_semaphore, #tpu.memory_space<semaphore_mem>> -> memref<!tpu.dma_semaphore, #tpu.memory_space<semaphore_mem>>
    tpu.wait_dma2 semaphore(%160 : memref<!tpu.dma_semaphore, #tpu.memory_space<semaphore_mem>>) src(%156 : memref<3x256x512xbf16, #tpu.memory_space<any>>) dst(%158 : memref<3x256x512xbf16, #tpu.memory_space<vmem>>)
    %c2_202 = arith.constant 2 : index
    %c0_203 = arith.constant 0 : index
    %c0_204 = arith.constant 0 : index
    %c0_205 = arith.constant 0 : index
    %161 = vector.load %arg11[%c2_202, %c0_203, %c0_204, %c0_205] : memref<5x5x8x256xbf16, #tpu.memory_space<vmem>>, vector<1x1x8x256xbf16>
    %162 = vector.shape_cast %161 : vector<1x1x8x256xbf16> to vector<8x256xbf16>
    %c2_206 = arith.constant 2 : index
    %c2_207 = arith.constant 2 : index
    %c0_208 = arith.constant 0 : index
    %c0_209 = arith.constant 0 : index
    %163 = vector.load %arg11[%c2_206, %c2_207, %c0_208, %c0_209] : memref<5x5x8x256xbf16, #tpu.memory_space<vmem>>, vector<1x1x8x256xbf16>
    %164 = vector.shape_cast %163 : vector<1x1x8x256xbf16> to vector<8x256xbf16>
    %c4_210 = arith.constant 4 : index
    %c0_211 = arith.constant 0 : index
    %c0_212 = arith.constant 0 : index
    %c0_213 = arith.constant 0 : index
    %165 = vector.load %arg11[%c4_210, %c0_211, %c0_212, %c0_213] : memref<5x5x8x256xbf16, #tpu.memory_space<vmem>>, vector<1x1x8x256xbf16>
    %166 = vector.shape_cast %165 : vector<1x1x8x256xbf16> to vector<8x256xbf16>
    %c4_214 = arith.constant 4 : index
    %c2_215 = arith.constant 2 : index
    %c0_216 = arith.constant 0 : index
    %c0_217 = arith.constant 0 : index
    %167 = vector.load %arg11[%c4_214, %c2_215, %c0_216, %c0_217] : memref<5x5x8x256xbf16, #tpu.memory_space<vmem>>, vector<1x1x8x256xbf16>
    %168 = vector.shape_cast %167 : vector<1x1x8x256xbf16> to vector<8x256xbf16>
    %169 = tpu.concatenate %162, %164, %166, %168 in 0 : vector<8x256xbf16>, vector<8x256xbf16>, vector<8x256xbf16>, vector<8x256xbf16> -> vector<32x256xbf16>
    %c2_218 = arith.constant 2 : index
    %c1_219 = arith.constant 1 : index
    %c0_220 = arith.constant 0 : index
    %c0_221 = arith.constant 0 : index
    %170 = vector.load %arg11[%c2_218, %c1_219, %c0_220, %c0_221] : memref<5x5x8x256xbf16, #tpu.memory_space<vmem>>, vector<1x1x8x256xbf16>
    %171 = vector.shape_cast %170 : vector<1x1x8x256xbf16> to vector<8x256xbf16>
    %c2_222 = arith.constant 2 : index
    %c3_223 = arith.constant 3 : index
    %c0_224 = arith.constant 0 : index
    %c0_225 = arith.constant 0 : index
    %172 = vector.load %arg11[%c2_222, %c3_223, %c0_224, %c0_225] : memref<5x5x8x256xbf16, #tpu.memory_space<vmem>>, vector<1x1x8x256xbf16>
    %173 = vector.shape_cast %172 : vector<1x1x8x256xbf16> to vector<8x256xbf16>
    %c4_226 = arith.constant 4 : index
    %c1_227 = arith.constant 1 : index
    %c0_228 = arith.constant 0 : index
    %c0_229 = arith.constant 0 : index
    %174 = vector.load %arg11[%c4_226, %c1_227, %c0_228, %c0_229] : memref<5x5x8x256xbf16, #tpu.memory_space<vmem>>, vector<1x1x8x256xbf16>
    %175 = vector.shape_cast %174 : vector<1x1x8x256xbf16> to vector<8x256xbf16>
    %c4_230 = arith.constant 4 : index
    %c3_231 = arith.constant 3 : index
    %c0_232 = arith.constant 0 : index
    %c0_233 = arith.constant 0 : index
    %176 = vector.load %arg11[%c4_230, %c3_231, %c0_232, %c0_233] : memref<5x5x8x256xbf16, #tpu.memory_space<vmem>>, vector<1x1x8x256xbf16>
    %177 = vector.shape_cast %176 : vector<1x1x8x256xbf16> to vector<8x256xbf16>
    %178 = tpu.concatenate %171, %173, %175, %177 in 0 : vector<8x256xbf16>, vector<8x256xbf16>, vector<8x256xbf16>, vector<8x256xbf16> -> vector<32x256xbf16>
    %c2_234 = arith.constant 2 : index
    %c2_235 = arith.constant 2 : index
    %c0_236 = arith.constant 0 : index
    %c0_237 = arith.constant 0 : index
    %179 = vector.load %arg11[%c2_234, %c2_235, %c0_236, %c0_237] : memref<5x5x8x256xbf16, #tpu.memory_space<vmem>>, vector<1x1x8x256xbf16>
    %180 = vector.shape_cast %179 : vector<1x1x8x256xbf16> to vector<8x256xbf16>
    %c2_238 = arith.constant 2 : index
    %c4_239 = arith.constant 4 : index
    %c0_240 = arith.constant 0 : index
    %c0_241 = arith.constant 0 : index
    %181 = vector.load %arg11[%c2_238, %c4_239, %c0_240, %c0_241] : memref<5x5x8x256xbf16, #tpu.memory_space<vmem>>, vector<1x1x8x256xbf16>
    %182 = vector.shape_cast %181 : vector<1x1x8x256xbf16> to vector<8x256xbf16>
    %c4_242 = arith.constant 4 : index
    %c2_243 = arith.constant 2 : index
    %c0_244 = arith.constant 0 : index
    %c0_245 = arith.constant 0 : index
    %183 = vector.load %arg11[%c4_242, %c2_243, %c0_244, %c0_245] : memref<5x5x8x256xbf16, #tpu.memory_space<vmem>>, vector<1x1x8x256xbf16>
    %184 = vector.shape_cast %183 : vector<1x1x8x256xbf16> to vector<8x256xbf16>
    %c4_246 = arith.constant 4 : index
    %c4_247 = arith.constant 4 : index
    %c0_248 = arith.constant 0 : index
    %c0_249 = arith.constant 0 : index
    %185 = vector.load %arg11[%c4_246, %c4_247, %c0_248, %c0_249] : memref<5x5x8x256xbf16, #tpu.memory_space<vmem>>, vector<1x1x8x256xbf16>
    %186 = vector.shape_cast %185 : vector<1x1x8x256xbf16> to vector<8x256xbf16>
    %187 = tpu.concatenate %180, %182, %184, %186 in 0 : vector<8x256xbf16>, vector<8x256xbf16>, vector<8x256xbf16>, vector<8x256xbf16> -> vector<32x256xbf16>
    %188 = tpu.concatenate %169, %178, %187 in 1 : vector<32x256xbf16>, vector<32x256xbf16>, vector<32x256xbf16> -> vector<32x768xbf16>
    %c0_250 = arith.constant 0 : index
    %c0_251 = arith.constant 0 : index
    %c0_252 = arith.constant 0 : index
    %c0_253 = arith.constant 0 : index
    %189 = vector.load %arg12[%c0_250, %c0_251, %c0_252, %c0_253] : memref<2x3x256x512xbf16, #tpu.memory_space<vmem>>, vector<1x3x256x512xbf16>
    %190 = vector.shape_cast %189 : vector<1x3x256x512xbf16> to vector<3x256x512xbf16>
    %191 = vector.shape_cast %190 : vector<3x256x512xbf16> to vector<768x512xbf16>
    %cst_254 = arith.constant dense<0.000000e+00> : vector<32x512xf32>
    %192 = tpu.matmul %188, %191, %cst_254 {dimension_numbers = #tpu.dot_dimension_numbers<[1], [0], [0], [1], [0, 0, 1, 1], [], []>} : vector<32x768xbf16>, vector<768x512xbf16>, vector<32x512xf32> -> vector<32x512xf32>
    %193 = arith.addf %154, %192 : vector<32x512xf32>
    %c0_255 = arith.constant 0 : index
    %c0_256 = arith.constant 0 : index
    %194 = vector.load %arg2[%c0_255, %c0_256] : memref<1x512xf32, #tpu.memory_space<vmem>>, vector<1x512xf32>
    %195 = vector.broadcast %194 : vector<1x512xf32> to vector<32x512xf32>
    %196 = arith.mulf %193, %195 : vector<32x512xf32>
    %c0_257 = arith.constant 0 : index
    %c0_258 = arith.constant 0 : index
    %197 = vector.load %arg3[%c0_257, %c0_258] : memref<1x512xf32, #tpu.memory_space<vmem>>, vector<1x512xf32>
    %198 = vector.broadcast %197 : vector<1x512xf32> to vector<32x512xf32>
    %199 = arith.addf %196, %198 : vector<32x512xf32>
    %cst_259 = arith.constant 0.000000e+00 : f32
    %200 = vector.broadcast %cst_259 : f32 to vector<32x512xf32>
    %201 = arith.maximumf %199, %200 : vector<32x512xf32>
    %202 = vector.extract_strided_slice %201 {offsets = [0, 0], sizes = [8, 512], strides = [1, 1]} : vector<32x512xf32> to vector<8x512xf32>
    %203 = vector.extract_strided_slice %201 {offsets = [8, 0], sizes = [8, 512], strides = [1, 1]} : vector<32x512xf32> to vector<8x512xf32>
    %204 = arith.addf %202, %203 : vector<8x512xf32>
    %205 = vector.extract_strided_slice %201 {offsets = [16, 0], sizes = [8, 512], strides = [1, 1]} : vector<32x512xf32> to vector<8x512xf32>
    %206 = arith.addf %204, %205 : vector<8x512xf32>
    %207 = vector.extract_strided_slice %201 {offsets = [24, 0], sizes = [8, 512], strides = [1, 1]} : vector<32x512xf32> to vector<8x512xf32>
    %208 = arith.addf %206, %207 : vector<8x512xf32>
    %cst_260 = arith.constant 2.500000e-01 : f32
    %209 = vector.broadcast %cst_260 : f32 to vector<8x512xf32>
    %210 = arith.mulf %209, %208 : vector<8x512xf32>
    %211 = arith.truncf %210 : vector<8x512xf32> to vector<8x512xbf16>
    %c0_261 = arith.constant 0 : index
    %c0_262 = arith.constant 0 : index
    %212 = vector.load %arg4[%c0_261, %c0_262] : memref<512x128xbf16, #tpu.memory_space<vmem>>, vector<512x128xbf16>
    %cst_263 = arith.constant dense<0.000000e+00> : vector<8x128xf32>
    %213 = tpu.matmul %211, %212, %cst_263 {dimension_numbers = #tpu.dot_dimension_numbers<[1], [0], [0], [1], [0, 0, 1, 1], [], []>} : vector<8x512xbf16>, vector<512x128xbf16>, vector<8x128xf32> -> vector<8x128xf32>
    %c0_264 = arith.constant 0 : index
    %c0_265 = arith.constant 0 : index
    %214 = vector.load %arg5[%c0_264, %c0_265] : memref<1x128xf32, #tpu.memory_space<vmem>>, vector<1x128xf32>
    %215 = vector.broadcast %214 : vector<1x128xf32> to vector<8x128xf32>
    %216 = arith.addf %213, %215 : vector<8x128xf32>
    %cst_266 = arith.constant 0.000000e+00 : f32
    %217 = vector.broadcast %cst_266 : f32 to vector<8x128xf32>
    %218 = arith.maximumf %216, %217 : vector<8x128xf32>
    %c0_267 = arith.constant 0 : index
    %c0_268 = arith.constant 0 : index
    %219 = vector.load %arg6[%c0_267, %c0_268] : memref<1x128xf32, #tpu.memory_space<vmem>>, vector<1x128xf32>
    %220 = vector.broadcast %219 : vector<1x128xf32> to vector<8x128xf32>
    %221 = arith.mulf %218, %220 : vector<8x128xf32>
    %c0_269 = arith.constant 0 : index
    %c0_270 = arith.constant 0 : index
    %222 = vector.load %arg7[%c0_269, %c0_270] : memref<1x128xf32, #tpu.memory_space<vmem>>, vector<1x128xf32>
    %223 = vector.broadcast %222 : vector<1x128xf32> to vector<8x128xf32>
    %224 = arith.addf %221, %223 : vector<8x128xf32>
    %225 = arith.truncf %224 : vector<8x128xf32> to vector<8x128xbf16>
    %c0_271 = arith.constant 0 : index
    %c0_272 = arith.constant 0 : index
    %226 = vector.load %arg8[%c0_271, %c0_272] : memref<128x10xbf16, #tpu.memory_space<vmem>>, vector<128x10xbf16>
    %cst_273 = arith.constant dense<0.000000e+00> : vector<8x10xf32>
    %227 = tpu.matmul %225, %226, %cst_273 {dimension_numbers = #tpu.dot_dimension_numbers<[1], [0], [0], [1], [0, 0, 1, 1], [], []>} : vector<8x128xbf16>, vector<128x10xbf16>, vector<8x10xf32> -> vector<8x10xf32>
    %c0_274 = arith.constant 0 : index
    %c0_275 = arith.constant 0 : index
    %228 = vector.load %arg9[%c0_274, %c0_275] : memref<1x10xf32, #tpu.memory_space<vmem>>, vector<1x10xf32>
    %229 = vector.broadcast %228 : vector<1x10xf32> to vector<8x10xf32>
    %230 = arith.addf %227, %229 : vector<8x10xf32>
    %c0_276 = arith.constant 0 : index
    %c0_277 = arith.constant 0 : index
    %231 = vector.load %arg10[%c0_276, %c0_277] : memref<8x10xf32, #tpu.memory_space<vmem>>, vector<8x10xf32>
    tpu.vector_store %arg10[%c0_276, %c0_277], %230 {strides = array<i32>} : memref<8x10xf32, #tpu.memory_space<vmem>>, vector<8x10xf32>,
    return
  }
}

</mosaic_0001>

<llo_original>
// kernel: vgg_tinyserver_forward.1
$region0: #{vgg_tinyserver_forward.1}
  #allocation0 [shape = 'u32[]', space=smem, size = 0x4, offset = 0x4, fixed_abs, tag = 'smem constant byte address 0x4 - core index']
  #allocation1 [shape = 'u32[72,128]{1,0:T(1,128)}', space=vmem, size = 0x9000, scoped, tag = 'internal scratch']
  #allocation2 [shape = 'bf16[5,5,8,256]{3,2,1,0:T(8,128)(2,1)}', space=vmem, size = 0x19000, scoped, tag = 'scratch operand']
  #allocation3 [shape = 'bf16[2,3,256,512]{3,2,1,0:T(8,128)(2,1)}', space=vmem, size = 0x180000, scoped, tag = 'scratch operand']
  #allocation4 [shape = 's32[2]{0}', space=sflag, size = 0x8, scoped, tag = 'scratch operand']
  #allocation7 [shape = 's32[]', space=sflag, size = 0x4, offset = 0, fixed_abs, tag = 'sflag constant byte address 0x0 - dummy sync flag']
  #allocation8 [shape = 's32[]', space=sflag, size = 0x4, offset = 0, fixed_abs, tag = 'sflag constant byte address 0x0 - dummy sync flag']
  #allocation9 [shape = 's32[]', space=sflag, size = 0x4, offset = 0, fixed_abs, tag = 'sflag constant byte address 0x0 - dummy sync flag']
  %s0 = inlined_call_operand.vmem [shape: bf16[8,8,8,256], index: 0, kind: input, shape index: {}]
  %s1 = inlined_call_operand.vmem [shape: bf16[3,3,256,512], index: 1, kind: input, shape index: {}]
  %s2 = inlined_call_operand.vmem [shape: f32[1,512], index: 2, kind: input, shape index: {}]
  %s3 = inlined_call_operand.vmem [shape: f32[1,512], index: 3, kind: input, shape index: {}]
  %s4 = inlined_call_operand.vmem [shape: bf16[512,128], index: 4, kind: input, shape index: {}]
  %s5 = inlined_call_operand.vmem [shape: f32[1,128], index: 5, kind: input, shape index: {}]
  %s6 = inlined_call_operand.vmem [shape: f32[1,128], index: 6, kind: input, shape index: {}]
  %s7 = inlined_call_operand.vmem [shape: f32[1,128], index: 7, kind: input, shape index: {}]
  %s8 = inlined_call_operand.vmem [shape: bf16[128,10], index: 8, kind: input, shape index: {}]
  %s9 = inlined_call_operand.vmem [shape: f32[1,10], index: 9, kind: input, shape index: {}]
  %s10 = inlined_call_operand.hbm [shape: f32[8,10], index: 10, kind: output, shape index: {}]
  %s11 = sld [smem:[#allocation0]]
  $region103: #{vgg_tinyserver_forward.1} parent=0
    _
  %s13 = ssub.s32 1, %s11
  %s14 = scalar_select 0, %s13, %s11
  $region1: #{vgg_tinyserver_forward.1} parent=0
    #allocation5 [shape = 'u8[4096]{0}', space=vmem, size = 0x1000, scoped, tag = 'output window, operand 0, single buffered']
    #allocation6 [shape = 's32[1]{0}', space=sflag, size = 0x4, scoped, tag = 'scoped memory for vgg_tinyserver_forward.1']
    %15 = vsyncpa [#allocation6], 0
    // Predicated region
    $region2: #{vgg_tinyserver_forward.1} parent=1 // pred_check
      _
    $region3: #{vgg_tinyserver_forward.1} parent=1 // pred_check_branch
      %17 = sbr.rel (0) target = $region5
    $region4: #{vgg_tinyserver_forward.1} parent=1 // pred_region
      _
    $region5: #{vgg_tinyserver_forward.1} parent=1 // pred_fallthru
      _
    // Predicated region
    $region6: #{vgg_tinyserver_forward.1} parent=1 // pred_check
      _
    $region7: #{vgg_tinyserver_forward.1} parent=1 // pred_check_branch
      %19 = sbr.rel (0) target = $region9
    $region8: #{vgg_tinyserver_forward.1} parent=1 // pred_region
      _
    $region9: #{vgg_tinyserver_forward.1} parent=1 // pred_fallthru
      _
    // Predicated region
    $region10: #{vgg_tinyserver_forward.1} parent=1 // pred_check
      _
    $region11: #{vgg_tinyserver_forward.1} parent=1 // pred_check_branch
      %21 = sbr.rel (0) target = $region13
    $region12: #{vgg_tinyserver_forward.1} parent=1 // pred_region
      _
    $region13: #{vgg_tinyserver_forward.1} parent=1 // pred_fallthru
      _
    // Predicated region
    $region14: #{vgg_tinyserver_forward.1} parent=1 // pred_check
      _
    $region15: #{vgg_tinyserver_forward.1} parent=1 // pred_check_branch
      %23 = sbr.rel (0) target = $region17
    $region16: #{vgg_tinyserver_forward.1} parent=1 // pred_region
      _
    $region17: #{vgg_tinyserver_forward.1} parent=1 // pred_fallthru
      _
    // Predicated region
    $region18: #{vgg_tinyserver_forward.1} parent=1 // pred_check
      _
    $region19: #{vgg_tinyserver_forward.1} parent=1 // pred_check_branch
      %25 = sbr.rel (0) target = $region21
    $region20: #{vgg_tinyserver_forward.1} parent=1 // pred_region
      _
    $region21: #{vgg_tinyserver_forward.1} parent=1 // pred_fallthru
      _
    // Predicated region
    $region22: #{vgg_tinyserver_forward.1} parent=1 // pred_check
      _
    $region23: #{vgg_tinyserver_forward.1} parent=1 // pred_check_branch
      %27 = sbr.rel (0) target = $region25
    $region24: #{vgg_tinyserver_forward.1} parent=1 // pred_region
      _
    $region25: #{vgg_tinyserver_forward.1} parent=1 // pred_fallthru
      _
    // Predicated region
    $region26: #{vgg_tinyserver_forward.1} parent=1 // pred_check
      _
    $region27: #{vgg_tinyserver_forward.1} parent=1 // pred_check_branch
      %29 = sbr.rel (0) target = $region29
    $region28: #{vgg_tinyserver_forward.1} parent=1 // pred_region
      _
    $region29: #{vgg_tinyserver_forward.1} parent=1 // pred_fallthru
      _
    // Predicated region
    $region30: #{vgg_tinyserver_forward.1} parent=1 // pred_check
      _
    $region31: #{vgg_tinyserver_forward.1} parent=1 // pred_check_branch
      %31 = sbr.rel (0) target = $region33
    $region32: #{vgg_tinyserver_forward.1} parent=1 // pred_region
      _
    $region33: #{vgg_tinyserver_forward.1} parent=1 // pred_fallthru
      _
    // Predicated region
    $region34: #{vgg_tinyserver_forward.1} parent=1 // pred_check
      _
    $region35: #{vgg_tinyserver_forward.1} parent=1 // pred_check_branch
      %33 = sbr.rel (0) target = $region37
    $region36: #{vgg_tinyserver_forward.1} parent=1 // pred_region
      _
    $region37: #{vgg_tinyserver_forward.1} parent=1 // pred_fallthru
      _
    // Predicated region
    $region38: #{vgg_tinyserver_forward.1} parent=1 // pred_check
      _
    $region39: #{vgg_tinyserver_forward.1} parent=1 // pred_check_branch
      %36 = sbr.rel (0) target = $region41
    $region40: #{vgg_tinyserver_forward.1} parent=1 // pred_region
      loop: start=0, step=1, limit=1
      $region42: #{vgg_tinyserver_forward.1} parent=40 // loop_pre_header
        _
      $region43: #{vgg_tinyserver_forward.1} parent=40 // loop_header
        %s38 = sphi 0, %s42
        %p39 = scmp.ge.s32.totalorder %s38, 1
        %s43 = sphi %s1, %s1
        %s44 = sphi [#allocation3], [#allocation3]
      $region44: #{vgg_tinyserver_forward.1} parent=40 // loop_header_branch
        %41 = sbr.rel (%p39) target = $region48
      $region45: #{vgg_tinyserver_forward.1} parent=40 // loop_body
        %v45 = vld [vmem:[%s43] sm:$0xff]
        %46 = vst [vmem:[%s44] sm:$0xff] %v45
        %v47 = vld [vmem:[%s43 + $0x8] sm:$0xff]
        %48 = vst [vmem:[%s44 + $0x8] sm:$0xff] %v47
        %v49 = vld [vmem:[%s43 + $0x10] sm:$0xff]
        %50 = vst [vmem:[%s44 + $0x10] sm:$0xff] %v49
        %v51 = vld [vmem:[%s43 + $0x18] sm:$0xff]
        %52 = vst [vmem:[%s44 + $0x18] sm:$0xff] %v51
        %v53 = vld [vmem:[%s43 + $0x20] sm:$0xff]
        %54 = vst [vmem:[%s44 + $0x20] sm:$0xff] %v53
        %v55 = vld [vmem:[%s43 + $0x28] sm:$0xff]
        %56 = vst [vmem:[%s44 + $0x28] sm:$0xff] %v55
        %v57 = vld [vmem:[%s43 + $0x30] sm:$0xff]
        %58 = vst [vmem:[%s44 + $0x30] sm:$0xff] %v57
        %v59 = vld [vmem:[%s43 + $0x38] sm:$0xff]
        %60 = vst [vmem:[%s44 + $0x38] sm:$0xff] %v59
        %v61 = vld [vmem:[%s43 + $0x40] sm:$0xff]
        %62 = vst [vmem:[%s44 + $0x40] sm:$0xff] %v61
        %v63 = vld [vmem:[%s43 + $0x48] sm:$0xff]
        %64 = vst [vmem:[%s44 + $0x48] sm:$0xff] %v63
        %v65 = vld [vmem:[%s43 + $0x50] sm:$0xff]
        %66 = vst [vmem:[%s44 + $0x50] sm:$0xff] %v65
        %v67 = vld [vmem:[%s43 + $0x58] sm:$0xff]
        %68 = vst [vmem:[%s44 + $0x58] sm:$0xff] %v67
        %v69 = vld [vmem:[%s43 + $0x60] sm:$0xff]
        %70 = vst [vmem:[%s44 + $0x60] sm:$0xff] %v69
        %v71 = vld [vmem:[%s43 + $0x68] sm:$0xff]
        %72 = vst [vmem:[%s44 + $0x68] sm:$0xff] %v71
        %v73 = vld [vmem:[%s43 + $0x70] sm:$0xff]
        %74 = vst [vmem:[%s44 + $0x70] sm:$0xff] %v73
        %v75 = vld [vmem:[%s43 + $0x78] sm:$0xff]
        %76 = vst [vmem:[%s44 + $0x78] sm:$0xff] %v75
        %v77 = vld [vmem:[%s43 + $0x80] sm:$0xff]
        %78 = vst [vmem:[%s44 + $0x80] sm:$0xff] %v77
        %v79 = vld [vmem:[%s43 + $0x88] sm:$0xff]
        %80 = vst [vmem:[%s44 + $0x88] sm:$0xff] %v79
        %v81 = vld [vmem:[%s43 + $0x90] sm:$0xff]
        %82 = vst [vmem:[%s44 + $0x90] sm:$0xff] %v81
        %v83 = vld [vmem:[%s43 + $0x98] sm:$0xff]
        %84 = vst [vmem:[%s44 + $0x98] sm:$0xff] %v83
        %v85 = vld [vmem:[%s43 + $0xa0] sm:$0xff]
        %86 = vst [vmem:[%s44 + $0xa0] sm:$0xff] %v85
        %v87 = vld [vmem:[%s43 + $0xa8] sm:$0xff]
        %88 = vst [vmem:[%s44 + $0xa8] sm:$0xff] %v87
        %v89 = vld [vmem:[%s43 + $0xb0] sm:$0xff]
        %90 = vst [vmem:[%s44 + $0xb0] sm:$0xff] %v89
        %v91 = vld [vmem:[%s43 + $0xb8] sm:$0xff]
        %92 = vst [vmem:[%s44 + $0xb8] sm:$0xff] %v91
        %v93 = vld [vmem:[%s43 + $0xc0] sm:$0xff]
        %94 = vst [vmem:[%s44 + $0xc0] sm:$0xff] %v93
        %v95 = vld [vmem:[%s43 + $0xc8] sm:$0xff]
        %96 = vst [vmem:[%s44 + $0xc8] sm:$0xff] %v95
        %v97 = vld [vmem:[%s43 + $0xd0] sm:$0xff]
        %98 = vst [vmem:[%s44 + $0xd0] sm:$0xff] %v97
        %v99 = vld [vmem:[%s43 + $0xd8] sm:$0xff]
        %100 = vst [vmem:[%s44 + $0xd8] sm:$0xff] %v99
        %v101 = vld [vmem:[%s43 + $0xe0] sm:$0xff]
        %102 = vst [vmem:[%s44 + $0xe0] sm:$0xff] %v101
        %v103 = vld [vmem:[%s43 + $0xe8] sm:$0xff]
        %104 = vst [vmem:[%s44 + $0xe8] sm:$0xff] %v103
        %v105 = vld [vmem:[%s43 + $0xf0] sm:$0xff]
        %106 = vst [vmem:[%s44 + $0xf0] sm:$0xff] %v105
        %v107 = vld [vmem:[%s43 + $0xf8] sm:$0xff]
        %108 = vst [vmem:[%s44 + $0xf8] sm:$0xff] %v107
        %v109 = vld [vmem:[%s43 + $0x100] sm:$0xff]
        %110 = vst [vmem:[%s44 + $0x100] sm:$0xff] %v109
        %v111 = vld [vmem:[%s43 + $0x108] sm:$0xff]
        %112 = vst [vmem:[%s44 + $0x108] sm:$0xff] %v111
        %v113 = vld [vmem:[%s43 + $0x110] sm:$0xff]
        %114 = vst [vmem:[%s44 + $0x110] sm:$0xff] %v113
        %v115 = vld [vmem:[%s43 + $0x118] sm:$0xff]
        %116 = vst [vmem:[%s44 + $0x118] sm:$0xff] %v115
        %v117 = vld [vmem:[%s43 + $0x120] sm:$0xff]
        %118 = vst [vmem:[%s44 + $0x120] sm:$0xff] %v117
        %v119 = vld [vmem:[%s43 + $0x128] sm:$0xff]
        %120 = vst [vmem:[%s44 + $0x128] sm:$0xff] %v119
        %v121 = vld [vmem:[%s43 + $0x130] sm:$0xff]
        %122 = vst [vmem:[%s44 + $0x130] sm:$0xff] %v121
        %v123 = vld [vmem:[%s43 + $0x138] sm:$0xff]
        %124 = vst [vmem:[%s44 + $0x138] sm:$0xff] %v123
        %v125 = vld [vmem:[%s43 + $0x140] sm:$0xff]
        %126 = vst [vmem:[%s44 + $0x140] sm:$0xff] %v125
        %v127 = vld [vmem:[%s43 + $0x148] sm:$0xff]
        %128 = vst [vmem:[%s44 + $0x148] sm:$0xff] %v127
        %v129 = vld [vmem:[%s43 + $0x150] sm:$0xff]
        %130 = vst [vmem:[%s44 + $0x150] sm:$0xff] %v129
        %v131 = vld [vmem:[%s43 + $0x158] sm:$0xff]
        %132 = vst [vmem:[%s44 + $0x158] sm:$0xff] %v131
        %v133 = vld [vmem:[%s43 + $0x160] sm:$0xff]
        %134 = vst [vmem:[%s44 + $0x160] sm:$0xff] %v133
        %v135 = vld [vmem:[%s43 + $0x168] sm:$0xff]
        %136 = vst [vmem:[%s44 + $0x168] sm:$0xff] %v135
        %v137 = vld [vmem:[%s43 + $0x170] sm:$0xff]
        %138 = vst [vmem:[%s44 + $0x170] sm:$0xff] %v137
        %v139 = vld [vmem:[%s43 + $0x178] sm:$0xff]
        %140 = vst [vmem:[%s44 + $0x178] sm:$0xff] %v139
        %v141 = vld [vmem:[%s43 + $0x180] sm:$0xff]
        %142 = vst [vmem:[%s44 + $0x180] sm:$0xff] %v141
        %v143 = vld [vmem:[%s43 + $0x188] sm:$0xff]
        %144 = vst [vmem:[%s44 + $0x188] sm:$0xff] %v143
        %v145 = vld [vmem:[%s43 + $0x190] sm:$0xff]
        %146 = vst [vmem:[%s44 + $0x190] sm:$0xff] %v145
        %v147 = vld [vmem:[%s43 + $0x198] sm:$0xff]
        %148 = vst [vmem:[%s44 + $0x198] sm:$0xff] %v147
        %v149 = vld [vmem:[%s43 + $0x1a0] sm:$0xff]
        %150 = vst [vmem:[%s44 + $0x1a0] sm:$0xff] %v149
        %v151 = vld [vmem:[%s43 + $0x1a8] sm:$0xff]
        %152 = vst [vmem:[%s44 + $0x1a8] sm:$0xff] %v151
        %v153 = vld [vmem:[%s43 + $0x1b0] sm:$0xff]
        %154 = vst [vmem:[%s44 + $0x1b0] sm:$0xff] %v153
        %v155 = vld [vmem:[%s43 + $0x1b8] sm:$0xff]
        %156 = vst [vmem:[%s44 + $0x1b8] sm:$0xff] %v155
        %v157 = vld [vmem:[%s43 + $0x1c0] sm:$0xff]
        %158 = vst [vmem:[%s44 + $0x1c0] sm:$0xff] %v157
        %v159 = vld [vmem:[%s43 + $0x1c8] sm:$0xff]
        %160 = vst [vmem:[%s44 + $0x1c8] sm:$0xff] %v159
        %v161 = vld [vmem:[%s43 + $0x1d0] sm:$0xff]
        %162 = vst [vmem:[%s44 + $0x1d0] sm:$0xff] %v161
        %v163 = vld [vmem:[%s43 + $0x1d8] sm:$0xff]
        %164 = vst [vmem:[%s44 + $0x1d8] sm:$0xff] %v163
        %v165 = vld [vmem:[%s43 + $0x1e0] sm:$0xff]
        %166 = vst [vmem:[%s44 + $0x1e0] sm:$0xff] %v165
        %v167 = vld [vmem:[%s43 + $0x1e8] sm:$0xff]
        %168 = vst [vmem:[%s44 + $0x1e8] sm:$0xff] %v167
        %v169 = vld [vmem:[%s43 + $0x1f0] sm:$0xff]
        %170 = vst [vmem:[%s44 + $0x1f0] sm:$0xff] %v169
        %v171 = vld [vmem:[%s43 + $0x1f8] sm:$0xff]
        %172 = vst [vmem:[%s44 + $0x1f8] sm:$0xff] %v171
        %v173 = vld [vmem:[%s43 + $0x200] sm:$0xff]
        %174 = vst [vmem:[%s44 + $0x200] sm:$0xff] %v173
        %v175 = vld [vmem:[%s43 + $0x208] sm:$0xff]
        %176 = vst [vmem:[%s44 + $0x208] sm:$0xff] %v175
        %v177 = vld [vmem:[%s43 + $0x210] sm:$0xff]
        %178 = vst [vmem:[%s44 + $0x210] sm:$0xff] %v177
        %v179 = vld [vmem:[%s43 + $0x218] sm:$0xff]
        %180 = vst [vmem:[%s44 + $0x218] sm:$0xff] %v179
        %v181 = vld [vmem:[%s43 + $0x220] sm:$0xff]
        %182 = vst [vmem:[%s44 + $0x220] sm:$0xff] %v181
        %v183 = vld [vmem:[%s43 + $0x228] sm:$0xff]
        %184 = vst [vmem:[%s44 + $0x228] sm:$0xff] %v183
        %v185 = vld [vmem:[%s43 + $0x230] sm:$0xff]
        %186 = vst [vmem:[%s44 + $0x230] sm:$0xff] %v185
        %v187 = vld [vmem:[%s43 + $0x238] sm:$0xff]
        %188 = vst [vmem:[%s44 + $0x238] sm:$0xff] %v187
        %v189 = vld [vmem:[%s43 + $0x240] sm:$0xff]
        %190 = vst [vmem:[%s44 + $0x240] sm:$0xff] %v189
        %v191 = vld [vmem:[%s43 + $0x248] sm:$0xff]
        %192 = vst [vmem:[%s44 + $0x248] sm:$0xff] %v191
        %v193 = vld [vmem:[%s43 + $0x250] sm:$0xff]
        %194 = vst [vmem:[%s44 + $0x250] sm:$0xff] %v193
        %v195 = vld [vmem:[%s43 + $0x258] sm:$0xff]
        %196 = vst [vmem:[%s44 + $0x258] sm:$0xff] %v195
        %v197 = vld [vmem:[%s43 + $0x260] sm:$0xff]
        %198 = vst [vmem:[%s44 + $0x260] sm:$0xff] %v197
        %v199 = vld [vmem:[%s43 + $0x268] sm:$0xff]
        %200 = vst [vmem:[%s44 + $0x268] sm:$0xff] %v199
        %v201 = vld [vmem:[%s43 + $0x270] sm:$0xff]
        %202 = vst [vmem:[%s44 + $0x270] sm:$0xff] %v201
        %v203 = vld [vmem:[%s43 + $0x278] sm:$0xff]
        %204 = vst [vmem:[%s44 + $0x278] sm:$0xff] %v203
        %v205 = vld [vmem:[%s43 + $0x280] sm:$0xff]
        %206 = vst [vmem:[%s44 + $0x280] sm:$0xff] %v205
        %v207 = vld [vmem:[%s43 + $0x288] sm:$0xff]
        %208 = vst [vmem:[%s44 + $0x288] sm:$0xff] %v207
        %v209 = vld [vmem:[%s43 + $0x290] sm:$0xff]
        %210 = vst [vmem:[%s44 + $0x290] sm:$0xff] %v209
        %v211 = vld [vmem:[%s43 + $0x298] sm:$0xff]
        %212 = vst [vmem:[%s44 + $0x298] sm:$0xff] %v211
        %v213 = vld [vmem:[%s43 + $0x2a0] sm:$0xff]
        %214 = vst [vmem:[%s44 + $0x2a0] sm:$0xff] %v213
        %v215 = vld [vmem:[%s43 + $0x2a8] sm:$0xff]
        %216 = vst [vmem:[%s44 + $0x2a8] sm:$0xff] %v215
        %v217 = vld [vmem:[%s43 + $0x2b0] sm:$0xff]
        %218 = vst [vmem:[%s44 + $0x2b0] sm:$0xff] %v217
        %v219 = vld [vmem:[%s43 + $0x2b8] sm:$0xff]
        %220 = vst [vmem:[%s44 + $0x2b8] sm:$0xff] %v219
        %v221 = vld [vmem:[%s43 + $0x2c0] sm:$0xff]
        %222 = vst [vmem:[%s44 + $0x2c0] sm:$0xff] %v221
        %v223 = vld [vmem:[%s43 + $0x2c8] sm:$0xff]
        %224 = vst [vmem:[%s44 + $0x2c8] sm:$0xff] %v223
        %v225 = vld [vmem:[%s43 + $0x2d0] sm:$0xff]
        %226 = vst [vmem:[%s44 + $0x2d0] sm:$0xff] %v225
        %v227 = vld [vmem:[%s43 + $0x2d8] sm:$0xff]
        %228 = vst [vmem:[%s44 + $0x2d8] sm:$0xff] %v227
        %v229 = vld [vmem:[%s43 + $0x2e0] sm:$0xff]
        %230 = vst [vmem:[%s44 + $0x2e0] sm:$0xff] %v229
        %v231 = vld [vmem:[%s43 + $0x2e8] sm:$0xff]
        %232 = vst [vmem:[%s44 + $0x2e8] sm:$0xff] %v231
        %v233 = vld [vmem:[%s43 + $0x2f0] sm:$0xff]
        %234 = vst [vmem:[%s44 + $0x2f0] sm:$0xff] %v233
        %v235 = vld [vmem:[%s43 + $0x2f8] sm:$0xff]
        %236 = vst [vmem:[%s44 + $0x2f8] sm:$0xff] %v235
        %v237 = vld [vmem:[%s43 + $0x300] sm:$0xff]
        %238 = vst [vmem:[%s44 + $0x300] sm:$0xff] %v237
        %v239 = vld [vmem:[%s43 + $0x308] sm:$0xff]
        %240 = vst [vmem:[%s44 + $0x308] sm:$0xff] %v239
        %v241 = vld [vmem:[%s43 + $0x310] sm:$0xff]
        %242 = vst [vmem:[%s44 + $0x310] sm:$0xff] %v241
        %v243 = vld [vmem:[%s43 + $0x318] sm:$0xff]
        %244 = vst [vmem:[%s44 + $0x318] sm:$0xff] %v243
        %v245 = vld [vmem:[%s43 + $0x320] sm:$0xff]
        %246 = vst [vmem:[%s44 + $0x320] sm:$0xff] %v245
        %v247 = vld [vmem:[%s43 + $0x328] sm:$0xff]
        %248 = vst [vmem:[%s44 + $0x328] sm:$0xff] %v247
        %v249 = vld [vmem:[%s43 + $0x330] sm:$0xff]
        %250 = vst [vmem:[%s44 + $0x330] sm:$0xff] %v249
        %v251 = vld [vmem:[%s43 + $0x338] sm:$0xff]
        %252 = vst [vmem:[%s44 + $0x338] sm:$0xff] %v251
        %v253 = vld [vmem:[%s43 + $0x340] sm:$0xff]
        %254 = vst [vmem:[%s44 + $0x340] sm:$0xff] %v253
        %v255 = vld [vmem:[%s43 + $0x348] sm:$0xff]
        %256 = vst [vmem:[%s44 + $0x348] sm:$0xff] %v255
        %v257 = vld [vmem:[%s43 + $0x350] sm:$0xff]
        %258 = vst [vmem:[%s44 + $0x350] sm:$0xff] %v257
        %v259 = vld [vmem:[%s43 + $0x358] sm:$0xff]
        %260 = vst [vmem:[%s44 + $0x358] sm:$0xff] %v259
        %v261 = vld [vmem:[%s43 + $0x360] sm:$0xff]
        %262 = vst [vmem:[%s44 + $0x360] sm:$0xff] %v261
        %v263 = vld [vmem:[%s43 + $0x368] sm:$0xff]
        %264 = vst [vmem:[%s44 + $0x368] sm:$0xff] %v263
        %v265 = vld [vmem:[%s43 + $0x370] sm:$0xff]
        %266 = vst [vmem:[%s44 + $0x370] sm:$0xff] %v265
        %v267 = vld [vmem:[%s43 + $0x378] sm:$0xff]
        %268 = vst [vmem:[%s44 + $0x378] sm:$0xff] %v267
        %v269 = vld [vmem:[%s43 + $0x380] sm:$0xff]
        %270 = vst [vmem:[%s44 + $0x380] sm:$0xff] %v269
        %v271 = vld [vmem:[%s43 + $0x388] sm:$0xff]
        %272 = vst [vmem:[%s44 + $0x388] sm:$0xff] %v271
        %v273 = vld [vmem:[%s43 + $0x390] sm:$0xff]
        %274 = vst [vmem:[%s44 + $0x390] sm:$0xff] %v273
        %v275 = vld [vmem:[%s43 + $0x398] sm:$0xff]
        %276 = vst [vmem:[%s44 + $0x398] sm:$0xff] %v275
        %v277 = vld [vmem:[%s43 + $0x3a0] sm:$0xff]
        %278 = vst [vmem:[%s44 + $0x3a0] sm:$0xff] %v277
        %v279 = vld [vmem:[%s43 + $0x3a8] sm:$0xff]
        %280 = vst [vmem:[%s44 + $0x3a8] sm:$0xff] %v279
        %v281 = vld [vmem:[%s43 + $0x3b0] sm:$0xff]
        %282 = vst [vmem:[%s44 + $0x3b0] sm:$0xff] %v281
        %v283 = vld [vmem:[%s43 + $0x3b8] sm:$0xff]
        %284 = vst [vmem:[%s44 + $0x3b8] sm:$0xff] %v283
        %v285 = vld [vmem:[%s43 + $0x3c0] sm:$0xff]
        %286 = vst [vmem:[%s44 + $0x3c0] sm:$0xff] %v285
        %v287 = vld [vmem:[%s43 + $0x3c8] sm:$0xff]
        %288 = vst [vmem:[%s44 + $0x3c8] sm:$0xff] %v287
        %v289 = vld [vmem:[%s43 + $0x3d0] sm:$0xff]
        %290 = vst [vmem:[%s44 + $0x3d0] sm:$0xff] %v289
        %v291 = vld [vmem:[%s43 + $0x3d8] sm:$0xff]
        %292 = vst [vmem:[%s44 + $0x3d8] sm:$0xff] %v291
        %v293 = vld [vmem:[%s43 + $0x3e0] sm:$0xff]
        %294 = vst [vmem:[%s44 + $0x3e0] sm:$0xff] %v293
        %v295 = vld [vmem:[%s43 + $0x3e8] sm:$0xff]
        %296 = vst [vmem:[%s44 + $0x3e8] sm:$0xff] %v295
        %v297 = vld [vmem:[%s43 + $0x3f0] sm:$0xff]
        %298 = vst [vmem:[%s44 + $0x3f0] sm:$0xff] %v297
        %v299 = vld [vmem:[%s43 + $0x3f8] sm:$0xff]
        %300 = vst [vmem:[%s44 + $0x3f8] sm:$0xff] %v299
        %v301 = vld [vmem:[%s43 + $0x400] sm:$0xff]
        %302 = vst [vmem:[%s44 + $0x400] sm:$0xff] %v301
        %v303 = vld [vmem:[%s43 + $0x408] sm:$0xff]
        %304 = vst [vmem:[%s44 + $0x408] sm:$0xff] %v303
        %v305 = vld [vmem:[%s43 + $0x410] sm:$0xff]
        %306 = vst [vmem:[%s44 + $0x410] sm:$0xff] %v305
        %v307 = vld [vmem:[%s43 + $0x418] sm:$0xff]
        %308 = vst [vmem:[%s44 + $0x418] sm:$0xff] %v307
        %v309 = vld [vmem:[%s43 + $0x420] sm:$0xff]
        %310 = vst [vmem:[%s44 + $0x420] sm:$0xff] %v309
        %v311 = vld [vmem:[%s43 + $0x428] sm:$0xff]
        %312 = vst [vmem:[%s44 + $0x428] sm:$0xff] %v311
        %v313 = vld [vmem:[%s43 + $0x430] sm:$0xff]
        %314 = vst [vmem:[%s44 + $0x430] sm:$0xff] %v313
        %v315 = vld [vmem:[%s43 + $0x438] sm:$0xff]
        %316 = vst [vmem:[%s44 + $0x438] sm:$0xff] %v315
        %v317 = vld [vmem:[%s43 + $0x440] sm:$0xff]
        %318 = vst [vmem:[%s44 + $0x440] sm:$0xff] %v317
        %v319 = vld [vmem:[%s43 + $0x448] sm:$0xff]
        %320 = vst [vmem:[%s44 + $0x448] sm:$0xff] %v319
        %v321 = vld [vmem:[%s43 + $0x450] sm:$0xff]
        %322 = vst [vmem:[%s44 + $0x450] sm:$0xff] %v321
        %v323 = vld [vmem:[%s43 + $0x458] sm:$0xff]
        %324 = vst [vmem:[%s44 + $0x458] sm:$0xff] %v323
        %v325 = vld [vmem:[%s43 + $0x460] sm:$0xff]
        %326 = vst [vmem:[%s44 + $0x460] sm:$0xff] %v325
        %v327 = vld [vmem:[%s43 + $0x468] sm:$0xff]
        %328 = vst [vmem:[%s44 + $0x468] sm:$0xff] %v327
        %v329 = vld [vmem:[%s43 + $0x470] sm:$0xff]
        %330 = vst [vmem:[%s44 + $0x470] sm:$0xff] %v329
        %v331 = vld [vmem:[%s43 + $0x478] sm:$0xff]
        %332 = vst [vmem:[%s44 + $0x478] sm:$0xff] %v331
        %v333 = vld [vmem:[%s43 + $0x480] sm:$0xff]
        %334 = vst [vmem:[%s44 + $0x480] sm:$0xff] %v333
        %v335 = vld [vmem:[%s43 + $0x488] sm:$0xff]
        %336 = vst [vmem:[%s44 + $0x488] sm:$0xff] %v335
        %v337 = vld [vmem:[%s43 + $0x490] sm:$0xff]
        %338 = vst [vmem:[%s44 + $0x490] sm:$0xff] %v337
        %v339 = vld [vmem:[%s43 + $0x498] sm:$0xff]
        %340 = vst [vmem:[%s44 + $0x498] sm:$0xff] %v339
        %v341 = vld [vmem:[%s43 + $0x4a0] sm:$0xff]
        %342 = vst [vmem:[%s44 + $0x4a0] sm:$0xff] %v341
        %v343 = vld [vmem:[%s43 + $0x4a8] sm:$0xff]
        %344 = vst [vmem:[%s44 + $0x4a8] sm:$0xff] %v343
        %v345 = vld [vmem:[%s43 + $0x4b0] sm:$0xff]
        %346 = vst [vmem:[%s44 + $0x4b0] sm:$0xff] %v345
        %v347 = vld [vmem:[%s43 + $0x4b8] sm:$0xff]
        %348 = vst [vmem:[%s44 + $0x4b8] sm:$0xff] %v347
        %v349 = vld [vmem:[%s43 + $0x4c0] sm:$0xff]
        %350 = vst [vmem:[%s44 + $0x4c0] sm:$0xff] %v349
        %v351 = vld [vmem:[%s43 + $0x4c8] sm:$0xff]
        %352 = vst [vmem:[%s44 + $0x4c8] sm:$0xff] %v351
        %v353 = vld [vmem:[%s43 + $0x4d0] sm:$0xff]
        %354 = vst [vmem:[%s44 + $0x4d0] sm:$0xff] %v353
        %v355 = vld [vmem:[%s43 + $0x4d8] sm:$0xff]
        %356 = vst [vmem:[%s44 + $0x4d8] sm:$0xff] %v355
        %v357 = vld [vmem:[%s43 + $0x4e0] sm:$0xff]
        %358 = vst [vmem:[%s44 + $0x4e0] sm:$0xff] %v357
        %v359 = vld [vmem:[%s43 + $0x4e8] sm:$0xff]
        %360 = vst [vmem:[%s44 + $0x4e8] sm:$0xff] %v359
        %v361 = vld [vmem:[%s43 + $0x4f0] sm:$0xff]
        %362 = vst [vmem:[%s44 + $0x4f0] sm:$0xff] %v361
        %v363 = vld [vmem:[%s43 + $0x4f8] sm:$0xff]
        %364 = vst [vmem:[%s44 + $0x4f8] sm:$0xff] %v363
        %v365 = vld [vmem:[%s43 + $0x500] sm:$0xff]
        %366 = vst [vmem:[%s44 + $0x500] sm:$0xff] %v365
        %v367 = vld [vmem:[%s43 + $0x508] sm:$0xff]
        %368 = vst [vmem:[%s44 + $0x508] sm:$0xff] %v367
        %v369 = vld [vmem:[%s43 + $0x510] sm:$0xff]
        %370 = vst [vmem:[%s44 + $0x510] sm:$0xff] %v369
        %v371 = vld [vmem:[%s43 + $0x518] sm:$0xff]
        %372 = vst [vmem:[%s44 + $0x518] sm:$0xff] %v371
        %v373 = vld [vmem:[%s43 + $0x520] sm:$0xff]
        %374 = vst [vmem:[%s44 + $0x520] sm:$0xff] %v373
        %v375 = vld [vmem:[%s43 + $0x528] sm:$0xff]
        %376 = vst [vmem:[%s44 + $0x528] sm:$0xff] %v375
        %v377 = vld [vmem:[%s43 + $0x530] sm:$0xff]
        %378 = vst [vmem:[%s44 + $0x530] sm:$0xff] %v377
        %v379 = vld [vmem:[%s43 + $0x538] sm:$0xff]
        %380 = vst [vmem:[%s44 + $0x538] sm:$0xff] %v379
        %v381 = vld [vmem:[%s43 + $0x540] sm:$0xff]
        %382 = vst [vmem:[%s44 + $0x540] sm:$0xff] %v381
        %v383 = vld [vmem:[%s43 + $0x548] sm:$0xff]
        %384 = vst [vmem:[%s44 + $0x548] sm:$0xff] %v383
        %v385 = vld [vmem:[%s43 + $0x550] sm:$0xff]
        %386 = vst [vmem:[%s44 + $0x550] sm:$0xff] %v385
        %v387 = vld [vmem:[%s43 + $0x558] sm:$0xff]
        %388 = vst [vmem:[%s44 + $0x558] sm:$0xff] %v387
        %v389 = vld [vmem:[%s43 + $0x560] sm:$0xff]
        %390 = vst [vmem:[%s44 + $0x560] sm:$0xff] %v389
        %v391 = vld [vmem:[%s43 + $0x568] sm:$0xff]
        %392 = vst [vmem:[%s44 + $0x568] sm:$0xff] %v391
        %v393 = vld [vmem:[%s43 + $0x570] sm:$0xff]
        %394 = vst [vmem:[%s44 + $0x570] sm:$0xff] %v393
        %v395 = vld [vmem:[%s43 + $0x578] sm:$0xff]
        %396 = vst [vmem:[%s44 + $0x578] sm:$0xff] %v395
        %v397 = vld [vmem:[%s43 + $0x580] sm:$0xff]
        %398 = vst [vmem:[%s44 + $0x580] sm:$0xff] %v397
        %v399 = vld [vmem:[%s43 + $0x588] sm:$0xff]
        %400 = vst [vmem:[%s44 + $0x588] sm:$0xff] %v399
        %v401 = vld [vmem:[%s43 + $0x590] sm:$0xff]
        %402 = vst [vmem:[%s44 + $0x590] sm:$0xff] %v401
        %v403 = vld [vmem:[%s43 + $0x598] sm:$0xff]
        %404 = vst [vmem:[%s44 + $0x598] sm:$0xff] %v403
        %v405 = vld [vmem:[%s43 + $0x5a0] sm:$0xff]
        %406 = vst [vmem:[%s44 + $0x5a0] sm:$0xff] %v405
        %v407 = vld [vmem:[%s43 + $0x5a8] sm:$0xff]
        %408 = vst [vmem:[%s44 + $0x5a8] sm:$0xff] %v407
        %v409 = vld [vmem:[%s43 + $0x5b0] sm:$0xff]
        %410 = vst [vmem:[%s44 + $0x5b0] sm:$0xff] %v409
        %v411 = vld [vmem:[%s43 + $0x5b8] sm:$0xff]
        %412 = vst [vmem:[%s44 + $0x5b8] sm:$0xff] %v411
        %v413 = vld [vmem:[%s43 + $0x5c0] sm:$0xff]
        %414 = vst [vmem:[%s44 + $0x5c0] sm:$0xff] %v413
        %v415 = vld [vmem:[%s43 + $0x5c8] sm:$0xff]
        %416 = vst [vmem:[%s44 + $0x5c8] sm:$0xff] %v415
        %v417 = vld [vmem:[%s43 + $0x5d0] sm:$0xff]
        %418 = vst [vmem:[%s44 + $0x5d0] sm:$0xff] %v417
        %v419 = vld [vmem:[%s43 + $0x5d8] sm:$0xff]
        %420 = vst [vmem:[%s44 + $0x5d8] sm:$0xff] %v419
        %v421 = vld [vmem:[%s43 + $0x5e0] sm:$0xff]
        %422 = vst [vmem:[%s44 + $0x5e0] sm:$0xff] %v421
        %v423 = vld [vmem:[%s43 + $0x5e8] sm:$0xff]
        %424 = vst [vmem:[%s44 + $0x5e8] sm:$0xff] %v423
        %v425 = vld [vmem:[%s43 + $0x5f0] sm:$0xff]
        %426 = vst [vmem:[%s44 + $0x5f0] sm:$0xff] %v425
        %v427 = vld [vmem:[%s43 + $0x5f8] sm:$0xff]
        %428 = vst [vmem:[%s44 + $0x5f8] sm:$0xff] %v427
      $region46: #{vgg_tinyserver_forward.1} parent=40 // loop_footer
        %s42 = sadd.s32 1, %s38
      $region47: #{vgg_tinyserver_forward.1} parent=40 // loop_footer_branch
        %37 = sbr.rel target = $region43
      $region48: #{vgg_tinyserver_forward.1} parent=40 // loop_exit
        _
    $region41: #{vgg_tinyserver_forward.1} parent=1 // pred_fallthru
      _
    // Predicated region
    $region49: #{vgg_tinyserver_forward.1} parent=1 // pred_check
      _
    $region50: #{vgg_tinyserver_forward.1} parent=1 // pred_check_branch
      %430 = sbr.rel target = $region52
    $region51: #{vgg_tinyserver_forward.1} parent=1 // pred_region
      _
    $region52: #{vgg_tinyserver_forward.1} parent=1 // pred_fallthru
      _
    // Predicated region
    $region53: #{vgg_tinyserver_forward.1} parent=1 // pred_check
      _
    $region54: #{vgg_tinyserver_forward.1} parent=1 // pred_check_branch
      %433 = sbr.rel (0) target = $region56
    $region55: #{vgg_tinyserver_forward.1} parent=1 // pred_region
      %434 = vsyncadd [#allocation4], 24576
    $region56: #{vgg_tinyserver_forward.1} parent=1 // pred_fallthru
      _
    %435 = vst [vmem:[#allocation2] sm:$0xff] 0
    %436 = vst [vmem:[#allocation2 + $0x8] sm:$0xff] 0
    %437 = vst [vmem:[#allocation2 + $0x10] sm:$0xff] 0
    %438 = vst [vmem:[#allocation2 + $0x18] sm:$0xff] 0
    %439 = vst [vmem:[#allocation2 + $0x20] sm:$0xff] 0
    %440 = vst [vmem:[#allocation2 + $0x28] sm:$0xff] 0
    %441 = vst [vmem:[#allocation2 + $0x30] sm:$0xff] 0
    %442 = vst [vmem:[#allocation2 + $0x38] sm:$0xff] 0
    %443 = vst [vmem:[#allocation2 + $0x40] sm:$0xff] 0
    %444 = vst [vmem:[#allocation2 + $0x48] sm:$0xff] 0
    %445 = vst [vmem:[#allocation2 + $0x50] sm:$0xff] 0
    %446 = vst [vmem:[#allocation2 + $0x58] sm:$0xff] 0
    %447 = vst [vmem:[#allocation2 + $0x60] sm:$0xff] 0
    %448 = vst [vmem:[#allocation2 + $0x68] sm:$0xff] 0
    %449 = vst [vmem:[#allocation2 + $0x70] sm:$0xff] 0
    %450 = vst [vmem:[#allocation2 + $0x78] sm:$0xff] 0
    %451 = vst [vmem:[#allocation2 + $0x80] sm:$0xff] 0
    %452 = vst [vmem:[#allocation2 + $0x88] sm:$0xff] 0
    %453 = vst [vmem:[#allocation2 + $0x90] sm:$0xff] 0
    %454 = vst [vmem:[#allocation2 + $0x98] sm:$0xff] 0
    %455 = vst [vmem:[#allocation2 + $0xa0] sm:$0xff] 0
    %456 = vst [vmem:[#allocation2 + $0xa8] sm:$0xff] 0
    %457 = vst [vmem:[#allocation2 + $0xb0] sm:$0xff] 0
    %458 = vst [vmem:[#allocation2 + $0xb8] sm:$0xff] 0
    %459 = vst [vmem:[#allocation2 + $0xc0] sm:$0xff] 0
    %v460 = vld [vmem:[%s0] sm:$0xff]
    %v461 = vld [vmem:[%s0 + $0x8] sm:$0xff]
    %v462 = vld [vmem:[%s0 + $0x10] sm:$0xff]
    %v463 = vld [vmem:[%s0 + $0x18] sm:$0xff]
    %v464 = vld [vmem:[%s0 + $0x20] sm:$0xff]
    %v465 = vld [vmem:[%s0 + $0x28] sm:$0xff]
    %v466 = vld [vmem:[%s0 + $0x30] sm:$0xff]
    %v467 = vld [vmem:[%s0 + $0x38] sm:$0xff]
    %s468 = scalar_lea.vmem %s0, 64
    %v469 = vld [vmem:[%s468] sm:$0xff]
    %v470 = vld [vmem:[%s468 + $0x8] sm:$0xff]
    %v471 = vld [vmem:[%s468 + $0x10] sm:$0xff]
    %v472 = vld [vmem:[%s468 + $0x18] sm:$0xff]
    %v473 = vld [vmem:[%s468 + $0x20] sm:$0xff]
    %v474 = vld [vmem:[%s468 + $0x28] sm:$0xff]
    %v475 = vld [vmem:[%s468 + $0x30] sm:$0xff]
    %v476 = vld [vmem:[%s468 + $0x38] sm:$0xff]
    %v477 = vunpack.c.l.bf16 %v460
    %v478 = vunpack.c.h.bf16 %v460
    %v479 = vunpack.c.l.bf16 %v461
    %v480 = vunpack.c.h.bf16 %v461
    %v481 = vunpack.c.l.bf16 %v462
    %v482 = vunpack.c.h.bf16 %v462
    %v483 = vunpack.c.l.bf16 %v463
    %v484 = vunpack.c.h.bf16 %v463
    %v485 = vunpack.c.l.bf16 %v464
    %v486 = vunpack.c.h.bf16 %v464
    %v487 = vunpack.c.l.bf16 %v465
    %v488 = vunpack.c.h.bf16 %v465
    %v489 = vunpack.c.l.bf16 %v466
    %v490 = vunpack.c.h.bf16 %v466
    %v491 = vunpack.c.l.bf16 %v467
    %v492 = vunpack.c.h.bf16 %v467
    %v493 = vunpack.c.l.bf16 %v469
    %v494 = vunpack.c.h.bf16 %v469
    %v495 = vunpack.c.l.bf16 %v470
    %v496 = vunpack.c.h.bf16 %v470
    %v497 = vunpack.c.l.bf16 %v471
    %v498 = vunpack.c.h.bf16 %v471
    %v499 = vunpack.c.l.bf16 %v472
    %v500 = vunpack.c.h.bf16 %v472
    %v501 = vunpack.c.l.bf16 %v473
    %v502 = vunpack.c.h.bf16 %v473
    %v503 = vunpack.c.l.bf16 %v474
    %v504 = vunpack.c.h.bf16 %v474
    %v505 = vunpack.c.l.bf16 %v475
    %v506 = vunpack.c.h.bf16 %v475
    %v507 = vunpack.c.l.bf16 %v476
    %v508 = vunpack.c.h.bf16 %v476
    %v509 = vmax.f32 %v477, %v493
    %v510 = vmax.f32 %v478, %v494
    %v511 = vmax.f32 %v479, %v495
    %v512 = vmax.f32 %v480, %v496
    %v513 = vmax.f32 %v481, %v497
    %v514 = vmax.f32 %v482, %v498
    %v515 = vmax.f32 %v483, %v499
    %v516 = vmax.f32 %v484, %v500
    %v517 = vmax.f32 %v485, %v501
    %v518 = vmax.f32 %v486, %v502
    %v519 = vmax.f32 %v487, %v503
    %v520 = vmax.f32 %v488, %v504
    %v521 = vmax.f32 %v489, %v505
    %v522 = vmax.f32 %v490, %v506
    %v523 = vmax.f32 %v491, %v507
    %v524 = vmax.f32 %v492, %v508
    %v525 = vpack.c.bf16 %v510, %v509
    %v526 = vpack.c.bf16 %v512, %v511
    %v527 = vpack.c.bf16 %v514, %v513
    %v528 = vpack.c.bf16 %v516, %v515
    %v529 = vpack.c.bf16 %v518, %v517
    %v530 = vpack.c.bf16 %v520, %v519
    %v531 = vpack.c.bf16 %v522, %v521
    %v532 = vpack.c.bf16 %v524, %v523
    %v533 = vunpack.c.l.bf16 %v525
    %v534 = vunpack.c.h.bf16 %v525
    %v535 = vunpack.c.l.bf16 %v527
    %v536 = vunpack.c.h.bf16 %v527
    %v537 = vunpack.c.l.bf16 %v529
    %v538 = vunpack.c.h.bf16 %v529
    %v539 = vunpack.c.l.bf16 %v531
    %v540 = vunpack.c.h.bf16 %v531
    %v541 = vunpack.c.l.bf16 %v526
    %v542 = vunpack.c.h.bf16 %v526
    %v543 = vunpack.c.l.bf16 %v528
    %v544 = vunpack.c.h.bf16 %v528
    %v545 = vunpack.c.l.bf16 %v530
    %v546 = vunpack.c.h.bf16 %v530
    %v547 = vunpack.c.l.bf16 %v532
    %v548 = vunpack.c.h.bf16 %v532
    %v549 = vmax.f32 %v533, %v541
    %v550 = vmax.f32 %v534, %v542
    %v551 = vmax.f32 %v535, %v543
    %v552 = vmax.f32 %v536, %v544
    %v553 = vmax.f32 %v537, %v545
    %v554 = vmax.f32 %v538, %v546
    %v555 = vmax.f32 %v539, %v547
    %v556 = vmax.f32 %v540, %v548
    %v557 = vpack.c.bf16 %v550, %v549
    %v558 = vpack.c.bf16 %v552, %v551
    %v559 = vpack.c.bf16 %v554, %v553
    %v560 = vpack.c.bf16 %v556, %v555
    %s561 = scalar_lea.vmem [#allocation2], 48
    %562 = vst [vmem:[%s561] sm:$0xff] %v557
    %563 = vst [vmem:[%s561 + $0x8] sm:$0xff] %v558
    %564 = vst [vmem:[%s561 + $0x10] sm:$0xff] %v559
    %565 = vst [vmem:[%s561 + $0x18] sm:$0xff] %v560
    %s566 = scalar_lea.vmem %s0, 128
    %v567 = vld [vmem:[%s566] sm:$0xff]
    %v568 = vld [vmem:[%s566 + $0x8] sm:$0xff]
    %v569 = vld [vmem:[%s566 + $0x10] sm:$0xff]
    %v570 = vld [vmem:[%s566 + $0x18] sm:$0xff]
    %v571 = vld [vmem:[%s566 + $0x20] sm:$0xff]
    %v572 = vld [vmem:[%s566 + $0x28] sm:$0xff]
    %v573 = vld [vmem:[%s566 + $0x30] sm:$0xff]
    %v574 = vld [vmem:[%s566 + $0x38] sm:$0xff]
    %s575 = scalar_lea.vmem %s0, 192
    %v576 = vld [vmem:[%s575] sm:$0xff]
    %v577 = vld [vmem:[%s575 + $0x8] sm:$0xff]
    %v578 = vld [vmem:[%s575 + $0x10] sm:$0xff]
    %v579 = vld [vmem:[%s575 + $0x18] sm:$0xff]
    %v580 = vld [vmem:[%s575 + $0x20] sm:$0xff]
    %v581 = vld [vmem:[%s575 + $0x28] sm:$0xff]
    %v582 = vld [vmem:[%s575 + $0x30] sm:$0xff]
    %v583 = vld [vmem:[%s575 + $0x38] sm:$0xff]
    %v584 = vunpack.c.l.bf16 %v567
    %v585 = vunpack.c.h.bf16 %v567
    %v586 = vunpack.c.l.bf16 %v568
    %v587 = vunpack.c.h.bf16 %v568
    %v588 = vunpack.c.l.bf16 %v569
    %v589 = vunpack.c.h.bf16 %v569
    %v590 = vunpack.c.l.bf16 %v570
    %v591 = vunpack.c.h.bf16 %v570
    %v592 = vunpack.c.l.bf16 %v571
    %v593 = vunpack.c.h.bf16 %v571
    %v594 = vunpack.c.l.bf16 %v572
    %v595 = vunpack.c.h.bf16 %v572
    %v596 = vunpack.c.l.bf16 %v573
    %v597 = vunpack.c.h.bf16 %v573
    %v598 = vunpack.c.l.bf16 %v574
    %v599 = vunpack.c.h.bf16 %v574
    %v600 = vunpack.c.l.bf16 %v576
    %v601 = vunpack.c.h.bf16 %v576
    %v602 = vunpack.c.l.bf16 %v577
    %v603 = vunpack.c.h.bf16 %v577
    %v604 = vunpack.c.l.bf16 %v578
    %v605 = vunpack.c.h.bf16 %v578
    %v606 = vunpack.c.l.bf16 %v579
    %v607 = vunpack.c.h.bf16 %v579
    %v608 = vunpack.c.l.bf16 %v580
    %v609 = vunpack.c.h.bf16 %v580
    %v610 = vunpack.c.l.bf16 %v581
    %v611 = vunpack.c.h.bf16 %v581
    %v612 = vunpack.c.l.bf16 %v582
    %v613 = vunpack.c.h.bf16 %v582
    %v614 = vunpack.c.l.bf16 %v583
    %v615 = vunpack.c.h.bf16 %v583
    %v616 = vmax.f32 %v584, %v600
    %v617 = vmax.f32 %v585, %v601
    %v618 = vmax.f32 %v586, %v602
    %v619 = vmax.f32 %v587, %v603
    %v620 = vmax.f32 %v588, %v604
    %v621 = vmax.f32 %v589, %v605
    %v622 = vmax.f32 %v590, %v606
    %v623 = vmax.f32 %v591, %v607
    %v624 = vmax.f32 %v592, %v608
    %v625 = vmax.f32 %v593, %v609
    %v626 = vmax.f32 %v594, %v610
    %v627 = vmax.f32 %v595, %v611
    %v628 = vmax.f32 %v596, %v612
    %v629 = vmax.f32 %v597, %v613
    %v630 = vmax.f32 %v598, %v614
    %v631 = vmax.f32 %v599, %v615
    %v632 = vpack.c.bf16 %v617, %v616
    %v633 = vpack.c.bf16 %v619, %v618
    %v634 = vpack.c.bf16 %v621, %v620
    %v635 = vpack.c.bf16 %v623, %v622
    %v636 = vpack.c.bf16 %v625, %v624
    %v637 = vpack.c.bf16 %v627, %v626
    %v638 = vpack.c.bf16 %v629, %v628
    %v639 = vpack.c.bf16 %v631, %v630
    %v640 = vunpack.c.l.bf16 %v632
    %v641 = vunpack.c.h.bf16 %v632
    %v642 = vunpack.c.l.bf16 %v634
    %v643 = vunpack.c.h.bf16 %v634
    %v644 = vunpack.c.l.bf16 %v636
    %v645 = vunpack.c.h.bf16 %v636
    %v646 = vunpack.c.l.bf16 %v638
    %v647 = vunpack.c.h.bf16 %v638
    %v648 = vunpack.c.l.bf16 %v633
    %v649 = vunpack.c.h.bf16 %v633
    %v650 = vunpack.c.l.bf16 %v635
    %v651 = vunpack.c.h.bf16 %v635
    %v652 = vunpack.c.l.bf16 %v637
    %v653 = vunpack.c.h.bf16 %v637
    %v654 = vunpack.c.l.bf16 %v639
    %v655 = vunpack.c.h.bf16 %v639
    %v656 = vmax.f32 %v640, %v648
    %v657 = vmax.f32 %v641, %v649
    %v658 = vmax.f32 %v642, %v650
    %v659 = vmax.f32 %v643, %v651
    %v660 = vmax.f32 %v644, %v652
    %v661 = vmax.f32 %v645, %v653
    %v662 = vmax.f32 %v646, %v654
    %v663 = vmax.f32 %v647, %v655
    %v664 = vpack.c.bf16 %v657, %v656
    %v665 = vpack.c.bf16 %v659, %v658
    %v666 = vpack.c.bf16 %v661, %v660
    %v667 = vpack.c.bf16 %v663, %v662
    %s668 = scalar_lea.vmem [#allocation2], 88
    %669 = vst [vmem:[%s668] sm:$0xff] %v664
    %670 = vst [vmem:[%s668 + $0x8] sm:$0xff] %v665
    %671 = vst [vmem:[%s668 + $0x10] sm:$0xff] %v666
    %672 = vst [vmem:[%s668 + $0x18] sm:$0xff] %v667
    %s673 = scalar_lea.vmem %s0, 256
    %v674 = vld [vmem:[%s673] sm:$0xff]
    %v675 = vld [vmem:[%s673 + $0x8] sm:$0xff]
    %v676 = vld [vmem:[%s673 + $0x10] sm:$0xff]
    %v677 = vld [vmem:[%s673 + $0x18] sm:$0xff]
    %v678 = vld [vmem:[%s673 + $0x20] sm:$0xff]
    %v679 = vld [vmem:[%s673 + $0x28] sm:$0xff]
    %v680 = vld [vmem:[%s673 + $0x30] sm:$0xff]
    %v681 = vld [vmem:[%s673 + $0x38] sm:$0xff]
    %s682 = scalar_lea.vmem %s0, 320
    %v683 = vld [vmem:[%s682] sm:$0xff]
    %v684 = vld [vmem:[%s682 + $0x8] sm:$0xff]
    %v685 = vld [vmem:[%s682 + $0x10] sm:$0xff]
    %v686 = vld [vmem:[%s682 + $0x18] sm:$0xff]
    %v687 = vld [vmem:[%s682 + $0x20] sm:$0xff]
    %v688 = vld [vmem:[%s682 + $0x28] sm:$0xff]
    %v689 = vld [vmem:[%s682 + $0x30] sm:$0xff]
    %v690 = vld [vmem:[%s682 + $0x38] sm:$0xff]
    %v691 = vunpack.c.l.bf16 %v674
    %v692 = vunpack.c.h.bf16 %v674
    %v693 = vunpack.c.l.bf16 %v675
    %v694 = vunpack.c.h.bf16 %v675
    %v695 = vunpack.c.l.bf16 %v676
    %v696 = vunpack.c.h.bf16 %v676
    %v697 = vunpack.c.l.bf16 %v677
    %v698 = vunpack.c.h.bf16 %v677
    %v699 = vunpack.c.l.bf16 %v678
    %v700 = vunpack.c.h.bf16 %v678
    %v701 = vunpack.c.l.bf16 %v679
    %v702 = vunpack.c.h.bf16 %v679
    %v703 = vunpack.c.l.bf16 %v680
    %v704 = vunpack.c.h.bf16 %v680
    %v705 = vunpack.c.l.bf16 %v681
    %v706 = vunpack.c.h.bf16 %v681
    %v707 = vunpack.c.l.bf16 %v683
    %v708 = vunpack.c.h.bf16 %v683
    %v709 = vunpack.c.l.bf16 %v684
    %v710 = vunpack.c.h.bf16 %v684
    %v711 = vunpack.c.l.bf16 %v685
    %v712 = vunpack.c.h.bf16 %v685
    %v713 = vunpack.c.l.bf16 %v686
    %v714 = vunpack.c.h.bf16 %v686
    %v715 = vunpack.c.l.bf16 %v687
    %v716 = vunpack.c.h.bf16 %v687
    %v717 = vunpack.c.l.bf16 %v688
    %v718 = vunpack.c.h.bf16 %v688
    %v719 = vunpack.c.l.bf16 %v689
    %v720 = vunpack.c.h.bf16 %v689
    %v721 = vunpack.c.l.bf16 %v690
    %v722 = vunpack.c.h.bf16 %v690
    %v723 = vmax.f32 %v691, %v707
    %v724 = vmax.f32 %v692, %v708
    %v725 = vmax.f32 %v693, %v709
    %v726 = vmax.f32 %v694, %v710
    %v727 = vmax.f32 %v695, %v711
    %v728 = vmax.f32 %v696, %v712
    %v729 = vmax.f32 %v697, %v713
    %v730 = vmax.f32 %v698, %v714
    %v731 = vmax.f32 %v699, %v715
    %v732 = vmax.f32 %v700, %v716
    %v733 = vmax.f32 %v701, %v717
    %v734 = vmax.f32 %v702, %v718
    %v735 = vmax.f32 %v703, %v719
    %v736 = vmax.f32 %v704, %v720
    %v737 = vmax.f32 %v705, %v721
    %v738 = vmax.f32 %v706, %v722
    %v739 = vpack.c.bf16 %v724, %v723
    %v740 = vpack.c.bf16 %v726, %v725
    %v741 = vpack.c.bf16 %v728, %v727
    %v742 = vpack.c.bf16 %v730, %v729
    %v743 = vpack.c.bf16 %v732, %v731
    %v744 = vpack.c.bf16 %v734, %v733
    %v745 = vpack.c.bf16 %v736, %v735
    %v746 = vpack.c.bf16 %v738, %v737
    %v747 = vunpack.c.l.bf16 %v739
    %v748 = vunpack.c.h.bf16 %v739
    %v749 = vunpack.c.l.bf16 %v741
    %v750 = vunpack.c.h.bf16 %v741
    %v751 = vunpack.c.l.bf16 %v743
    %v752 = vunpack.c.h.bf16 %v743
    %v753 = vunpack.c.l.bf16 %v745
    %v754 = vunpack.c.h.bf16 %v745
    %v755 = vunpack.c.l.bf16 %v740
    %v756 = vunpack.c.h.bf16 %v740
    %v757 = vunpack.c.l.bf16 %v742
    %v758 = vunpack.c.h.bf16 %v742
    %v759 = vunpack.c.l.bf16 %v744
    %v760 = vunpack.c.h.bf16 %v744
    %v761 = vunpack.c.l.bf16 %v746
    %v762 = vunpack.c.h.bf16 %v746
    %v763 = vmax.f32 %v747, %v755
    %v764 = vmax.f32 %v748, %v756
    %v765 = vmax.f32 %v749, %v757
    %v766 = vmax.f32 %v750, %v758
    %v767 = vmax.f32 %v751, %v759
    %v768 = vmax.f32 %v752, %v760
    %v769 = vmax.f32 %v753, %v761
    %v770 = vmax.f32 %v754, %v762
    %v771 = vpack.c.bf16 %v764, %v763
    %v772 = vpack.c.bf16 %v766, %v765
    %v773 = vpack.c.bf16 %v768, %v767
    %v774 = vpack.c.bf16 %v770, %v769
    %s775 = scalar_lea.vmem [#allocation2], 128
    %776 = vst [vmem:[%s775] sm:$0xff] %v771
    %777 = vst [vmem:[%s775 + $0x8] sm:$0xff] %v772
    %778 = vst [vmem:[%s775 + $0x10] sm:$0xff] %v773
    %779 = vst [vmem:[%s775 + $0x18] sm:$0xff] %v774
    %s780 = scalar_lea.vmem %s0, 384
    %v781 = vld [vmem:[%s780] sm:$0xff]
    %v782 = vld [vmem:[%s780 + $0x8] sm:$0xff]
    %v783 = vld [vmem:[%s780 + $0x10] sm:$0xff]
    %v784 = vld [vmem:[%s780 + $0x18] sm:$0xff]
    %v785 = vld [vmem:[%s780 + $0x20] sm:$0xff]
    %v786 = vld [vmem:[%s780 + $0x28] sm:$0xff]
    %v787 = vld [vmem:[%s780 + $0x30] sm:$0xff]
    %v788 = vld [vmem:[%s780 + $0x38] sm:$0xff]
    %s789 = scalar_lea.vmem %s0, 448
    %v790 = vld [vmem:[%s789] sm:$0xff]
    %v791 = vld [vmem:[%s789 + $0x8] sm:$0xff]
    %v792 = vld [vmem:[%s789 + $0x10] sm:$0xff]
    %v793 = vld [vmem:[%s789 + $0x18] sm:$0xff]
    %v794 = vld [vmem:[%s789 + $0x20] sm:$0xff]
    %v795 = vld [vmem:[%s789 + $0x28] sm:$0xff]
    %v796 = vld [vmem:[%s789 + $0x30] sm:$0xff]
    %v797 = vld [vmem:[%s789 + $0x38] sm:$0xff]
    %v798 = vunpack.c.l.bf16 %v781
    %v799 = vunpack.c.h.bf16 %v781
    %v800 = vunpack.c.l.bf16 %v782
    %v801 = vunpack.c.h.bf16 %v782
    %v802 = vunpack.c.l.bf16 %v783
    %v803 = vunpack.c.h.bf16 %v783
    %v804 = vunpack.c.l.bf16 %v784
    %v805 = vunpack.c.h.bf16 %v784
    %v806 = vunpack.c.l.bf16 %v785
    %v807 = vunpack.c.h.bf16 %v785
    %v808 = vunpack.c.l.bf16 %v786
    %v809 = vunpack.c.h.bf16 %v786
    %v810 = vunpack.c.l.bf16 %v787
    %v811 = vunpack.c.h.bf16 %v787
    %v812 = vunpack.c.l.bf16 %v788
    %v813 = vunpack.c.h.bf16 %v788
    %v814 = vunpack.c.l.bf16 %v790
    %v815 = vunpack.c.h.bf16 %v790
    %v816 = vunpack.c.l.bf16 %v791
    %v817 = vunpack.c.h.bf16 %v791
    %v818 = vunpack.c.l.bf16 %v792
    %v819 = vunpack.c.h.bf16 %v792
    %v820 = vunpack.c.l.bf16 %v793
    %v821 = vunpack.c.h.bf16 %v793
    %v822 = vunpack.c.l.bf16 %v794
    %v823 = vunpack.c.h.bf16 %v794
    %v824 = vunpack.c.l.bf16 %v795
    %v825 = vunpack.c.h.bf16 %v795
    %v826 = vunpack.c.l.bf16 %v796
    %v827 = vunpack.c.h.bf16 %v796
    %v828 = vunpack.c.l.bf16 %v797
    %v829 = vunpack.c.h.bf16 %v797
    %v830 = vmax.f32 %v798, %v814
    %v831 = vmax.f32 %v799, %v815
    %v832 = vmax.f32 %v800, %v816
    %v833 = vmax.f32 %v801, %v817
    %v834 = vmax.f32 %v802, %v818
    %v835 = vmax.f32 %v803, %v819
    %v836 = vmax.f32 %v804, %v820
    %v837 = vmax.f32 %v805, %v821
    %v838 = vmax.f32 %v806, %v822
    %v839 = vmax.f32 %v807, %v823
    %v840 = vmax.f32 %v808, %v824
    %v841 = vmax.f32 %v809, %v825
    %v842 = vmax.f32 %v810, %v826
    %v843 = vmax.f32 %v811, %v827
    %v844 = vmax.f32 %v812, %v828
    %v845 = vmax.f32 %v813, %v829
    %v846 = vpack.c.bf16 %v831, %v830
    %v847 = vpack.c.bf16 %v833, %v832
    %v848 = vpack.c.bf16 %v835, %v834
    %v849 = vpack.c.bf16 %v837, %v836
    %v850 = vpack.c.bf16 %v839, %v838
    %v851 = vpack.c.bf16 %v841, %v840
    %v852 = vpack.c.bf16 %v843, %v842
    %v853 = vpack.c.bf16 %v845, %v844
    %v854 = vunpack.c.l.bf16 %v846
    %v855 = vunpack.c.h.bf16 %v846
    %v856 = vunpack.c.l.bf16 %v848
    %v857 = vunpack.c.h.bf16 %v848
    %v858 = vunpack.c.l.bf16 %v850
    %v859 = vunpack.c.h.bf16 %v850
    %v860 = vunpack.c.l.bf16 %v852
    %v861 = vunpack.c.h.bf16 %v852
    %v862 = vunpack.c.l.bf16 %v847
    %v863 = vunpack.c.h.bf16 %v847
    %v864 = vunpack.c.l.bf16 %v849
    %v865 = vunpack.c.h.bf16 %v849
    %v866 = vunpack.c.l.bf16 %v851
    %v867 = vunpack.c.h.bf16 %v851
    %v868 = vunpack.c.l.bf16 %v853
    %v869 = vunpack.c.h.bf16 %v853
    %v870 = vmax.f32 %v854, %v862
    %v871 = vmax.f32 %v855, %v863
    %v872 = vmax.f32 %v856, %v864
    %v873 = vmax.f32 %v857, %v865
    %v874 = vmax.f32 %v858, %v866
    %v875 = vmax.f32 %v859, %v867
    %v876 = vmax.f32 %v860, %v868
    %v877 = vmax.f32 %v861, %v869
    %v878 = vpack.c.bf16 %v871, %v870
    %v879 = vpack.c.bf16 %v873, %v872
    %v880 = vpack.c.bf16 %v875, %v874
    %v881 = vpack.c.bf16 %v877, %v876
    %s882 = scalar_lea.vmem [#allocation2], 168
    %883 = vst [vmem:[%s882] sm:$0xff] %v878
    %884 = vst [vmem:[%s882 + $0x8] sm:$0xff] %v879
    %885 = vst [vmem:[%s882 + $0x10] sm:$0xff] %v880
    %886 = vst [vmem:[%s882 + $0x18] sm:$0xff] %v881
    %s887 = scalar_lea.vmem %s1, 1536
    %s888 = scalar_lea.vmem [#allocation3], 1536
    %s889 = scalar_lea.sflag [#allocation4], 1
    // Predicated region
    $region57: #{vgg_tinyserver_forward.1} parent=1 // pred_check
      _
    $region58: #{vgg_tinyserver_forward.1} parent=1 // pred_check_branch
      %891 = sbr.rel (0) target = $region60
    $region59: #{vgg_tinyserver_forward.1} parent=1 // pred_region
      loop: start=0, step=1, limit=1
      $region61: #{vgg_tinyserver_forward.1} parent=59 // loop_pre_header
        _
      $region62: #{vgg_tinyserver_forward.1} parent=59 // loop_header
        %s893 = sphi 0, %s897
        %p894 = scmp.ge.s32.totalorder %s893, 1
        %s898 = sphi %s887, %s887
        %s899 = sphi %s888, %s888
      $region63: #{vgg_tinyserver_forward.1} parent=59 // loop_header_branch
        %896 = sbr.rel (%p894) target = $region67
      $region64: #{vgg_tinyserver_forward.1} parent=59 // loop_body
        %v900 = vld [vmem:[%s898] sm:$0xff]
        %901 = vst [vmem:[%s899] sm:$0xff] %v900
        %v902 = vld [vmem:[%s898 + $0x8] sm:$0xff]
        %903 = vst [vmem:[%s899 + $0x8] sm:$0xff] %v902
        %v904 = vld [vmem:[%s898 + $0x10] sm:$0xff]
        %905 = vst [vmem:[%s899 + $0x10] sm:$0xff] %v904
        %v906 = vld [vmem:[%s898 + $0x18] sm:$0xff]
        %907 = vst [vmem:[%s899 + $0x18] sm:$0xff] %v906
        %v908 = vld [vmem:[%s898 + $0x20] sm:$0xff]
        %909 = vst [vmem:[%s899 + $0x20] sm:$0xff] %v908
        %v910 = vld [vmem:[%s898 + $0x28] sm:$0xff]
        %911 = vst [vmem:[%s899 + $0x28] sm:$0xff] %v910
        %v912 = vld [vmem:[%s898 + $0x30] sm:$0xff]
        %913 = vst [vmem:[%s899 + $0x30] sm:$0xff] %v912
        %v914 = vld [vmem:[%s898 + $0x38] sm:$0xff]
        %915 = vst [vmem:[%s899 + $0x38] sm:$0xff] %v914
        %v916 = vld [vmem:[%s898 + $0x40] sm:$0xff]
        %917 = vst [vmem:[%s899 + $0x40] sm:$0xff] %v916
        %v918 = vld [vmem:[%s898 + $0x48] sm:$0xff]
        %919 = vst [vmem:[%s899 + $0x48] sm:$0xff] %v918
        %v920 = vld [vmem:[%s898 + $0x50] sm:$0xff]
        %921 = vst [vmem:[%s899 + $0x50] sm:$0xff] %v920
        %v922 = vld [vmem:[%s898 + $0x58] sm:$0xff]
        %923 = vst [vmem:[%s899 + $0x58] sm:$0xff] %v922
        %v924 = vld [vmem:[%s898 + $0x60] sm:$0xff]
        %925 = vst [vmem:[%s899 + $0x60] sm:$0xff] %v924
        %v926 = vld [vmem:[%s898 + $0x68] sm:$0xff]
        %927 = vst [vmem:[%s899 + $0x68] sm:$0xff] %v926
        %v928 = vld [vmem:[%s898 + $0x70] sm:$0xff]
        %929 = vst [vmem:[%s899 + $0x70] sm:$0xff] %v928
        %v930 = vld [vmem:[%s898 + $0x78] sm:$0xff]
        %931 = vst [vmem:[%s899 + $0x78] sm:$0xff] %v930
        %v932 = vld [vmem:[%s898 + $0x80] sm:$0xff]
        %933 = vst [vmem:[%s899 + $0x80] sm:$0xff] %v932
        %v934 = vld [vmem:[%s898 + $0x88] sm:$0xff]
        %935 = vst [vmem:[%s899 + $0x88] sm:$0xff] %v934
        %v936 = vld [vmem:[%s898 + $0x90] sm:$0xff]
        %937 = vst [vmem:[%s899 + $0x90] sm:$0xff] %v936
        %v938 = vld [vmem:[%s898 + $0x98] sm:$0xff]
        %939 = vst [vmem:[%s899 + $0x98] sm:$0xff] %v938
        %v940 = vld [vmem:[%s898 + $0xa0] sm:$0xff]
        %941 = vst [vmem:[%s899 + $0xa0] sm:$0xff] %v940
        %v942 = vld [vmem:[%s898 + $0xa8] sm:$0xff]
        %943 = vst [vmem:[%s899 + $0xa8] sm:$0xff] %v942
        %v944 = vld [vmem:[%s898 + $0xb0] sm:$0xff]
        %945 = vst [vmem:[%s899 + $0xb0] sm:$0xff] %v944
        %v946 = vld [vmem:[%s898 + $0xb8] sm:$0xff]
        %947 = vst [vmem:[%s899 + $0xb8] sm:$0xff] %v946
        %v948 = vld [vmem:[%s898 + $0xc0] sm:$0xff]
        %949 = vst [vmem:[%s899 + $0xc0] sm:$0xff] %v948
        %v950 = vld [vmem:[%s898 + $0xc8] sm:$0xff]
        %951 = vst [vmem:[%s899 + $0xc8] sm:$0xff] %v950
        %v952 = vld [vmem:[%s898 + $0xd0] sm:$0xff]
        %953 = vst [vmem:[%s899 + $0xd0] sm:$0xff] %v952
        %v954 = vld [vmem:[%s898 + $0xd8] sm:$0xff]
        %955 = vst [vmem:[%s899 + $0xd8] sm:$0xff] %v954
        %v956 = vld [vmem:[%s898 + $0xe0] sm:$0xff]
        %957 = vst [vmem:[%s899 + $0xe0] sm:$0xff] %v956
        %v958 = vld [vmem:[%s898 + $0xe8] sm:$0xff]
        %959 = vst [vmem:[%s899 + $0xe8] sm:$0xff] %v958
        %v960 = vld [vmem:[%s898 + $0xf0] sm:$0xff]
        %961 = vst [vmem:[%s899 + $0xf0] sm:$0xff] %v960
        %v962 = vld [vmem:[%s898 + $0xf8] sm:$0xff]
        %963 = vst [vmem:[%s899 + $0xf8] sm:$0xff] %v962
        %v964 = vld [vmem:[%s898 + $0x100] sm:$0xff]
        %965 = vst [vmem:[%s899 + $0x100] sm:$0xff] %v964
        %v966 = vld [vmem:[%s898 + $0x108] sm:$0xff]
        %967 = vst [vmem:[%s899 + $0x108] sm:$0xff] %v966
        %v968 = vld [vmem:[%s898 + $0x110] sm:$0xff]
        %969 = vst [vmem:[%s899 + $0x110] sm:$0xff] %v968
        %v970 = vld [vmem:[%s898 + $0x118] sm:$0xff]
        %971 = vst [vmem:[%s899 + $0x118] sm:$0xff] %v970
        %v972 = vld [vmem:[%s898 + $0x120] sm:$0xff]
        %973 = vst [vmem:[%s899 + $0x120] sm:$0xff] %v972
        %v974 = vld [vmem:[%s898 + $0x128] sm:$0xff]
        %975 = vst [vmem:[%s899 + $0x128] sm:$0xff] %v974
        %v976 = vld [vmem:[%s898 + $0x130] sm:$0xff]
        %977 = vst [vmem:[%s899 + $0x130] sm:$0xff] %v976
        %v978 = vld [vmem:[%s898 + $0x138] sm:$0xff]
        %979 = vst [vmem:[%s899 + $0x138] sm:$0xff] %v978
        %v980 = vld [vmem:[%s898 + $0x140] sm:$0xff]
        %981 = vst [vmem:[%s899 + $0x140] sm:$0xff] %v980
        %v982 = vld [vmem:[%s898 + $0x148] sm:$0xff]
        %983 = vst [vmem:[%s899 + $0x148] sm:$0xff] %v982
        %v984 = vld [vmem:[%s898 + $0x150] sm:$0xff]
        %985 = vst [vmem:[%s899 + $0x150] sm:$0xff] %v984
        %v986 = vld [vmem:[%s898 + $0x158] sm:$0xff]
        %987 = vst [vmem:[%s899 + $0x158] sm:$0xff] %v986
        %v988 = vld [vmem:[%s898 + $0x160] sm:$0xff]
        %989 = vst [vmem:[%s899 + $0x160] sm:$0xff] %v988
        %v990 = vld [vmem:[%s898 + $0x168] sm:$0xff]
        %991 = vst [vmem:[%s899 + $0x168] sm:$0xff] %v990
        %v992 = vld [vmem:[%s898 + $0x170] sm:$0xff]
        %993 = vst [vmem:[%s899 + $0x170] sm:$0xff] %v992
        %v994 = vld [vmem:[%s898 + $0x178] sm:$0xff]
        %995 = vst [vmem:[%s899 + $0x178] sm:$0xff] %v994
        %v996 = vld [vmem:[%s898 + $0x180] sm:$0xff]
        %997 = vst [vmem:[%s899 + $0x180] sm:$0xff] %v996
        %v998 = vld [vmem:[%s898 + $0x188] sm:$0xff]
        %999 = vst [vmem:[%s899 + $0x188] sm:$0xff] %v998
        %v1000 = vld [vmem:[%s898 + $0x190] sm:$0xff]
        %1001 = vst [vmem:[%s899 + $0x190] sm:$0xff] %v1000
        %v1002 = vld [vmem:[%s898 + $0x198] sm:$0xff]
        %1003 = vst [vmem:[%s899 + $0x198] sm:$0xff] %v1002
        %v1004 = vld [vmem:[%s898 + $0x1a0] sm:$0xff]
        %1005 = vst [vmem:[%s899 + $0x1a0] sm:$0xff] %v1004
        %v1006 = vld [vmem:[%s898 + $0x1a8] sm:$0xff]
        %1007 = vst [vmem:[%s899 + $0x1a8] sm:$0xff] %v1006
        %v1008 = vld [vmem:[%s898 + $0x1b0] sm:$0xff]
        %1009 = vst [vmem:[%s899 + $0x1b0] sm:$0xff] %v1008
        %v1010 = vld [vmem:[%s898 + $0x1b8] sm:$0xff]
        %1011 = vst [vmem:[%s899 + $0x1b8] sm:$0xff] %v1010
        %v1012 = vld [vmem:[%s898 + $0x1c0] sm:$0xff]
        %1013 = vst [vmem:[%s899 + $0x1c0] sm:$0xff] %v1012
        %v1014 = vld [vmem:[%s898 + $0x1c8] sm:$0xff]
        %1015 = vst [vmem:[%s899 + $0x1c8] sm:$0xff] %v1014
        %v1016 = vld [vmem:[%s898 + $0x1d0] sm:$0xff]
        %1017 = vst [vmem:[%s899 + $0x1d0] sm:$0xff] %v1016
        %v1018 = vld [vmem:[%s898 + $0x1d8] sm:$0xff]
        %1019 = vst [vmem:[%s899 + $0x1d8] sm:$0xff] %v1018
        %v1020 = vld [vmem:[%s898 + $0x1e0] sm:$0xff]
        %1021 = vst [vmem:[%s899 + $0x1e0] sm:$0xff] %v1020
        %v1022 = vld [vmem:[%s898 + $0x1e8] sm:$0xff]
        %1023 = vst [vmem:[%s899 + $0x1e8] sm:$0xff] %v1022
        %v1024 = vld [vmem:[%s898 + $0x1f0] sm:$0xff]
        %1025 = vst [vmem:[%s899 + $0x1f0] sm:$0xff] %v1024
        %v1026 = vld [vmem:[%s898 + $0x1f8] sm:$0xff]
        %1027 = vst [vmem:[%s899 + $0x1f8] sm:$0xff] %v1026
        %v1028 = vld [vmem:[%s898 + $0x200] sm:$0xff]
        %1029 = vst [vmem:[%s899 + $0x200] sm:$0xff] %v1028
        %v1030 = vld [vmem:[%s898 + $0x208] sm:$0xff]
        %1031 = vst [vmem:[%s899 + $0x208] sm:$0xff] %v1030
        %v1032 = vld [vmem:[%s898 + $0x210] sm:$0xff]
        %1033 = vst [vmem:[%s899 + $0x210] sm:$0xff] %v1032
        %v1034 = vld [vmem:[%s898 + $0x218] sm:$0xff]
        %1035 = vst [vmem:[%s899 + $0x218] sm:$0xff] %v1034
        %v1036 = vld [vmem:[%s898 + $0x220] sm:$0xff]
        %1037 = vst [vmem:[%s899 + $0x220] sm:$0xff] %v1036
        %v1038 = vld [vmem:[%s898 + $0x228] sm:$0xff]
        %1039 = vst [vmem:[%s899 + $0x228] sm:$0xff] %v1038
        %v1040 = vld [vmem:[%s898 + $0x230] sm:$0xff]
        %1041 = vst [vmem:[%s899 + $0x230] sm:$0xff] %v1040
        %v1042 = vld [vmem:[%s898 + $0x238] sm:$0xff]
        %1043 = vst [vmem:[%s899 + $0x238] sm:$0xff] %v1042
        %v1044 = vld [vmem:[%s898 + $0x240] sm:$0xff]
        %1045 = vst [vmem:[%s899 + $0x240] sm:$0xff] %v1044
        %v1046 = vld [vmem:[%s898 + $0x248] sm:$0xff]
        %1047 = vst [vmem:[%s899 + $0x248] sm:$0xff] %v1046
        %v1048 = vld [vmem:[%s898 + $0x250] sm:$0xff]
        %1049 = vst [vmem:[%s899 + $0x250] sm:$0xff] %v1048
        %v1050 = vld [vmem:[%s898 + $0x258] sm:$0xff]
        %1051 = vst [vmem:[%s899 + $0x258] sm:$0xff] %v1050
        %v1052 = vld [vmem:[%s898 + $0x260] sm:$0xff]
        %1053 = vst [vmem:[%s899 + $0x260] sm:$0xff] %v1052
        %v1054 = vld [vmem:[%s898 + $0x268] sm:$0xff]
        %1055 = vst [vmem:[%s899 + $0x268] sm:$0xff] %v1054
        %v1056 = vld [vmem:[%s898 + $0x270] sm:$0xff]
        %1057 = vst [vmem:[%s899 + $0x270] sm:$0xff] %v1056
        %v1058 = vld [vmem:[%s898 + $0x278] sm:$0xff]
        %1059 = vst [vmem:[%s899 + $0x278] sm:$0xff] %v1058
        %v1060 = vld [vmem:[%s898 + $0x280] sm:$0xff]
        %1061 = vst [vmem:[%s899 + $0x280] sm:$0xff] %v1060
        %v1062 = vld [vmem:[%s898 + $0x288] sm:$0xff]
        %1063 = vst [vmem:[%s899 + $0x288] sm:$0xff] %v1062
        %v1064 = vld [vmem:[%s898 + $0x290] sm:$0xff]
        %1065 = vst [vmem:[%s899 + $0x290] sm:$0xff] %v1064
        %v1066 = vld [vmem:[%s898 + $0x298] sm:$0xff]
        %1067 = vst [vmem:[%s899 + $0x298] sm:$0xff] %v1066
        %v1068 = vld [vmem:[%s898 + $0x2a0] sm:$0xff]
        %1069 = vst [vmem:[%s899 + $0x2a0] sm:$0xff] %v1068
        %v1070 = vld [vmem:[%s898 + $0x2a8] sm:$0xff]
        %1071 = vst [vmem:[%s899 + $0x2a8] sm:$0xff] %v1070
        %v1072 = vld [vmem:[%s898 + $0x2b0] sm:$0xff]
        %1073 = vst [vmem:[%s899 + $0x2b0] sm:$0xff] %v1072
        %v1074 = vld [vmem:[%s898 + $0x2b8] sm:$0xff]
        %1075 = vst [vmem:[%s899 + $0x2b8] sm:$0xff] %v1074
        %v1076 = vld [vmem:[%s898 + $0x2c0] sm:$0xff]
        %1077 = vst [vmem:[%s899 + $0x2c0] sm:$0xff] %v1076
        %v1078 = vld [vmem:[%s898 + $0x2c8] sm:$0xff]
        %1079 = vst [vmem:[%s899 + $0x2c8] sm:$0xff] %v1078
        %v1080 = vld [vmem:[%s898 + $0x2d0] sm:$0xff]
        %1081 = vst [vmem:[%s899 + $0x2d0] sm:$0xff] %v1080
        %v1082 = vld [vmem:[%s898 + $0x2d8] sm:$0xff]
        %1083 = vst [vmem:[%s899 + $0x2d8] sm:$0xff] %v1082
        %v1084 = vld [vmem:[%s898 + $0x2e0] sm:$0xff]
        %1085 = vst [vmem:[%s899 + $0x2e0] sm:$0xff] %v1084
        %v1086 = vld [vmem:[%s898 + $0x2e8] sm:$0xff]
        %1087 = vst [vmem:[%s899 + $0x2e8] sm:$0xff] %v1086
        %v1088 = vld [vmem:[%s898 + $0x2f0] sm:$0xff]
        %1089 = vst [vmem:[%s899 + $0x2f0] sm:$0xff] %v1088
        %v1090 = vld [vmem:[%s898 + $0x2f8] sm:$0xff]
        %1091 = vst [vmem:[%s899 + $0x2f8] sm:$0xff] %v1090
        %v1092 = vld [vmem:[%s898 + $0x300] sm:$0xff]
        %1093 = vst [vmem:[%s899 + $0x300] sm:$0xff] %v1092
        %v1094 = vld [vmem:[%s898 + $0x308] sm:$0xff]
        %1095 = vst [vmem:[%s899 + $0x308] sm:$0xff] %v1094
        %v1096 = vld [vmem:[%s898 + $0x310] sm:$0xff]
        %1097 = vst [vmem:[%s899 + $0x310] sm:$0xff] %v1096
        %v1098 = vld [vmem:[%s898 + $0x318] sm:$0xff]
        %1099 = vst [vmem:[%s899 + $0x318] sm:$0xff] %v1098
        %v1100 = vld [vmem:[%s898 + $0x320] sm:$0xff]
        %1101 = vst [vmem:[%s899 + $0x320] sm:$0xff] %v1100
        %v1102 = vld [vmem:[%s898 + $0x328] sm:$0xff]
        %1103 = vst [vmem:[%s899 + $0x328] sm:$0xff] %v1102
        %v1104 = vld [vmem:[%s898 + $0x330] sm:$0xff]
        %1105 = vst [vmem:[%s899 + $0x330] sm:$0xff] %v1104
        %v1106 = vld [vmem:[%s898 + $0x338] sm:$0xff]
        %1107 = vst [vmem:[%s899 + $0x338] sm:$0xff] %v1106
        %v1108 = vld [vmem:[%s898 + $0x340] sm:$0xff]
        %1109 = vst [vmem:[%s899 + $0x340] sm:$0xff] %v1108
        %v1110 = vld [vmem:[%s898 + $0x348] sm:$0xff]
        %1111 = vst [vmem:[%s899 + $0x348] sm:$0xff] %v1110
        %v1112 = vld [vmem:[%s898 + $0x350] sm:$0xff]
        %1113 = vst [vmem:[%s899 + $0x350] sm:$0xff] %v1112
        %v1114 = vld [vmem:[%s898 + $0x358] sm:$0xff]
        %1115 = vst [vmem:[%s899 + $0x358] sm:$0xff] %v1114
        %v1116 = vld [vmem:[%s898 + $0x360] sm:$0xff]
        %1117 = vst [vmem:[%s899 + $0x360] sm:$0xff] %v1116
        %v1118 = vld [vmem:[%s898 + $0x368] sm:$0xff]
        %1119 = vst [vmem:[%s899 + $0x368] sm:$0xff] %v1118
        %v1120 = vld [vmem:[%s898 + $0x370] sm:$0xff]
        %1121 = vst [vmem:[%s899 + $0x370] sm:$0xff] %v1120
        %v1122 = vld [vmem:[%s898 + $0x378] sm:$0xff]
        %1123 = vst [vmem:[%s899 + $0x378] sm:$0xff] %v1122
        %v1124 = vld [vmem:[%s898 + $0x380] sm:$0xff]
        %1125 = vst [vmem:[%s899 + $0x380] sm:$0xff] %v1124
        %v1126 = vld [vmem:[%s898 + $0x388] sm:$0xff]
        %1127 = vst [vmem:[%s899 + $0x388] sm:$0xff] %v1126
        %v1128 = vld [vmem:[%s898 + $0x390] sm:$0xff]
        %1129 = vst [vmem:[%s899 + $0x390] sm:$0xff] %v1128
        %v1130 = vld [vmem:[%s898 + $0x398] sm:$0xff]
        %1131 = vst [vmem:[%s899 + $0x398] sm:$0xff] %v1130
        %v1132 = vld [vmem:[%s898 + $0x3a0] sm:$0xff]
        %1133 = vst [vmem:[%s899 + $0x3a0] sm:$0xff] %v1132
        %v1134 = vld [vmem:[%s898 + $0x3a8] sm:$0xff]
        %1135 = vst [vmem:[%s899 + $0x3a8] sm:$0xff] %v1134
        %v1136 = vld [vmem:[%s898 + $0x3b0] sm:$0xff]
        %1137 = vst [vmem:[%s899 + $0x3b0] sm:$0xff] %v1136
        %v1138 = vld [vmem:[%s898 + $0x3b8] sm:$0xff]
        %1139 = vst [vmem:[%s899 + $0x3b8] sm:$0xff] %v1138
        %v1140 = vld [vmem:[%s898 + $0x3c0] sm:$0xff]
        %1141 = vst [vmem:[%s899 + $0x3c0] sm:$0xff] %v1140
        %v1142 = vld [vmem:[%s898 + $0x3c8] sm:$0xff]
        %1143 = vst [vmem:[%s899 + $0x3c8] sm:$0xff] %v1142
        %v1144 = vld [vmem:[%s898 + $0x3d0] sm:$0xff]
        %1145 = vst [vmem:[%s899 + $0x3d0] sm:$0xff] %v1144
        %v1146 = vld [vmem:[%s898 + $0x3d8] sm:$0xff]
        %1147 = vst [vmem:[%s899 + $0x3d8] sm:$0xff] %v1146
        %v1148 = vld [vmem:[%s898 + $0x3e0] sm:$0xff]
        %1149 = vst [vmem:[%s899 + $0x3e0] sm:$0xff] %v1148
        %v1150 = vld [vmem:[%s898 + $0x3e8] sm:$0xff]
        %1151 = vst [vmem:[%s899 + $0x3e8] sm:$0xff] %v1150
        %v1152 = vld [vmem:[%s898 + $0x3f0] sm:$0xff]
        %1153 = vst [vmem:[%s899 + $0x3f0] sm:$0xff] %v1152
        %v1154 = vld [vmem:[%s898 + $0x3f8] sm:$0xff]
        %1155 = vst [vmem:[%s899 + $0x3f8] sm:$0xff] %v1154
        %v1156 = vld [vmem:[%s898 + $0x400] sm:$0xff]
        %1157 = vst [vmem:[%s899 + $0x400] sm:$0xff] %v1156
        %v1158 = vld [vmem:[%s898 + $0x408] sm:$0xff]
        %1159 = vst [vmem:[%s899 + $0x408] sm:$0xff] %v1158
        %v1160 = vld [vmem:[%s898 + $0x410] sm:$0xff]
        %1161 = vst [vmem:[%s899 + $0x410] sm:$0xff] %v1160
        %v1162 = vld [vmem:[%s898 + $0x418] sm:$0xff]
        %1163 = vst [vmem:[%s899 + $0x418] sm:$0xff] %v1162
        %v1164 = vld [vmem:[%s898 + $0x420] sm:$0xff]
        %1165 = vst [vmem:[%s899 + $0x420] sm:$0xff] %v1164
        %v1166 = vld [vmem:[%s898 + $0x428] sm:$0xff]
        %1167 = vst [vmem:[%s899 + $0x428] sm:$0xff] %v1166
        %v1168 = vld [vmem:[%s898 + $0x430] sm:$0xff]
        %1169 = vst [vmem:[%s899 + $0x430] sm:$0xff] %v1168
        %v1170 = vld [vmem:[%s898 + $0x438] sm:$0xff]
        %1171 = vst [vmem:[%s899 + $0x438] sm:$0xff] %v1170
        %v1172 = vld [vmem:[%s898 + $0x440] sm:$0xff]
        %1173 = vst [vmem:[%s899 + $0x440] sm:$0xff] %v1172
        %v1174 = vld [vmem:[%s898 + $0x448] sm:$0xff]
        %1175 = vst [vmem:[%s899 + $0x448] sm:$0xff] %v1174
        %v1176 = vld [vmem:[%s898 + $0x450] sm:$0xff]
        %1177 = vst [vmem:[%s899 + $0x450] sm:$0xff] %v1176
        %v1178 = vld [vmem:[%s898 + $0x458] sm:$0xff]
        %1179 = vst [vmem:[%s899 + $0x458] sm:$0xff] %v1178
        %v1180 = vld [vmem:[%s898 + $0x460] sm:$0xff]
        %1181 = vst [vmem:[%s899 + $0x460] sm:$0xff] %v1180
        %v1182 = vld [vmem:[%s898 + $0x468] sm:$0xff]
        %1183 = vst [vmem:[%s899 + $0x468] sm:$0xff] %v1182
        %v1184 = vld [vmem:[%s898 + $0x470] sm:$0xff]
        %1185 = vst [vmem:[%s899 + $0x470] sm:$0xff] %v1184
        %v1186 = vld [vmem:[%s898 + $0x478] sm:$0xff]
        %1187 = vst [vmem:[%s899 + $0x478] sm:$0xff] %v1186
        %v1188 = vld [vmem:[%s898 + $0x480] sm:$0xff]
        %1189 = vst [vmem:[%s899 + $0x480] sm:$0xff] %v1188
        %v1190 = vld [vmem:[%s898 + $0x488] sm:$0xff]
        %1191 = vst [vmem:[%s899 + $0x488] sm:$0xff] %v1190
        %v1192 = vld [vmem:[%s898 + $0x490] sm:$0xff]
        %1193 = vst [vmem:[%s899 + $0x490] sm:$0xff] %v1192
        %v1194 = vld [vmem:[%s898 + $0x498] sm:$0xff]
        %1195 = vst [vmem:[%s899 + $0x498] sm:$0xff] %v1194
        %v1196 = vld [vmem:[%s898 + $0x4a0] sm:$0xff]
        %1197 = vst [vmem:[%s899 + $0x4a0] sm:$0xff] %v1196
        %v1198 = vld [vmem:[%s898 + $0x4a8] sm:$0xff]
        %1199 = vst [vmem:[%s899 + $0x4a8] sm:$0xff] %v1198
        %v1200 = vld [vmem:[%s898 + $0x4b0] sm:$0xff]
        %1201 = vst [vmem:[%s899 + $0x4b0] sm:$0xff] %v1200
        %v1202 = vld [vmem:[%s898 + $0x4b8] sm:$0xff]
        %1203 = vst [vmem:[%s899 + $0x4b8] sm:$0xff] %v1202
        %v1204 = vld [vmem:[%s898 + $0x4c0] sm:$0xff]
        %1205 = vst [vmem:[%s899 + $0x4c0] sm:$0xff] %v1204
        %v1206 = vld [vmem:[%s898 + $0x4c8] sm:$0xff]
        %1207 = vst [vmem:[%s899 + $0x4c8] sm:$0xff] %v1206
        %v1208 = vld [vmem:[%s898 + $0x4d0] sm:$0xff]
        %1209 = vst [vmem:[%s899 + $0x4d0] sm:$0xff] %v1208
        %v1210 = vld [vmem:[%s898 + $0x4d8] sm:$0xff]
        %1211 = vst [vmem:[%s899 + $0x4d8] sm:$0xff] %v1210
        %v1212 = vld [vmem:[%s898 + $0x4e0] sm:$0xff]
        %1213 = vst [vmem:[%s899 + $0x4e0] sm:$0xff] %v1212
        %v1214 = vld [vmem:[%s898 + $0x4e8] sm:$0xff]
        %1215 = vst [vmem:[%s899 + $0x4e8] sm:$0xff] %v1214
        %v1216 = vld [vmem:[%s898 + $0x4f0] sm:$0xff]
        %1217 = vst [vmem:[%s899 + $0x4f0] sm:$0xff] %v1216
        %v1218 = vld [vmem:[%s898 + $0x4f8] sm:$0xff]
        %1219 = vst [vmem:[%s899 + $0x4f8] sm:$0xff] %v1218
        %v1220 = vld [vmem:[%s898 + $0x500] sm:$0xff]
        %1221 = vst [vmem:[%s899 + $0x500] sm:$0xff] %v1220
        %v1222 = vld [vmem:[%s898 + $0x508] sm:$0xff]
        %1223 = vst [vmem:[%s899 + $0x508] sm:$0xff] %v1222
        %v1224 = vld [vmem:[%s898 + $0x510] sm:$0xff]
        %1225 = vst [vmem:[%s899 + $0x510] sm:$0xff] %v1224
        %v1226 = vld [vmem:[%s898 + $0x518] sm:$0xff]
        %1227 = vst [vmem:[%s899 + $0x518] sm:$0xff] %v1226
        %v1228 = vld [vmem:[%s898 + $0x520] sm:$0xff]
        %1229 = vst [vmem:[%s899 + $0x520] sm:$0xff] %v1228
        %v1230 = vld [vmem:[%s898 + $0x528] sm:$0xff]
        %1231 = vst [vmem:[%s899 + $0x528] sm:$0xff] %v1230
        %v1232 = vld [vmem:[%s898 + $0x530] sm:$0xff]
        %1233 = vst [vmem:[%s899 + $0x530] sm:$0xff] %v1232
        %v1234 = vld [vmem:[%s898 + $0x538] sm:$0xff]
        %1235 = vst [vmem:[%s899 + $0x538] sm:$0xff] %v1234
        %v1236 = vld [vmem:[%s898 + $0x540] sm:$0xff]
        %1237 = vst [vmem:[%s899 + $0x540] sm:$0xff] %v1236
        %v1238 = vld [vmem:[%s898 + $0x548] sm:$0xff]
        %1239 = vst [vmem:[%s899 + $0x548] sm:$0xff] %v1238
        %v1240 = vld [vmem:[%s898 + $0x550] sm:$0xff]
        %1241 = vst [vmem:[%s899 + $0x550] sm:$0xff] %v1240
        %v1242 = vld [vmem:[%s898 + $0x558] sm:$0xff]
        %1243 = vst [vmem:[%s899 + $0x558] sm:$0xff] %v1242
        %v1244 = vld [vmem:[%s898 + $0x560] sm:$0xff]
        %1245 = vst [vmem:[%s899 + $0x560] sm:$0xff] %v1244
        %v1246 = vld [vmem:[%s898 + $0x568] sm:$0xff]
        %1247 = vst [vmem:[%s899 + $0x568] sm:$0xff] %v1246
        %v1248 = vld [vmem:[%s898 + $0x570] sm:$0xff]
        %1249 = vst [vmem:[%s899 + $0x570] sm:$0xff] %v1248
        %v1250 = vld [vmem:[%s898 + $0x578] sm:$0xff]
        %1251 = vst [vmem:[%s899 + $0x578] sm:$0xff] %v1250
        %v1252 = vld [vmem:[%s898 + $0x580] sm:$0xff]
        %1253 = vst [vmem:[%s899 + $0x580] sm:$0xff] %v1252
        %v1254 = vld [vmem:[%s898 + $0x588] sm:$0xff]
        %1255 = vst [vmem:[%s899 + $0x588] sm:$0xff] %v1254
        %v1256 = vld [vmem:[%s898 + $0x590] sm:$0xff]
        %1257 = vst [vmem:[%s899 + $0x590] sm:$0xff] %v1256
        %v1258 = vld [vmem:[%s898 + $0x598] sm:$0xff]
        %1259 = vst [vmem:[%s899 + $0x598] sm:$0xff] %v1258
        %v1260 = vld [vmem:[%s898 + $0x5a0] sm:$0xff]
        %1261 = vst [vmem:[%s899 + $0x5a0] sm:$0xff] %v1260
        %v1262 = vld [vmem:[%s898 + $0x5a8] sm:$0xff]
        %1263 = vst [vmem:[%s899 + $0x5a8] sm:$0xff] %v1262
        %v1264 = vld [vmem:[%s898 + $0x5b0] sm:$0xff]
        %1265 = vst [vmem:[%s899 + $0x5b0] sm:$0xff] %v1264
        %v1266 = vld [vmem:[%s898 + $0x5b8] sm:$0xff]
        %1267 = vst [vmem:[%s899 + $0x5b8] sm:$0xff] %v1266
        %v1268 = vld [vmem:[%s898 + $0x5c0] sm:$0xff]
        %1269 = vst [vmem:[%s899 + $0x5c0] sm:$0xff] %v1268
        %v1270 = vld [vmem:[%s898 + $0x5c8] sm:$0xff]
        %1271 = vst [vmem:[%s899 + $0x5c8] sm:$0xff] %v1270
        %v1272 = vld [vmem:[%s898 + $0x5d0] sm:$0xff]
        %1273 = vst [vmem:[%s899 + $0x5d0] sm:$0xff] %v1272
        %v1274 = vld [vmem:[%s898 + $0x5d8] sm:$0xff]
        %1275 = vst [vmem:[%s899 + $0x5d8] sm:$0xff] %v1274
        %v1276 = vld [vmem:[%s898 + $0x5e0] sm:$0xff]
        %1277 = vst [vmem:[%s899 + $0x5e0] sm:$0xff] %v1276
        %v1278 = vld [vmem:[%s898 + $0x5e8] sm:$0xff]
        %1279 = vst [vmem:[%s899 + $0x5e8] sm:$0xff] %v1278
        %v1280 = vld [vmem:[%s898 + $0x5f0] sm:$0xff]
        %1281 = vst [vmem:[%s899 + $0x5f0] sm:$0xff] %v1280
        %v1282 = vld [vmem:[%s898 + $0x5f8] sm:$0xff]
        %1283 = vst [vmem:[%s899 + $0x5f8] sm:$0xff] %v1282
      $region65: #{vgg_tinyserver_forward.1} parent=59 // loop_footer
        %s897 = sadd.s32 1, %s893
      $region66: #{vgg_tinyserver_forward.1} parent=59 // loop_footer_branch
        %892 = sbr.rel target = $region62
      $region67: #{vgg_tinyserver_forward.1} parent=59 // loop_exit
        _
    $region60: #{vgg_tinyserver_forward.1} parent=1 // pred_fallthru
      _
    // Predicated region
    $region68: #{vgg_tinyserver_forward.1} parent=1 // pred_check
      _
    $region69: #{vgg_tinyserver_forward.1} parent=1 // pred_check_branch
      %1285 = sbr.rel target = $region71
    $region70: #{vgg_tinyserver_forward.1} parent=1 // pred_region
      _
    $region71: #{vgg_tinyserver_forward.1} parent=1 // pred_fallthru
      _
    // Predicated region
    $region72: #{vgg_tinyserver_forward.1} parent=1 // pred_check
      _
    $region73: #{vgg_tinyserver_forward.1} parent=1 // pred_check_branch
      %1288 = sbr.rel (0) target = $region75
    $region74: #{vgg_tinyserver_forward.1} parent=1 // pred_region
      %1289 = vsyncadd %s889, 24576
    $region75: #{vgg_tinyserver_forward.1} parent=1 // pred_fallthru
      _
    %s1290 = smul.u32 4, 3
    %s1291 = smul.u32 %s1290, 32
    %s1292 = smul.u32 %s1291, 4
    %s1293 = sshll.u32 %s1292, 4
    %1294 = dma.done [#allocation4], %s1293
    %v1295 = vld [vmem:[#allocation2] sm:$0xff]
    %s1296 = scalar_lea.vmem [#allocation2], 16
    %v1297 = vld [vmem:[%s1296] sm:$0xff]
    %s1298 = scalar_lea.vmem [#allocation2], 80
    %v1299 = vld [vmem:[%s1298] sm:$0xff]
    %s1300 = scalar_lea.vmem [#allocation2], 96
    %v1301 = vld [vmem:[%s1300] sm:$0xff]
    %v1303 = vunpack.c.l.b16 %v1295
    %v1304 = vunpack.c.h.b16 %v1295
    %v1305 = vpack.c.b16 %v1303, %v1303
    %v1306 = vpack.c.b16 %v1304, %v1304
    %v1308 = vunpack.c.l.b16 %v1297
    %v1309 = vunpack.c.h.b16 %v1297
    %v1310 = vpack.c.b16 %v1308, %v1308
    %v1311 = vpack.c.b16 %v1309, %v1309
    %v1313 = vunpack.c.l.b16 %v1299
    %v1314 = vunpack.c.h.b16 %v1299
    %v1315 = vpack.c.b16 %v1313, %v1313
    %v1316 = vpack.c.b16 %v1314, %v1314
    %v1318 = vunpack.c.l.b16 %v1301
    %v1319 = vunpack.c.h.b16 %v1301
    %v1320 = vpack.c.b16 %v1318, %v1318
    %v1321 = vpack.c.b16 %v1319, %v1319
    %vm1322 = vcmask 1043456
    %v1325 = vsel %vm1322, %v1305, %v1310
    %v1329 = vsel %vm1322, %v1306, %v1311
    %v1333 = vsel %vm1322, %v1315, %v1320
    %v1337 = vsel %vm1322, %v1316, %v1321
    %s1339 = scalar_lea.vmem [#allocation2], 8
    %v1340 = vld [vmem:[%s1339] sm:$0xff]
    %s1341 = scalar_lea.vmem [#allocation2], 24
    %v1342 = vld [vmem:[%s1341] sm:$0xff]
    %v1343 = vld [vmem:[%s668] sm:$0xff]
    %s1344 = scalar_lea.vmem [#allocation2], 104
    %v1345 = vld [vmem:[%s1344] sm:$0xff]
    %v1347 = vunpack.c.l.b16 %v1340
    %v1348 = vunpack.c.h.b16 %v1340
    %v1349 = vpack.c.b16 %v1347, %v1347
    %v1350 = vpack.c.b16 %v1348, %v1348
    %v1352 = vunpack.c.l.b16 %v1342
    %v1353 = vunpack.c.h.b16 %v1342
    %v1354 = vpack.c.b16 %v1352, %v1352
    %v1355 = vpack.c.b16 %v1353, %v1353
    %v1357 = vunpack.c.l.b16 %v1343
    %v1358 = vunpack.c.h.b16 %v1343
    %v1359 = vpack.c.b16 %v1357, %v1357
    %v1360 = vpack.c.b16 %v1358, %v1358
    %v1362 = vunpack.c.l.b16 %v1345
    %v1363 = vunpack.c.h.b16 %v1345
    %v1364 = vpack.c.b16 %v1362, %v1362
    %v1365 = vpack.c.b16 %v1363, %v1363
    %v1368 = vsel %vm1322, %v1349, %v1354
    %v1372 = vsel %vm1322, %v1350, %v1355
    %v1376 = vsel %vm1322, %v1359, %v1364
    %v1380 = vsel %vm1322, %v1360, %v1365
    %s1382 = scalar_lea.vmem [#allocation2], 32
    %v1383 = vld [vmem:[%s1382] sm:$0xff]
    %s1384 = scalar_lea.vmem [#allocation2], 112
    %v1385 = vld [vmem:[%s1384] sm:$0xff]
    %v1387 = vunpack.c.l.b16 %v1383
    %v1388 = vunpack.c.h.b16 %v1383
    %v1389 = vpack.c.b16 %v1387, %v1387
    %v1390 = vpack.c.b16 %v1388, %v1388
    %v1392 = vunpack.c.l.b16 %v1385
    %v1393 = vunpack.c.h.b16 %v1385
    %v1394 = vpack.c.b16 %v1392, %v1392
    %v1395 = vpack.c.b16 %v1393, %v1393
    %v1397 = vsel %vm1322, %v1310, %v1389
    %v1400 = vsel %vm1322, %v1311, %v1390
    %v1403 = vsel %vm1322, %v1320, %v1394
    %v1406 = vsel %vm1322, %v1321, %v1395
    %v1408 = vld [vmem:[#allocation3] sm:$0xff]
    %v1409 = vld [vmem:[#allocation3 + $0x8] sm:$0xff]
    %v1410 = vld [vmem:[#allocation3 + $0x10] sm:$0xff]
    %v1411 = vld [vmem:[#allocation3 + $0x18] sm:$0xff]
    %v1412 = vld [vmem:[#allocation3 + $0x20] sm:$0xff]
    %v1413 = vld [vmem:[#allocation3 + $0x28] sm:$0xff]
    %v1414 = vld [vmem:[#allocation3 + $0x30] sm:$0xff]
    %v1415 = vld [vmem:[#allocation3 + $0x38] sm:$0xff]
    %v1416 = vld [vmem:[#allocation3 + $0x40] sm:$0xff]
    %v1417 = vld [vmem:[#allocation3 + $0x48] sm:$0xff]
    %v1418 = vld [vmem:[#allocation3 + $0x50] sm:$0xff]
    %v1419 = vld [vmem:[#allocation3 + $0x58] sm:$0xff]
    %v1420 = vld [vmem:[#allocation3 + $0x60] sm:$0xff]
    %v1421 = vld [vmem:[#allocation3 + $0x68] sm:$0xff]
    %v1422 = vld [vmem:[#allocation3 + $0x70] sm:$0xff]
    %v1423 = vld [vmem:[#allocation3 + $0x78] sm:$0xff]
    %v1424 = vld [vmem:[#allocation3 + $0x80] sm:$0xff]
    %v1425 = vld [vmem:[#allocation3 + $0x88] sm:$0xff]
    %v1426 = vld [vmem:[#allocation3 + $0x90] sm:$0xff]
    %v1427 = vld [vmem:[#allocation3 + $0x98] sm:$0xff]
    %v1428 = vld [vmem:[#allocation3 + $0xa0] sm:$0xff]
    %v1429 = vld [vmem:[#allocation3 + $0xa8] sm:$0xff]
    %v1430 = vld [vmem:[#allocation3 + $0xb0] sm:$0xff]
    %v1431 = vld [vmem:[#allocation3 + $0xb8] sm:$0xff]
    %v1432 = vld [vmem:[#allocation3 + $0xc0] sm:$0xff]
    %v1433 = vld [vmem:[#allocation3 + $0xc8] sm:$0xff]
    %v1434 = vld [vmem:[#allocation3 + $0xd0] sm:$0xff]
    %v1435 = vld [vmem:[#allocation3 + $0xd8] sm:$0xff]
    %v1436 = vld [vmem:[#allocation3 + $0xe0] sm:$0xff]
    %v1437 = vld [vmem:[#allocation3 + $0xe8] sm:$0xff]
    %v1438 = vld [vmem:[#allocation3 + $0xf0] sm:$0xff]
    %v1439 = vld [vmem:[#allocation3 + $0xf8] sm:$0xff]
    %v1440 = vld [vmem:[#allocation3 + $0x100] sm:$0xff]
    %v1441 = vld [vmem:[#allocation3 + $0x108] sm:$0xff]
    %v1442 = vld [vmem:[#allocation3 + $0x110] sm:$0xff]
    %v1443 = vld [vmem:[#allocation3 + $0x118] sm:$0xff]
    %v1444 = vld [vmem:[#allocation3 + $0x120] sm:$0xff]
    %v1445 = vld [vmem:[#allocation3 + $0x128] sm:$0xff]
    %v1446 = vld [vmem:[#allocation3 + $0x130] sm:$0xff]
    %v1447 = vld [vmem:[#allocation3 + $0x138] sm:$0xff]
    %v1448 = vld [vmem:[#allocation3 + $0x140] sm:$0xff]
    %v1449 = vld [vmem:[#allocation3 + $0x148] sm:$0xff]
    %v1450 = vld [vmem:[#allocation3 + $0x150] sm:$0xff]
    %v1451 = vld [vmem:[#allocation3 + $0x158] sm:$0xff]
    %v1452 = vld [vmem:[#allocation3 + $0x160] sm:$0xff]
    %v1453 = vld [vmem:[#allocation3 + $0x168] sm:$0xff]
    %v1454 = vld [vmem:[#allocation3 + $0x170] sm:$0xff]
    %v1455 = vld [vmem:[#allocation3 + $0x178] sm:$0xff]
    %v1456 = vld [vmem:[#allocation3 + $0x180] sm:$0xff]
    %v1457 = vld [vmem:[#allocation3 + $0x188] sm:$0xff]
    %v1458 = vld [vmem:[#allocation3 + $0x190] sm:$0xff]
    %v1459 = vld [vmem:[#allocation3 + $0x198] sm:$0xff]
    %v1460 = vld [vmem:[#allocation3 + $0x1a0] sm:$0xff]
    %v1461 = vld [vmem:[#allocation3 + $0x1a8] sm:$0xff]
    %v1462 = vld [vmem:[#allocation3 + $0x1b0] sm:$0xff]
    %v1463 = vld [vmem:[#allocation3 + $0x1b8] sm:$0xff]
    %v1464 = vld [vmem:[#allocation3 + $0x1c0] sm:$0xff]
    %v1465 = vld [vmem:[#allocation3 + $0x1c8] sm:$0xff]
    %v1466 = vld [vmem:[#allocation3 + $0x1d0] sm:$0xff]
    %v1467 = vld [vmem:[#allocation3 + $0x1d8] sm:$0xff]
    %v1468 = vld [vmem:[#allocation3 + $0x1e0] sm:$0xff]
    %v1469 = vld [vmem:[#allocation3 + $0x1e8] sm:$0xff]
    %v1470 = vld [vmem:[#allocation3 + $0x1f0] sm:$0xff]
    %v1471 = vld [vmem:[#allocation3 + $0x1f8] sm:$0xff]
    %v1472 = vld [vmem:[#allocation3 + $0x200] sm:$0xff]
    %v1473 = vld [vmem:[#allocation3 + $0x208] sm:$0xff]
    %v1474 = vld [vmem:[#allocation3 + $0x210] sm:$0xff]
    %v1475 = vld [vmem:[#allocation3 + $0x218] sm:$0xff]
    %v1476 = vld [vmem:[#allocation3 + $0x220] sm:$0xff]
    %v1477 = vld [vmem:[#allocation3 + $0x228] sm:$0xff]
    %v1478 = vld [vmem:[#allocation3 + $0x230] sm:$0xff]
    %v1479 = vld [vmem:[#allocation3 + $0x238] sm:$0xff]
    %v1480 = vld [vmem:[#allocation3 + $0x240] sm:$0xff]
    %v1481 = vld [vmem:[#allocation3 + $0x248] sm:$0xff]
    %v1482 = vld [vmem:[#allocation3 + $0x250] sm:$0xff]
    %v1483 = vld [vmem:[#allocation3 + $0x258] sm:$0xff]
    %v1484 = vld [vmem:[#allocation3 + $0x260] sm:$0xff]
    %v1485 = vld [vmem:[#allocation3 + $0x268] sm:$0xff]
    %v1486 = vld [vmem:[#allocation3 + $0x270] sm:$0xff]
    %v1487 = vld [vmem:[#allocation3 + $0x278] sm:$0xff]
    %v1488 = vld [vmem:[#allocation3 + $0x280] sm:$0xff]
    %v1489 = vld [vmem:[#allocation3 + $0x288] sm:$0xff]
    %v1490 = vld [vmem:[#allocation3 + $0x290] sm:$0xff]
    %v1491 = vld [vmem:[#allocation3 + $0x298] sm:$0xff]
    %v1492 = vld [vmem:[#allocation3 + $0x2a0] sm:$0xff]
    %v1493 = vld [vmem:[#allocation3 + $0x2a8] sm:$0xff]
    %v1494 = vld [vmem:[#allocation3 + $0x2b0] sm:$0xff]
    %v1495 = vld [vmem:[#allocation3 + $0x2b8] sm:$0xff]
    %v1496 = vld [vmem:[#allocation3 + $0x2c0] sm:$0xff]
    %v1497 = vld [vmem:[#allocation3 + $0x2c8] sm:$0xff]
    %v1498 = vld [vmem:[#allocation3 + $0x2d0] sm:$0xff]
    %v1499 = vld [vmem:[#allocation3 + $0x2d8] sm:$0xff]
    %v1500 = vld [vmem:[#allocation3 + $0x2e0] sm:$0xff]
    %v1501 = vld [vmem:[#allocation3 + $0x2e8] sm:$0xff]
    %v1502 = vld [vmem:[#allocation3 + $0x2f0] sm:$0xff]
    %v1503 = vld [vmem:[#allocation3 + $0x2f8] sm:$0xff]
    %v1504 = vld [vmem:[#allocation3 + $0x300] sm:$0xff]
    %v1505 = vld [vmem:[#allocation3 + $0x308] sm:$0xff]
    %v1506 = vld [vmem:[#allocation3 + $0x310] sm:$0xff]
    %v1507 = vld [vmem:[#allocation3 + $0x318] sm:$0xff]
    %v1508 = vld [vmem:[#allocation3 + $0x320] sm:$0xff]
    %v1509 = vld [vmem:[#allocation3 + $0x328] sm:$0xff]
    %v1510 = vld [vmem:[#allocation3 + $0x330] sm:$0xff]
    %v1511 = vld [vmem:[#allocation3 + $0x338] sm:$0xff]
    %v1512 = vld [vmem:[#allocation3 + $0x340] sm:$0xff]
    %v1513 = vld [vmem:[#allocation3 + $0x348] sm:$0xff]
    %v1514 = vld [vmem:[#allocation3 + $0x350] sm:$0xff]
    %v1515 = vld [vmem:[#allocation3 + $0x358] sm:$0xff]
    %v1516 = vld [vmem:[#allocation3 + $0x360] sm:$0xff]
    %v1517 = vld [vmem:[#allocation3 + $0x368] sm:$0xff]
    %v1518 = vld [vmem:[#allocation3 + $0x370] sm:$0xff]
    %v1519 = vld [vmem:[#allocation3 + $0x378] sm:$0xff]
    %v1520 = vld [vmem:[#allocation3 + $0x380] sm:$0xff]
    %v1521 = vld [vmem:[#allocation3 + $0x388] sm:$0xff]
    %v1522 = vld [vmem:[#allocation3 + $0x390] sm:$0xff]
    %v1523 = vld [vmem:[#allocation3 + $0x398] sm:$0xff]
    %v1524 = vld [vmem:[#allocation3 + $0x3a0] sm:$0xff]
    %v1525 = vld [vmem:[#allocation3 + $0x3a8] sm:$0xff]
    %v1526 = vld [vmem:[#allocation3 + $0x3b0] sm:$0xff]
    %v1527 = vld [vmem:[#allocation3 + $0x3b8] sm:$0xff]
    %v1528 = vld [vmem:[#allocation3 + $0x3c0] sm:$0xff]
    %v1529 = vld [vmem:[#allocation3 + $0x3c8] sm:$0xff]
    %v1530 = vld [vmem:[#allocation3 + $0x3d0] sm:$0xff]
    %v1531 = vld [vmem:[#allocation3 + $0x3d8] sm:$0xff]
    %v1532 = vld [vmem:[#allocation3 + $0x3e0] sm:$0xff]
    %v1533 = vld [vmem:[#allocation3 + $0x3e8] sm:$0xff]
    %v1534 = vld [vmem:[#allocation3 + $0x3f0] sm:$0xff]
    %v1535 = vld [vmem:[#allocation3 + $0x3f8] sm:$0xff]
    %v1536 = vld [vmem:[#allocation3 + $0x400] sm:$0xff]
    %v1537 = vld [vmem:[#allocation3 + $0x408] sm:$0xff]
    %v1538 = vld [vmem:[#allocation3 + $0x410] sm:$0xff]
    %v1539 = vld [vmem:[#allocation3 + $0x418] sm:$0xff]
    %v1540 = vld [vmem:[#allocation3 + $0x420] sm:$0xff]
    %v1541 = vld [vmem:[#allocation3 + $0x428] sm:$0xff]
    %v1542 = vld [vmem:[#allocation3 + $0x430] sm:$0xff]
    %v1543 = vld [vmem:[#allocation3 + $0x438] sm:$0xff]
    %v1544 = vld [vmem:[#allocation3 + $0x440] sm:$0xff]
    %v1545 = vld [vmem:[#allocation3 + $0x448] sm:$0xff]
    %v1546 = vld [vmem:[#allocation3 + $0x450] sm:$0xff]
    %v1547 = vld [vmem:[#allocation3 + $0x458] sm:$0xff]
    %v1548 = vld [vmem:[#allocation3 + $0x460] sm:$0xff]
    %v1549 = vld [vmem:[#allocation3 + $0x468] sm:$0xff]
    %v1550 = vld [vmem:[#allocation3 + $0x470] sm:$0xff]
    %v1551 = vld [vmem:[#allocation3 + $0x478] sm:$0xff]
    %v1552 = vld [vmem:[#allocation3 + $0x480] sm:$0xff]
    %v1553 = vld [vmem:[#allocation3 + $0x488] sm:$0xff]
    %v1554 = vld [vmem:[#allocation3 + $0x490] sm:$0xff]
    %v1555 = vld [vmem:[#allocation3 + $0x498] sm:$0xff]
    %v1556 = vld [vmem:[#allocation3 + $0x4a0] sm:$0xff]
    %v1557 = vld [vmem:[#allocation3 + $0x4a8] sm:$0xff]
    %v1558 = vld [vmem:[#allocation3 + $0x4b0] sm:$0xff]
    %v1559 = vld [vmem:[#allocation3 + $0x4b8] sm:$0xff]
    %v1560 = vld [vmem:[#allocation3 + $0x4c0] sm:$0xff]
    %v1561 = vld [vmem:[#allocation3 + $0x4c8] sm:$0xff]
    %v1562 = vld [vmem:[#allocation3 + $0x4d0] sm:$0xff]
    %v1563 = vld [vmem:[#allocation3 + $0x4d8] sm:$0xff]
    %v1564 = vld [vmem:[#allocation3 + $0x4e0] sm:$0xff]
    %v1565 = vld [vmem:[#allocation3 + $0x4e8] sm:$0xff]
    %v1566 = vld [vmem:[#allocation3 + $0x4f0] sm:$0xff]
    %v1567 = vld [vmem:[#allocation3 + $0x4f8] sm:$0xff]
    %v1568 = vld [vmem:[#allocation3 + $0x500] sm:$0xff]
    %v1569 = vld [vmem:[#allocation3 + $0x508] sm:$0xff]
    %v1570 = vld [vmem:[#allocation3 + $0x510] sm:$0xff]
    %v1571 = vld [vmem:[#allocation3 + $0x518] sm:$0xff]
    %v1572 = vld [vmem:[#allocation3 + $0x520] sm:$0xff]
    %v1573 = vld [vmem:[#allocation3 + $0x528] sm:$0xff]
    %v1574 = vld [vmem:[#allocation3 + $0x530] sm:$0xff]
    %v1575 = vld [vmem:[#allocation3 + $0x538] sm:$0xff]
    %v1576 = vld [vmem:[#allocation3 + $0x540] sm:$0xff]
    %v1577 = vld [vmem:[#allocation3 + $0x548] sm:$0xff]
    %v1578 = vld [vmem:[#allocation3 + $0x550] sm:$0xff]
    %v1579 = vld [vmem:[#allocation3 + $0x558] sm:$0xff]
    %v1580 = vld [vmem:[#allocation3 + $0x560] sm:$0xff]
    %v1581 = vld [vmem:[#allocation3 + $0x568] sm:$0xff]
    %v1582 = vld [vmem:[#allocation3 + $0x570] sm:$0xff]
    %v1583 = vld [vmem:[#allocation3 + $0x578] sm:$0xff]
    %v1584 = vld [vmem:[#allocation3 + $0x580] sm:$0xff]
    %v1585 = vld [vmem:[#allocation3 + $0x588] sm:$0xff]
    %v1586 = vld [vmem:[#allocation3 + $0x590] sm:$0xff]
    %v1587 = vld [vmem:[#allocation3 + $0x598] sm:$0xff]
    %v1588 = vld [vmem:[#allocation3 + $0x5a0] sm:$0xff]
    %v1589 = vld [vmem:[#allocation3 + $0x5a8] sm:$0xff]
    %v1590 = vld [vmem:[#allocation3 + $0x5b0] sm:$0xff]
    %v1591 = vld [vmem:[#allocation3 + $0x5b8] sm:$0xff]
    %v1592 = vld [vmem:[#allocation3 + $0x5c0] sm:$0xff]
    %v1593 = vld [vmem:[#allocation3 + $0x5c8] sm:$0xff]
    %v1594 = vld [vmem:[#allocation3 + $0x5d0] sm:$0xff]
    %v1595 = vld [vmem:[#allocation3 + $0x5d8] sm:$0xff]
    %v1596 = vld [vmem:[#allocation3 + $0x5e0] sm:$0xff]
    %v1597 = vld [vmem:[#allocation3 + $0x5e8] sm:$0xff]
    %v1598 = vld [vmem:[#allocation3 + $0x5f0] sm:$0xff]
    %v1599 = vld [vmem:[#allocation3 + $0x5f8] sm:$0xff]
    %s1600 = scalar_lea.vmem %s1, 3072
    // Predicated region
    $region76: #{vgg_tinyserver_forward.1} parent=1 // pred_check
      _
    $region77: #{vgg_tinyserver_forward.1} parent=1 // pred_check_branch
      %1602 = sbr.rel (0) target = $region79
    $region78: #{vgg_tinyserver_forward.1} parent=1 // pred_region
      loop: start=0, step=1, limit=1
      $region80: #{vgg_tinyserver_forward.1} parent=78 // loop_pre_header
        _
      $region81: #{vgg_tinyserver_forward.1} parent=78 // loop_header
        %s1604 = sphi 0, %s1608
        %p1605 = scmp.ge.s32.totalorder %s1604, 1
        %s1609 = sphi %s1600, %s1600
        %s1610 = sphi [#allocation3], [#allocation3]
      $region82: #{vgg_tinyserver_forward.1} parent=78 // loop_header_branch
        %1607 = sbr.rel (%p1605) target = $region86
      $region83: #{vgg_tinyserver_forward.1} parent=78 // loop_body
        %v1611 = vld [vmem:[%s1609] sm:$0xff]
        %1612 = vst [vmem:[%s1610] sm:$0xff] %v1611
        %v1613 = vld [vmem:[%s1609 + $0x8] sm:$0xff]
        %1614 = vst [vmem:[%s1610 + $0x8] sm:$0xff] %v1613
        %v1615 = vld [vmem:[%s1609 + $0x10] sm:$0xff]
        %1616 = vst [vmem:[%s1610 + $0x10] sm:$0xff] %v1615
        %v1617 = vld [vmem:[%s1609 + $0x18] sm:$0xff]
        %1618 = vst [vmem:[%s1610 + $0x18] sm:$0xff] %v1617
        %v1619 = vld [vmem:[%s1609 + $0x20] sm:$0xff]
        %1620 = vst [vmem:[%s1610 + $0x20] sm:$0xff] %v1619
        %v1621 = vld [vmem:[%s1609 + $0x28] sm:$0xff]
        %1622 = vst [vmem:[%s1610 + $0x28] sm:$0xff] %v1621
        %v1623 = vld [vmem:[%s1609 + $0x30] sm:$0xff]
        %1624 = vst [vmem:[%s1610 + $0x30] sm:$0xff] %v1623
        %v1625 = vld [vmem:[%s1609 + $0x38] sm:$0xff]
        %1626 = vst [vmem:[%s1610 + $0x38] sm:$0xff] %v1625
        %v1627 = vld [vmem:[%s1609 + $0x40] sm:$0xff]
        %1628 = vst [vmem:[%s1610 + $0x40] sm:$0xff] %v1627
        %v1629 = vld [vmem:[%s1609 + $0x48] sm:$0xff]
        %1630 = vst [vmem:[%s1610 + $0x48] sm:$0xff] %v1629
        %v1631 = vld [vmem:[%s1609 + $0x50] sm:$0xff]
        %1632 = vst [vmem:[%s1610 + $0x50] sm:$0xff] %v1631
        %v1633 = vld [vmem:[%s1609 + $0x58] sm:$0xff]
        %1634 = vst [vmem:[%s1610 + $0x58] sm:$0xff] %v1633
        %v1635 = vld [vmem:[%s1609 + $0x60] sm:$0xff]
        %1636 = vst [vmem:[%s1610 + $0x60] sm:$0xff] %v1635
        %v1637 = vld [vmem:[%s1609 + $0x68] sm:$0xff]
        %1638 = vst [vmem:[%s1610 + $0x68] sm:$0xff] %v1637
        %v1639 = vld [vmem:[%s1609 + $0x70] sm:$0xff]
        %1640 = vst [vmem:[%s1610 + $0x70] sm:$0xff] %v1639
        %v1641 = vld [vmem:[%s1609 + $0x78] sm:$0xff]
        %1642 = vst [vmem:[%s1610 + $0x78] sm:$0xff] %v1641
        %v1643 = vld [vmem:[%s1609 + $0x80] sm:$0xff]
        %1644 = vst [vmem:[%s1610 + $0x80] sm:$0xff] %v1643
        %v1645 = vld [vmem:[%s1609 + $0x88] sm:$0xff]
        %1646 = vst [vmem:[%s1610 + $0x88] sm:$0xff] %v1645
        %v1647 = vld [vmem:[%s1609 + $0x90] sm:$0xff]
        %1648 = vst [vmem:[%s1610 + $0x90] sm:$0xff] %v1647
        %v1649 = vld [vmem:[%s1609 + $0x98] sm:$0xff]
        %1650 = vst [vmem:[%s1610 + $0x98] sm:$0xff] %v1649
        %v1651 = vld [vmem:[%s1609 + $0xa0] sm:$0xff]
        %1652 = vst [vmem:[%s1610 + $0xa0] sm:$0xff] %v1651
        %v1653 = vld [vmem:[%s1609 + $0xa8] sm:$0xff]
        %1654 = vst [vmem:[%s1610 + $0xa8] sm:$0xff] %v1653
        %v1655 = vld [vmem:[%s1609 + $0xb0] sm:$0xff]
        %1656 = vst [vmem:[%s1610 + $0xb0] sm:$0xff] %v1655
        %v1657 = vld [vmem:[%s1609 + $0xb8] sm:$0xff]
        %1658 = vst [vmem:[%s1610 + $0xb8] sm:$0xff] %v1657
        %v1659 = vld [vmem:[%s1609 + $0xc0] sm:$0xff]
        %1660 = vst [vmem:[%s1610 + $0xc0] sm:$0xff] %v1659
        %v1661 = vld [vmem:[%s1609 + $0xc8] sm:$0xff]
        %1662 = vst [vmem:[%s1610 + $0xc8] sm:$0xff] %v1661
        %v1663 = vld [vmem:[%s1609 + $0xd0] sm:$0xff]
        %1664 = vst [vmem:[%s1610 + $0xd0] sm:$0xff] %v1663
        %v1665 = vld [vmem:[%s1609 + $0xd8] sm:$0xff]
        %1666 = vst [vmem:[%s1610 + $0xd8] sm:$0xff] %v1665
        %v1667 = vld [vmem:[%s1609 + $0xe0] sm:$0xff]
        %1668 = vst [vmem:[%s1610 + $0xe0] sm:$0xff] %v1667
        %v1669 = vld [vmem:[%s1609 + $0xe8] sm:$0xff]
        %1670 = vst [vmem:[%s1610 + $0xe8] sm:$0xff] %v1669
        %v1671 = vld [vmem:[%s1609 + $0xf0] sm:$0xff]
        %1672 = vst [vmem:[%s1610 + $0xf0] sm:$0xff] %v1671
        %v1673 = vld [vmem:[%s1609 + $0xf8] sm:$0xff]
        %1674 = vst [vmem:[%s1610 + $0xf8] sm:$0xff] %v1673
        %v1675 = vld [vmem:[%s1609 + $0x100] sm:$0xff]
        %1676 = vst [vmem:[%s1610 + $0x100] sm:$0xff] %v1675
        %v1677 = vld [vmem:[%s1609 + $0x108] sm:$0xff]
        %1678 = vst [vmem:[%s1610 + $0x108] sm:$0xff] %v1677
        %v1679 = vld [vmem:[%s1609 + $0x110] sm:$0xff]
        %1680 = vst [vmem:[%s1610 + $0x110] sm:$0xff] %v1679
        %v1681 = vld [vmem:[%s1609 + $0x118] sm:$0xff]
        %1682 = vst [vmem:[%s1610 + $0x118] sm:$0xff] %v1681
        %v1683 = vld [vmem:[%s1609 + $0x120] sm:$0xff]
        %1684 = vst [vmem:[%s1610 + $0x120] sm:$0xff] %v1683
        %v1685 = vld [vmem:[%s1609 + $0x128] sm:$0xff]
        %1686 = vst [vmem:[%s1610 + $0x128] sm:$0xff] %v1685
        %v1687 = vld [vmem:[%s1609 + $0x130] sm:$0xff]
        %1688 = vst [vmem:[%s1610 + $0x130] sm:$0xff] %v1687
        %v1689 = vld [vmem:[%s1609 + $0x138] sm:$0xff]
        %1690 = vst [vmem:[%s1610 + $0x138] sm:$0xff] %v1689
        %v1691 = vld [vmem:[%s1609 + $0x140] sm:$0xff]
        %1692 = vst [vmem:[%s1610 + $0x140] sm:$0xff] %v1691
        %v1693 = vld [vmem:[%s1609 + $0x148] sm:$0xff]
        %1694 = vst [vmem:[%s1610 + $0x148] sm:$0xff] %v1693
        %v1695 = vld [vmem:[%s1609 + $0x150] sm:$0xff]
        %1696 = vst [vmem:[%s1610 + $0x150] sm:$0xff] %v1695
        %v1697 = vld [vmem:[%s1609 + $0x158] sm:$0xff]
        %1698 = vst [vmem:[%s1610 + $0x158] sm:$0xff] %v1697
        %v1699 = vld [vmem:[%s1609 + $0x160] sm:$0xff]
        %1700 = vst [vmem:[%s1610 + $0x160] sm:$0xff] %v1699
        %v1701 = vld [vmem:[%s1609 + $0x168] sm:$0xff]
        %1702 = vst [vmem:[%s1610 + $0x168] sm:$0xff] %v1701
        %v1703 = vld [vmem:[%s1609 + $0x170] sm:$0xff]
        %1704 = vst [vmem:[%s1610 + $0x170] sm:$0xff] %v1703
        %v1705 = vld [vmem:[%s1609 + $0x178] sm:$0xff]
        %1706 = vst [vmem:[%s1610 + $0x178] sm:$0xff] %v1705
        %v1707 = vld [vmem:[%s1609 + $0x180] sm:$0xff]
        %1708 = vst [vmem:[%s1610 + $0x180] sm:$0xff] %v1707
        %v1709 = vld [vmem:[%s1609 + $0x188] sm:$0xff]
        %1710 = vst [vmem:[%s1610 + $0x188] sm:$0xff] %v1709
        %v1711 = vld [vmem:[%s1609 + $0x190] sm:$0xff]
        %1712 = vst [vmem:[%s1610 + $0x190] sm:$0xff] %v1711
        %v1713 = vld [vmem:[%s1609 + $0x198] sm:$0xff]
        %1714 = vst [vmem:[%s1610 + $0x198] sm:$0xff] %v1713
        %v1715 = vld [vmem:[%s1609 + $0x1a0] sm:$0xff]
        %1716 = vst [vmem:[%s1610 + $0x1a0] sm:$0xff] %v1715
        %v1717 = vld [vmem:[%s1609 + $0x1a8] sm:$0xff]
        %1718 = vst [vmem:[%s1610 + $0x1a8] sm:$0xff] %v1717
        %v1719 = vld [vmem:[%s1609 + $0x1b0] sm:$0xff]
        %1720 = vst [vmem:[%s1610 + $0x1b0] sm:$0xff] %v1719
        %v1721 = vld [vmem:[%s1609 + $0x1b8] sm:$0xff]
        %1722 = vst [vmem:[%s1610 + $0x1b8] sm:$0xff] %v1721
        %v1723 = vld [vmem:[%s1609 + $0x1c0] sm:$0xff]
        %1724 = vst [vmem:[%s1610 + $0x1c0] sm:$0xff] %v1723
        %v1725 = vld [vmem:[%s1609 + $0x1c8] sm:$0xff]
        %1726 = vst [vmem:[%s1610 + $0x1c8] sm:$0xff] %v1725
        %v1727 = vld [vmem:[%s1609 + $0x1d0] sm:$0xff]
        %1728 = vst [vmem:[%s1610 + $0x1d0] sm:$0xff] %v1727
        %v1729 = vld [vmem:[%s1609 + $0x1d8] sm:$0xff]
        %1730 = vst [vmem:[%s1610 + $0x1d8] sm:$0xff] %v1729
        %v1731 = vld [vmem:[%s1609 + $0x1e0] sm:$0xff]
        %1732 = vst [vmem:[%s1610 + $0x1e0] sm:$0xff] %v1731
        %v1733 = vld [vmem:[%s1609 + $0x1e8] sm:$0xff]
        %1734 = vst [vmem:[%s1610 + $0x1e8] sm:$0xff] %v1733
        %v1735 = vld [vmem:[%s1609 + $0x1f0] sm:$0xff]
        %1736 = vst [vmem:[%s1610 + $0x1f0] sm:$0xff] %v1735
        %v1737 = vld [vmem:[%s1609 + $0x1f8] sm:$0xff]
        %1738 = vst [vmem:[%s1610 + $0x1f8] sm:$0xff] %v1737
        %v1739 = vld [vmem:[%s1609 + $0x200] sm:$0xff]
        %1740 = vst [vmem:[%s1610 + $0x200] sm:$0xff] %v1739
        %v1741 = vld [vmem:[%s1609 + $0x208] sm:$0xff]
        %1742 = vst [vmem:[%s1610 + $0x208] sm:$0xff] %v1741
        %v1743 = vld [vmem:[%s1609 + $0x210] sm:$0xff]
        %1744 = vst [vmem:[%s1610 + $0x210] sm:$0xff] %v1743
        %v1745 = vld [vmem:[%s1609 + $0x218] sm:$0xff]
        %1746 = vst [vmem:[%s1610 + $0x218] sm:$0xff] %v1745
        %v1747 = vld [vmem:[%s1609 + $0x220] sm:$0xff]
        %1748 = vst [vmem:[%s1610 + $0x220] sm:$0xff] %v1747
        %v1749 = vld [vmem:[%s1609 + $0x228] sm:$0xff]
        %1750 = vst [vmem:[%s1610 + $0x228] sm:$0xff] %v1749
        %v1751 = vld [vmem:[%s1609 + $0x230] sm:$0xff]
        %1752 = vst [vmem:[%s1610 + $0x230] sm:$0xff] %v1751
        %v1753 = vld [vmem:[%s1609 + $0x238] sm:$0xff]
        %1754 = vst [vmem:[%s1610 + $0x238] sm:$0xff] %v1753
        %v1755 = vld [vmem:[%s1609 + $0x240] sm:$0xff]
        %1756 = vst [vmem:[%s1610 + $0x240] sm:$0xff] %v1755
        %v1757 = vld [vmem:[%s1609 + $0x248] sm:$0xff]
        %1758 = vst [vmem:[%s1610 + $0x248] sm:$0xff] %v1757
        %v1759 = vld [vmem:[%s1609 + $0x250] sm:$0xff]
        %1760 = vst [vmem:[%s1610 + $0x250] sm:$0xff] %v1759
        %v1761 = vld [vmem:[%s1609 + $0x258] sm:$0xff]
        %1762 = vst [vmem:[%s1610 + $0x258] sm:$0xff] %v1761
        %v1763 = vld [vmem:[%s1609 + $0x260] sm:$0xff]
        %1764 = vst [vmem:[%s1610 + $0x260] sm:$0xff] %v1763
        %v1765 = vld [vmem:[%s1609 + $0x268] sm:$0xff]
        %1766 = vst [vmem:[%s1610 + $0x268] sm:$0xff] %v1765
        %v1767 = vld [vmem:[%s1609 + $0x270] sm:$0xff]
        %1768 = vst [vmem:[%s1610 + $0x270] sm:$0xff] %v1767
        %v1769 = vld [vmem:[%s1609 + $0x278] sm:$0xff]
        %1770 = vst [vmem:[%s1610 + $0x278] sm:$0xff] %v1769
        %v1771 = vld [vmem:[%s1609 + $0x280] sm:$0xff]
        %1772 = vst [vmem:[%s1610 + $0x280] sm:$0xff] %v1771
        %v1773 = vld [vmem:[%s1609 + $0x288] sm:$0xff]
        %1774 = vst [vmem:[%s1610 + $0x288] sm:$0xff] %v1773
        %v1775 = vld [vmem:[%s1609 + $0x290] sm:$0xff]
        %1776 = vst [vmem:[%s1610 + $0x290] sm:$0xff] %v1775
        %v1777 = vld [vmem:[%s1609 + $0x298] sm:$0xff]
        %1778 = vst [vmem:[%s1610 + $0x298] sm:$0xff] %v1777
        %v1779 = vld [vmem:[%s1609 + $0x2a0] sm:$0xff]
        %1780 = vst [vmem:[%s1610 + $0x2a0] sm:$0xff] %v1779
        %v1781 = vld [vmem:[%s1609 + $0x2a8] sm:$0xff]
        %1782 = vst [vmem:[%s1610 + $0x2a8] sm:$0xff] %v1781
        %v1783 = vld [vmem:[%s1609 + $0x2b0] sm:$0xff]
        %1784 = vst [vmem:[%s1610 + $0x2b0] sm:$0xff] %v1783
        %v1785 = vld [vmem:[%s1609 + $0x2b8] sm:$0xff]
        %1786 = vst [vmem:[%s1610 + $0x2b8] sm:$0xff] %v1785
        %v1787 = vld [vmem:[%s1609 + $0x2c0] sm:$0xff]
        %1788 = vst [vmem:[%s1610 + $0x2c0] sm:$0xff] %v1787
        %v1789 = vld [vmem:[%s1609 + $0x2c8] sm:$0xff]
        %1790 = vst [vmem:[%s1610 + $0x2c8] sm:$0xff] %v1789
        %v1791 = vld [vmem:[%s1609 + $0x2d0] sm:$0xff]
        %1792 = vst [vmem:[%s1610 + $0x2d0] sm:$0xff] %v1791
        %v1793 = vld [vmem:[%s1609 + $0x2d8] sm:$0xff]
        %1794 = vst [vmem:[%s1610 + $0x2d8] sm:$0xff] %v1793
        %v1795 = vld [vmem:[%s1609 + $0x2e0] sm:$0xff]
        %1796 = vst [vmem:[%s1610 + $0x2e0] sm:$0xff] %v1795
        %v1797 = vld [vmem:[%s1609 + $0x2e8] sm:$0xff]
        %1798 = vst [vmem:[%s1610 + $0x2e8] sm:$0xff] %v1797
        %v1799 = vld [vmem:[%s1609 + $0x2f0] sm:$0xff]
        %1800 = vst [vmem:[%s1610 + $0x2f0] sm:$0xff] %v1799
        %v1801 = vld [vmem:[%s1609 + $0x2f8] sm:$0xff]
        %1802 = vst [vmem:[%s1610 + $0x2f8] sm:$0xff] %v1801
        %v1803 = vld [vmem:[%s1609 + $0x300] sm:$0xff]
        %1804 = vst [vmem:[%s1610 + $0x300] sm:$0xff] %v1803
        %v1805 = vld [vmem:[%s1609 + $0x308] sm:$0xff]
        %1806 = vst [vmem:[%s1610 + $0x308] sm:$0xff] %v1805
        %v1807 = vld [vmem:[%s1609 + $0x310] sm:$0xff]
        %1808 = vst [vmem:[%s1610 + $0x310] sm:$0xff] %v1807
        %v1809 = vld [vmem:[%s1609 + $0x318] sm:$0xff]
        %1810 = vst [vmem:[%s1610 + $0x318] sm:$0xff] %v1809
        %v1811 = vld [vmem:[%s1609 + $0x320] sm:$0xff]
        %1812 = vst [vmem:[%s1610 + $0x320] sm:$0xff] %v1811
        %v1813 = vld [vmem:[%s1609 + $0x328] sm:$0xff]
        %1814 = vst [vmem:[%s1610 + $0x328] sm:$0xff] %v1813
        %v1815 = vld [vmem:[%s1609 + $0x330] sm:$0xff]
        %1816 = vst [vmem:[%s1610 + $0x330] sm:$0xff] %v1815
        %v1817 = vld [vmem:[%s1609 + $0x338] sm:$0xff]
        %1818 = vst [vmem:[%s1610 + $0x338] sm:$0xff] %v1817
        %v1819 = vld [vmem:[%s1609 + $0x340] sm:$0xff]
        %1820 = vst [vmem:[%s1610 + $0x340] sm:$0xff] %v1819
        %v1821 = vld [vmem:[%s1609 + $0x348] sm:$0xff]
        %1822 = vst [vmem:[%s1610 + $0x348] sm:$0xff] %v1821
        %v1823 = vld [vmem:[%s1609 + $0x350] sm:$0xff]
        %1824 = vst [vmem:[%s1610 + $0x350] sm:$0xff] %v1823
        %v1825 = vld [vmem:[%s1609 + $0x358] sm:$0xff]
        %1826 = vst [vmem:[%s1610 + $0x358] sm:$0xff] %v1825
        %v1827 = vld [vmem:[%s1609 + $0x360] sm:$0xff]
        %1828 = vst [vmem:[%s1610 + $0x360] sm:$0xff] %v1827
        %v1829 = vld [vmem:[%s1609 + $0x368] sm:$0xff]
        %1830 = vst [vmem:[%s1610 + $0x368] sm:$0xff] %v1829
        %v1831 = vld [vmem:[%s1609 + $0x370] sm:$0xff]
        %1832 = vst [vmem:[%s1610 + $0x370] sm:$0xff] %v1831
        %v1833 = vld [vmem:[%s1609 + $0x378] sm:$0xff]
        %1834 = vst [vmem:[%s1610 + $0x378] sm:$0xff] %v1833
        %v1835 = vld [vmem:[%s1609 + $0x380] sm:$0xff]
        %1836 = vst [vmem:[%s1610 + $0x380] sm:$0xff] %v1835
        %v1837 = vld [vmem:[%s1609 + $0x388] sm:$0xff]
        %1838 = vst [vmem:[%s1610 + $0x388] sm:$0xff] %v1837
        %v1839 = vld [vmem:[%s1609 + $0x390] sm:$0xff]
        %1840 = vst [vmem:[%s1610 + $0x390] sm:$0xff] %v1839
        %v1841 = vld [vmem:[%s1609 + $0x398] sm:$0xff]
        %1842 = vst [vmem:[%s1610 + $0x398] sm:$0xff] %v1841
        %v1843 = vld [vmem:[%s1609 + $0x3a0] sm:$0xff]
        %1844 = vst [vmem:[%s1610 + $0x3a0] sm:$0xff] %v1843
        %v1845 = vld [vmem:[%s1609 + $0x3a8] sm:$0xff]
        %1846 = vst [vmem:[%s1610 + $0x3a8] sm:$0xff] %v1845
        %v1847 = vld [vmem:[%s1609 + $0x3b0] sm:$0xff]
        %1848 = vst [vmem:[%s1610 + $0x3b0] sm:$0xff] %v1847
        %v1849 = vld [vmem:[%s1609 + $0x3b8] sm:$0xff]
        %1850 = vst [vmem:[%s1610 + $0x3b8] sm:$0xff] %v1849
        %v1851 = vld [vmem:[%s1609 + $0x3c0] sm:$0xff]
        %1852 = vst [vmem:[%s1610 + $0x3c0] sm:$0xff] %v1851
        %v1853 = vld [vmem:[%s1609 + $0x3c8] sm:$0xff]
        %1854 = vst [vmem:[%s1610 + $0x3c8] sm:$0xff] %v1853
        %v1855 = vld [vmem:[%s1609 + $0x3d0] sm:$0xff]
        %1856 = vst [vmem:[%s1610 + $0x3d0] sm:$0xff] %v1855
        %v1857 = vld [vmem:[%s1609 + $0x3d8] sm:$0xff]
        %1858 = vst [vmem:[%s1610 + $0x3d8] sm:$0xff] %v1857
        %v1859 = vld [vmem:[%s1609 + $0x3e0] sm:$0xff]
        %1860 = vst [vmem:[%s1610 + $0x3e0] sm:$0xff] %v1859
        %v1861 = vld [vmem:[%s1609 + $0x3e8] sm:$0xff]
        %1862 = vst [vmem:[%s1610 + $0x3e8] sm:$0xff] %v1861
        %v1863 = vld [vmem:[%s1609 + $0x3f0] sm:$0xff]
        %1864 = vst [vmem:[%s1610 + $0x3f0] sm:$0xff] %v1863
        %v1865 = vld [vmem:[%s1609 + $0x3f8] sm:$0xff]
        %1866 = vst [vmem:[%s1610 + $0x3f8] sm:$0xff] %v1865
        %v1867 = vld [vmem:[%s1609 + $0x400] sm:$0xff]
        %1868 = vst [vmem:[%s1610 + $0x400] sm:$0xff] %v1867
        %v1869 = vld [vmem:[%s1609 + $0x408] sm:$0xff]
        %1870 = vst [vmem:[%s1610 + $0x408] sm:$0xff] %v1869
        %v1871 = vld [vmem:[%s1609 + $0x410] sm:$0xff]
        %1872 = vst [vmem:[%s1610 + $0x410] sm:$0xff] %v1871
        %v1873 = vld [vmem:[%s1609 + $0x418] sm:$0xff]
        %1874 = vst [vmem:[%s1610 + $0x418] sm:$0xff] %v1873
        %v1875 = vld [vmem:[%s1609 + $0x420] sm:$0xff]
        %1876 = vst [vmem:[%s1610 + $0x420] sm:$0xff] %v1875
        %v1877 = vld [vmem:[%s1609 + $0x428] sm:$0xff]
        %1878 = vst [vmem:[%s1610 + $0x428] sm:$0xff] %v1877
        %v1879 = vld [vmem:[%s1609 + $0x430] sm:$0xff]
        %1880 = vst [vmem:[%s1610 + $0x430] sm:$0xff] %v1879
        %v1881 = vld [vmem:[%s1609 + $0x438] sm:$0xff]
        %1882 = vst [vmem:[%s1610 + $0x438] sm:$0xff] %v1881
        %v1883 = vld [vmem:[%s1609 + $0x440] sm:$0xff]
        %1884 = vst [vmem:[%s1610 + $0x440] sm:$0xff] %v1883
        %v1885 = vld [vmem:[%s1609 + $0x448] sm:$0xff]
        %1886 = vst [vmem:[%s1610 + $0x448] sm:$0xff] %v1885
        %v1887 = vld [vmem:[%s1609 + $0x450] sm:$0xff]
        %1888 = vst [vmem:[%s1610 + $0x450] sm:$0xff] %v1887
        %v1889 = vld [vmem:[%s1609 + $0x458] sm:$0xff]
        %1890 = vst [vmem:[%s1610 + $0x458] sm:$0xff] %v1889
        %v1891 = vld [vmem:[%s1609 + $0x460] sm:$0xff]
        %1892 = vst [vmem:[%s1610 + $0x460] sm:$0xff] %v1891
        %v1893 = vld [vmem:[%s1609 + $0x468] sm:$0xff]
        %1894 = vst [vmem:[%s1610 + $0x468] sm:$0xff] %v1893
        %v1895 = vld [vmem:[%s1609 + $0x470] sm:$0xff]
        %1896 = vst [vmem:[%s1610 + $0x470] sm:$0xff] %v1895
        %v1897 = vld [vmem:[%s1609 + $0x478] sm:$0xff]
        %1898 = vst [vmem:[%s1610 + $0x478] sm:$0xff] %v1897
        %v1899 = vld [vmem:[%s1609 + $0x480] sm:$0xff]
        %1900 = vst [vmem:[%s1610 + $0x480] sm:$0xff] %v1899
        %v1901 = vld [vmem:[%s1609 + $0x488] sm:$0xff]
        %1902 = vst [vmem:[%s1610 + $0x488] sm:$0xff] %v1901
        %v1903 = vld [vmem:[%s1609 + $0x490] sm:$0xff]
        %1904 = vst [vmem:[%s1610 + $0x490] sm:$0xff] %v1903
        %v1905 = vld [vmem:[%s1609 + $0x498] sm:$0xff]
        %1906 = vst [vmem:[%s1610 + $0x498] sm:$0xff] %v1905
        %v1907 = vld [vmem:[%s1609 + $0x4a0] sm:$0xff]
        %1908 = vst [vmem:[%s1610 + $0x4a0] sm:$0xff] %v1907
        %v1909 = vld [vmem:[%s1609 + $0x4a8] sm:$0xff]
        %1910 = vst [vmem:[%s1610 + $0x4a8] sm:$0xff] %v1909
        %v1911 = vld [vmem:[%s1609 + $0x4b0] sm:$0xff]
        %1912 = vst [vmem:[%s1610 + $0x4b0] sm:$0xff] %v1911
        %v1913 = vld [vmem:[%s1609 + $0x4b8] sm:$0xff]
        %1914 = vst [vmem:[%s1610 + $0x4b8] sm:$0xff] %v1913
        %v1915 = vld [vmem:[%s1609 + $0x4c0] sm:$0xff]
        %1916 = vst [vmem:[%s1610 + $0x4c0] sm:$0xff] %v1915
        %v1917 = vld [vmem:[%s1609 + $0x4c8] sm:$0xff]
        %1918 = vst [vmem:[%s1610 + $0x4c8] sm:$0xff] %v1917
        %v1919 = vld [vmem:[%s1609 + $0x4d0] sm:$0xff]
        %1920 = vst [vmem:[%s1610 + $0x4d0] sm:$0xff] %v1919
        %v1921 = vld [vmem:[%s1609 + $0x4d8] sm:$0xff]
        %1922 = vst [vmem:[%s1610 + $0x4d8] sm:$0xff] %v1921
        %v1923 = vld [vmem:[%s1609 + $0x4e0] sm:$0xff]
        %1924 = vst [vmem:[%s1610 + $0x4e0] sm:$0xff] %v1923
        %v1925 = vld [vmem:[%s1609 + $0x4e8] sm:$0xff]
        %1926 = vst [vmem:[%s1610 + $0x4e8] sm:$0xff] %v1925
        %v1927 = vld [vmem:[%s1609 + $0x4f0] sm:$0xff]
        %1928 = vst [vmem:[%s1610 + $0x4f0] sm:$0xff] %v1927
        %v1929 = vld [vmem:[%s1609 + $0x4f8] sm:$0xff]
        %1930 = vst [vmem:[%s1610 + $0x4f8] sm:$0xff] %v1929
        %v1931 = vld [vmem:[%s1609 + $0x500] sm:$0xff]
        %1932 = vst [vmem:[%s1610 + $0x500] sm:$0xff] %v1931
        %v1933 = vld [vmem:[%s1609 + $0x508] sm:$0xff]
        %1934 = vst [vmem:[%s1610 + $0x508] sm:$0xff] %v1933
        %v1935 = vld [vmem:[%s1609 + $0x510] sm:$0xff]
        %1936 = vst [vmem:[%s1610 + $0x510] sm:$0xff] %v1935
        %v1937 = vld [vmem:[%s1609 + $0x518] sm:$0xff]
        %1938 = vst [vmem:[%s1610 + $0x518] sm:$0xff] %v1937
        %v1939 = vld [vmem:[%s1609 + $0x520] sm:$0xff]
        %1940 = vst [vmem:[%s1610 + $0x520] sm:$0xff] %v1939
        %v1941 = vld [vmem:[%s1609 + $0x528] sm:$0xff]
        %1942 = vst [vmem:[%s1610 + $0x528] sm:$0xff] %v1941
        %v1943 = vld [vmem:[%s1609 + $0x530] sm:$0xff]
        %1944 = vst [vmem:[%s1610 + $0x530] sm:$0xff] %v1943
        %v1945 = vld [vmem:[%s1609 + $0x538] sm:$0xff]
        %1946 = vst [vmem:[%s1610 + $0x538] sm:$0xff] %v1945
        %v1947 = vld [vmem:[%s1609 + $0x540] sm:$0xff]
        %1948 = vst [vmem:[%s1610 + $0x540] sm:$0xff] %v1947
        %v1949 = vld [vmem:[%s1609 + $0x548] sm:$0xff]
        %1950 = vst [vmem:[%s1610 + $0x548] sm:$0xff] %v1949
        %v1951 = vld [vmem:[%s1609 + $0x550] sm:$0xff]
        %1952 = vst [vmem:[%s1610 + $0x550] sm:$0xff] %v1951
        %v1953 = vld [vmem:[%s1609 + $0x558] sm:$0xff]
        %1954 = vst [vmem:[%s1610 + $0x558] sm:$0xff] %v1953
        %v1955 = vld [vmem:[%s1609 + $0x560] sm:$0xff]
        %1956 = vst [vmem:[%s1610 + $0x560] sm:$0xff] %v1955
        %v1957 = vld [vmem:[%s1609 + $0x568] sm:$0xff]
        %1958 = vst [vmem:[%s1610 + $0x568] sm:$0xff] %v1957
        %v1959 = vld [vmem:[%s1609 + $0x570] sm:$0xff]
        %1960 = vst [vmem:[%s1610 + $0x570] sm:$0xff] %v1959
        %v1961 = vld [vmem:[%s1609 + $0x578] sm:$0xff]
        %1962 = vst [vmem:[%s1610 + $0x578] sm:$0xff] %v1961
        %v1963 = vld [vmem:[%s1609 + $0x580] sm:$0xff]
        %1964 = vst [vmem:[%s1610 + $0x580] sm:$0xff] %v1963
        %v1965 = vld [vmem:[%s1609 + $0x588] sm:$0xff]
        %1966 = vst [vmem:[%s1610 + $0x588] sm:$0xff] %v1965
        %v1967 = vld [vmem:[%s1609 + $0x590] sm:$0xff]
        %1968 = vst [vmem:[%s1610 + $0x590] sm:$0xff] %v1967
        %v1969 = vld [vmem:[%s1609 + $0x598] sm:$0xff]
        %1970 = vst [vmem:[%s1610 + $0x598] sm:$0xff] %v1969
        %v1971 = vld [vmem:[%s1609 + $0x5a0] sm:$0xff]
        %1972 = vst [vmem:[%s1610 + $0x5a0] sm:$0xff] %v1971
        %v1973 = vld [vmem:[%s1609 + $0x5a8] sm:$0xff]
        %1974 = vst [vmem:[%s1610 + $0x5a8] sm:$0xff] %v1973
        %v1975 = vld [vmem:[%s1609 + $0x5b0] sm:$0xff]
        %1976 = vst [vmem:[%s1610 + $0x5b0] sm:$0xff] %v1975
        %v1977 = vld [vmem:[%s1609 + $0x5b8] sm:$0xff]
        %1978 = vst [vmem:[%s1610 + $0x5b8] sm:$0xff] %v1977
        %v1979 = vld [vmem:[%s1609 + $0x5c0] sm:$0xff]
        %1980 = vst [vmem:[%s1610 + $0x5c0] sm:$0xff] %v1979
        %v1981 = vld [vmem:[%s1609 + $0x5c8] sm:$0xff]
        %1982 = vst [vmem:[%s1610 + $0x5c8] sm:$0xff] %v1981
        %v1983 = vld [vmem:[%s1609 + $0x5d0] sm:$0xff]
        %1984 = vst [vmem:[%s1610 + $0x5d0] sm:$0xff] %v1983
        %v1985 = vld [vmem:[%s1609 + $0x5d8] sm:$0xff]
        %1986 = vst [vmem:[%s1610 + $0x5d8] sm:$0xff] %v1985
        %v1987 = vld [vmem:[%s1609 + $0x5e0] sm:$0xff]
        %1988 = vst [vmem:[%s1610 + $0x5e0] sm:$0xff] %v1987
        %v1989 = vld [vmem:[%s1609 + $0x5e8] sm:$0xff]
        %1990 = vst [vmem:[%s1610 + $0x5e8] sm:$0xff] %v1989
        %v1991 = vld [vmem:[%s1609 + $0x5f0] sm:$0xff]
        %1992 = vst [vmem:[%s1610 + $0x5f0] sm:$0xff] %v1991
        %v1993 = vld [vmem:[%s1609 + $0x5f8] sm:$0xff]
        %1994 = vst [vmem:[%s1610 + $0x5f8] sm:$0xff] %v1993
      $region84: #{vgg_tinyserver_forward.1} parent=78 // loop_footer
        %s1608 = sadd.s32 1, %s1604
      $region85: #{vgg_tinyserver_forward.1} parent=78 // loop_footer_branch
        %1603 = sbr.rel target = $region81
      $region86: #{vgg_tinyserver_forward.1} parent=78 // loop_exit
        _
    $region79: #{vgg_tinyserver_forward.1} parent=1 // pred_fallthru
      _
    // Predicated region
    $region87: #{vgg_tinyserver_forward.1} parent=1 // pred_check
      _
    $region88: #{vgg_tinyserver_forward.1} parent=1 // pred_check_branch
      %1996 = sbr.rel target = $region90
    $region89: #{vgg_tinyserver_forward.1} parent=1 // pred_region
      _
    $region90: #{vgg_tinyserver_forward.1} parent=1 // pred_fallthru
      _
    // Predicated region
    $region91: #{vgg_tinyserver_forward.1} parent=1 // pred_check
      _
    $region92: #{vgg_tinyserver_forward.1} parent=1 // pred_check_branch
      %1999 = sbr.rel (0) target = $region94
    $region93: #{vgg_tinyserver_forward.1} parent=1 // pred_region
      %2000 = vsyncadd [#allocation4], 24576
    $region94: #{vgg_tinyserver_forward.1} parent=1 // pred_fallthru
      _
    %s2001 = sshll.u32 %s1292, 4
    %2002 = dma.done %s889, %s2001
    %s2003 = scalar_lea.vmem [#allocation2], 40
    %v2004 = vld [vmem:[%s2003] sm:$0xff]
    %s2005 = scalar_lea.vmem [#allocation2], 56
    %v2006 = vld [vmem:[%s2005] sm:$0xff]
    %s2007 = scalar_lea.vmem [#allocation2], 120
    %v2008 = vld [vmem:[%s2007] sm:$0xff]
    %s2009 = scalar_lea.vmem [#allocation2], 136
    %v2010 = vld [vmem:[%s2009] sm:$0xff]
    %v2012 = vunpack.c.l.b16 %v2004
    %v2013 = vunpack.c.h.b16 %v2004
    %v2014 = vpack.c.b16 %v2012, %v2012
    %v2015 = vpack.c.b16 %v2013, %v2013
    %v2017 = vunpack.c.l.b16 %v2006
    %v2018 = vunpack.c.h.b16 %v2006
    %v2019 = vpack.c.b16 %v2017, %v2017
    %v2020 = vpack.c.b16 %v2018, %v2018
    %v2022 = vunpack.c.l.b16 %v2008
    %v2023 = vunpack.c.h.b16 %v2008
    %v2024 = vpack.c.b16 %v2022, %v2022
    %v2025 = vpack.c.b16 %v2023, %v2023
    %v2027 = vunpack.c.l.b16 %v2010
    %v2028 = vunpack.c.h.b16 %v2010
    %v2029 = vpack.c.b16 %v2027, %v2027
    %v2030 = vpack.c.b16 %v2028, %v2028
    %v2033 = vsel %vm1322, %v2014, %v2019
    %v2037 = vsel %vm1322, %v2015, %v2020
    %v2041 = vsel %vm1322, %v2024, %v2029
    %v2045 = vsel %vm1322, %v2025, %v2030
    %v2047 = vld [vmem:[%s561] sm:$0xff]
    %s2048 = scalar_lea.vmem [#allocation2], 64
    %v2049 = vld [vmem:[%s2048] sm:$0xff]
    %v2050 = vld [vmem:[%s775] sm:$0xff]
    %s2051 = scalar_lea.vmem [#allocation2], 144
    %v2052 = vld [vmem:[%s2051] sm:$0xff]
    %v2054 = vunpack.c.l.b16 %v2047
    %v2055 = vunpack.c.h.b16 %v2047
    %v2056 = vpack.c.b16 %v2054, %v2054
    %v2057 = vpack.c.b16 %v2055, %v2055
    %v2059 = vunpack.c.l.b16 %v2049
    %v2060 = vunpack.c.h.b16 %v2049
    %v2061 = vpack.c.b16 %v2059, %v2059
    %v2062 = vpack.c.b16 %v2060, %v2060
    %v2064 = vunpack.c.l.b16 %v2050
    %v2065 = vunpack.c.h.b16 %v2050
    %v2066 = vpack.c.b16 %v2064, %v2064
    %v2067 = vpack.c.b16 %v2065, %v2065
    %v2069 = vunpack.c.l.b16 %v2052
    %v2070 = vunpack.c.h.b16 %v2052
    %v2071 = vpack.c.b16 %v2069, %v2069
    %v2072 = vpack.c.b16 %v2070, %v2070
    %v2075 = vsel %vm1322, %v2056, %v2061
    %v2079 = vsel %vm1322, %v2057, %v2062
    %v2083 = vsel %vm1322, %v2066, %v2071
    %v2087 = vsel %vm1322, %v2067, %v2072
    %s2089 = scalar_lea.vmem [#allocation2], 72
    %v2090 = vld [vmem:[%s2089] sm:$0xff]
    %s2091 = scalar_lea.vmem [#allocation2], 152
    %v2092 = vld [vmem:[%s2091] sm:$0xff]
    %v2094 = vunpack.c.l.b16 %v2090
    %v2095 = vunpack.c.h.b16 %v2090
    %v2096 = vpack.c.b16 %v2094, %v2094
    %v2097 = vpack.c.b16 %v2095, %v2095
    %v2099 = vunpack.c.l.b16 %v2092
    %v2100 = vunpack.c.h.b16 %v2092
    %v2101 = vpack.c.b16 %v2099, %v2099
    %v2102 = vpack.c.b16 %v2100, %v2100
    %v2104 = vsel %vm1322, %v2019, %v2096
    %v2107 = vsel %vm1322, %v2020, %v2097
    %v2110 = vsel %vm1322, %v2029, %v2101
    %v2113 = vsel %vm1322, %v2030, %v2102
    %v2115 = vld [vmem:[%s888] sm:$0xff]
    %v2116 = vld [vmem:[%s888 + $0x8] sm:$0xff]
    %v2117 = vld [vmem:[%s888 + $0x10] sm:$0xff]
    %v2118 = vld [vmem:[%s888 + $0x18] sm:$0xff]
    %v2119 = vld [vmem:[%s888 + $0x20] sm:$0xff]
    %v2120 = vld [vmem:[%s888 + $0x28] sm:$0xff]
    %v2121 = vld [vmem:[%s888 + $0x30] sm:$0xff]
    %v2122 = vld [vmem:[%s888 + $0x38] sm:$0xff]
    %v2123 = vld [vmem:[%s888 + $0x40] sm:$0xff]
    %v2124 = vld [vmem:[%s888 + $0x48] sm:$0xff]
    %v2125 = vld [vmem:[%s888 + $0x50] sm:$0xff]
    %v2126 = vld [vmem:[%s888 + $0x58] sm:$0xff]
    %v2127 = vld [vmem:[%s888 + $0x60] sm:$0xff]
    %v2128 = vld [vmem:[%s888 + $0x68] sm:$0xff]
    %v2129 = vld [vmem:[%s888 + $0x70] sm:$0xff]
    %v2130 = vld [vmem:[%s888 + $0x78] sm:$0xff]
    %v2131 = vld [vmem:[%s888 + $0x80] sm:$0xff]
    %v2132 = vld [vmem:[%s888 + $0x88] sm:$0xff]
    %v2133 = vld [vmem:[%s888 + $0x90] sm:$0xff]
    %v2134 = vld [vmem:[%s888 + $0x98] sm:$0xff]
    %v2135 = vld [vmem:[%s888 + $0xa0] sm:$0xff]
    %v2136 = vld [vmem:[%s888 + $0xa8] sm:$0xff]
    %v2137 = vld [vmem:[%s888 + $0xb0] sm:$0xff]
    %v2138 = vld [vmem:[%s888 + $0xb8] sm:$0xff]
    %v2139 = vld [vmem:[%s888 + $0xc0] sm:$0xff]
    %v2140 = vld [vmem:[%s888 + $0xc8] sm:$0xff]
    %v2141 = vld [vmem:[%s888 + $0xd0] sm:$0xff]
    %v2142 = vld [vmem:[%s888 + $0xd8] sm:$0xff]
    %v2143 = vld [vmem:[%s888 + $0xe0] sm:$0xff]
    %v2144 = vld [vmem:[%s888 + $0xe8] sm:$0xff]
    %v2145 = vld [vmem:[%s888 + $0xf0] sm:$0xff]
    %v2146 = vld [vmem:[%s888 + $0xf8] sm:$0xff]
    %v2147 = vld [vmem:[%s888 + $0x100] sm:$0xff]
    %v2148 = vld [vmem:[%s888 + $0x108] sm:$0xff]
    %v2149 = vld [vmem:[%s888 + $0x110] sm:$0xff]
    %v2150 = vld [vmem:[%s888 + $0x118] sm:$0xff]
    %v2151 = vld [vmem:[%s888 + $0x120] sm:$0xff]
    %v2152 = vld [vmem:[%s888 + $0x128] sm:$0xff]
    %v2153 = vld [vmem:[%s888 + $0x130] sm:$0xff]
    %v2154 = vld [vmem:[%s888 + $0x138] sm:$0xff]
    %v2155 = vld [vmem:[%s888 + $0x140] sm:$0xff]
    %v2156 = vld [vmem:[%s888 + $0x148] sm:$0xff]
    %v2157 = vld [vmem:[%s888 + $0x150] sm:$0xff]
    %v2158 = vld [vmem:[%s888 + $0x158] sm:$0xff]
    %v2159 = vld [vmem:[%s888 + $0x160] sm:$0xff]
    %v2160 = vld [vmem:[%s888 + $0x168] sm:$0xff]
    %v2161 = vld [vmem:[%s888 + $0x170] sm:$0xff]
    %v2162 = vld [vmem:[%s888 + $0x178] sm:$0xff]
    %v2163 = vld [vmem:[%s888 + $0x180] sm:$0xff]
    %v2164 = vld [vmem:[%s888 + $0x188] sm:$0xff]
    %v2165 = vld [vmem:[%s888 + $0x190] sm:$0xff]
    %v2166 = vld [vmem:[%s888 + $0x198] sm:$0xff]
    %v2167 = vld [vmem:[%s888 + $0x1a0] sm:$0xff]
    %v2168 = vld [vmem:[%s888 + $0x1a8] sm:$0xff]
    %v2169 = vld [vmem:[%s888 + $0x1b0] sm:$0xff]
    %v2170 = vld [vmem:[%s888 + $0x1b8] sm:$0xff]
    %v2171 = vld [vmem:[%s888 + $0x1c0] sm:$0xff]
    %v2172 = vld [vmem:[%s888 + $0x1c8] sm:$0xff]
    %v2173 = vld [vmem:[%s888 + $0x1d0] sm:$0xff]
    %v2174 = vld [vmem:[%s888 + $0x1d8] sm:$0xff]
    %v2175 = vld [vmem:[%s888 + $0x1e0] sm:$0xff]
    %v2176 = vld [vmem:[%s888 + $0x1e8] sm:$0xff]
    %v2177 = vld [vmem:[%s888 + $0x1f0] sm:$0xff]
    %v2178 = vld [vmem:[%s888 + $0x1f8] sm:$0xff]
    %v2179 = vld [vmem:[%s888 + $0x200] sm:$0xff]
    %v2180 = vld [vmem:[%s888 + $0x208] sm:$0xff]
    %v2181 = vld [vmem:[%s888 + $0x210] sm:$0xff]
    %v2182 = vld [vmem:[%s888 + $0x218] sm:$0xff]
    %v2183 = vld [vmem:[%s888 + $0x220] sm:$0xff]
    %v2184 = vld [vmem:[%s888 + $0x228] sm:$0xff]
    %v2185 = vld [vmem:[%s888 + $0x230] sm:$0xff]
    %v2186 = vld [vmem:[%s888 + $0x238] sm:$0xff]
    %v2187 = vld [vmem:[%s888 + $0x240] sm:$0xff]
    %v2188 = vld [vmem:[%s888 + $0x248] sm:$0xff]
    %v2189 = vld [vmem:[%s888 + $0x250] sm:$0xff]
    %v2190 = vld [vmem:[%s888 + $0x258] sm:$0xff]
    %v2191 = vld [vmem:[%s888 + $0x260] sm:$0xff]
    %v2192 = vld [vmem:[%s888 + $0x268] sm:$0xff]
    %v2193 = vld [vmem:[%s888 + $0x270] sm:$0xff]
    %v2194 = vld [vmem:[%s888 + $0x278] sm:$0xff]
    %v2195 = vld [vmem:[%s888 + $0x280] sm:$0xff]
    %v2196 = vld [vmem:[%s888 + $0x288] sm:$0xff]
    %v2197 = vld [vmem:[%s888 + $0x290] sm:$0xff]
    %v2198 = vld [vmem:[%s888 + $0x298] sm:$0xff]
    %v2199 = vld [vmem:[%s888 + $0x2a0] sm:$0xff]
    %v2200 = vld [vmem:[%s888 + $0x2a8] sm:$0xff]
    %v2201 = vld [vmem:[%s888 + $0x2b0] sm:$0xff]
    %v2202 = vld [vmem:[%s888 + $0x2b8] sm:$0xff]
    %v2203 = vld [vmem:[%s888 + $0x2c0] sm:$0xff]
    %v2204 = vld [vmem:[%s888 + $0x2c8] sm:$0xff]
    %v2205 = vld [vmem:[%s888 + $0x2d0] sm:$0xff]
    %v2206 = vld [vmem:[%s888 + $0x2d8] sm:$0xff]
    %v2207 = vld [vmem:[%s888 + $0x2e0] sm:$0xff]
    %v2208 = vld [vmem:[%s888 + $0x2e8] sm:$0xff]
    %v2209 = vld [vmem:[%s888 + $0x2f0] sm:$0xff]
    %v2210 = vld [vmem:[%s888 + $0x2f8] sm:$0xff]
    %v2211 = vld [vmem:[%s888 + $0x300] sm:$0xff]
    %v2212 = vld [vmem:[%s888 + $0x308] sm:$0xff]
    %v2213 = vld [vmem:[%s888 + $0x310] sm:$0xff]
    %v2214 = vld [vmem:[%s888 + $0x318] sm:$0xff]
    %v2215 = vld [vmem:[%s888 + $0x320] sm:$0xff]
    %v2216 = vld [vmem:[%s888 + $0x328] sm:$0xff]
    %v2217 = vld [vmem:[%s888 + $0x330] sm:$0xff]
    %v2218 = vld [vmem:[%s888 + $0x338] sm:$0xff]
    %v2219 = vld [vmem:[%s888 + $0x340] sm:$0xff]
    %v2220 = vld [vmem:[%s888 + $0x348] sm:$0xff]
    %v2221 = vld [vmem:[%s888 + $0x350] sm:$0xff]
    %v2222 = vld [vmem:[%s888 + $0x358] sm:$0xff]
    %v2223 = vld [vmem:[%s888 + $0x360] sm:$0xff]
    %v2224 = vld [vmem:[%s888 + $0x368] sm:$0xff]
    %v2225 = vld [vmem:[%s888 + $0x370] sm:$0xff]
    %v2226 = vld [vmem:[%s888 + $0x378] sm:$0xff]
    %v2227 = vld [vmem:[%s888 + $0x380] sm:$0xff]
    %v2228 = vld [vmem:[%s888 + $0x388] sm:$0xff]
    %v2229 = vld [vmem:[%s888 + $0x390] sm:$0xff]
    %v2230 = vld [vmem:[%s888 + $0x398] sm:$0xff]
    %v2231 = vld [vmem:[%s888 + $0x3a0] sm:$0xff]
    %v2232 = vld [vmem:[%s888 + $0x3a8] sm:$0xff]
    %v2233 = vld [vmem:[%s888 + $0x3b0] sm:$0xff]
    %v2234 = vld [vmem:[%s888 + $0x3b8] sm:$0xff]
    %v2235 = vld [vmem:[%s888 + $0x3c0] sm:$0xff]
    %v2236 = vld [vmem:[%s888 + $0x3c8] sm:$0xff]
    %v2237 = vld [vmem:[%s888 + $0x3d0] sm:$0xff]
    %v2238 = vld [vmem:[%s888 + $0x3d8] sm:$0xff]
    %v2239 = vld [vmem:[%s888 + $0x3e0] sm:$0xff]
    %v2240 = vld [vmem:[%s888 + $0x3e8] sm:$0xff]
    %v2241 = vld [vmem:[%s888 + $0x3f0] sm:$0xff]
    %v2242 = vld [vmem:[%s888 + $0x3f8] sm:$0xff]
    %v2243 = vld [vmem:[%s888 + $0x400] sm:$0xff]
    %v2244 = vld [vmem:[%s888 + $0x408] sm:$0xff]
    %v2245 = vld [vmem:[%s888 + $0x410] sm:$0xff]
    %v2246 = vld [vmem:[%s888 + $0x418] sm:$0xff]
    %v2247 = vld [vmem:[%s888 + $0x420] sm:$0xff]
    %v2248 = vld [vmem:[%s888 + $0x428] sm:$0xff]
    %v2249 = vld [vmem:[%s888 + $0x430] sm:$0xff]
    %v2250 = vld [vmem:[%s888 + $0x438] sm:$0xff]
    %v2251 = vld [vmem:[%s888 + $0x440] sm:$0xff]
    %v2252 = vld [vmem:[%s888 + $0x448] sm:$0xff]
    %v2253 = vld [vmem:[%s888 + $0x450] sm:$0xff]
    %v2254 = vld [vmem:[%s888 + $0x458] sm:$0xff]
    %v2255 = vld [vmem:[%s888 + $0x460] sm:$0xff]
    %v2256 = vld [vmem:[%s888 + $0x468] sm:$0xff]
    %v2257 = vld [vmem:[%s888 + $0x470] sm:$0xff]
    %v2258 = vld [vmem:[%s888 + $0x478] sm:$0xff]
    %v2259 = vld [vmem:[%s888 + $0x480] sm:$0xff]
    %v2260 = vld [vmem:[%s888 + $0x488] sm:$0xff]
    %v2261 = vld [vmem:[%s888 + $0x490] sm:$0xff]
    %v2262 = vld [vmem:[%s888 + $0x498] sm:$0xff]
    %v2263 = vld [vmem:[%s888 + $0x4a0] sm:$0xff]
    %v2264 = vld [vmem:[%s888 + $0x4a8] sm:$0xff]
    %v2265 = vld [vmem:[%s888 + $0x4b0] sm:$0xff]
    %v2266 = vld [vmem:[%s888 + $0x4b8] sm:$0xff]
    %v2267 = vld [vmem:[%s888 + $0x4c0] sm:$0xff]
    %v2268 = vld [vmem:[%s888 + $0x4c8] sm:$0xff]
    %v2269 = vld [vmem:[%s888 + $0x4d0] sm:$0xff]
    %v2270 = vld [vmem:[%s888 + $0x4d8] sm:$0xff]
    %v2271 = vld [vmem:[%s888 + $0x4e0] sm:$0xff]
    %v2272 = vld [vmem:[%s888 + $0x4e8] sm:$0xff]
    %v2273 = vld [vmem:[%s888 + $0x4f0] sm:$0xff]
    %v2274 = vld [vmem:[%s888 + $0x4f8] sm:$0xff]
    %v2275 = vld [vmem:[%s888 + $0x500] sm:$0xff]
    %v2276 = vld [vmem:[%s888 + $0x508] sm:$0xff]
    %v2277 = vld [vmem:[%s888 + $0x510] sm:$0xff]
    %v2278 = vld [vmem:[%s888 + $0x518] sm:$0xff]
    %v2279 = vld [vmem:[%s888 + $0x520] sm:$0xff]
    %v2280 = vld [vmem:[%s888 + $0x528] sm:$0xff]
    %v2281 = vld [vmem:[%s888 + $0x530] sm:$0xff]
    %v2282 = vld [vmem:[%s888 + $0x538] sm:$0xff]
    %v2283 = vld [vmem:[%s888 + $0x540] sm:$0xff]
    %v2284 = vld [vmem:[%s888 + $0x548] sm:$0xff]
    %v2285 = vld [vmem:[%s888 + $0x550] sm:$0xff]
    %v2286 = vld [vmem:[%s888 + $0x558] sm:$0xff]
    %v2287 = vld [vmem:[%s888 + $0x560] sm:$0xff]
    %v2288 = vld [vmem:[%s888 + $0x568] sm:$0xff]
    %v2289 = vld [vmem:[%s888 + $0x570] sm:$0xff]
    %v2290 = vld [vmem:[%s888 + $0x578] sm:$0xff]
    %v2291 = vld [vmem:[%s888 + $0x580] sm:$0xff]
    %v2292 = vld [vmem:[%s888 + $0x588] sm:$0xff]
    %v2293 = vld [vmem:[%s888 + $0x590] sm:$0xff]
    %v2294 = vld [vmem:[%s888 + $0x598] sm:$0xff]
    %v2295 = vld [vmem:[%s888 + $0x5a0] sm:$0xff]
    %v2296 = vld [vmem:[%s888 + $0x5a8] sm:$0xff]
    %v2297 = vld [vmem:[%s888 + $0x5b0] sm:$0xff]
    %v2298 = vld [vmem:[%s888 + $0x5b8] sm:$0xff]
    %v2299 = vld [vmem:[%s888 + $0x5c0] sm:$0xff]
    %v2300 = vld [vmem:[%s888 + $0x5c8] sm:$0xff]
    %v2301 = vld [vmem:[%s888 + $0x5d0] sm:$0xff]
    %v2302 = vld [vmem:[%s888 + $0x5d8] sm:$0xff]
    %v2303 = vld [vmem:[%s888 + $0x5e0] sm:$0xff]
    %v2304 = vld [vmem:[%s888 + $0x5e8] sm:$0xff]
    %v2305 = vld [vmem:[%s888 + $0x5f0] sm:$0xff]
    %v2306 = vld [vmem:[%s888 + $0x5f8] sm:$0xff]
    %v2499 = vunpack.c.l.b16 %v2115
    %v2500 = vunpack.c.h.b16 %v2115
    %v2501 = vunpack.c.l.b16 %v2116
    %v2502 = vunpack.c.h.b16 %v2116
    %v2503 = vunpack.c.l.b16 %v2117
    %v2504 = vunpack.c.h.b16 %v2117
    %v2505 = vunpack.c.l.b16 %v2118
    %v2506 = vunpack.c.h.b16 %v2118
    %v2507 = vunpack.c.l.b16 %v2119
    %v2508 = vunpack.c.h.b16 %v2119
    %v2509 = vunpack.c.l.b16 %v2120
    %v2510 = vunpack.c.h.b16 %v2120
    %v2511 = vunpack.c.l.b16 %v2121
    %v2512 = vunpack.c.h.b16 %v2121
    %v2513 = vunpack.c.l.b16 %v2122
    %v2514 = vunpack.c.h.b16 %v2122
    %v2515 = vunpack.c.l.b16 %v2123
    %v2516 = vunpack.c.h.b16 %v2123
    %v2517 = vunpack.c.l.b16 %v2124
    %v2518 = vunpack.c.h.b16 %v2124
    %v2519 = vunpack.c.l.b16 %v2125
    %v2520 = vunpack.c.h.b16 %v2125
    %v2521 = vunpack.c.l.b16 %v2126
    %v2522 = vunpack.c.h.b16 %v2126
    %v2523 = vunpack.c.l.b16 %v2127
    %v2524 = vunpack.c.h.b16 %v2127
    %v2525 = vunpack.c.l.b16 %v2128
    %v2526 = vunpack.c.h.b16 %v2128
    %v2527 = vunpack.c.l.b16 %v2129
    %v2528 = vunpack.c.h.b16 %v2129
    %v2529 = vunpack.c.l.b16 %v2130
    %v2530 = vunpack.c.h.b16 %v2130
    %v2531 = vunpack.c.l.b16 %v2131
    %v2532 = vunpack.c.h.b16 %v2131
    %v2533 = vunpack.c.l.b16 %v2132
    %v2534 = vunpack.c.h.b16 %v2132
    %v2535 = vunpack.c.l.b16 %v2133
    %v2536 = vunpack.c.h.b16 %v2133
    %v2537 = vunpack.c.l.b16 %v2134
    %v2538 = vunpack.c.h.b16 %v2134
    %v2539 = vunpack.c.l.b16 %v2135
    %v2540 = vunpack.c.h.b16 %v2135
    %v2541 = vunpack.c.l.b16 %v2136
    %v2542 = vunpack.c.h.b16 %v2136
    %v2543 = vunpack.c.l.b16 %v2137
    %v2544 = vunpack.c.h.b16 %v2137
    %v2545 = vunpack.c.l.b16 %v2138
    %v2546 = vunpack.c.h.b16 %v2138
    %v2547 = vunpack.c.l.b16 %v2139
    %v2548 = vunpack.c.h.b16 %v2139
    %v2549 = vunpack.c.l.b16 %v2140
    %v2550 = vunpack.c.h.b16 %v2140
    %v2551 = vunpack.c.l.b16 %v2141
    %v2552 = vunpack.c.h.b16 %v2141
    %v2553 = vunpack.c.l.b16 %v2142
    %v2554 = vunpack.c.h.b16 %v2142
    %v2555 = vunpack.c.l.b16 %v2143
    %v2556 = vunpack.c.h.b16 %v2143
    %v2557 = vunpack.c.l.b16 %v2144
    %v2558 = vunpack.c.h.b16 %v2144
    %v2559 = vunpack.c.l.b16 %v2145
    %v2560 = vunpack.c.h.b16 %v2145
    %v2561 = vunpack.c.l.b16 %v2146
    %v2562 = vunpack.c.h.b16 %v2146
    %v2563 = vunpack.c.l.b16 %v2147
    %v2564 = vunpack.c.h.b16 %v2147
    %v2565 = vunpack.c.l.b16 %v2148
    %v2566 = vunpack.c.h.b16 %v2148
    %v2567 = vunpack.c.l.b16 %v2149
    %v2568 = vunpack.c.h.b16 %v2149
    %v2569 = vunpack.c.l.b16 %v2150
    %v2570 = vunpack.c.h.b16 %v2150
    %v2571 = vunpack.c.l.b16 %v2151
    %v2572 = vunpack.c.h.b16 %v2151
    %v2573 = vunpack.c.l.b16 %v2152
    %v2574 = vunpack.c.h.b16 %v2152
    %v2575 = vunpack.c.l.b16 %v2153
    %v2576 = vunpack.c.h.b16 %v2153
    %v2577 = vunpack.c.l.b16 %v2154
    %v2578 = vunpack.c.h.b16 %v2154
    %v2579 = vunpack.c.l.b16 %v2155
    %v2580 = vunpack.c.h.b16 %v2155
    %v2581 = vunpack.c.l.b16 %v2156
    %v2582 = vunpack.c.h.b16 %v2156
    %v2583 = vunpack.c.l.b16 %v2157
    %v2584 = vunpack.c.h.b16 %v2157
    %v2585 = vunpack.c.l.b16 %v2158
    %v2586 = vunpack.c.h.b16 %v2158
    %v2587 = vunpack.c.l.b16 %v2159
    %v2588 = vunpack.c.h.b16 %v2159
    %v2589 = vunpack.c.l.b16 %v2160
    %v2590 = vunpack.c.h.b16 %v2160
    %v2591 = vunpack.c.l.b16 %v2161
    %v2592 = vunpack.c.h.b16 %v2161
    %v2593 = vunpack.c.l.b16 %v2162
    %v2594 = vunpack.c.h.b16 %v2162
    %v2595 = vunpack.c.l.b16 %v2163
    %v2596 = vunpack.c.h.b16 %v2163
    %v2597 = vunpack.c.l.b16 %v2164
    %v2598 = vunpack.c.h.b16 %v2164
    %v2599 = vunpack.c.l.b16 %v2165
    %v2600 = vunpack.c.h.b16 %v2165
    %v2601 = vunpack.c.l.b16 %v2166
    %v2602 = vunpack.c.h.b16 %v2166
    %v2603 = vunpack.c.l.b16 %v2167
    %v2604 = vunpack.c.h.b16 %v2167
    %v2605 = vunpack.c.l.b16 %v2168
    %v2606 = vunpack.c.h.b16 %v2168
    %v2607 = vunpack.c.l.b16 %v2169
    %v2608 = vunpack.c.h.b16 %v2169
    %v2609 = vunpack.c.l.b16 %v2170
    %v2610 = vunpack.c.h.b16 %v2170
    %v2611 = vunpack.c.l.b16 %v2171
    %v2612 = vunpack.c.h.b16 %v2171
    %v2613 = vunpack.c.l.b16 %v2172
    %v2614 = vunpack.c.h.b16 %v2172
    %v2615 = vunpack.c.l.b16 %v2173
    %v2616 = vunpack.c.h.b16 %v2173
    %v2617 = vunpack.c.l.b16 %v2174
    %v2618 = vunpack.c.h.b16 %v2174
    %v2619 = vunpack.c.l.b16 %v2175
    %v2620 = vunpack.c.h.b16 %v2175
    %v2621 = vunpack.c.l.b16 %v2176
    %v2622 = vunpack.c.h.b16 %v2176
    %v2623 = vunpack.c.l.b16 %v2177
    %v2624 = vunpack.c.h.b16 %v2177
    %v2625 = vunpack.c.l.b16 %v2178
    %v2626 = vunpack.c.h.b16 %v2178
    %v2627 = vunpack.c.l.b16 %v2179
    %v2628 = vunpack.c.h.b16 %v2179
    %v2629 = vunpack.c.l.b16 %v2180
    %v2630 = vunpack.c.h.b16 %v2180
    %v2631 = vunpack.c.l.b16 %v2181
    %v2632 = vunpack.c.h.b16 %v2181
    %v2633 = vunpack.c.l.b16 %v2182
    %v2634 = vunpack.c.h.b16 %v2182
    %v2635 = vunpack.c.l.b16 %v2183
    %v2636 = vunpack.c.h.b16 %v2183
    %v2637 = vunpack.c.l.b16 %v2184
    %v2638 = vunpack.c.h.b16 %v2184
    %v2639 = vunpack.c.l.b16 %v2185
    %v2640 = vunpack.c.h.b16 %v2185
    %v2641 = vunpack.c.l.b16 %v2186
    %v2642 = vunpack.c.h.b16 %v2186
    %v2643 = vunpack.c.l.b16 %v2187
    %v2644 = vunpack.c.h.b16 %v2187
    %v2645 = vunpack.c.l.b16 %v2188
    %v2646 = vunpack.c.h.b16 %v2188
    %v2647 = vunpack.c.l.b16 %v2189
    %v2648 = vunpack.c.h.b16 %v2189
    %v2649 = vunpack.c.l.b16 %v2190
    %v2650 = vunpack.c.h.b16 %v2190
    %v2651 = vunpack.c.l.b16 %v2191
    %v2652 = vunpack.c.h.b16 %v2191
    %v2653 = vunpack.c.l.b16 %v2192
    %v2654 = vunpack.c.h.b16 %v2192
    %v2655 = vunpack.c.l.b16 %v2193
    %v2656 = vunpack.c.h.b16 %v2193
    %v2657 = vunpack.c.l.b16 %v2194
    %v2658 = vunpack.c.h.b16 %v2194
    %v2659 = vunpack.c.l.b16 %v2195
    %v2660 = vunpack.c.h.b16 %v2195
    %v2661 = vunpack.c.l.b16 %v2196
    %v2662 = vunpack.c.h.b16 %v2196
    %v2663 = vunpack.c.l.b16 %v2197
    %v2664 = vunpack.c.h.b16 %v2197
    %v2665 = vunpack.c.l.b16 %v2198
    %v2666 = vunpack.c.h.b16 %v2198
    %v2667 = vunpack.c.l.b16 %v2199
    %v2668 = vunpack.c.h.b16 %v2199
    %v2669 = vunpack.c.l.b16 %v2200
    %v2670 = vunpack.c.h.b16 %v2200
    %v2671 = vunpack.c.l.b16 %v2201
    %v2672 = vunpack.c.h.b16 %v2201
    %v2673 = vunpack.c.l.b16 %v2202
    %v2674 = vunpack.c.h.b16 %v2202
    %v2675 = vunpack.c.l.b16 %v2203
    %v2676 = vunpack.c.h.b16 %v2203
    %v2677 = vunpack.c.l.b16 %v2204
    %v2678 = vunpack.c.h.b16 %v2204
    %v2679 = vunpack.c.l.b16 %v2205
    %v2680 = vunpack.c.h.b16 %v2205
    %v2681 = vunpack.c.l.b16 %v2206
    %v2682 = vunpack.c.h.b16 %v2206
    %v2683 = vunpack.c.l.b16 %v2207
    %v2684 = vunpack.c.h.b16 %v2207
    %v2685 = vunpack.c.l.b16 %v2208
    %v2686 = vunpack.c.h.b16 %v2208
    %v2687 = vunpack.c.l.b16 %v2209
    %v2688 = vunpack.c.h.b16 %v2209
    %v2689 = vunpack.c.l.b16 %v2210
    %v2690 = vunpack.c.h.b16 %v2210
    %v2691 = vunpack.c.l.b16 %v2211
    %v2692 = vunpack.c.h.b16 %v2211
    %v2693 = vunpack.c.l.b16 %v2212
    %v2694 = vunpack.c.h.b16 %v2212
    %v2695 = vunpack.c.l.b16 %v2213
    %v2696 = vunpack.c.h.b16 %v2213
    %v2697 = vunpack.c.l.b16 %v2214
    %v2698 = vunpack.c.h.b16 %v2214
    %v2699 = vunpack.c.l.b16 %v2215
    %v2700 = vunpack.c.h.b16 %v2215
    %v2701 = vunpack.c.l.b16 %v2216
    %v2702 = vunpack.c.h.b16 %v2216
    %v2703 = vunpack.c.l.b16 %v2217
    %v2704 = vunpack.c.h.b16 %v2217
    %v2705 = vunpack.c.l.b16 %v2218
    %v2706 = vunpack.c.h.b16 %v2218
    %v2707 = vunpack.c.l.b16 %v2219
    %v2708 = vunpack.c.h.b16 %v2219
    %v2709 = vunpack.c.l.b16 %v2220
    %v2710 = vunpack.c.h.b16 %v2220
    %v2711 = vunpack.c.l.b16 %v2221
    %v2712 = vunpack.c.h.b16 %v2221
    %v2713 = vunpack.c.l.b16 %v2222
    %v2714 = vunpack.c.h.b16 %v2222
    %v2715 = vunpack.c.l.b16 %v2223
    %v2716 = vunpack.c.h.b16 %v2223
    %v2717 = vunpack.c.l.b16 %v2224
    %v2718 = vunpack.c.h.b16 %v2224
    %v2719 = vunpack.c.l.b16 %v2225
    %v2720 = vunpack.c.h.b16 %v2225
    %v2721 = vunpack.c.l.b16 %v2226
    %v2722 = vunpack.c.h.b16 %v2226
    %v2723 = vunpack.c.l.b16 %v2227
    %v2724 = vunpack.c.h.b16 %v2227
    %v2725 = vunpack.c.l.b16 %v2228
    %v2726 = vunpack.c.h.b16 %v2228
    %v2727 = vunpack.c.l.b16 %v2229
    %v2728 = vunpack.c.h.b16 %v2229
    %v2729 = vunpack.c.l.b16 %v2230
    %v2730 = vunpack.c.h.b16 %v2230
    %v2731 = vunpack.c.l.b16 %v2231
    %v2732 = vunpack.c.h.b16 %v2231
    %v2733 = vunpack.c.l.b16 %v2232
    %v2734 = vunpack.c.h.b16 %v2232
    %v2735 = vunpack.c.l.b16 %v2233
    %v2736 = vunpack.c.h.b16 %v2233
    %v2737 = vunpack.c.l.b16 %v2234
    %v2738 = vunpack.c.h.b16 %v2234
    %v2739 = vunpack.c.l.b16 %v2235
    %v2740 = vunpack.c.h.b16 %v2235
    %v2741 = vunpack.c.l.b16 %v2236
    %v2742 = vunpack.c.h.b16 %v2236
    %v2743 = vunpack.c.l.b16 %v2237
    %v2744 = vunpack.c.h.b16 %v2237
    %v2745 = vunpack.c.l.b16 %v2238
    %v2746 = vunpack.c.h.b16 %v2238
    %v2747 = vunpack.c.l.b16 %v2239
    %v2748 = vunpack.c.h.b16 %v2239
    %v2749 = vunpack.c.l.b16 %v2240
    %v2750 = vunpack.c.h.b16 %v2240
    %v2751 = vunpack.c.l.b16 %v2241
    %v2752 = vunpack.c.h.b16 %v2241
    %v2753 = vunpack.c.l.b16 %v2242
    %v2754 = vunpack.c.h.b16 %v2242
    %v2755 = vunpack.c.l.b16 %v2243
    %v2756 = vunpack.c.h.b16 %v2243
    %v2757 = vunpack.c.l.b16 %v2244
    %v2758 = vunpack.c.h.b16 %v2244
    %v2759 = vunpack.c.l.b16 %v2245
    %v2760 = vunpack.c.h.b16 %v2245
    %v2761 = vunpack.c.l.b16 %v2246
    %v2762 = vunpack.c.h.b16 %v2246
    %v2763 = vunpack.c.l.b16 %v2247
    %v2764 = vunpack.c.h.b16 %v2247
    %v2765 = vunpack.c.l.b16 %v2248
    %v2766 = vunpack.c.h.b16 %v2248
    %v2767 = vunpack.c.l.b16 %v2249
    %v2768 = vunpack.c.h.b16 %v2249
    %v2769 = vunpack.c.l.b16 %v2250
    %v2770 = vunpack.c.h.b16 %v2250
    %v2771 = vunpack.c.l.b16 %v2251
    %v2772 = vunpack.c.h.b16 %v2251
    %v2773 = vunpack.c.l.b16 %v2252
    %v2774 = vunpack.c.h.b16 %v2252
    %v2775 = vunpack.c.l.b16 %v2253
    %v2776 = vunpack.c.h.b16 %v2253
    %v2777 = vunpack.c.l.b16 %v2254
    %v2778 = vunpack.c.h.b16 %v2254
    %v2779 = vunpack.c.l.b16 %v2255
    %v2780 = vunpack.c.h.b16 %v2255
    %v2781 = vunpack.c.l.b16 %v2256
    %v2782 = vunpack.c.h.b16 %v2256
    %v2783 = vunpack.c.l.b16 %v2257
    %v2784 = vunpack.c.h.b16 %v2257
    %v2785 = vunpack.c.l.b16 %v2258
    %v2786 = vunpack.c.h.b16 %v2258
    %v2787 = vunpack.c.l.b16 %v2259
    %v2788 = vunpack.c.h.b16 %v2259
    %v2789 = vunpack.c.l.b16 %v2260
    %v2790 = vunpack.c.h.b16 %v2260
    %v2791 = vunpack.c.l.b16 %v2261
    %v2792 = vunpack.c.h.b16 %v2261
    %v2793 = vunpack.c.l.b16 %v2262
    %v2794 = vunpack.c.h.b16 %v2262
    %v2795 = vunpack.c.l.b16 %v2263
    %v2796 = vunpack.c.h.b16 %v2263
    %v2797 = vunpack.c.l.b16 %v2264
    %v2798 = vunpack.c.h.b16 %v2264
    %v2799 = vunpack.c.l.b16 %v2265
    %v2800 = vunpack.c.h.b16 %v2265
    %v2801 = vunpack.c.l.b16 %v2266
    %v2802 = vunpack.c.h.b16 %v2266
    %v2803 = vunpack.c.l.b16 %v2267
    %v2804 = vunpack.c.h.b16 %v2267
    %v2805 = vunpack.c.l.b16 %v2268
    %v2806 = vunpack.c.h.b16 %v2268
    %v2807 = vunpack.c.l.b16 %v2269
    %v2808 = vunpack.c.h.b16 %v2269
    %v2809 = vunpack.c.l.b16 %v2270
    %v2810 = vunpack.c.h.b16 %v2270
    %v2811 = vunpack.c.l.b16 %v2271
    %v2812 = vunpack.c.h.b16 %v2271
    %v2813 = vunpack.c.l.b16 %v2272
    %v2814 = vunpack.c.h.b16 %v2272
    %v2815 = vunpack.c.l.b16 %v2273
    %v2816 = vunpack.c.h.b16 %v2273
    %v2817 = vunpack.c.l.b16 %v2274
    %v2818 = vunpack.c.h.b16 %v2274
    %v2819 = vunpack.c.l.b16 %v2275
    %v2820 = vunpack.c.h.b16 %v2275
    %v2821 = vunpack.c.l.b16 %v2276
    %v2822 = vunpack.c.h.b16 %v2276
    %v2823 = vunpack.c.l.b16 %v2277
    %v2824 = vunpack.c.h.b16 %v2277
    %v2825 = vunpack.c.l.b16 %v2278
    %v2826 = vunpack.c.h.b16 %v2278
    %v2827 = vunpack.c.l.b16 %v2279
    %v2828 = vunpack.c.h.b16 %v2279
    %v2829 = vunpack.c.l.b16 %v2280
    %v2830 = vunpack.c.h.b16 %v2280
    %v2831 = vunpack.c.l.b16 %v2281
    %v2832 = vunpack.c.h.b16 %v2281
    %v2833 = vunpack.c.l.b16 %v2282
    %v2834 = vunpack.c.h.b16 %v2282
    %v2835 = vunpack.c.l.b16 %v2283
    %v2836 = vunpack.c.h.b16 %v2283
    %v2837 = vunpack.c.l.b16 %v2284
    %v2838 = vunpack.c.h.b16 %v2284
    %v2839 = vunpack.c.l.b16 %v2285
    %v2840 = vunpack.c.h.b16 %v2285
    %v2841 = vunpack.c.l.b16 %v2286
    %v2842 = vunpack.c.h.b16 %v2286
    %v2843 = vunpack.c.l.b16 %v2287
    %v2844 = vunpack.c.h.b16 %v2287
    %v2845 = vunpack.c.l.b16 %v2288
    %v2846 = vunpack.c.h.b16 %v2288
    %v2847 = vunpack.c.l.b16 %v2289
    %v2848 = vunpack.c.h.b16 %v2289
    %v2849 = vunpack.c.l.b16 %v2290
    %v2850 = vunpack.c.h.b16 %v2290
    %v2851 = vunpack.c.l.b16 %v2291
    %v2852 = vunpack.c.h.b16 %v2291
    %v2853 = vunpack.c.l.b16 %v2292
    %v2854 = vunpack.c.h.b16 %v2292
    %v2855 = vunpack.c.l.b16 %v2293
    %v2856 = vunpack.c.h.b16 %v2293
    %v2857 = vunpack.c.l.b16 %v2294
    %v2858 = vunpack.c.h.b16 %v2294
    %v2859 = vunpack.c.l.b16 %v2295
    %v2860 = vunpack.c.h.b16 %v2295
    %v2861 = vunpack.c.l.b16 %v2296
    %v2862 = vunpack.c.h.b16 %v2296
    %v2863 = vunpack.c.l.b16 %v2297
    %v2864 = vunpack.c.h.b16 %v2297
    %v2865 = vunpack.c.l.b16 %v2298
    %v2866 = vunpack.c.h.b16 %v2298
    %v2867 = vunpack.c.l.b16 %v2299
    %v2868 = vunpack.c.h.b16 %v2299
    %v2869 = vunpack.c.l.b16 %v2300
    %v2870 = vunpack.c.h.b16 %v2300
    %v2871 = vunpack.c.l.b16 %v2301
    %v2872 = vunpack.c.h.b16 %v2301
    %v2873 = vunpack.c.l.b16 %v2302
    %v2874 = vunpack.c.h.b16 %v2302
    %v2875 = vunpack.c.l.b16 %v2303
    %v2876 = vunpack.c.h.b16 %v2303
    %v2877 = vunpack.c.l.b16 %v2304
    %v2878 = vunpack.c.h.b16 %v2304
    %v2879 = vunpack.c.l.b16 %v2305
    %v2880 = vunpack.c.h.b16 %v2305
    %v2881 = vunpack.c.l.b16 %v2306
    %v2882 = vunpack.c.h.b16 %v2306
    %v2883 = vpack.c.b16 %v2503, %v2499
    %v2884 = vpack.c.b16 %v2504, %v2500
    %v2885 = vpack.c.b16 %v2505, %v2501
    %v2886 = vpack.c.b16 %v2506, %v2502
    %v2887 = vpack.c.b16 %v2511, %v2507
    %v2888 = vpack.c.b16 %v2512, %v2508
    %v2889 = vpack.c.b16 %v2513, %v2509
    %v2890 = vpack.c.b16 %v2514, %v2510
    %v2891 = vpack.c.b16 %v2519, %v2515
    %v2892 = vpack.c.b16 %v2520, %v2516
    %v2893 = vpack.c.b16 %v2521, %v2517
    %v2894 = vpack.c.b16 %v2522, %v2518
    %v2895 = vpack.c.b16 %v2527, %v2523
    %v2896 = vpack.c.b16 %v2528, %v2524
    %v2897 = vpack.c.b16 %v2529, %v2525
    %v2898 = vpack.c.b16 %v2530, %v2526
    %v2899 = vpack.c.b16 %v2535, %v2531
    %v2900 = vpack.c.b16 %v2536, %v2532
    %v2901 = vpack.c.b16 %v2537, %v2533
    %v2902 = vpack.c.b16 %v2538, %v2534
    %v2903 = vpack.c.b16 %v2543, %v2539
    %v2904 = vpack.c.b16 %v2544, %v2540
    %v2905 = vpack.c.b16 %v2545, %v2541
    %v2906 = vpack.c.b16 %v2546, %v2542
    %v2907 = vpack.c.b16 %v2551, %v2547
    %v2908 = vpack.c.b16 %v2552, %v2548
    %v2909 = vpack.c.b16 %v2553, %v2549
    %v2910 = vpack.c.b16 %v2554, %v2550
    %v2911 = vpack.c.b16 %v2559, %v2555
    %v2912 = vpack.c.b16 %v2560, %v2556
    %v2913 = vpack.c.b16 %v2561, %v2557
    %v2914 = vpack.c.b16 %v2562, %v2558
    %v2915 = vpack.c.b16 %v2567, %v2563
    %v2916 = vpack.c.b16 %v2568, %v2564
    %v2917 = vpack.c.b16 %v2569, %v2565
    %v2918 = vpack.c.b16 %v2570, %v2566
    %v2919 = vpack.c.b16 %v2575, %v2571
    %v2920 = vpack.c.b16 %v2576, %v2572
    %v2921 = vpack.c.b16 %v2577, %v2573
    %v2922 = vpack.c.b16 %v2578, %v2574
    %v2923 = vpack.c.b16 %v2583, %v2579
    %v2924 = vpack.c.b16 %v2584, %v2580
    %v2925 = vpack.c.b16 %v2585, %v2581
    %v2926 = vpack.c.b16 %v2586, %v2582
    %v2927 = vpack.c.b16 %v2591, %v2587
    %v2928 = vpack.c.b16 %v2592, %v2588
    %v2929 = vpack.c.b16 %v2593, %v2589
    %v2930 = vpack.c.b16 %v2594, %v2590
    %v2931 = vpack.c.b16 %v2599, %v2595
    %v2932 = vpack.c.b16 %v2600, %v2596
    %v2933 = vpack.c.b16 %v2601, %v2597
    %v2934 = vpack.c.b16 %v2602, %v2598
    %v2935 = vpack.c.b16 %v2607, %v2603
    %v2936 = vpack.c.b16 %v2608, %v2604
    %v2937 = vpack.c.b16 %v2609, %v2605
    %v2938 = vpack.c.b16 %v2610, %v2606
    %v2939 = vpack.c.b16 %v2615, %v2611
    %v2940 = vpack.c.b16 %v2616, %v2612
    %v2941 = vpack.c.b16 %v2617, %v2613
    %v2942 = vpack.c.b16 %v2618, %v2614
    %v2943 = vpack.c.b16 %v2623, %v2619
    %v2944 = vpack.c.b16 %v2624, %v2620
    %v2945 = vpack.c.b16 %v2625, %v2621
    %v2946 = vpack.c.b16 %v2626, %v2622
    %v2947 = vpack.c.b16 %v2631, %v2627
    %v2948 = vpack.c.b16 %v2632, %v2628
    %v2949 = vpack.c.b16 %v2633, %v2629
    %v2950 = vpack.c.b16 %v2634, %v2630
    %v2951 = vpack.c.b16 %v2639, %v2635
    %v2952 = vpack.c.b16 %v2640, %v2636
    %v2953 = vpack.c.b16 %v2641, %v2637
    %v2954 = vpack.c.b16 %v2642, %v2638
    %v2955 = vpack.c.b16 %v2647, %v2643
    %v2956 = vpack.c.b16 %v2648, %v2644
    %v2957 = vpack.c.b16 %v2649, %v2645
    %v2958 = vpack.c.b16 %v2650, %v2646
    %v2959 = vpack.c.b16 %v2655, %v2651
    %v2960 = vpack.c.b16 %v2656, %v2652
    %v2961 = vpack.c.b16 %v2657, %v2653
    %v2962 = vpack.c.b16 %v2658, %v2654
    %v2963 = vpack.c.b16 %v2663, %v2659
    %v2964 = vpack.c.b16 %v2664, %v2660
    %v2965 = vpack.c.b16 %v2665, %v2661
    %v2966 = vpack.c.b16 %v2666, %v2662
    %v2967 = vpack.c.b16 %v2671, %v2667
    %v2968 = vpack.c.b16 %v2672, %v2668
    %v2969 = vpack.c.b16 %v2673, %v2669
    %v2970 = vpack.c.b16 %v2674, %v2670
    %v2971 = vpack.c.b16 %v2679, %v2675
    %v2972 = vpack.c.b16 %v2680, %v2676
    %v2973 = vpack.c.b16 %v2681, %v2677
    %v2974 = vpack.c.b16 %v2682, %v2678
    %v2975 = vpack.c.b16 %v2687, %v2683
    %v2976 = vpack.c.b16 %v2688, %v2684
    %v2977 = vpack.c.b16 %v2689, %v2685
    %v2978 = vpack.c.b16 %v2690, %v2686
    %v2979 = vpack.c.b16 %v2695, %v2691
    %v2980 = vpack.c.b16 %v2696, %v2692
    %v2981 = vpack.c.b16 %v2697, %v2693
    %v2982 = vpack.c.b16 %v2698, %v2694
    %v2983 = vpack.c.b16 %v2703, %v2699
    %v2984 = vpack.c.b16 %v2704, %v2700
    %v2985 = vpack.c.b16 %v2705, %v2701
    %v2986 = vpack.c.b16 %v2706, %v2702
    %v2987 = vpack.c.b16 %v2711, %v2707
    %v2988 = vpack.c.b16 %v2712, %v2708
    %v2989 = vpack.c.b16 %v2713, %v2709
    %v2990 = vpack.c.b16 %v2714, %v2710
    %v2991 = vpack.c.b16 %v2719, %v2715
    %v2992 = vpack.c.b16 %v2720, %v2716
    %v2993 = vpack.c.b16 %v2721, %v2717
    %v2994 = vpack.c.b16 %v2722, %v2718
    %v2995 = vpack.c.b16 %v2727, %v2723
    %v2996 = vpack.c.b16 %v2728, %v2724
    %v2997 = vpack.c.b16 %v2729, %v2725
    %v2998 = vpack.c.b16 %v2730, %v2726
    %v2999 = vpack.c.b16 %v2735, %v2731
    %v3000 = vpack.c.b16 %v2736, %v2732
    %v3001 = vpack.c.b16 %v2737, %v2733
    %v3002 = vpack.c.b16 %v2738, %v2734
    %v3003 = vpack.c.b16 %v2743, %v2739
    %v3004 = vpack.c.b16 %v2744, %v2740
    %v3005 = vpack.c.b16 %v2745, %v2741
    %v3006 = vpack.c.b16 %v2746, %v2742
    %v3007 = vpack.c.b16 %v2751, %v2747
    %v3008 = vpack.c.b16 %v2752, %v2748
    %v3009 = vpack.c.b16 %v2753, %v2749
    %v3010 = vpack.c.b16 %v2754, %v2750
    %v3011 = vpack.c.b16 %v2759, %v2755
    %v3012 = vpack.c.b16 %v2760, %v2756
    %v3013 = vpack.c.b16 %v2761, %v2757
    %v3014 = vpack.c.b16 %v2762, %v2758
    %v3015 = vpack.c.b16 %v2767, %v2763
    %v3016 = vpack.c.b16 %v2768, %v2764
    %v3017 = vpack.c.b16 %v2769, %v2765
    %v3018 = vpack.c.b16 %v2770, %v2766
    %v3019 = vpack.c.b16 %v2775, %v2771
    %v3020 = vpack.c.b16 %v2776, %v2772
    %v3021 = vpack.c.b16 %v2777, %v2773
    %v3022 = vpack.c.b16 %v2778, %v2774
    %v3023 = vpack.c.b16 %v2783, %v2779
    %v3024 = vpack.c.b16 %v2784, %v2780
    %v3025 = vpack.c.b16 %v2785, %v2781
    %v3026 = vpack.c.b16 %v2786, %v2782
    %v3027 = vpack.c.b16 %v2791, %v2787
    %v3028 = vpack.c.b16 %v2792, %v2788
    %v3029 = vpack.c.b16 %v2793, %v2789
    %v3030 = vpack.c.b16 %v2794, %v2790
    %v3031 = vpack.c.b16 %v2799, %v2795
    %v3032 = vpack.c.b16 %v2800, %v2796
    %v3033 = vpack.c.b16 %v2801, %v2797
    %v3034 = vpack.c.b16 %v2802, %v2798
    %v3035 = vpack.c.b16 %v2807, %v2803
    %v3036 = vpack.c.b16 %v2808, %v2804
    %v3037 = vpack.c.b16 %v2809, %v2805
    %v3038 = vpack.c.b16 %v2810, %v2806
    %v3039 = vpack.c.b16 %v2815, %v2811
    %v3040 = vpack.c.b16 %v2816, %v2812
    %v3041 = vpack.c.b16 %v2817, %v2813
    %v3042 = vpack.c.b16 %v2818, %v2814
    %v3043 = vpack.c.b16 %v2823, %v2819
    %v3044 = vpack.c.b16 %v2824, %v2820
    %v3045 = vpack.c.b16 %v2825, %v2821
    %v3046 = vpack.c.b16 %v2826, %v2822
    %v3047 = vpack.c.b16 %v2831, %v2827
    %v3048 = vpack.c.b16 %v2832, %v2828
    %v3049 = vpack.c.b16 %v2833, %v2829
    %v3050 = vpack.c.b16 %v2834, %v2830
    %v3051 = vpack.c.b16 %v2839, %v2835
    %v3052 = vpack.c.b16 %v2840, %v2836
    %v3053 = vpack.c.b16 %v2841, %v2837
    %v3054 = vpack.c.b16 %v2842, %v2838
    %v3055 = vpack.c.b16 %v2847, %v2843
    %v3056 = vpack.c.b16 %v2848, %v2844
    %v3057 = vpack.c.b16 %v2849, %v2845
    %v3058 = vpack.c.b16 %v2850, %v2846
    %v3059 = vpack.c.b16 %v2855, %v2851
    %v3060 = vpack.c.b16 %v2856, %v2852
    %v3061 = vpack.c.b16 %v2857, %v2853
    %v3062 = vpack.c.b16 %v2858, %v2854
    %v3063 = vpack.c.b16 %v2863, %v2859
    %v3064 = vpack.c.b16 %v2864, %v2860
    %v3065 = vpack.c.b16 %v2865, %v2861
    %v3066 = vpack.c.b16 %v2866, %v2862
    %v3067 = vpack.c.b16 %v2871, %v2867
    %v3068 = vpack.c.b16 %v2872, %v2868
    %v3069 = vpack.c.b16 %v2873, %v2869
    %v3070 = vpack.c.b16 %v2874, %v2870
    %v3071 = vpack.c.b16 %v2879, %v2875
    %v3072 = vpack.c.b16 %v2880, %v2876
    %v3073 = vpack.c.b16 %v2881, %v2877
    %v3074 = vpack.c.b16 %v2882, %v2878
    %3267 = vmatpush.bf16.msra.mxu0 %v2911
    %3268 = vmatpush.bf16.msra.mxu0 %v2907
    %3269 = vmatpush.bf16.msra.mxu0 %v2903
    %3270 = vmatpush.bf16.msra.mxu0 %v2899
    %3271 = vmatpush.bf16.msra.mxu0 %v2895
    %3272 = vmatpush.bf16.msra.mxu0 %v2891
    %3273 = vmatpush.bf16.msra.mxu0 %v2887
    %3274 = vmatpush.bf16.msra.mxu0 %v2883
    %3275 = vmatmul.bf16.gmra.mxu0 %v2033
    %v3276 = vpop.f32.mrf.mxu0
    %v3277 = vadd.f32 0.0, %v3276
    %v3278 = vpop.f32.mrf.mxu0
    %v3279 = vadd.f32 0.0, %v3278
    %3280 = vmatmul.bf16.gmra.mxu0 %v2041
    %v3281 = vpop.f32.mrf.mxu0
    %v3282 = vadd.f32 0.0, %v3281
    %v3283 = vpop.f32.mrf.mxu0
    %v3284 = vadd.f32 0.0, %v3283
    %3285 = vdwg.mxu0
    %3286 = vmatpush.bf16.msra.mxu0 %v2943
    %3287 = vmatpush.bf16.msra.mxu0 %v2939
    %3288 = vmatpush.bf16.msra.mxu0 %v2935
    %3289 = vmatpush.bf16.msra.mxu0 %v2931
    %3290 = vmatpush.bf16.msra.mxu0 %v2927
    %3291 = vmatpush.bf16.msra.mxu0 %v2923
    %3292 = vmatpush.bf16.msra.mxu0 %v2919
    %3293 = vmatpush.bf16.msra.mxu0 %v2915
    %3294 = vmatmul.bf16.gmra.mxu0 %v2037
    %v3295 = vpop.f32.mrf.mxu0
    %v3296 = vadd.f32 %v3277, %v3295
    %v3297 = vpop.f32.mrf.mxu0
    %v3298 = vadd.f32 %v3279, %v3297
    %3299 = vmatmul.bf16.gmra.mxu0 %v2045
    %v3300 = vpop.f32.mrf.mxu0
    %v3301 = vadd.f32 %v3282, %v3300
    %v3302 = vpop.f32.mrf.mxu0
    %v3303 = vadd.f32 %v3284, %v3302
    %3304 = vdwg.mxu0
    %3305 = vmatpush.bf16.msra.mxu0 %v2975
    %3306 = vmatpush.bf16.msra.mxu0 %v2971
    %3307 = vmatpush.bf16.msra.mxu0 %v2967
    %3308 = vmatpush.bf16.msra.mxu0 %v2963
    %3309 = vmatpush.bf16.msra.mxu0 %v2959
    %3310 = vmatpush.bf16.msra.mxu0 %v2955
    %3311 = vmatpush.bf16.msra.mxu0 %v2951
    %3312 = vmatpush.bf16.msra.mxu0 %v2947
    %3313 = vmatmul.bf16.gmra.mxu0 %v2075
    %v3314 = vpop.f32.mrf.mxu0
    %v3315 = vadd.f32 %v3296, %v3314
    %v3316 = vpop.f32.mrf.mxu0
    %v3317 = vadd.f32 %v3298, %v3316
    %3318 = vmatmul.bf16.gmra.mxu0 %v2083
    %v3319 = vpop.f32.mrf.mxu0
    %v3320 = vadd.f32 %v3301, %v3319
    %v3321 = vpop.f32.mrf.mxu0
    %v3322 = vadd.f32 %v3303, %v3321
    %3323 = vdwg.mxu0
    %3324 = vmatpush.bf16.msra.mxu0 %v3007
    %3325 = vmatpush.bf16.msra.mxu0 %v3003
    %3326 = vmatpush.bf16.msra.mxu0 %v2999
    %3327 = vmatpush.bf16.msra.mxu0 %v2995
    %3328 = vmatpush.bf16.msra.mxu0 %v2991
    %3329 = vmatpush.bf16.msra.mxu0 %v2987
    %3330 = vmatpush.bf16.msra.mxu0 %v2983
    %3331 = vmatpush.bf16.msra.mxu0 %v2979
    %3332 = vmatmul.bf16.gmra.mxu0 %v2079
    %v3333 = vpop.f32.mrf.mxu0
    %v3334 = vadd.f32 %v3315, %v3333
    %v3335 = vpop.f32.mrf.mxu0
    %v3336 = vadd.f32 %v3317, %v3335
    %3337 = vmatmul.bf16.gmra.mxu0 %v2087
    %v3338 = vpop.f32.mrf.mxu0
    %v3339 = vadd.f32 %v3320, %v3338
    %v3340 = vpop.f32.mrf.mxu0
    %v3341 = vadd.f32 %v3322, %v3340
    %3342 = vdwg.mxu0
    %3343 = vmatpush.bf16.msra.mxu0 %v3039
    %3344 = vmatpush.bf16.msra.mxu0 %v3035
    %3345 = vmatpush.bf16.msra.mxu0 %v3031
    %3346 = vmatpush.bf16.msra.mxu0 %v3027
    %3347 = vmatpush.bf16.msra.mxu0 %v3023
    %3348 = vmatpush.bf16.msra.mxu0 %v3019
    %3349 = vmatpush.bf16.msra.mxu0 %v3015
    %3350 = vmatpush.bf16.msra.mxu0 %v3011
    %3351 = vmatmul.bf16.gmra.mxu0 %v2104
    %v3352 = vpop.f32.mrf.mxu0
    %v3353 = vadd.f32 %v3334, %v3352
    %v3354 = vpop.f32.mrf.mxu0
    %v3355 = vadd.f32 %v3336, %v3354
    %3356 = vmatmul.bf16.gmra.mxu0 %v2110
    %v3357 = vpop.f32.mrf.mxu0
    %v3358 = vadd.f32 %v3339, %v3357
    %v3359 = vpop.f32.mrf.mxu0
    %v3360 = vadd.f32 %v3341, %v3359
    %3361 = vdwg.mxu0
    %3362 = vmatpush.bf16.msra.mxu0 %v3071
    %3363 = vmatpush.bf16.msra.mxu0 %v3067
    %3364 = vmatpush.bf16.msra.mxu0 %v3063
    %3365 = vmatpush.bf16.msra.mxu0 %v3059
    %3366 = vmatpush.bf16.msra.mxu0 %v3055
    %3367 = vmatpush.bf16.msra.mxu0 %v3051
    %3368 = vmatpush.bf16.msra.mxu0 %v3047
    %3369 = vmatpush.bf16.msra.mxu0 %v3043
    %3370 = vmatmul.bf16.gmra.mxu0 %v2107
    %v3371 = vpop.f32.mrf.mxu0
    %v3372 = vadd.f32 %v3353, %v3371
    %v3373 = vpop.f32.mrf.mxu0
    %v3374 = vadd.f32 %v3355, %v3373
    %3375 = vmatmul.bf16.gmra.mxu0 %v2113
    %v3376 = vpop.f32.mrf.mxu0
    %v3377 = vadd.f32 %v3358, %v3376
    %v3378 = vpop.f32.mrf.mxu0
    %v3379 = vadd.f32 %v3360, %v3378
    %3380 = vdwg.mxu0
    %3381 = vmatpush.bf16.msra.mxu0 %v2912
    %3382 = vmatpush.bf16.msra.mxu0 %v2908
    %3383 = vmatpush.bf16.msra.mxu0 %v2904
    %3384 = vmatpush.bf16.msra.mxu0 %v2900
    %3385 = vmatpush.bf16.msra.mxu0 %v2896
    %3386 = vmatpush.bf16.msra.mxu0 %v2892
    %3387 = vmatpush.bf16.msra.mxu0 %v2888
    %3388 = vmatpush.bf16.msra.mxu0 %v2884
    %3389 = vmatmul.bf16.gmra.mxu0 %v2033
    %v3390 = vpop.f32.mrf.mxu0
    %v3391 = vadd.f32 0.0, %v3390
    %v3392 = vpop.f32.mrf.mxu0
    %v3393 = vadd.f32 0.0, %v3392
    %3394 = vmatmul.bf16.gmra.mxu0 %v2041
    %v3395 = vpop.f32.mrf.mxu0
    %v3396 = vadd.f32 0.0, %v3395
    %v3397 = vpop.f32.mrf.mxu0
    %v3398 = vadd.f32 0.0, %v3397
    %3399 = vdwg.mxu0
    %3400 = vmatpush.bf16.msra.mxu0 %v2944
    %3401 = vmatpush.bf16.msra.mxu0 %v2940
    %3402 = vmatpush.bf16.msra.mxu0 %v2936
    %3403 = vmatpush.bf16.msra.mxu0 %v2932
    %3404 = vmatpush.bf16.msra.mxu0 %v2928
    %3405 = vmatpush.bf16.msra.mxu0 %v2924
    %3406 = vmatpush.bf16.msra.mxu0 %v2920
    %3407 = vmatpush.bf16.msra.mxu0 %v2916
    %3408 = vmatmul.bf16.gmra.mxu0 %v2037
    %v3409 = vpop.f32.mrf.mxu0
    %v3410 = vadd.f32 %v3391, %v3409
    %v3411 = vpop.f32.mrf.mxu0
    %v3412 = vadd.f32 %v3393, %v3411
    %3413 = vmatmul.bf16.gmra.mxu0 %v2045
    %v3414 = vpop.f32.mrf.mxu0
    %v3415 = vadd.f32 %v3396, %v3414
    %v3416 = vpop.f32.mrf.mxu0
    %v3417 = vadd.f32 %v3398, %v3416
    %3418 = vdwg.mxu0
    %3419 = vmatpush.bf16.msra.mxu0 %v2976
    %3420 = vmatpush.bf16.msra.mxu0 %v2972
    %3421 = vmatpush.bf16.msra.mxu0 %v2968
    %3422 = vmatpush.bf16.msra.mxu0 %v2964
    %3423 = vmatpush.bf16.msra.mxu0 %v2960
    %3424 = vmatpush.bf16.msra.mxu0 %v2956
    %3425 = vmatpush.bf16.msra.mxu0 %v2952
    %3426 = vmatpush.bf16.msra.mxu0 %v2948
    %3427 = vmatmul.bf16.gmra.mxu0 %v2075
    %v3428 = vpop.f32.mrf.mxu0
    %v3429 = vadd.f32 %v3410, %v3428
    %v3430 = vpop.f32.mrf.mxu0
    %v3431 = vadd.f32 %v3412, %v3430
    %3432 = vmatmul.bf16.gmra.mxu0 %v2083
    %v3433 = vpop.f32.mrf.mxu0
    %v3434 = vadd.f32 %v3415, %v3433
    %v3435 = vpop.f32.mrf.mxu0
    %v3436 = vadd.f32 %v3417, %v3435
    %3437 = vdwg.mxu0
    %3438 = vmatpush.bf16.msra.mxu0 %v3008
    %3439 = vmatpush.bf16.msra.mxu0 %v3004
    %3440 = vmatpush.bf16.msra.mxu0 %v3000
    %3441 = vmatpush.bf16.msra.mxu0 %v2996
    %3442 = vmatpush.bf16.msra.mxu0 %v2992
    %3443 = vmatpush.bf16.msra.mxu0 %v2988
    %3444 = vmatpush.bf16.msra.mxu0 %v2984
    %3445 = vmatpush.bf16.msra.mxu0 %v2980
    %3446 = vmatmul.bf16.gmra.mxu0 %v2079
    %v3447 = vpop.f32.mrf.mxu0
    %v3448 = vadd.f32 %v3429, %v3447
    %v3449 = vpop.f32.mrf.mxu0
    %v3450 = vadd.f32 %v3431, %v3449
    %3451 = vmatmul.bf16.gmra.mxu0 %v2087
    %v3452 = vpop.f32.mrf.mxu0
    %v3453 = vadd.f32 %v3434, %v3452
    %v3454 = vpop.f32.mrf.mxu0
    %v3455 = vadd.f32 %v3436, %v3454
    %3456 = vdwg.mxu0
    %3457 = vmatpush.bf16.msra.mxu0 %v3040
    %3458 = vmatpush.bf16.msra.mxu0 %v3036
    %3459 = vmatpush.bf16.msra.mxu0 %v3032
    %3460 = vmatpush.bf16.msra.mxu0 %v3028
    %3461 = vmatpush.bf16.msra.mxu0 %v3024
    %3462 = vmatpush.bf16.msra.mxu0 %v3020
    %3463 = vmatpush.bf16.msra.mxu0 %v3016
    %3464 = vmatpush.bf16.msra.mxu0 %v3012
    %3465 = vmatmul.bf16.gmra.mxu0 %v2104
    %v3466 = vpop.f32.mrf.mxu0
    %v3467 = vadd.f32 %v3448, %v3466
    %v3468 = vpop.f32.mrf.mxu0
    %v3469 = vadd.f32 %v3450, %v3468
    %3470 = vmatmul.bf16.gmra.mxu0 %v2110
    %v3471 = vpop.f32.mrf.mxu0
    %v3472 = vadd.f32 %v3453, %v3471
    %v3473 = vpop.f32.mrf.mxu0
    %v3474 = vadd.f32 %v3455, %v3473
    %3475 = vdwg.mxu0
    %3476 = vmatpush.bf16.msra.mxu0 %v3072
    %3477 = vmatpush.bf16.msra.mxu0 %v3068
    %3478 = vmatpush.bf16.msra.mxu0 %v3064
    %3479 = vmatpush.bf16.msra.mxu0 %v3060
    %3480 = vmatpush.bf16.msra.mxu0 %v3056
    %3481 = vmatpush.bf16.msra.mxu0 %v3052
    %3482 = vmatpush.bf16.msra.mxu0 %v3048
    %3483 = vmatpush.bf16.msra.mxu0 %v3044
    %3484 = vmatmul.bf16.gmra.mxu0 %v2107
    %v3485 = vpop.f32.mrf.mxu0
    %v3486 = vadd.f32 %v3467, %v3485
    %v3487 = vpop.f32.mrf.mxu0
    %v3488 = vadd.f32 %v3469, %v3487
    %3489 = vmatmul.bf16.gmra.mxu0 %v2113
    %v3490 = vpop.f32.mrf.mxu0
    %v3491 = vadd.f32 %v3472, %v3490
    %v3492 = vpop.f32.mrf.mxu0
    %v3493 = vadd.f32 %v3474, %v3492
    %3494 = vdwg.mxu0
    %3495 = vmatpush.bf16.msra.mxu0 %v2913
    %3496 = vmatpush.bf16.msra.mxu0 %v2909
    %3497 = vmatpush.bf16.msra.mxu0 %v2905
    %3498 = vmatpush.bf16.msra.mxu0 %v2901
    %3499 = vmatpush.bf16.msra.mxu0 %v2897
    %3500 = vmatpush.bf16.msra.mxu0 %v2893
    %3501 = vmatpush.bf16.msra.mxu0 %v2889
    %3502 = vmatpush.bf16.msra.mxu0 %v2885
    %3503 = vmatmul.bf16.gmra.mxu0 %v2033
    %v3504 = vpop.f32.mrf.mxu0
    %v3505 = vadd.f32 0.0, %v3504
    %v3506 = vpop.f32.mrf.mxu0
    %v3507 = vadd.f32 0.0, %v3506
    %3508 = vmatmul.bf16.gmra.mxu0 %v2041
    %v3509 = vpop.f32.mrf.mxu0
    %v3510 = vadd.f32 0.0, %v3509
    %v3511 = vpop.f32.mrf.mxu0
    %v3512 = vadd.f32 0.0, %v3511
    %3513 = vdwg.mxu0
    %3514 = vmatpush.bf16.msra.mxu0 %v2945
    %3515 = vmatpush.bf16.msra.mxu0 %v2941
    %3516 = vmatpush.bf16.msra.mxu0 %v2937
    %3517 = vmatpush.bf16.msra.mxu0 %v2933
    %3518 = vmatpush.bf16.msra.mxu0 %v2929
    %3519 = vmatpush.bf16.msra.mxu0 %v2925
    %3520 = vmatpush.bf16.msra.mxu0 %v2921
    %3521 = vmatpush.bf16.msra.mxu0 %v2917
    %3522 = vmatmul.bf16.gmra.mxu0 %v2037
    %v3523 = vpop.f32.mrf.mxu0
    %v3524 = vadd.f32 %v3505, %v3523
    %v3525 = vpop.f32.mrf.mxu0
    %v3526 = vadd.f32 %v3507, %v3525
    %3527 = vmatmul.bf16.gmra.mxu0 %v2045
    %v3528 = vpop.f32.mrf.mxu0
    %v3529 = vadd.f32 %v3510, %v3528
    %v3530 = vpop.f32.mrf.mxu0
    %v3531 = vadd.f32 %v3512, %v3530
    %3532 = vdwg.mxu0
    %3533 = vmatpush.bf16.msra.mxu0 %v2977
    %3534 = vmatpush.bf16.msra.mxu0 %v2973
    %3535 = vmatpush.bf16.msra.mxu0 %v2969
    %3536 = vmatpush.bf16.msra.mxu0 %v2965
    %3537 = vmatpush.bf16.msra.mxu0 %v2961
    %3538 = vmatpush.bf16.msra.mxu0 %v2957
    %3539 = vmatpush.bf16.msra.mxu0 %v2953
    %3540 = vmatpush.bf16.msra.mxu0 %v2949
    %3541 = vmatmul.bf16.gmra.mxu0 %v2075
    %v3542 = vpop.f32.mrf.mxu0
    %v3543 = vadd.f32 %v3524, %v3542
    %v3544 = vpop.f32.mrf.mxu0
    %v3545 = vadd.f32 %v3526, %v3544
    %3546 = vmatmul.bf16.gmra.mxu0 %v2083
    %v3547 = vpop.f32.mrf.mxu0
    %v3548 = vadd.f32 %v3529, %v3547
    %v3549 = vpop.f32.mrf.mxu0
    %v3550 = vadd.f32 %v3531, %v3549
    %3551 = vdwg.mxu0
    %3552 = vmatpush.bf16.msra.mxu0 %v3009
    %3553 = vmatpush.bf16.msra.mxu0 %v3005
    %3554 = vmatpush.bf16.msra.mxu0 %v3001
    %3555 = vmatpush.bf16.msra.mxu0 %v2997
    %3556 = vmatpush.bf16.msra.mxu0 %v2993
    %3557 = vmatpush.bf16.msra.mxu0 %v2989
    %3558 = vmatpush.bf16.msra.mxu0 %v2985
    %3559 = vmatpush.bf16.msra.mxu0 %v2981
    %3560 = vmatmul.bf16.gmra.mxu0 %v2079
    %v3561 = vpop.f32.mrf.mxu0
    %v3562 = vadd.f32 %v3543, %v3561
    %v3563 = vpop.f32.mrf.mxu0
    %v3564 = vadd.f32 %v3545, %v3563
    %3565 = vmatmul.bf16.gmra.mxu0 %v2087
    %v3566 = vpop.f32.mrf.mxu0
    %v3567 = vadd.f32 %v3548, %v3566
    %v3568 = vpop.f32.mrf.mxu0
    %v3569 = vadd.f32 %v3550, %v3568
    %3570 = vdwg.mxu0
    %3571 = vmatpush.bf16.msra.mxu0 %v3041
    %3572 = vmatpush.bf16.msra.mxu0 %v3037
    %3573 = vmatpush.bf16.msra.mxu0 %v3033
    %3574 = vmatpush.bf16.msra.mxu0 %v3029
    %3575 = vmatpush.bf16.msra.mxu0 %v3025
    %3576 = vmatpush.bf16.msra.mxu0 %v3021
    %3577 = vmatpush.bf16.msra.mxu0 %v3017
    %3578 = vmatpush.bf16.msra.mxu0 %v3013
    %3579 = vmatmul.bf16.gmra.mxu0 %v2104
    %v3580 = vpop.f32.mrf.mxu0
    %v3581 = vadd.f32 %v3562, %v3580
    %v3582 = vpop.f32.mrf.mxu0
    %v3583 = vadd.f32 %v3564, %v3582
    %3584 = vmatmul.bf16.gmra.mxu0 %v2110
    %v3585 = vpop.f32.mrf.mxu0
    %v3586 = vadd.f32 %v3567, %v3585
    %v3587 = vpop.f32.mrf.mxu0
    %v3588 = vadd.f32 %v3569, %v3587
    %3589 = vdwg.mxu0
    %3590 = vmatpush.bf16.msra.mxu0 %v3073
    %3591 = vmatpush.bf16.msra.mxu0 %v3069
    %3592 = vmatpush.bf16.msra.mxu0 %v3065
    %3593 = vmatpush.bf16.msra.mxu0 %v3061
    %3594 = vmatpush.bf16.msra.mxu0 %v3057
    %3595 = vmatpush.bf16.msra.mxu0 %v3053
    %3596 = vmatpush.bf16.msra.mxu0 %v3049
    %3597 = vmatpush.bf16.msra.mxu0 %v3045
    %3598 = vmatmul.bf16.gmra.mxu0 %v2107
    %v3599 = vpop.f32.mrf.mxu0
    %v3600 = vadd.f32 %v3581, %v3599
    %v3601 = vpop.f32.mrf.mxu0
    %v3602 = vadd.f32 %v3583, %v3601
    %3603 = vmatmul.bf16.gmra.mxu0 %v2113
    %v3604 = vpop.f32.mrf.mxu0
    %v3605 = vadd.f32 %v3586, %v3604
    %v3606 = vpop.f32.mrf.mxu0
    %v3607 = vadd.f32 %v3588, %v3606
    %3608 = vdwg.mxu0
    %3609 = vmatpush.bf16.msra.mxu0 %v2914
    %3610 = vmatpush.bf16.msra.mxu0 %v2910
    %3611 = vmatpush.bf16.msra.mxu0 %v2906
    %3612 = vmatpush.bf16.msra.mxu0 %v2902
    %3613 = vmatpush.bf16.msra.mxu0 %v2898
    %3614 = vmatpush.bf16.msra.mxu0 %v2894
    %3615 = vmatpush.bf16.msra.mxu0 %v2890
    %3616 = vmatpush.bf16.msra.mxu0 %v2886
    %3617 = vmatmul.bf16.gmra.mxu0 %v2033
    %v3618 = vpop.f32.mrf.mxu0
    %v3619 = vadd.f32 0.0, %v3618
    %v3620 = vpop.f32.mrf.mxu0
    %v3621 = vadd.f32 0.0, %v3620
    %3622 = vmatmul.bf16.gmra.mxu0 %v2041
    %v3623 = vpop.f32.mrf.mxu0
    %v3624 = vadd.f32 0.0, %v3623
    %v3625 = vpop.f32.mrf.mxu0
    %v3626 = vadd.f32 0.0, %v3625
    %3627 = vdwg.mxu0
    %3628 = vmatpush.bf16.msra.mxu0 %v2946
    %3629 = vmatpush.bf16.msra.mxu0 %v2942
    %3630 = vmatpush.bf16.msra.mxu0 %v2938
    %3631 = vmatpush.bf16.msra.mxu0 %v2934
    %3632 = vmatpush.bf16.msra.mxu0 %v2930
    %3633 = vmatpush.bf16.msra.mxu0 %v2926
    %3634 = vmatpush.bf16.msra.mxu0 %v2922
    %3635 = vmatpush.bf16.msra.mxu0 %v2918
    %3636 = vmatmul.bf16.gmra.mxu0 %v2037
    %v3637 = vpop.f32.mrf.mxu0
    %v3638 = vadd.f32 %v3619, %v3637
    %v3639 = vpop.f32.mrf.mxu0
    %v3640 = vadd.f32 %v3621, %v3639
    %3641 = vmatmul.bf16.gmra.mxu0 %v2045
    %v3642 = vpop.f32.mrf.mxu0
    %v3643 = vadd.f32 %v3624, %v3642
    %v3644 = vpop.f32.mrf.mxu0
    %v3645 = vadd.f32 %v3626, %v3644
    %3646 = vdwg.mxu0
    %3647 = vmatpush.bf16.msra.mxu0 %v2978
    %3648 = vmatpush.bf16.msra.mxu0 %v2974
    %3649 = vmatpush.bf16.msra.mxu0 %v2970
    %3650 = vmatpush.bf16.msra.mxu0 %v2966
    %3651 = vmatpush.bf16.msra.mxu0 %v2962
    %3652 = vmatpush.bf16.msra.mxu0 %v2958
    %3653 = vmatpush.bf16.msra.mxu0 %v2954
    %3654 = vmatpush.bf16.msra.mxu0 %v2950
    %3655 = vmatmul.bf16.gmra.mxu0 %v2075
    %v3656 = vpop.f32.mrf.mxu0
    %v3657 = vadd.f32 %v3638, %v3656
    %v3658 = vpop.f32.mrf.mxu0
    %v3659 = vadd.f32 %v3640, %v3658
    %3660 = vmatmul.bf16.gmra.mxu0 %v2083
    %v3661 = vpop.f32.mrf.mxu0
    %v3662 = vadd.f32 %v3643, %v3661
    %v3663 = vpop.f32.mrf.mxu0
    %v3664 = vadd.f32 %v3645, %v3663
    %3665 = vdwg.mxu0
    %3666 = vmatpush.bf16.msra.mxu0 %v3010
    %3667 = vmatpush.bf16.msra.mxu0 %v3006
    %3668 = vmatpush.bf16.msra.mxu0 %v3002
    %3669 = vmatpush.bf16.msra.mxu0 %v2998
    %3670 = vmatpush.bf16.msra.mxu0 %v2994
    %3671 = vmatpush.bf16.msra.mxu0 %v2990
    %3672 = vmatpush.bf16.msra.mxu0 %v2986
    %3673 = vmatpush.bf16.msra.mxu0 %v2982
    %3674 = vmatmul.bf16.gmra.mxu0 %v2079
    %v3675 = vpop.f32.mrf.mxu0
    %v3676 = vadd.f32 %v3657, %v3675
    %v3677 = vpop.f32.mrf.mxu0
    %v3678 = vadd.f32 %v3659, %v3677
    %3679 = vmatmul.bf16.gmra.mxu0 %v2087
    %v3680 = vpop.f32.mrf.mxu0
    %v3681 = vadd.f32 %v3662, %v3680
    %v3682 = vpop.f32.mrf.mxu0
    %v3683 = vadd.f32 %v3664, %v3682
    %3684 = vdwg.mxu0
    %3685 = vmatpush.bf16.msra.mxu0 %v3042
    %3686 = vmatpush.bf16.msra.mxu0 %v3038
    %3687 = vmatpush.bf16.msra.mxu0 %v3034
    %3688 = vmatpush.bf16.msra.mxu0 %v3030
    %3689 = vmatpush.bf16.msra.mxu0 %v3026
    %3690 = vmatpush.bf16.msra.mxu0 %v3022
    %3691 = vmatpush.bf16.msra.mxu0 %v3018
    %3692 = vmatpush.bf16.msra.mxu0 %v3014
    %3693 = vmatmul.bf16.gmra.mxu0 %v2104
    %v3694 = vpop.f32.mrf.mxu0
    %v3695 = vadd.f32 %v3676, %v3694
    %v3696 = vpop.f32.mrf.mxu0
    %v3697 = vadd.f32 %v3678, %v3696
    %3698 = vmatmul.bf16.gmra.mxu0 %v2110
    %v3699 = vpop.f32.mrf.mxu0
    %v3700 = vadd.f32 %v3681, %v3699
    %v3701 = vpop.f32.mrf.mxu0
    %v3702 = vadd.f32 %v3683, %v3701
    %3703 = vdwg.mxu0
    %3704 = vmatpush.bf16.msra.mxu0 %v3074
    %3705 = vmatpush.bf16.msra.mxu0 %v3070
    %3706 = vmatpush.bf16.msra.mxu0 %v3066
    %3707 = vmatpush.bf16.msra.mxu0 %v3062
    %3708 = vmatpush.bf16.msra.mxu0 %v3058
    %3709 = vmatpush.bf16.msra.mxu0 %v3054
    %3710 = vmatpush.bf16.msra.mxu0 %v3050
    %3711 = vmatpush.bf16.msra.mxu0 %v3046
    %3712 = vmatmul.bf16.gmra.mxu0 %v2107
    %v3713 = vpop.f32.mrf.mxu0
    %v3714 = vadd.f32 %v3695, %v3713
    %v3715 = vpop.f32.mrf.mxu0
    %v3716 = vadd.f32 %v3697, %v3715
    %3717 = vmatmul.bf16.gmra.mxu0 %v2113
    %v3718 = vpop.f32.mrf.mxu0
    %v3719 = vadd.f32 %v3700, %v3718
    %v3720 = vpop.f32.mrf.mxu0
    %v3721 = vadd.f32 %v3702, %v3720
    %3722 = vdwg.mxu0
    %v3915 = vunpack.c.l.b16 %v1408
    %v3916 = vunpack.c.h.b16 %v1408
    %v3917 = vunpack.c.l.b16 %v1409
    %v3918 = vunpack.c.h.b16 %v1409
    %v3919 = vunpack.c.l.b16 %v1410
    %v3920 = vunpack.c.h.b16 %v1410
    %v3921 = vunpack.c.l.b16 %v1411
    %v3922 = vunpack.c.h.b16 %v1411
    %v3923 = vunpack.c.l.b16 %v1412
    %v3924 = vunpack.c.h.b16 %v1412
    %v3925 = vunpack.c.l.b16 %v1413
    %v3926 = vunpack.c.h.b16 %v1413
    %v3927 = vunpack.c.l.b16 %v1414
    %v3928 = vunpack.c.h.b16 %v1414
    %v3929 = vunpack.c.l.b16 %v1415
    %v3930 = vunpack.c.h.b16 %v1415
    %v3931 = vunpack.c.l.b16 %v1416
    %v3932 = vunpack.c.h.b16 %v1416
    %v3933 = vunpack.c.l.b16 %v1417
    %v3934 = vunpack.c.h.b16 %v1417
    %v3935 = vunpack.c.l.b16 %v1418
    %v3936 = vunpack.c.h.b16 %v1418
    %v3937 = vunpack.c.l.b16 %v1419
    %v3938 = vunpack.c.h.b16 %v1419
    %v3939 = vunpack.c.l.b16 %v1420
    %v3940 = vunpack.c.h.b16 %v1420
    %v3941 = vunpack.c.l.b16 %v1421
    %v3942 = vunpack.c.h.b16 %v1421
    %v3943 = vunpack.c.l.b16 %v1422
    %v3944 = vunpack.c.h.b16 %v1422
    %v3945 = vunpack.c.l.b16 %v1423
    %v3946 = vunpack.c.h.b16 %v1423
    %v3947 = vunpack.c.l.b16 %v1424
    %v3948 = vunpack.c.h.b16 %v1424
    %v3949 = vunpack.c.l.b16 %v1425
    %v3950 = vunpack.c.h.b16 %v1425
    %v3951 = vunpack.c.l.b16 %v1426
    %v3952 = vunpack.c.h.b16 %v1426
    %v3953 = vunpack.c.l.b16 %v1427
    %v3954 = vunpack.c.h.b16 %v1427
    %v3955 = vunpack.c.l.b16 %v1428
    %v3956 = vunpack.c.h.b16 %v1428
    %v3957 = vunpack.c.l.b16 %v1429
    %v3958 = vunpack.c.h.b16 %v1429
    %v3959 = vunpack.c.l.b16 %v1430
    %v3960 = vunpack.c.h.b16 %v1430
    %v3961 = vunpack.c.l.b16 %v1431
    %v3962 = vunpack.c.h.b16 %v1431
    %v3963 = vunpack.c.l.b16 %v1432
    %v3964 = vunpack.c.h.b16 %v1432
    %v3965 = vunpack.c.l.b16 %v1433
    %v3966 = vunpack.c.h.b16 %v1433
    %v3967 = vunpack.c.l.b16 %v1434
    %v3968 = vunpack.c.h.b16 %v1434
    %v3969 = vunpack.c.l.b16 %v1435
    %v3970 = vunpack.c.h.b16 %v1435
    %v3971 = vunpack.c.l.b16 %v1436
    %v3972 = vunpack.c.h.b16 %v1436
    %v3973 = vunpack.c.l.b16 %v1437
    %v3974 = vunpack.c.h.b16 %v1437
    %v3975 = vunpack.c.l.b16 %v1438
    %v3976 = vunpack.c.h.b16 %v1438
    %v3977 = vunpack.c.l.b16 %v1439
    %v3978 = vunpack.c.h.b16 %v1439
    %v3979 = vunpack.c.l.b16 %v1440
    %v3980 = vunpack.c.h.b16 %v1440
    %v3981 = vunpack.c.l.b16 %v1441
    %v3982 = vunpack.c.h.b16 %v1441
    %v3983 = vunpack.c.l.b16 %v1442
    %v3984 = vunpack.c.h.b16 %v1442
    %v3985 = vunpack.c.l.b16 %v1443
    %v3986 = vunpack.c.h.b16 %v1443
    %v3987 = vunpack.c.l.b16 %v1444
    %v3988 = vunpack.c.h.b16 %v1444
    %v3989 = vunpack.c.l.b16 %v1445
    %v3990 = vunpack.c.h.b16 %v1445
    %v3991 = vunpack.c.l.b16 %v1446
    %v3992 = vunpack.c.h.b16 %v1446
    %v3993 = vunpack.c.l.b16 %v1447
    %v3994 = vunpack.c.h.b16 %v1447
    %v3995 = vunpack.c.l.b16 %v1448
    %v3996 = vunpack.c.h.b16 %v1448
    %v3997 = vunpack.c.l.b16 %v1449
    %v3998 = vunpack.c.h.b16 %v1449
    %v3999 = vunpack.c.l.b16 %v1450
    %v4000 = vunpack.c.h.b16 %v1450
    %v4001 = vunpack.c.l.b16 %v1451
    %v4002 = vunpack.c.h.b16 %v1451
    %v4003 = vunpack.c.l.b16 %v1452
    %v4004 = vunpack.c.h.b16 %v1452
    %v4005 = vunpack.c.l.b16 %v1453
    %v4006 = vunpack.c.h.b16 %v1453
    %v4007 = vunpack.c.l.b16 %v1454
    %v4008 = vunpack.c.h.b16 %v1454
    %v4009 = vunpack.c.l.b16 %v1455
    %v4010 = vunpack.c.h.b16 %v1455
    %v4011 = vunpack.c.l.b16 %v1456
    %v4012 = vunpack.c.h.b16 %v1456
    %v4013 = vunpack.c.l.b16 %v1457
    %v4014 = vunpack.c.h.b16 %v1457
    %v4015 = vunpack.c.l.b16 %v1458
    %v4016 = vunpack.c.h.b16 %v1458
    %v4017 = vunpack.c.l.b16 %v1459
    %v4018 = vunpack.c.h.b16 %v1459
    %v4019 = vunpack.c.l.b16 %v1460
    %v4020 = vunpack.c.h.b16 %v1460
    %v4021 = vunpack.c.l.b16 %v1461
    %v4022 = vunpack.c.h.b16 %v1461
    %v4023 = vunpack.c.l.b16 %v1462
    %v4024 = vunpack.c.h.b16 %v1462
    %v4025 = vunpack.c.l.b16 %v1463
    %v4026 = vunpack.c.h.b16 %v1463
    %v4027 = vunpack.c.l.b16 %v1464
    %v4028 = vunpack.c.h.b16 %v1464
    %v4029 = vunpack.c.l.b16 %v1465
    %v4030 = vunpack.c.h.b16 %v1465
    %v4031 = vunpack.c.l.b16 %v1466
    %v4032 = vunpack.c.h.b16 %v1466
    %v4033 = vunpack.c.l.b16 %v1467
    %v4034 = vunpack.c.h.b16 %v1467
    %v4035 = vunpack.c.l.b16 %v1468
    %v4036 = vunpack.c.h.b16 %v1468
    %v4037 = vunpack.c.l.b16 %v1469
    %v4038 = vunpack.c.h.b16 %v1469
    %v4039 = vunpack.c.l.b16 %v1470
    %v4040 = vunpack.c.h.b16 %v1470
    %v4041 = vunpack.c.l.b16 %v1471
    %v4042 = vunpack.c.h.b16 %v1471
    %v4043 = vunpack.c.l.b16 %v1472
    %v4044 = vunpack.c.h.b16 %v1472
    %v4045 = vunpack.c.l.b16 %v1473
    %v4046 = vunpack.c.h.b16 %v1473
    %v4047 = vunpack.c.l.b16 %v1474
    %v4048 = vunpack.c.h.b16 %v1474
    %v4049 = vunpack.c.l.b16 %v1475
    %v4050 = vunpack.c.h.b16 %v1475
    %v4051 = vunpack.c.l.b16 %v1476
    %v4052 = vunpack.c.h.b16 %v1476
    %v4053 = vunpack.c.l.b16 %v1477
    %v4054 = vunpack.c.h.b16 %v1477
    %v4055 = vunpack.c.l.b16 %v1478
    %v4056 = vunpack.c.h.b16 %v1478
    %v4057 = vunpack.c.l.b16 %v1479
    %v4058 = vunpack.c.h.b16 %v1479
    %v4059 = vunpack.c.l.b16 %v1480
    %v4060 = vunpack.c.h.b16 %v1480
    %v4061 = vunpack.c.l.b16 %v1481
    %v4062 = vunpack.c.h.b16 %v1481
    %v4063 = vunpack.c.l.b16 %v1482
    %v4064 = vunpack.c.h.b16 %v1482
    %v4065 = vunpack.c.l.b16 %v1483
    %v4066 = vunpack.c.h.b16 %v1483
    %v4067 = vunpack.c.l.b16 %v1484
    %v4068 = vunpack.c.h.b16 %v1484
    %v4069 = vunpack.c.l.b16 %v1485
    %v4070 = vunpack.c.h.b16 %v1485
    %v4071 = vunpack.c.l.b16 %v1486
    %v4072 = vunpack.c.h.b16 %v1486
    %v4073 = vunpack.c.l.b16 %v1487
    %v4074 = vunpack.c.h.b16 %v1487
    %v4075 = vunpack.c.l.b16 %v1488
    %v4076 = vunpack.c.h.b16 %v1488
    %v4077 = vunpack.c.l.b16 %v1489
    %v4078 = vunpack.c.h.b16 %v1489
    %v4079 = vunpack.c.l.b16 %v1490
    %v4080 = vunpack.c.h.b16 %v1490
    %v4081 = vunpack.c.l.b16 %v1491
    %v4082 = vunpack.c.h.b16 %v1491
    %v4083 = vunpack.c.l.b16 %v1492
    %v4084 = vunpack.c.h.b16 %v1492
    %v4085 = vunpack.c.l.b16 %v1493
    %v4086 = vunpack.c.h.b16 %v1493
    %v4087 = vunpack.c.l.b16 %v1494
    %v4088 = vunpack.c.h.b16 %v1494
    %v4089 = vunpack.c.l.b16 %v1495
    %v4090 = vunpack.c.h.b16 %v1495
    %v4091 = vunpack.c.l.b16 %v1496
    %v4092 = vunpack.c.h.b16 %v1496
    %v4093 = vunpack.c.l.b16 %v1497
    %v4094 = vunpack.c.h.b16 %v1497
    %v4095 = vunpack.c.l.b16 %v1498
    %v4096 = vunpack.c.h.b16 %v1498
    %v4097 = vunpack.c.l.b16 %v1499
    %v4098 = vunpack.c.h.b16 %v1499
    %v4099 = vunpack.c.l.b16 %v1500
    %v4100 = vunpack.c.h.b16 %v1500
    %v4101 = vunpack.c.l.b16 %v1501
    %v4102 = vunpack.c.h.b16 %v1501
    %v4103 = vunpack.c.l.b16 %v1502
    %v4104 = vunpack.c.h.b16 %v1502
    %v4105 = vunpack.c.l.b16 %v1503
    %v4106 = vunpack.c.h.b16 %v1503
    %v4107 = vunpack.c.l.b16 %v1504
    %v4108 = vunpack.c.h.b16 %v1504
    %v4109 = vunpack.c.l.b16 %v1505
    %v4110 = vunpack.c.h.b16 %v1505
    %v4111 = vunpack.c.l.b16 %v1506
    %v4112 = vunpack.c.h.b16 %v1506
    %v4113 = vunpack.c.l.b16 %v1507
    %v4114 = vunpack.c.h.b16 %v1507
    %v4115 = vunpack.c.l.b16 %v1508
    %v4116 = vunpack.c.h.b16 %v1508
    %v4117 = vunpack.c.l.b16 %v1509
    %v4118 = vunpack.c.h.b16 %v1509
    %v4119 = vunpack.c.l.b16 %v1510
    %v4120 = vunpack.c.h.b16 %v1510
    %v4121 = vunpack.c.l.b16 %v1511
    %v4122 = vunpack.c.h.b16 %v1511
    %v4123 = vunpack.c.l.b16 %v1512
    %v4124 = vunpack.c.h.b16 %v1512
    %v4125 = vunpack.c.l.b16 %v1513
    %v4126 = vunpack.c.h.b16 %v1513
    %v4127 = vunpack.c.l.b16 %v1514
    %v4128 = vunpack.c.h.b16 %v1514
    %v4129 = vunpack.c.l.b16 %v1515
    %v4130 = vunpack.c.h.b16 %v1515
    %v4131 = vunpack.c.l.b16 %v1516
    %v4132 = vunpack.c.h.b16 %v1516
    %v4133 = vunpack.c.l.b16 %v1517
    %v4134 = vunpack.c.h.b16 %v1517
    %v4135 = vunpack.c.l.b16 %v1518
    %v4136 = vunpack.c.h.b16 %v1518
    %v4137 = vunpack.c.l.b16 %v1519
    %v4138 = vunpack.c.h.b16 %v1519
    %v4139 = vunpack.c.l.b16 %v1520
    %v4140 = vunpack.c.h.b16 %v1520
    %v4141 = vunpack.c.l.b16 %v1521
    %v4142 = vunpack.c.h.b16 %v1521
    %v4143 = vunpack.c.l.b16 %v1522
    %v4144 = vunpack.c.h.b16 %v1522
    %v4145 = vunpack.c.l.b16 %v1523
    %v4146 = vunpack.c.h.b16 %v1523
    %v4147 = vunpack.c.l.b16 %v1524
    %v4148 = vunpack.c.h.b16 %v1524
    %v4149 = vunpack.c.l.b16 %v1525
    %v4150 = vunpack.c.h.b16 %v1525
    %v4151 = vunpack.c.l.b16 %v1526
    %v4152 = vunpack.c.h.b16 %v1526
    %v4153 = vunpack.c.l.b16 %v1527
    %v4154 = vunpack.c.h.b16 %v1527
    %v4155 = vunpack.c.l.b16 %v1528
    %v4156 = vunpack.c.h.b16 %v1528
    %v4157 = vunpack.c.l.b16 %v1529
    %v4158 = vunpack.c.h.b16 %v1529
    %v4159 = vunpack.c.l.b16 %v1530
    %v4160 = vunpack.c.h.b16 %v1530
    %v4161 = vunpack.c.l.b16 %v1531
    %v4162 = vunpack.c.h.b16 %v1531
    %v4163 = vunpack.c.l.b16 %v1532
    %v4164 = vunpack.c.h.b16 %v1532
    %v4165 = vunpack.c.l.b16 %v1533
    %v4166 = vunpack.c.h.b16 %v1533
    %v4167 = vunpack.c.l.b16 %v1534
    %v4168 = vunpack.c.h.b16 %v1534
    %v4169 = vunpack.c.l.b16 %v1535
    %v4170 = vunpack.c.h.b16 %v1535
    %v4171 = vunpack.c.l.b16 %v1536
    %v4172 = vunpack.c.h.b16 %v1536
    %v4173 = vunpack.c.l.b16 %v1537
    %v4174 = vunpack.c.h.b16 %v1537
    %v4175 = vunpack.c.l.b16 %v1538
    %v4176 = vunpack.c.h.b16 %v1538
    %v4177 = vunpack.c.l.b16 %v1539
    %v4178 = vunpack.c.h.b16 %v1539
    %v4179 = vunpack.c.l.b16 %v1540
    %v4180 = vunpack.c.h.b16 %v1540
    %v4181 = vunpack.c.l.b16 %v1541
    %v4182 = vunpack.c.h.b16 %v1541
    %v4183 = vunpack.c.l.b16 %v1542
    %v4184 = vunpack.c.h.b16 %v1542
    %v4185 = vunpack.c.l.b16 %v1543
    %v4186 = vunpack.c.h.b16 %v1543
    %v4187 = vunpack.c.l.b16 %v1544
    %v4188 = vunpack.c.h.b16 %v1544
    %v4189 = vunpack.c.l.b16 %v1545
    %v4190 = vunpack.c.h.b16 %v1545
    %v4191 = vunpack.c.l.b16 %v1546
    %v4192 = vunpack.c.h.b16 %v1546
    %v4193 = vunpack.c.l.b16 %v1547
    %v4194 = vunpack.c.h.b16 %v1547
    %v4195 = vunpack.c.l.b16 %v1548
    %v4196 = vunpack.c.h.b16 %v1548
    %v4197 = vunpack.c.l.b16 %v1549
    %v4198 = vunpack.c.h.b16 %v1549
    %v4199 = vunpack.c.l.b16 %v1550
    %v4200 = vunpack.c.h.b16 %v1550
    %v4201 = vunpack.c.l.b16 %v1551
    %v4202 = vunpack.c.h.b16 %v1551
    %v4203 = vunpack.c.l.b16 %v1552
    %v4204 = vunpack.c.h.b16 %v1552
    %v4205 = vunpack.c.l.b16 %v1553
    %v4206 = vunpack.c.h.b16 %v1553
    %v4207 = vunpack.c.l.b16 %v1554
    %v4208 = vunpack.c.h.b16 %v1554
    %v4209 = vunpack.c.l.b16 %v1555
    %v4210 = vunpack.c.h.b16 %v1555
    %v4211 = vunpack.c.l.b16 %v1556
    %v4212 = vunpack.c.h.b16 %v1556
    %v4213 = vunpack.c.l.b16 %v1557
    %v4214 = vunpack.c.h.b16 %v1557
    %v4215 = vunpack.c.l.b16 %v1558
    %v4216 = vunpack.c.h.b16 %v1558
    %v4217 = vunpack.c.l.b16 %v1559
    %v4218 = vunpack.c.h.b16 %v1559
    %v4219 = vunpack.c.l.b16 %v1560
    %v4220 = vunpack.c.h.b16 %v1560
    %v4221 = vunpack.c.l.b16 %v1561
    %v4222 = vunpack.c.h.b16 %v1561
    %v4223 = vunpack.c.l.b16 %v1562
    %v4224 = vunpack.c.h.b16 %v1562
    %v4225 = vunpack.c.l.b16 %v1563
    %v4226 = vunpack.c.h.b16 %v1563
    %v4227 = vunpack.c.l.b16 %v1564
    %v4228 = vunpack.c.h.b16 %v1564
    %v4229 = vunpack.c.l.b16 %v1565
    %v4230 = vunpack.c.h.b16 %v1565
    %v4231 = vunpack.c.l.b16 %v1566
    %v4232 = vunpack.c.h.b16 %v1566
    %v4233 = vunpack.c.l.b16 %v1567
    %v4234 = vunpack.c.h.b16 %v1567
    %v4235 = vunpack.c.l.b16 %v1568
    %v4236 = vunpack.c.h.b16 %v1568
    %v4237 = vunpack.c.l.b16 %v1569
    %v4238 = vunpack.c.h.b16 %v1569
    %v4239 = vunpack.c.l.b16 %v1570
    %v4240 = vunpack.c.h.b16 %v1570
    %v4241 = vunpack.c.l.b16 %v1571
    %v4242 = vunpack.c.h.b16 %v1571
    %v4243 = vunpack.c.l.b16 %v1572
    %v4244 = vunpack.c.h.b16 %v1572
    %v4245 = vunpack.c.l.b16 %v1573
    %v4246 = vunpack.c.h.b16 %v1573
    %v4247 = vunpack.c.l.b16 %v1574
    %v4248 = vunpack.c.h.b16 %v1574
    %v4249 = vunpack.c.l.b16 %v1575
    %v4250 = vunpack.c.h.b16 %v1575
    %v4251 = vunpack.c.l.b16 %v1576
    %v4252 = vunpack.c.h.b16 %v1576
    %v4253 = vunpack.c.l.b16 %v1577
    %v4254 = vunpack.c.h.b16 %v1577
    %v4255 = vunpack.c.l.b16 %v1578
    %v4256 = vunpack.c.h.b16 %v1578
    %v4257 = vunpack.c.l.b16 %v1579
    %v4258 = vunpack.c.h.b16 %v1579
    %v4259 = vunpack.c.l.b16 %v1580
    %v4260 = vunpack.c.h.b16 %v1580
    %v4261 = vunpack.c.l.b16 %v1581
    %v4262 = vunpack.c.h.b16 %v1581
    %v4263 = vunpack.c.l.b16 %v1582
    %v4264 = vunpack.c.h.b16 %v1582
    %v4265 = vunpack.c.l.b16 %v1583
    %v4266 = vunpack.c.h.b16 %v1583
    %v4267 = vunpack.c.l.b16 %v1584
    %v4268 = vunpack.c.h.b16 %v1584
    %v4269 = vunpack.c.l.b16 %v1585
    %v4270 = vunpack.c.h.b16 %v1585
    %v4271 = vunpack.c.l.b16 %v1586
    %v4272 = vunpack.c.h.b16 %v1586
    %v4273 = vunpack.c.l.b16 %v1587
    %v4274 = vunpack.c.h.b16 %v1587
    %v4275 = vunpack.c.l.b16 %v1588
    %v4276 = vunpack.c.h.b16 %v1588
    %v4277 = vunpack.c.l.b16 %v1589
    %v4278 = vunpack.c.h.b16 %v1589
    %v4279 = vunpack.c.l.b16 %v1590
    %v4280 = vunpack.c.h.b16 %v1590
    %v4281 = vunpack.c.l.b16 %v1591
    %v4282 = vunpack.c.h.b16 %v1591
    %v4283 = vunpack.c.l.b16 %v1592
    %v4284 = vunpack.c.h.b16 %v1592
    %v4285 = vunpack.c.l.b16 %v1593
    %v4286 = vunpack.c.h.b16 %v1593
    %v4287 = vunpack.c.l.b16 %v1594
    %v4288 = vunpack.c.h.b16 %v1594
    %v4289 = vunpack.c.l.b16 %v1595
    %v4290 = vunpack.c.h.b16 %v1595
    %v4291 = vunpack.c.l.b16 %v1596
    %v4292 = vunpack.c.h.b16 %v1596
    %v4293 = vunpack.c.l.b16 %v1597
    %v4294 = vunpack.c.h.b16 %v1597
    %v4295 = vunpack.c.l.b16 %v1598
    %v4296 = vunpack.c.h.b16 %v1598
    %v4297 = vunpack.c.l.b16 %v1599
    %v4298 = vunpack.c.h.b16 %v1599
    %v4299 = vpack.c.b16 %v3919, %v3915
    %v4300 = vpack.c.b16 %v3920, %v3916
    %v4301 = vpack.c.b16 %v3921, %v3917
    %v4302 = vpack.c.b16 %v3922, %v3918
    %v4303 = vpack.c.b16 %v3927, %v3923
    %v4304 = vpack.c.b16 %v3928, %v3924
    %v4305 = vpack.c.b16 %v3929, %v3925
    %v4306 = vpack.c.b16 %v3930, %v3926
    %v4307 = vpack.c.b16 %v3935, %v3931
    %v4308 = vpack.c.b16 %v3936, %v3932
    %v4309 = vpack.c.b16 %v3937, %v3933
    %v4310 = vpack.c.b16 %v3938, %v3934
    %v4311 = vpack.c.b16 %v3943, %v3939
    %v4312 = vpack.c.b16 %v3944, %v3940
    %v4313 = vpack.c.b16 %v3945, %v3941
    %v4314 = vpack.c.b16 %v3946, %v3942
    %v4315 = vpack.c.b16 %v3951, %v3947
    %v4316 = vpack.c.b16 %v3952, %v3948
    %v4317 = vpack.c.b16 %v3953, %v3949
    %v4318 = vpack.c.b16 %v3954, %v3950
    %v4319 = vpack.c.b16 %v3959, %v3955
    %v4320 = vpack.c.b16 %v3960, %v3956
    %v4321 = vpack.c.b16 %v3961, %v3957
    %v4322 = vpack.c.b16 %v3962, %v3958
    %v4323 = vpack.c.b16 %v3967, %v3963
    %v4324 = vpack.c.b16 %v3968, %v3964
    %v4325 = vpack.c.b16 %v3969, %v3965
    %v4326 = vpack.c.b16 %v3970, %v3966
    %v4327 = vpack.c.b16 %v3975, %v3971
    %v4328 = vpack.c.b16 %v3976, %v3972
    %v4329 = vpack.c.b16 %v3977, %v3973
    %v4330 = vpack.c.b16 %v3978, %v3974
    %v4331 = vpack.c.b16 %v3983, %v3979
    %v4332 = vpack.c.b16 %v3984, %v3980
    %v4333 = vpack.c.b16 %v3985, %v3981
    %v4334 = vpack.c.b16 %v3986, %v3982
    %v4335 = vpack.c.b16 %v3991, %v3987
    %v4336 = vpack.c.b16 %v3992, %v3988
    %v4337 = vpack.c.b16 %v3993, %v3989
    %v4338 = vpack.c.b16 %v3994, %v3990
    %v4339 = vpack.c.b16 %v3999, %v3995
    %v4340 = vpack.c.b16 %v4000, %v3996
    %v4341 = vpack.c.b16 %v4001, %v3997
    %v4342 = vpack.c.b16 %v4002, %v3998
    %v4343 = vpack.c.b16 %v4007, %v4003
    %v4344 = vpack.c.b16 %v4008, %v4004
    %v4345 = vpack.c.b16 %v4009, %v4005
    %v4346 = vpack.c.b16 %v4010, %v4006
    %v4347 = vpack.c.b16 %v4015, %v4011
    %v4348 = vpack.c.b16 %v4016, %v4012
    %v4349 = vpack.c.b16 %v4017, %v4013
    %v4350 = vpack.c.b16 %v4018, %v4014
    %v4351 = vpack.c.b16 %v4023, %v4019
    %v4352 = vpack.c.b16 %v4024, %v4020
    %v4353 = vpack.c.b16 %v4025, %v4021
    %v4354 = vpack.c.b16 %v4026, %v4022
    %v4355 = vpack.c.b16 %v4031, %v4027
    %v4356 = vpack.c.b16 %v4032, %v4028
    %v4357 = vpack.c.b16 %v4033, %v4029
    %v4358 = vpack.c.b16 %v4034, %v4030
    %v4359 = vpack.c.b16 %v4039, %v4035
    %v4360 = vpack.c.b16 %v4040, %v4036
    %v4361 = vpack.c.b16 %v4041, %v4037
    %v4362 = vpack.c.b16 %v4042, %v4038
    %v4363 = vpack.c.b16 %v4047, %v4043
    %v4364 = vpack.c.b16 %v4048, %v4044
    %v4365 = vpack.c.b16 %v4049, %v4045
    %v4366 = vpack.c.b16 %v4050, %v4046
    %v4367 = vpack.c.b16 %v4055, %v4051
    %v4368 = vpack.c.b16 %v4056, %v4052
    %v4369 = vpack.c.b16 %v4057, %v4053
    %v4370 = vpack.c.b16 %v4058, %v4054
    %v4371 = vpack.c.b16 %v4063, %v4059
    %v4372 = vpack.c.b16 %v4064, %v4060
    %v4373 = vpack.c.b16 %v4065, %v4061
    %v4374 = vpack.c.b16 %v4066, %v4062
    %v4375 = vpack.c.b16 %v4071, %v4067
    %v4376 = vpack.c.b16 %v4072, %v4068
    %v4377 = vpack.c.b16 %v4073, %v4069
    %v4378 = vpack.c.b16 %v4074, %v4070
    %v4379 = vpack.c.b16 %v4079, %v4075
    %v4380 = vpack.c.b16 %v4080, %v4076
    %v4381 = vpack.c.b16 %v4081, %v4077
    %v4382 = vpack.c.b16 %v4082, %v4078
    %v4383 = vpack.c.b16 %v4087, %v4083
    %v4384 = vpack.c.b16 %v4088, %v4084
    %v4385 = vpack.c.b16 %v4089, %v4085
    %v4386 = vpack.c.b16 %v4090, %v4086
    %v4387 = vpack.c.b16 %v4095, %v4091
    %v4388 = vpack.c.b16 %v4096, %v4092
    %v4389 = vpack.c.b16 %v4097, %v4093
    %v4390 = vpack.c.b16 %v4098, %v4094
    %v4391 = vpack.c.b16 %v4103, %v4099
    %v4392 = vpack.c.b16 %v4104, %v4100
    %v4393 = vpack.c.b16 %v4105, %v4101
    %v4394 = vpack.c.b16 %v4106, %v4102
    %v4395 = vpack.c.b16 %v4111, %v4107
    %v4396 = vpack.c.b16 %v4112, %v4108
    %v4397 = vpack.c.b16 %v4113, %v4109
    %v4398 = vpack.c.b16 %v4114, %v4110
    %v4399 = vpack.c.b16 %v4119, %v4115
    %v4400 = vpack.c.b16 %v4120, %v4116
    %v4401 = vpack.c.b16 %v4121, %v4117
    %v4402 = vpack.c.b16 %v4122, %v4118
    %v4403 = vpack.c.b16 %v4127, %v4123
    %v4404 = vpack.c.b16 %v4128, %v4124
    %v4405 = vpack.c.b16 %v4129, %v4125
    %v4406 = vpack.c.b16 %v4130, %v4126
    %v4407 = vpack.c.b16 %v4135, %v4131
    %v4408 = vpack.c.b16 %v4136, %v4132
    %v4409 = vpack.c.b16 %v4137, %v4133
    %v4410 = vpack.c.b16 %v4138, %v4134
    %v4411 = vpack.c.b16 %v4143, %v4139
    %v4412 = vpack.c.b16 %v4144, %v4140
    %v4413 = vpack.c.b16 %v4145, %v4141
    %v4414 = vpack.c.b16 %v4146, %v4142
    %v4415 = vpack.c.b16 %v4151, %v4147
    %v4416 = vpack.c.b16 %v4152, %v4148
    %v4417 = vpack.c.b16 %v4153, %v4149
    %v4418 = vpack.c.b16 %v4154, %v4150
    %v4419 = vpack.c.b16 %v4159, %v4155
    %v4420 = vpack.c.b16 %v4160, %v4156
    %v4421 = vpack.c.b16 %v4161, %v4157
    %v4422 = vpack.c.b16 %v4162, %v4158
    %v4423 = vpack.c.b16 %v4167, %v4163
    %v4424 = vpack.c.b16 %v4168, %v4164
    %v4425 = vpack.c.b16 %v4169, %v4165
    %v4426 = vpack.c.b16 %v4170, %v4166
    %v4427 = vpack.c.b16 %v4175, %v4171
    %v4428 = vpack.c.b16 %v4176, %v4172
    %v4429 = vpack.c.b16 %v4177, %v4173
    %v4430 = vpack.c.b16 %v4178, %v4174
    %v4431 = vpack.c.b16 %v4183, %v4179
    %v4432 = vpack.c.b16 %v4184, %v4180
    %v4433 = vpack.c.b16 %v4185, %v4181
    %v4434 = vpack.c.b16 %v4186, %v4182
    %v4435 = vpack.c.b16 %v4191, %v4187
    %v4436 = vpack.c.b16 %v4192, %v4188
    %v4437 = vpack.c.b16 %v4193, %v4189
    %v4438 = vpack.c.b16 %v4194, %v4190
    %v4439 = vpack.c.b16 %v4199, %v4195
    %v4440 = vpack.c.b16 %v4200, %v4196
    %v4441 = vpack.c.b16 %v4201, %v4197
    %v4442 = vpack.c.b16 %v4202, %v4198
    %v4443 = vpack.c.b16 %v4207, %v4203
    %v4444 = vpack.c.b16 %v4208, %v4204
    %v4445 = vpack.c.b16 %v4209, %v4205
    %v4446 = vpack.c.b16 %v4210, %v4206
    %v4447 = vpack.c.b16 %v4215, %v4211
    %v4448 = vpack.c.b16 %v4216, %v4212
    %v4449 = vpack.c.b16 %v4217, %v4213
    %v4450 = vpack.c.b16 %v4218, %v4214
    %v4451 = vpack.c.b16 %v4223, %v4219
    %v4452 = vpack.c.b16 %v4224, %v4220
    %v4453 = vpack.c.b16 %v4225, %v4221
    %v4454 = vpack.c.b16 %v4226, %v4222
    %v4455 = vpack.c.b16 %v4231, %v4227
    %v4456 = vpack.c.b16 %v4232, %v4228
    %v4457 = vpack.c.b16 %v4233, %v4229
    %v4458 = vpack.c.b16 %v4234, %v4230
    %v4459 = vpack.c.b16 %v4239, %v4235
    %v4460 = vpack.c.b16 %v4240, %v4236
    %v4461 = vpack.c.b16 %v4241, %v4237
    %v4462 = vpack.c.b16 %v4242, %v4238
    %v4463 = vpack.c.b16 %v4247, %v4243
    %v4464 = vpack.c.b16 %v4248, %v4244
    %v4465 = vpack.c.b16 %v4249, %v4245
    %v4466 = vpack.c.b16 %v4250, %v4246
    %v4467 = vpack.c.b16 %v4255, %v4251
    %v4468 = vpack.c.b16 %v4256, %v4252
    %v4469 = vpack.c.b16 %v4257, %v4253
    %v4470 = vpack.c.b16 %v4258, %v4254
    %v4471 = vpack.c.b16 %v4263, %v4259
    %v4472 = vpack.c.b16 %v4264, %v4260
    %v4473 = vpack.c.b16 %v4265, %v4261
    %v4474 = vpack.c.b16 %v4266, %v4262
    %v4475 = vpack.c.b16 %v4271, %v4267
    %v4476 = vpack.c.b16 %v4272, %v4268
    %v4477 = vpack.c.b16 %v4273, %v4269
    %v4478 = vpack.c.b16 %v4274, %v4270
    %v4479 = vpack.c.b16 %v4279, %v4275
    %v4480 = vpack.c.b16 %v4280, %v4276
    %v4481 = vpack.c.b16 %v4281, %v4277
    %v4482 = vpack.c.b16 %v4282, %v4278
    %v4483 = vpack.c.b16 %v4287, %v4283
    %v4484 = vpack.c.b16 %v4288, %v4284
    %v4485 = vpack.c.b16 %v4289, %v4285
    %v4486 = vpack.c.b16 %v4290, %v4286
    %v4487 = vpack.c.b16 %v4295, %v4291
    %v4488 = vpack.c.b16 %v4296, %v4292
    %v4489 = vpack.c.b16 %v4297, %v4293
    %v4490 = vpack.c.b16 %v4298, %v4294
    %4683 = vmatpush.bf16.msra.mxu0 %v4327
    %4684 = vmatpush.bf16.msra.mxu0 %v4323
    %4685 = vmatpush.bf16.msra.mxu0 %v4319
    %4686 = vmatpush.bf16.msra.mxu0 %v4315
    %4687 = vmatpush.bf16.msra.mxu0 %v4311
    %4688 = vmatpush.bf16.msra.mxu0 %v4307
    %4689 = vmatpush.bf16.msra.mxu0 %v4303
    %4690 = vmatpush.bf16.msra.mxu0 %v4299
    %4691 = vmatmul.bf16.gmra.mxu0 %v1325
    %v4692 = vpop.f32.mrf.mxu0
    %v4693 = vadd.f32 %v3372, %v4692
    %v4694 = vpop.f32.mrf.mxu0
    %v4695 = vadd.f32 %v3374, %v4694
    %4696 = vmatmul.bf16.gmra.mxu0 %v1333
    %v4697 = vpop.f32.mrf.mxu0
    %v4698 = vadd.f32 %v3377, %v4697
    %v4699 = vpop.f32.mrf.mxu0
    %v4700 = vadd.f32 %v3379, %v4699
    %4701 = vdwg.mxu0
    %4702 = vmatpush.bf16.msra.mxu0 %v4359
    %4703 = vmatpush.bf16.msra.mxu0 %v4355
    %4704 = vmatpush.bf16.msra.mxu0 %v4351
    %4705 = vmatpush.bf16.msra.mxu0 %v4347
    %4706 = vmatpush.bf16.msra.mxu0 %v4343
    %4707 = vmatpush.bf16.msra.mxu0 %v4339
    %4708 = vmatpush.bf16.msra.mxu0 %v4335
    %4709 = vmatpush.bf16.msra.mxu0 %v4331
    %4710 = vmatmul.bf16.gmra.mxu0 %v1329
    %v4711 = vpop.f32.mrf.mxu0
    %v4712 = vadd.f32 %v4693, %v4711
    %v4713 = vpop.f32.mrf.mxu0
    %v4714 = vadd.f32 %v4695, %v4713
    %4715 = vmatmul.bf16.gmra.mxu0 %v1337
    %v4716 = vpop.f32.mrf.mxu0
    %v4717 = vadd.f32 %v4698, %v4716
    %v4718 = vpop.f32.mrf.mxu0
    %v4719 = vadd.f32 %v4700, %v4718
    %4720 = vdwg.mxu0
    %4721 = vmatpush.bf16.msra.mxu0 %v4391
    %4722 = vmatpush.bf16.msra.mxu0 %v4387
    %4723 = vmatpush.bf16.msra.mxu0 %v4383
    %4724 = vmatpush.bf16.msra.mxu0 %v4379
    %4725 = vmatpush.bf16.msra.mxu0 %v4375
    %4726 = vmatpush.bf16.msra.mxu0 %v4371
    %4727 = vmatpush.bf16.msra.mxu0 %v4367
    %4728 = vmatpush.bf16.msra.mxu0 %v4363
    %4729 = vmatmul.bf16.gmra.mxu0 %v1368
    %v4730 = vpop.f32.mrf.mxu0
    %v4731 = vadd.f32 %v4712, %v4730
    %v4732 = vpop.f32.mrf.mxu0
    %v4733 = vadd.f32 %v4714, %v4732
    %4734 = vmatmul.bf16.gmra.mxu0 %v1376
    %v4735 = vpop.f32.mrf.mxu0
    %v4736 = vadd.f32 %v4717, %v4735
    %v4737 = vpop.f32.mrf.mxu0
    %v4738 = vadd.f32 %v4719, %v4737
    %4739 = vdwg.mxu0
    %4740 = vmatpush.bf16.msra.mxu0 %v4423
    %4741 = vmatpush.bf16.msra.mxu0 %v4419
    %4742 = vmatpush.bf16.msra.mxu0 %v4415
    %4743 = vmatpush.bf16.msra.mxu0 %v4411
    %4744 = vmatpush.bf16.msra.mxu0 %v4407
    %4745 = vmatpush.bf16.msra.mxu0 %v4403
    %4746 = vmatpush.bf16.msra.mxu0 %v4399
    %4747 = vmatpush.bf16.msra.mxu0 %v4395
    %4748 = vmatmul.bf16.gmra.mxu0 %v1372
    %v4749 = vpop.f32.mrf.mxu0
    %v4750 = vadd.f32 %v4731, %v4749
    %v4751 = vpop.f32.mrf.mxu0
    %v4752 = vadd.f32 %v4733, %v4751
    %4753 = vmatmul.bf16.gmra.mxu0 %v1380
    %v4754 = vpop.f32.mrf.mxu0
    %v4755 = vadd.f32 %v4736, %v4754
    %v4756 = vpop.f32.mrf.mxu0
    %v4757 = vadd.f32 %v4738, %v4756
    %4758 = vdwg.mxu0
    %4759 = vmatpush.bf16.msra.mxu0 %v4455
    %4760 = vmatpush.bf16.msra.mxu0 %v4451
    %4761 = vmatpush.bf16.msra.mxu0 %v4447
    %4762 = vmatpush.bf16.msra.mxu0 %v4443
    %4763 = vmatpush.bf16.msra.mxu0 %v4439
    %4764 = vmatpush.bf16.msra.mxu0 %v4435
    %4765 = vmatpush.bf16.msra.mxu0 %v4431
    %4766 = vmatpush.bf16.msra.mxu0 %v4427
    %4767 = vmatmul.bf16.gmra.mxu0 %v1397
    %v4768 = vpop.f32.mrf.mxu0
    %v4769 = vadd.f32 %v4750, %v4768
    %v4770 = vpop.f32.mrf.mxu0
    %v4771 = vadd.f32 %v4752, %v4770
    %4772 = vmatmul.bf16.gmra.mxu0 %v1403
    %v4773 = vpop.f32.mrf.mxu0
    %v4774 = vadd.f32 %v4755, %v4773
    %v4775 = vpop.f32.mrf.mxu0
    %v4776 = vadd.f32 %v4757, %v4775
    %4777 = vdwg.mxu0
    %4778 = vmatpush.bf16.msra.mxu0 %v4487
    %4779 = vmatpush.bf16.msra.mxu0 %v4483
    %4780 = vmatpush.bf16.msra.mxu0 %v4479
    %4781 = vmatpush.bf16.msra.mxu0 %v4475
    %4782 = vmatpush.bf16.msra.mxu0 %v4471
    %4783 = vmatpush.bf16.msra.mxu0 %v4467
    %4784 = vmatpush.bf16.msra.mxu0 %v4463
    %4785 = vmatpush.bf16.msra.mxu0 %v4459
    %4786 = vmatmul.bf16.gmra.mxu0 %v1400
    %v4787 = vpop.f32.mrf.mxu0
    %v4788 = vadd.f32 %v4769, %v4787
    %v4789 = vpop.f32.mrf.mxu0
    %v4790 = vadd.f32 %v4771, %v4789
    %4791 = vmatmul.bf16.gmra.mxu0 %v1406
    %v4792 = vpop.f32.mrf.mxu0
    %v4793 = vadd.f32 %v4774, %v4792
    %v4794 = vpop.f32.mrf.mxu0
    %v4795 = vadd.f32 %v4776, %v4794
    %4796 = vdwg.mxu0
    %4797 = vmatpush.bf16.msra.mxu0 %v4328
    %4798 = vmatpush.bf16.msra.mxu0 %v4324
    %4799 = vmatpush.bf16.msra.mxu0 %v4320
    %4800 = vmatpush.bf16.msra.mxu0 %v4316
    %4801 = vmatpush.bf16.msra.mxu0 %v4312
    %4802 = vmatpush.bf16.msra.mxu0 %v4308
    %4803 = vmatpush.bf16.msra.mxu0 %v4304
    %4804 = vmatpush.bf16.msra.mxu0 %v4300
    %4805 = vmatmul.bf16.gmra.mxu0 %v1325
    %v4806 = vpop.f32.mrf.mxu0
    %v4807 = vadd.f32 %v3486, %v4806
    %v4808 = vpop.f32.mrf.mxu0
    %v4809 = vadd.f32 %v3488, %v4808
    %4810 = vmatmul.bf16.gmra.mxu0 %v1333
    %v4811 = vpop.f32.mrf.mxu0
    %v4812 = vadd.f32 %v3491, %v4811
    %v4813 = vpop.f32.mrf.mxu0
    %v4814 = vadd.f32 %v3493, %v4813
    %4815 = vdwg.mxu0
    %4816 = vmatpush.bf16.msra.mxu0 %v4360
    %4817 = vmatpush.bf16.msra.mxu0 %v4356
    %4818 = vmatpush.bf16.msra.mxu0 %v4352
    %4819 = vmatpush.bf16.msra.mxu0 %v4348
    %4820 = vmatpush.bf16.msra.mxu0 %v4344
    %4821 = vmatpush.bf16.msra.mxu0 %v4340
    %4822 = vmatpush.bf16.msra.mxu0 %v4336
    %4823 = vmatpush.bf16.msra.mxu0 %v4332
    %4824 = vmatmul.bf16.gmra.mxu0 %v1329
    %v4825 = vpop.f32.mrf.mxu0
    %v4826 = vadd.f32 %v4807, %v4825
    %v4827 = vpop.f32.mrf.mxu0
    %v4828 = vadd.f32 %v4809, %v4827
    %4829 = vmatmul.bf16.gmra.mxu0 %v1337
    %v4830 = vpop.f32.mrf.mxu0
    %v4831 = vadd.f32 %v4812, %v4830
    %v4832 = vpop.f32.mrf.mxu0
    %v4833 = vadd.f32 %v4814, %v4832
    %4834 = vdwg.mxu0
    %4835 = vmatpush.bf16.msra.mxu0 %v4392
    %4836 = vmatpush.bf16.msra.mxu0 %v4388
    %4837 = vmatpush.bf16.msra.mxu0 %v4384
    %4838 = vmatpush.bf16.msra.mxu0 %v4380
    %4839 = vmatpush.bf16.msra.mxu0 %v4376
    %4840 = vmatpush.bf16.msra.mxu0 %v4372
    %4841 = vmatpush.bf16.msra.mxu0 %v4368
    %4842 = vmatpush.bf16.msra.mxu0 %v4364
    %4843 = vmatmul.bf16.gmra.mxu0 %v1368
    %v4844 = vpop.f32.mrf.mxu0
    %v4845 = vadd.f32 %v4826, %v4844
    %v4846 = vpop.f32.mrf.mxu0
    %v4847 = vadd.f32 %v4828, %v4846
    %4848 = vmatmul.bf16.gmra.mxu0 %v1376
    %v4849 = vpop.f32.mrf.mxu0
    %v4850 = vadd.f32 %v4831, %v4849
    %v4851 = vpop.f32.mrf.mxu0
    %v4852 = vadd.f32 %v4833, %v4851
    %4853 = vdwg.mxu0
    %4854 = vmatpush.bf16.msra.mxu0 %v4424
    %4855 = vmatpush.bf16.msra.mxu0 %v4420
    %4856 = vmatpush.bf16.msra.mxu0 %v4416
    %4857 = vmatpush.bf16.msra.mxu0 %v4412
    %4858 = vmatpush.bf16.msra.mxu0 %v4408
    %4859 = vmatpush.bf16.msra.mxu0 %v4404
    %4860 = vmatpush.bf16.msra.mxu0 %v4400
    %4861 = vmatpush.bf16.msra.mxu0 %v4396
    %4862 = vmatmul.bf16.gmra.mxu0 %v1372
    %v4863 = vpop.f32.mrf.mxu0
    %v4864 = vadd.f32 %v4845, %v4863
    %v4865 = vpop.f32.mrf.mxu0
    %v4866 = vadd.f32 %v4847, %v4865
    %4867 = vmatmul.bf16.gmra.mxu0 %v1380
    %v4868 = vpop.f32.mrf.mxu0
    %v4869 = vadd.f32 %v4850, %v4868
    %v4870 = vpop.f32.mrf.mxu0
    %v4871 = vadd.f32 %v4852, %v4870
    %4872 = vdwg.mxu0
    %4873 = vmatpush.bf16.msra.mxu0 %v4456
    %4874 = vmatpush.bf16.msra.mxu0 %v4452
    %4875 = vmatpush.bf16.msra.mxu0 %v4448
    %4876 = vmatpush.bf16.msra.mxu0 %v4444
    %4877 = vmatpush.bf16.msra.mxu0 %v4440
    %4878 = vmatpush.bf16.msra.mxu0 %v4436
    %4879 = vmatpush.bf16.msra.mxu0 %v4432
    %4880 = vmatpush.bf16.msra.mxu0 %v4428
    %4881 = vmatmul.bf16.gmra.mxu0 %v1397
    %v4882 = vpop.f32.mrf.mxu0
    %v4883 = vadd.f32 %v4864, %v4882
    %v4884 = vpop.f32.mrf.mxu0
    %v4885 = vadd.f32 %v4866, %v4884
    %4886 = vmatmul.bf16.gmra.mxu0 %v1403
    %v4887 = vpop.f32.mrf.mxu0
    %v4888 = vadd.f32 %v4869, %v4887
    %v4889 = vpop.f32.mrf.mxu0
    %v4890 = vadd.f32 %v4871, %v4889
    %4891 = vdwg.mxu0
    %4892 = vmatpush.bf16.msra.mxu0 %v4488
    %4893 = vmatpush.bf16.msra.mxu0 %v4484
    %4894 = vmatpush.bf16.msra.mxu0 %v4480
    %4895 = vmatpush.bf16.msra.mxu0 %v4476
    %4896 = vmatpush.bf16.msra.mxu0 %v4472
    %4897 = vmatpush.bf16.msra.mxu0 %v4468
    %4898 = vmatpush.bf16.msra.mxu0 %v4464
    %4899 = vmatpush.bf16.msra.mxu0 %v4460
    %4900 = vmatmul.bf16.gmra.mxu0 %v1400
    %v4901 = vpop.f32.mrf.mxu0
    %v4902 = vadd.f32 %v4883, %v4901
    %v4903 = vpop.f32.mrf.mxu0
    %v4904 = vadd.f32 %v4885, %v4903
    %4905 = vmatmul.bf16.gmra.mxu0 %v1406
    %v4906 = vpop.f32.mrf.mxu0
    %v4907 = vadd.f32 %v4888, %v4906
    %v4908 = vpop.f32.mrf.mxu0
    %v4909 = vadd.f32 %v4890, %v4908
    %4910 = vdwg.mxu0
    %4911 = vmatpush.bf16.msra.mxu0 %v4329
    %4912 = vmatpush.bf16.msra.mxu0 %v4325
    %4913 = vmatpush.bf16.msra.mxu0 %v4321
    %4914 = vmatpush.bf16.msra.mxu0 %v4317
    %4915 = vmatpush.bf16.msra.mxu0 %v4313
    %4916 = vmatpush.bf16.msra.mxu0 %v4309
    %4917 = vmatpush.bf16.msra.mxu0 %v4305
    %4918 = vmatpush.bf16.msra.mxu0 %v4301
    %4919 = vmatmul.bf16.gmra.mxu0 %v1325
    %v4920 = vpop.f32.mrf.mxu0
    %v4921 = vadd.f32 %v3600, %v4920
    %v4922 = vpop.f32.mrf.mxu0
    %v4923 = vadd.f32 %v3602, %v4922
    %4924 = vmatmul.bf16.gmra.mxu0 %v1333
    %v4925 = vpop.f32.mrf.mxu0
    %v4926 = vadd.f32 %v3605, %v4925
    %v4927 = vpop.f32.mrf.mxu0
    %v4928 = vadd.f32 %v3607, %v4927
    %4929 = vdwg.mxu0
    %4930 = vmatpush.bf16.msra.mxu0 %v4361
    %4931 = vmatpush.bf16.msra.mxu0 %v4357
    %4932 = vmatpush.bf16.msra.mxu0 %v4353
    %4933 = vmatpush.bf16.msra.mxu0 %v4349
    %4934 = vmatpush.bf16.msra.mxu0 %v4345
    %4935 = vmatpush.bf16.msra.mxu0 %v4341
    %4936 = vmatpush.bf16.msra.mxu0 %v4337
    %4937 = vmatpush.bf16.msra.mxu0 %v4333
    %4938 = vmatmul.bf16.gmra.mxu0 %v1329
    %v4939 = vpop.f32.mrf.mxu0
    %v4940 = vadd.f32 %v4921, %v4939
    %v4941 = vpop.f32.mrf.mxu0
    %v4942 = vadd.f32 %v4923, %v4941
    %4943 = vmatmul.bf16.gmra.mxu0 %v1337
    %v4944 = vpop.f32.mrf.mxu0
    %v4945 = vadd.f32 %v4926, %v4944
    %v4946 = vpop.f32.mrf.mxu0
    %v4947 = vadd.f32 %v4928, %v4946
    %4948 = vdwg.mxu0
    %4949 = vmatpush.bf16.msra.mxu0 %v4393
    %4950 = vmatpush.bf16.msra.mxu0 %v4389
    %4951 = vmatpush.bf16.msra.mxu0 %v4385
    %4952 = vmatpush.bf16.msra.mxu0 %v4381
    %4953 = vmatpush.bf16.msra.mxu0 %v4377
    %4954 = vmatpush.bf16.msra.mxu0 %v4373
    %4955 = vmatpush.bf16.msra.mxu0 %v4369
    %4956 = vmatpush.bf16.msra.mxu0 %v4365
    %4957 = vmatmul.bf16.gmra.mxu0 %v1368
    %v4958 = vpop.f32.mrf.mxu0
    %v4959 = vadd.f32 %v4940, %v4958
    %v4960 = vpop.f32.mrf.mxu0
    %v4961 = vadd.f32 %v4942, %v4960
    %4962 = vmatmul.bf16.gmra.mxu0 %v1376
    %v4963 = vpop.f32.mrf.mxu0
    %v4964 = vadd.f32 %v4945, %v4963
    %v4965 = vpop.f32.mrf.mxu0
    %v4966 = vadd.f32 %v4947, %v4965
    %4967 = vdwg.mxu0
    %4968 = vmatpush.bf16.msra.mxu0 %v4425
    %4969 = vmatpush.bf16.msra.mxu0 %v4421
    %4970 = vmatpush.bf16.msra.mxu0 %v4417
    %4971 = vmatpush.bf16.msra.mxu0 %v4413
    %4972 = vmatpush.bf16.msra.mxu0 %v4409
    %4973 = vmatpush.bf16.msra.mxu0 %v4405
    %4974 = vmatpush.bf16.msra.mxu0 %v4401
    %4975 = vmatpush.bf16.msra.mxu0 %v4397
    %4976 = vmatmul.bf16.gmra.mxu0 %v1372
    %v4977 = vpop.f32.mrf.mxu0
    %v4978 = vadd.f32 %v4959, %v4977
    %v4979 = vpop.f32.mrf.mxu0
    %v4980 = vadd.f32 %v4961, %v4979
    %4981 = vmatmul.bf16.gmra.mxu0 %v1380
    %v4982 = vpop.f32.mrf.mxu0
    %v4983 = vadd.f32 %v4964, %v4982
    %v4984 = vpop.f32.mrf.mxu0
    %v4985 = vadd.f32 %v4966, %v4984
    %4986 = vdwg.mxu0
    %4987 = vmatpush.bf16.msra.mxu0 %v4457
    %4988 = vmatpush.bf16.msra.mxu0 %v4453
    %4989 = vmatpush.bf16.msra.mxu0 %v4449
    %4990 = vmatpush.bf16.msra.mxu0 %v4445
    %4991 = vmatpush.bf16.msra.mxu0 %v4441
    %4992 = vmatpush.bf16.msra.mxu0 %v4437
    %4993 = vmatpush.bf16.msra.mxu0 %v4433
    %4994 = vmatpush.bf16.msra.mxu0 %v4429
    %4995 = vmatmul.bf16.gmra.mxu0 %v1397
    %v4996 = vpop.f32.mrf.mxu0
    %v4997 = vadd.f32 %v4978, %v4996
    %v4998 = vpop.f32.mrf.mxu0
    %v4999 = vadd.f32 %v4980, %v4998
    %5000 = vmatmul.bf16.gmra.mxu0 %v1403
    %v5001 = vpop.f32.mrf.mxu0
    %v5002 = vadd.f32 %v4983, %v5001
    %v5003 = vpop.f32.mrf.mxu0
    %v5004 = vadd.f32 %v4985, %v5003
    %5005 = vdwg.mxu0
    %5006 = vmatpush.bf16.msra.mxu0 %v4489
    %5007 = vmatpush.bf16.msra.mxu0 %v4485
    %5008 = vmatpush.bf16.msra.mxu0 %v4481
    %5009 = vmatpush.bf16.msra.mxu0 %v4477
    %5010 = vmatpush.bf16.msra.mxu0 %v4473
    %5011 = vmatpush.bf16.msra.mxu0 %v4469
    %5012 = vmatpush.bf16.msra.mxu0 %v4465
    %5013 = vmatpush.bf16.msra.mxu0 %v4461
    %5014 = vmatmul.bf16.gmra.mxu0 %v1400
    %v5015 = vpop.f32.mrf.mxu0
    %v5016 = vadd.f32 %v4997, %v5015
    %v5017 = vpop.f32.mrf.mxu0
    %v5018 = vadd.f32 %v4999, %v5017
    %5019 = vmatmul.bf16.gmra.mxu0 %v1406
    %v5020 = vpop.f32.mrf.mxu0
    %v5021 = vadd.f32 %v5002, %v5020
    %v5022 = vpop.f32.mrf.mxu0
    %v5023 = vadd.f32 %v5004, %v5022
    %5024 = vdwg.mxu0
    %5025 = vmatpush.bf16.msra.mxu0 %v4330
    %5026 = vmatpush.bf16.msra.mxu0 %v4326
    %5027 = vmatpush.bf16.msra.mxu0 %v4322
    %5028 = vmatpush.bf16.msra.mxu0 %v4318
    %5029 = vmatpush.bf16.msra.mxu0 %v4314
    %5030 = vmatpush.bf16.msra.mxu0 %v4310
    %5031 = vmatpush.bf16.msra.mxu0 %v4306
    %5032 = vmatpush.bf16.msra.mxu0 %v4302
    %5033 = vmatmul.bf16.gmra.mxu0 %v1325
    %v5034 = vpop.f32.mrf.mxu0
    %v5035 = vadd.f32 %v3714, %v5034
    %v5036 = vpop.f32.mrf.mxu0
    %v5037 = vadd.f32 %v3716, %v5036
    %5038 = vmatmul.bf16.gmra.mxu0 %v1333
    %v5039 = vpop.f32.mrf.mxu0
    %v5040 = vadd.f32 %v3719, %v5039
    %v5041 = vpop.f32.mrf.mxu0
    %v5042 = vadd.f32 %v3721, %v5041
    %5043 = vdwg.mxu0
    %5044 = vmatpush.bf16.msra.mxu0 %v4362
    %5045 = vmatpush.bf16.msra.mxu0 %v4358
    %5046 = vmatpush.bf16.msra.mxu0 %v4354
    %5047 = vmatpush.bf16.msra.mxu0 %v4350
    %5048 = vmatpush.bf16.msra.mxu0 %v4346
    %5049 = vmatpush.bf16.msra.mxu0 %v4342
    %5050 = vmatpush.bf16.msra.mxu0 %v4338
    %5051 = vmatpush.bf16.msra.mxu0 %v4334
    %5052 = vmatmul.bf16.gmra.mxu0 %v1329
    %v5053 = vpop.f32.mrf.mxu0
    %v5054 = vadd.f32 %v5035, %v5053
    %v5055 = vpop.f32.mrf.mxu0
    %v5056 = vadd.f32 %v5037, %v5055
    %5057 = vmatmul.bf16.gmra.mxu0 %v1337
    %v5058 = vpop.f32.mrf.mxu0
    %v5059 = vadd.f32 %v5040, %v5058
    %v5060 = vpop.f32.mrf.mxu0
    %v5061 = vadd.f32 %v5042, %v5060
    %5062 = vdwg.mxu0
    %5063 = vmatpush.bf16.msra.mxu0 %v4394
    %5064 = vmatpush.bf16.msra.mxu0 %v4390
    %5065 = vmatpush.bf16.msra.mxu0 %v4386
    %5066 = vmatpush.bf16.msra.mxu0 %v4382
    %5067 = vmatpush.bf16.msra.mxu0 %v4378
    %5068 = vmatpush.bf16.msra.mxu0 %v4374
    %5069 = vmatpush.bf16.msra.mxu0 %v4370
    %5070 = vmatpush.bf16.msra.mxu0 %v4366
    %5071 = vmatmul.bf16.gmra.mxu0 %v1368
    %v5072 = vpop.f32.mrf.mxu0
    %v5073 = vadd.f32 %v5054, %v5072
    %v5074 = vpop.f32.mrf.mxu0
    %v5075 = vadd.f32 %v5056, %v5074
    %5076 = vmatmul.bf16.gmra.mxu0 %v1376
    %v5077 = vpop.f32.mrf.mxu0
    %v5078 = vadd.f32 %v5059, %v5077
    %v5079 = vpop.f32.mrf.mxu0
    %v5080 = vadd.f32 %v5061, %v5079
    %5081 = vdwg.mxu0
    %5082 = vmatpush.bf16.msra.mxu0 %v4426
    %5083 = vmatpush.bf16.msra.mxu0 %v4422
    %5084 = vmatpush.bf16.msra.mxu0 %v4418
    %5085 = vmatpush.bf16.msra.mxu0 %v4414
    %5086 = vmatpush.bf16.msra.mxu0 %v4410
    %5087 = vmatpush.bf16.msra.mxu0 %v4406
    %5088 = vmatpush.bf16.msra.mxu0 %v4402
    %5089 = vmatpush.bf16.msra.mxu0 %v4398
    %5090 = vmatmul.bf16.gmra.mxu0 %v1372
    %v5091 = vpop.f32.mrf.mxu0
    %v5092 = vadd.f32 %v5073, %v5091
    %v5093 = vpop.f32.mrf.mxu0
    %v5094 = vadd.f32 %v5075, %v5093
    %5095 = vmatmul.bf16.gmra.mxu0 %v1380
    %v5096 = vpop.f32.mrf.mxu0
    %v5097 = vadd.f32 %v5078, %v5096
    %v5098 = vpop.f32.mrf.mxu0
    %v5099 = vadd.f32 %v5080, %v5098
    %5100 = vdwg.mxu0
    %5101 = vmatpush.bf16.msra.mxu0 %v4458
    %5102 = vmatpush.bf16.msra.mxu0 %v4454
    %5103 = vmatpush.bf16.msra.mxu0 %v4450
    %5104 = vmatpush.bf16.msra.mxu0 %v4446
    %5105 = vmatpush.bf16.msra.mxu0 %v4442
    %5106 = vmatpush.bf16.msra.mxu0 %v4438
    %5107 = vmatpush.bf16.msra.mxu0 %v4434
    %5108 = vmatpush.bf16.msra.mxu0 %v4430
    %5109 = vmatmul.bf16.gmra.mxu0 %v1397
    %v5110 = vpop.f32.mrf.mxu0
    %v5111 = vadd.f32 %v5092, %v5110
    %v5112 = vpop.f32.mrf.mxu0
    %v5113 = vadd.f32 %v5094, %v5112
    %5114 = vmatmul.bf16.gmra.mxu0 %v1403
    %v5115 = vpop.f32.mrf.mxu0
    %v5116 = vadd.f32 %v5097, %v5115
    %v5117 = vpop.f32.mrf.mxu0
    %v5118 = vadd.f32 %v5099, %v5117
    %5119 = vdwg.mxu0
    %5120 = vmatpush.bf16.msra.mxu0 %v4490
    %5121 = vmatpush.bf16.msra.mxu0 %v4486
    %5122 = vmatpush.bf16.msra.mxu0 %v4482
    %5123 = vmatpush.bf16.msra.mxu0 %v4478
    %5124 = vmatpush.bf16.msra.mxu0 %v4474
    %5125 = vmatpush.bf16.msra.mxu0 %v4470
    %5126 = vmatpush.bf16.msra.mxu0 %v4466
    %5127 = vmatpush.bf16.msra.mxu0 %v4462
    %5128 = vmatmul.bf16.gmra.mxu0 %v1400
    %v5129 = vpop.f32.mrf.mxu0
    %v5130 = vadd.f32 %v5111, %v5129
    %v5131 = vpop.f32.mrf.mxu0
    %v5132 = vadd.f32 %v5113, %v5131
    %5133 = vmatmul.bf16.gmra.mxu0 %v1406
    %v5134 = vpop.f32.mrf.mxu0
    %v5135 = vadd.f32 %v5116, %v5134
    %v5136 = vpop.f32.mrf.mxu0
    %v5137 = vadd.f32 %v5118, %v5136
    %5138 = vdwg.mxu0
    %s5139 = sshll.u32 %s1292, 4
    %5140 = dma.done [#allocation4], %s5139
    %v5141 = vld [vmem:[%s1298] sm:$0xff]
    %v5142 = vld [vmem:[%s1300] sm:$0xff]
    %s5143 = scalar_lea.vmem [#allocation2], 160
    %v5144 = vld [vmem:[%s5143] sm:$0xff]
    %s5145 = scalar_lea.vmem [#allocation2], 176
    %v5146 = vld [vmem:[%s5145] sm:$0xff]
    %v5148 = vunpack.c.l.b16 %v5141
    %v5149 = vunpack.c.h.b16 %v5141
    %v5150 = vpack.c.b16 %v5148, %v5148
    %v5151 = vpack.c.b16 %v5149, %v5149
    %v5153 = vunpack.c.l.b16 %v5142
    %v5154 = vunpack.c.h.b16 %v5142
    %v5155 = vpack.c.b16 %v5153, %v5153
    %v5156 = vpack.c.b16 %v5154, %v5154
    %v5158 = vunpack.c.l.b16 %v5144
    %v5159 = vunpack.c.h.b16 %v5144
    %v5160 = vpack.c.b16 %v5158, %v5158
    %v5161 = vpack.c.b16 %v5159, %v5159
    %v5163 = vunpack.c.l.b16 %v5146
    %v5164 = vunpack.c.h.b16 %v5146
    %v5165 = vpack.c.b16 %v5163, %v5163
    %v5166 = vpack.c.b16 %v5164, %v5164
    %v5169 = vsel %vm1322, %v5150, %v5155
    %v5173 = vsel %vm1322, %v5151, %v5156
    %v5177 = vsel %vm1322, %v5160, %v5165
    %v5181 = vsel %vm1322, %v5161, %v5166
    %v5183 = vld [vmem:[%s668] sm:$0xff]
    %v5184 = vld [vmem:[%s1344] sm:$0xff]
    %v5185 = vld [vmem:[%s882] sm:$0xff]
    %s5186 = scalar_lea.vmem [#allocation2], 184
    %v5187 = vld [vmem:[%s5186] sm:$0xff]
    %v5189 = vunpack.c.l.b16 %v5183
    %v5190 = vunpack.c.h.b16 %v5183
    %v5191 = vpack.c.b16 %v5189, %v5189
    %v5192 = vpack.c.b16 %v5190, %v5190
    %v5194 = vunpack.c.l.b16 %v5184
    %v5195 = vunpack.c.h.b16 %v5184
    %v5196 = vpack.c.b16 %v5194, %v5194
    %v5197 = vpack.c.b16 %v5195, %v5195
    %v5199 = vunpack.c.l.b16 %v5185
    %v5200 = vunpack.c.h.b16 %v5185
    %v5201 = vpack.c.b16 %v5199, %v5199
    %v5202 = vpack.c.b16 %v5200, %v5200
    %v5204 = vunpack.c.l.b16 %v5187
    %v5205 = vunpack.c.h.b16 %v5187
    %v5206 = vpack.c.b16 %v5204, %v5204
    %v5207 = vpack.c.b16 %v5205, %v5205
    %v5210 = vsel %vm1322, %v5191, %v5196
    %v5214 = vsel %vm1322, %v5192, %v5197
    %v5218 = vsel %vm1322, %v5201, %v5206
    %v5222 = vsel %vm1322, %v5202, %v5207
    %v5224 = vld [vmem:[%s1384] sm:$0xff]
    %s5225 = scalar_lea.vmem [#allocation2], 192
    %v5226 = vld [vmem:[%s5225] sm:$0xff]
    %v5228 = vunpack.c.l.b16 %v5224
    %v5229 = vunpack.c.h.b16 %v5224
    %v5230 = vpack.c.b16 %v5228, %v5228
    %v5231 = vpack.c.b16 %v5229, %v5229
    %v5233 = vunpack.c.l.b16 %v5226
    %v5234 = vunpack.c.h.b16 %v5226
    %v5235 = vpack.c.b16 %v5233, %v5233
    %v5236 = vpack.c.b16 %v5234, %v5234
    %v5238 = vsel %vm1322, %v5155, %v5230
    %v5241 = vsel %vm1322, %v5156, %v5231
    %v5244 = vsel %vm1322, %v5165, %v5235
    %v5247 = vsel %vm1322, %v5166, %v5236
    %v5249 = vld [vmem:[#allocation3] sm:$0xff]
    %v5250 = vld [vmem:[#allocation3 + $0x8] sm:$0xff]
    %v5251 = vld [vmem:[#allocation3 + $0x10] sm:$0xff]
    %v5252 = vld [vmem:[#allocation3 + $0x18] sm:$0xff]
    %v5253 = vld [vmem:[#allocation3 + $0x20] sm:$0xff]
    %v5254 = vld [vmem:[#allocation3 + $0x28] sm:$0xff]
    %v5255 = vld [vmem:[#allocation3 + $0x30] sm:$0xff]
    %v5256 = vld [vmem:[#allocation3 + $0x38] sm:$0xff]
    %v5257 = vld [vmem:[#allocation3 + $0x40] sm:$0xff]
    %v5258 = vld [vmem:[#allocation3 + $0x48] sm:$0xff]
    %v5259 = vld [vmem:[#allocation3 + $0x50] sm:$0xff]
    %v5260 = vld [vmem:[#allocation3 + $0x58] sm:$0xff]
    %v5261 = vld [vmem:[#allocation3 + $0x60] sm:$0xff]
    %v5262 = vld [vmem:[#allocation3 + $0x68] sm:$0xff]
    %v5263 = vld [vmem:[#allocation3 + $0x70] sm:$0xff]
    %v5264 = vld [vmem:[#allocation3 + $0x78] sm:$0xff]
    %v5265 = vld [vmem:[#allocation3 + $0x80] sm:$0xff]
    %v5266 = vld [vmem:[#allocation3 + $0x88] sm:$0xff]
    %v5267 = vld [vmem:[#allocation3 + $0x90] sm:$0xff]
    %v5268 = vld [vmem:[#allocation3 + $0x98] sm:$0xff]
    %v5269 = vld [vmem:[#allocation3 + $0xa0] sm:$0xff]
    %v5270 = vld [vmem:[#allocation3 + $0xa8] sm:$0xff]
    %v5271 = vld [vmem:[#allocation3 + $0xb0] sm:$0xff]
    %v5272 = vld [vmem:[#allocation3 + $0xb8] sm:$0xff]
    %v5273 = vld [vmem:[#allocation3 + $0xc0] sm:$0xff]
    %v5274 = vld [vmem:[#allocation3 + $0xc8] sm:$0xff]
    %v5275 = vld [vmem:[#allocation3 + $0xd0] sm:$0xff]
    %v5276 = vld [vmem:[#allocation3 + $0xd8] sm:$0xff]
    %v5277 = vld [vmem:[#allocation3 + $0xe0] sm:$0xff]
    %v5278 = vld [vmem:[#allocation3 + $0xe8] sm:$0xff]
    %v5279 = vld [vmem:[#allocation3 + $0xf0] sm:$0xff]
    %v5280 = vld [vmem:[#allocation3 + $0xf8] sm:$0xff]
    %v5281 = vld [vmem:[#allocation3 + $0x100] sm:$0xff]
    %v5282 = vld [vmem:[#allocation3 + $0x108] sm:$0xff]
    %v5283 = vld [vmem:[#allocation3 + $0x110] sm:$0xff]
    %v5284 = vld [vmem:[#allocation3 + $0x118] sm:$0xff]
    %v5285 = vld [vmem:[#allocation3 + $0x120] sm:$0xff]
    %v5286 = vld [vmem:[#allocation3 + $0x128] sm:$0xff]
    %v5287 = vld [vmem:[#allocation3 + $0x130] sm:$0xff]
    %v5288 = vld [vmem:[#allocation3 + $0x138] sm:$0xff]
    %v5289 = vld [vmem:[#allocation3 + $0x140] sm:$0xff]
    %v5290 = vld [vmem:[#allocation3 + $0x148] sm:$0xff]
    %v5291 = vld [vmem:[#allocation3 + $0x150] sm:$0xff]
    %v5292 = vld [vmem:[#allocation3 + $0x158] sm:$0xff]
    %v5293 = vld [vmem:[#allocation3 + $0x160] sm:$0xff]
    %v5294 = vld [vmem:[#allocation3 + $0x168] sm:$0xff]
    %v5295 = vld [vmem:[#allocation3 + $0x170] sm:$0xff]
    %v5296 = vld [vmem:[#allocation3 + $0x178] sm:$0xff]
    %v5297 = vld [vmem:[#allocation3 + $0x180] sm:$0xff]
    %v5298 = vld [vmem:[#allocation3 + $0x188] sm:$0xff]
    %v5299 = vld [vmem:[#allocation3 + $0x190] sm:$0xff]
    %v5300 = vld [vmem:[#allocation3 + $0x198] sm:$0xff]
    %v5301 = vld [vmem:[#allocation3 + $0x1a0] sm:$0xff]
    %v5302 = vld [vmem:[#allocation3 + $0x1a8] sm:$0xff]
    %v5303 = vld [vmem:[#allocation3 + $0x1b0] sm:$0xff]
    %v5304 = vld [vmem:[#allocation3 + $0x1b8] sm:$0xff]
    %v5305 = vld [vmem:[#allocation3 + $0x1c0] sm:$0xff]
    %v5306 = vld [vmem:[#allocation3 + $0x1c8] sm:$0xff]
    %v5307 = vld [vmem:[#allocation3 + $0x1d0] sm:$0xff]
    %v5308 = vld [vmem:[#allocation3 + $0x1d8] sm:$0xff]
    %v5309 = vld [vmem:[#allocation3 + $0x1e0] sm:$0xff]
    %v5310 = vld [vmem:[#allocation3 + $0x1e8] sm:$0xff]
    %v5311 = vld [vmem:[#allocation3 + $0x1f0] sm:$0xff]
    %v5312 = vld [vmem:[#allocation3 + $0x1f8] sm:$0xff]
    %v5313 = vld [vmem:[#allocation3 + $0x200] sm:$0xff]
    %v5314 = vld [vmem:[#allocation3 + $0x208] sm:$0xff]
    %v5315 = vld [vmem:[#allocation3 + $0x210] sm:$0xff]
    %v5316 = vld [vmem:[#allocation3 + $0x218] sm:$0xff]
    %v5317 = vld [vmem:[#allocation3 + $0x220] sm:$0xff]
    %v5318 = vld [vmem:[#allocation3 + $0x228] sm:$0xff]
    %v5319 = vld [vmem:[#allocation3 + $0x230] sm:$0xff]
    %v5320 = vld [vmem:[#allocation3 + $0x238] sm:$0xff]
    %v5321 = vld [vmem:[#allocation3 + $0x240] sm:$0xff]
    %v5322 = vld [vmem:[#allocation3 + $0x248] sm:$0xff]
    %v5323 = vld [vmem:[#allocation3 + $0x250] sm:$0xff]
    %v5324 = vld [vmem:[#allocation3 + $0x258] sm:$0xff]
    %v5325 = vld [vmem:[#allocation3 + $0x260] sm:$0xff]
    %v5326 = vld [vmem:[#allocation3 + $0x268] sm:$0xff]
    %v5327 = vld [vmem:[#allocation3 + $0x270] sm:$0xff]
    %v5328 = vld [vmem:[#allocation3 + $0x278] sm:$0xff]
    %v5329 = vld [vmem:[#allocation3 + $0x280] sm:$0xff]
    %v5330 = vld [vmem:[#allocation3 + $0x288] sm:$0xff]
    %v5331 = vld [vmem:[#allocation3 + $0x290] sm:$0xff]
    %v5332 = vld [vmem:[#allocation3 + $0x298] sm:$0xff]
    %v5333 = vld [vmem:[#allocation3 + $0x2a0] sm:$0xff]
    %v5334 = vld [vmem:[#allocation3 + $0x2a8] sm:$0xff]
    %v5335 = vld [vmem:[#allocation3 + $0x2b0] sm:$0xff]
    %v5336 = vld [vmem:[#allocation3 + $0x2b8] sm:$0xff]
    %v5337 = vld [vmem:[#allocation3 + $0x2c0] sm:$0xff]
    %v5338 = vld [vmem:[#allocation3 + $0x2c8] sm:$0xff]
    %v5339 = vld [vmem:[#allocation3 + $0x2d0] sm:$0xff]
    %v5340 = vld [vmem:[#allocation3 + $0x2d8] sm:$0xff]
    %v5341 = vld [vmem:[#allocation3 + $0x2e0] sm:$0xff]
    %v5342 = vld [vmem:[#allocation3 + $0x2e8] sm:$0xff]
    %v5343 = vld [vmem:[#allocation3 + $0x2f0] sm:$0xff]
    %v5344 = vld [vmem:[#allocation3 + $0x2f8] sm:$0xff]
    %v5345 = vld [vmem:[#allocation3 + $0x300] sm:$0xff]
    %v5346 = vld [vmem:[#allocation3 + $0x308] sm:$0xff]
    %v5347 = vld [vmem:[#allocation3 + $0x310] sm:$0xff]
    %v5348 = vld [vmem:[#allocation3 + $0x318] sm:$0xff]
    %v5349 = vld [vmem:[#allocation3 + $0x320] sm:$0xff]
    %v5350 = vld [vmem:[#allocation3 + $0x328] sm:$0xff]
    %v5351 = vld [vmem:[#allocation3 + $0x330] sm:$0xff]
    %v5352 = vld [vmem:[#allocation3 + $0x338] sm:$0xff]
    %v5353 = vld [vmem:[#allocation3 + $0x340] sm:$0xff]
    %v5354 = vld [vmem:[#allocation3 + $0x348] sm:$0xff]
    %v5355 = vld [vmem:[#allocation3 + $0x350] sm:$0xff]
    %v5356 = vld [vmem:[#allocation3 + $0x358] sm:$0xff]
    %v5357 = vld [vmem:[#allocation3 + $0x360] sm:$0xff]
    %v5358 = vld [vmem:[#allocation3 + $0x368] sm:$0xff]
    %v5359 = vld [vmem:[#allocation3 + $0x370] sm:$0xff]
    %v5360 = vld [vmem:[#allocation3 + $0x378] sm:$0xff]
    %v5361 = vld [vmem:[#allocation3 + $0x380] sm:$0xff]
    %v5362 = vld [vmem:[#allocation3 + $0x388] sm:$0xff]
    %v5363 = vld [vmem:[#allocation3 + $0x390] sm:$0xff]
    %v5364 = vld [vmem:[#allocation3 + $0x398] sm:$0xff]
    %v5365 = vld [vmem:[#allocation3 + $0x3a0] sm:$0xff]
    %v5366 = vld [vmem:[#allocation3 + $0x3a8] sm:$0xff]
    %v5367 = vld [vmem:[#allocation3 + $0x3b0] sm:$0xff]
    %v5368 = vld [vmem:[#allocation3 + $0x3b8] sm:$0xff]
    %v5369 = vld [vmem:[#allocation3 + $0x3c0] sm:$0xff]
    %v5370 = vld [vmem:[#allocation3 + $0x3c8] sm:$0xff]
    %v5371 = vld [vmem:[#allocation3 + $0x3d0] sm:$0xff]
    %v5372 = vld [vmem:[#allocation3 + $0x3d8] sm:$0xff]
    %v5373 = vld [vmem:[#allocation3 + $0x3e0] sm:$0xff]
    %v5374 = vld [vmem:[#allocation3 + $0x3e8] sm:$0xff]
    %v5375 = vld [vmem:[#allocation3 + $0x3f0] sm:$0xff]
    %v5376 = vld [vmem:[#allocation3 + $0x3f8] sm:$0xff]
    %v5377 = vld [vmem:[#allocation3 + $0x400] sm:$0xff]
    %v5378 = vld [vmem:[#allocation3 + $0x408] sm:$0xff]
    %v5379 = vld [vmem:[#allocation3 + $0x410] sm:$0xff]
    %v5380 = vld [vmem:[#allocation3 + $0x418] sm:$0xff]
    %v5381 = vld [vmem:[#allocation3 + $0x420] sm:$0xff]
    %v5382 = vld [vmem:[#allocation3 + $0x428] sm:$0xff]
    %v5383 = vld [vmem:[#allocation3 + $0x430] sm:$0xff]
    %v5384 = vld [vmem:[#allocation3 + $0x438] sm:$0xff]
    %v5385 = vld [vmem:[#allocation3 + $0x440] sm:$0xff]
    %v5386 = vld [vmem:[#allocation3 + $0x448] sm:$0xff]
    %v5387 = vld [vmem:[#allocation3 + $0x450] sm:$0xff]
    %v5388 = vld [vmem:[#allocation3 + $0x458] sm:$0xff]
    %v5389 = vld [vmem:[#allocation3 + $0x460] sm:$0xff]
    %v5390 = vld [vmem:[#allocation3 + $0x468] sm:$0xff]
    %v5391 = vld [vmem:[#allocation3 + $0x470] sm:$0xff]
    %v5392 = vld [vmem:[#allocation3 + $0x478] sm:$0xff]
    %v5393 = vld [vmem:[#allocation3 + $0x480] sm:$0xff]
    %v5394 = vld [vmem:[#allocation3 + $0x488] sm:$0xff]
    %v5395 = vld [vmem:[#allocation3 + $0x490] sm:$0xff]
    %v5396 = vld [vmem:[#allocation3 + $0x498] sm:$0xff]
    %v5397 = vld [vmem:[#allocation3 + $0x4a0] sm:$0xff]
    %v5398 = vld [vmem:[#allocation3 + $0x4a8] sm:$0xff]
    %v5399 = vld [vmem:[#allocation3 + $0x4b0] sm:$0xff]
    %v5400 = vld [vmem:[#allocation3 + $0x4b8] sm:$0xff]
    %v5401 = vld [vmem:[#allocation3 + $0x4c0] sm:$0xff]
    %v5402 = vld [vmem:[#allocation3 + $0x4c8] sm:$0xff]
    %v5403 = vld [vmem:[#allocation3 + $0x4d0] sm:$0xff]
    %v5404 = vld [vmem:[#allocation3 + $0x4d8] sm:$0xff]
    %v5405 = vld [vmem:[#allocation3 + $0x4e0] sm:$0xff]
    %v5406 = vld [vmem:[#allocation3 + $0x4e8] sm:$0xff]
    %v5407 = vld [vmem:[#allocation3 + $0x4f0] sm:$0xff]
    %v5408 = vld [vmem:[#allocation3 + $0x4f8] sm:$0xff]
    %v5409 = vld [vmem:[#allocation3 + $0x500] sm:$0xff]
    %v5410 = vld [vmem:[#allocation3 + $0x508] sm:$0xff]
    %v5411 = vld [vmem:[#allocation3 + $0x510] sm:$0xff]
    %v5412 = vld [vmem:[#allocation3 + $0x518] sm:$0xff]
    %v5413 = vld [vmem:[#allocation3 + $0x520] sm:$0xff]
    %v5414 = vld [vmem:[#allocation3 + $0x528] sm:$0xff]
    %v5415 = vld [vmem:[#allocation3 + $0x530] sm:$0xff]
    %v5416 = vld [vmem:[#allocation3 + $0x538] sm:$0xff]
    %v5417 = vld [vmem:[#allocation3 + $0x540] sm:$0xff]
    %v5418 = vld [vmem:[#allocation3 + $0x548] sm:$0xff]
    %v5419 = vld [vmem:[#allocation3 + $0x550] sm:$0xff]
    %v5420 = vld [vmem:[#allocation3 + $0x558] sm:$0xff]
    %v5421 = vld [vmem:[#allocation3 + $0x560] sm:$0xff]
    %v5422 = vld [vmem:[#allocation3 + $0x568] sm:$0xff]
    %v5423 = vld [vmem:[#allocation3 + $0x570] sm:$0xff]
    %v5424 = vld [vmem:[#allocation3 + $0x578] sm:$0xff]
    %v5425 = vld [vmem:[#allocation3 + $0x580] sm:$0xff]
    %v5426 = vld [vmem:[#allocation3 + $0x588] sm:$0xff]
    %v5427 = vld [vmem:[#allocation3 + $0x590] sm:$0xff]
    %v5428 = vld [vmem:[#allocation3 + $0x598] sm:$0xff]
    %v5429 = vld [vmem:[#allocation3 + $0x5a0] sm:$0xff]
    %v5430 = vld [vmem:[#allocation3 + $0x5a8] sm:$0xff]
    %v5431 = vld [vmem:[#allocation3 + $0x5b0] sm:$0xff]
    %v5432 = vld [vmem:[#allocation3 + $0x5b8] sm:$0xff]
    %v5433 = vld [vmem:[#allocation3 + $0x5c0] sm:$0xff]
    %v5434 = vld [vmem:[#allocation3 + $0x5c8] sm:$0xff]
    %v5435 = vld [vmem:[#allocation3 + $0x5d0] sm:$0xff]
    %v5436 = vld [vmem:[#allocation3 + $0x5d8] sm:$0xff]
    %v5437 = vld [vmem:[#allocation3 + $0x5e0] sm:$0xff]
    %v5438 = vld [vmem:[#allocation3 + $0x5e8] sm:$0xff]
    %v5439 = vld [vmem:[#allocation3 + $0x5f0] sm:$0xff]
    %v5440 = vld [vmem:[#allocation3 + $0x5f8] sm:$0xff]
    %v5633 = vunpack.c.l.b16 %v5249
    %v5634 = vunpack.c.h.b16 %v5249
    %v5635 = vunpack.c.l.b16 %v5250
    %v5636 = vunpack.c.h.b16 %v5250
    %v5637 = vunpack.c.l.b16 %v5251
    %v5638 = vunpack.c.h.b16 %v5251
    %v5639 = vunpack.c.l.b16 %v5252
    %v5640 = vunpack.c.h.b16 %v5252
    %v5641 = vunpack.c.l.b16 %v5253
    %v5642 = vunpack.c.h.b16 %v5253
    %v5643 = vunpack.c.l.b16 %v5254
    %v5644 = vunpack.c.h.b16 %v5254
    %v5645 = vunpack.c.l.b16 %v5255
    %v5646 = vunpack.c.h.b16 %v5255
    %v5647 = vunpack.c.l.b16 %v5256
    %v5648 = vunpack.c.h.b16 %v5256
    %v5649 = vunpack.c.l.b16 %v5257
    %v5650 = vunpack.c.h.b16 %v5257
    %v5651 = vunpack.c.l.b16 %v5258
    %v5652 = vunpack.c.h.b16 %v5258
    %v5653 = vunpack.c.l.b16 %v5259
    %v5654 = vunpack.c.h.b16 %v5259
    %v5655 = vunpack.c.l.b16 %v5260
    %v5656 = vunpack.c.h.b16 %v5260
    %v5657 = vunpack.c.l.b16 %v5261
    %v5658 = vunpack.c.h.b16 %v5261
    %v5659 = vunpack.c.l.b16 %v5262
    %v5660 = vunpack.c.h.b16 %v5262
    %v5661 = vunpack.c.l.b16 %v5263
    %v5662 = vunpack.c.h.b16 %v5263
    %v5663 = vunpack.c.l.b16 %v5264
    %v5664 = vunpack.c.h.b16 %v5264
    %v5665 = vunpack.c.l.b16 %v5265
    %v5666 = vunpack.c.h.b16 %v5265
    %v5667 = vunpack.c.l.b16 %v5266
    %v5668 = vunpack.c.h.b16 %v5266
    %v5669 = vunpack.c.l.b16 %v5267
    %v5670 = vunpack.c.h.b16 %v5267
    %v5671 = vunpack.c.l.b16 %v5268
    %v5672 = vunpack.c.h.b16 %v5268
    %v5673 = vunpack.c.l.b16 %v5269
    %v5674 = vunpack.c.h.b16 %v5269
    %v5675 = vunpack.c.l.b16 %v5270
    %v5676 = vunpack.c.h.b16 %v5270
    %v5677 = vunpack.c.l.b16 %v5271
    %v5678 = vunpack.c.h.b16 %v5271
    %v5679 = vunpack.c.l.b16 %v5272
    %v5680 = vunpack.c.h.b16 %v5272
    %v5681 = vunpack.c.l.b16 %v5273
    %v5682 = vunpack.c.h.b16 %v5273
    %v5683 = vunpack.c.l.b16 %v5274
    %v5684 = vunpack.c.h.b16 %v5274
    %v5685 = vunpack.c.l.b16 %v5275
    %v5686 = vunpack.c.h.b16 %v5275
    %v5687 = vunpack.c.l.b16 %v5276
    %v5688 = vunpack.c.h.b16 %v5276
    %v5689 = vunpack.c.l.b16 %v5277
    %v5690 = vunpack.c.h.b16 %v5277
    %v5691 = vunpack.c.l.b16 %v5278
    %v5692 = vunpack.c.h.b16 %v5278
    %v5693 = vunpack.c.l.b16 %v5279
    %v5694 = vunpack.c.h.b16 %v5279
    %v5695 = vunpack.c.l.b16 %v5280
    %v5696 = vunpack.c.h.b16 %v5280
    %v5697 = vunpack.c.l.b16 %v5281
    %v5698 = vunpack.c.h.b16 %v5281
    %v5699 = vunpack.c.l.b16 %v5282
    %v5700 = vunpack.c.h.b16 %v5282
    %v5701 = vunpack.c.l.b16 %v5283
    %v5702 = vunpack.c.h.b16 %v5283
    %v5703 = vunpack.c.l.b16 %v5284
    %v5704 = vunpack.c.h.b16 %v5284
    %v5705 = vunpack.c.l.b16 %v5285
    %v5706 = vunpack.c.h.b16 %v5285
    %v5707 = vunpack.c.l.b16 %v5286
    %v5708 = vunpack.c.h.b16 %v5286
    %v5709 = vunpack.c.l.b16 %v5287
    %v5710 = vunpack.c.h.b16 %v5287
    %v5711 = vunpack.c.l.b16 %v5288
    %v5712 = vunpack.c.h.b16 %v5288
    %v5713 = vunpack.c.l.b16 %v5289
    %v5714 = vunpack.c.h.b16 %v5289
    %v5715 = vunpack.c.l.b16 %v5290
    %v5716 = vunpack.c.h.b16 %v5290
    %v5717 = vunpack.c.l.b16 %v5291
    %v5718 = vunpack.c.h.b16 %v5291
    %v5719 = vunpack.c.l.b16 %v5292
    %v5720 = vunpack.c.h.b16 %v5292
    %v5721 = vunpack.c.l.b16 %v5293
    %v5722 = vunpack.c.h.b16 %v5293
    %v5723 = vunpack.c.l.b16 %v5294
    %v5724 = vunpack.c.h.b16 %v5294
    %v5725 = vunpack.c.l.b16 %v5295
    %v5726 = vunpack.c.h.b16 %v5295
    %v5727 = vunpack.c.l.b16 %v5296
    %v5728 = vunpack.c.h.b16 %v5296
    %v5729 = vunpack.c.l.b16 %v5297
    %v5730 = vunpack.c.h.b16 %v5297
    %v5731 = vunpack.c.l.b16 %v5298
    %v5732 = vunpack.c.h.b16 %v5298
    %v5733 = vunpack.c.l.b16 %v5299
    %v5734 = vunpack.c.h.b16 %v5299
    %v5735 = vunpack.c.l.b16 %v5300
    %v5736 = vunpack.c.h.b16 %v5300
    %v5737 = vunpack.c.l.b16 %v5301
    %v5738 = vunpack.c.h.b16 %v5301
    %v5739 = vunpack.c.l.b16 %v5302
    %v5740 = vunpack.c.h.b16 %v5302
    %v5741 = vunpack.c.l.b16 %v5303
    %v5742 = vunpack.c.h.b16 %v5303
    %v5743 = vunpack.c.l.b16 %v5304
    %v5744 = vunpack.c.h.b16 %v5304
    %v5745 = vunpack.c.l.b16 %v5305
    %v5746 = vunpack.c.h.b16 %v5305
    %v5747 = vunpack.c.l.b16 %v5306
    %v5748 = vunpack.c.h.b16 %v5306
    %v5749 = vunpack.c.l.b16 %v5307
    %v5750 = vunpack.c.h.b16 %v5307
    %v5751 = vunpack.c.l.b16 %v5308
    %v5752 = vunpack.c.h.b16 %v5308
    %v5753 = vunpack.c.l.b16 %v5309
    %v5754 = vunpack.c.h.b16 %v5309
    %v5755 = vunpack.c.l.b16 %v5310
    %v5756 = vunpack.c.h.b16 %v5310
    %v5757 = vunpack.c.l.b16 %v5311
    %v5758 = vunpack.c.h.b16 %v5311
    %v5759 = vunpack.c.l.b16 %v5312
    %v5760 = vunpack.c.h.b16 %v5312
    %v5761 = vunpack.c.l.b16 %v5313
    %v5762 = vunpack.c.h.b16 %v5313
    %v5763 = vunpack.c.l.b16 %v5314
    %v5764 = vunpack.c.h.b16 %v5314
    %v5765 = vunpack.c.l.b16 %v5315
    %v5766 = vunpack.c.h.b16 %v5315
    %v5767 = vunpack.c.l.b16 %v5316
    %v5768 = vunpack.c.h.b16 %v5316
    %v5769 = vunpack.c.l.b16 %v5317
    %v5770 = vunpack.c.h.b16 %v5317
    %v5771 = vunpack.c.l.b16 %v5318
    %v5772 = vunpack.c.h.b16 %v5318
    %v5773 = vunpack.c.l.b16 %v5319
    %v5774 = vunpack.c.h.b16 %v5319
    %v5775 = vunpack.c.l.b16 %v5320
    %v5776 = vunpack.c.h.b16 %v5320
    %v5777 = vunpack.c.l.b16 %v5321
    %v5778 = vunpack.c.h.b16 %v5321
    %v5779 = vunpack.c.l.b16 %v5322
    %v5780 = vunpack.c.h.b16 %v5322
    %v5781 = vunpack.c.l.b16 %v5323
    %v5782 = vunpack.c.h.b16 %v5323
    %v5783 = vunpack.c.l.b16 %v5324
    %v5784 = vunpack.c.h.b16 %v5324
    %v5785 = vunpack.c.l.b16 %v5325
    %v5786 = vunpack.c.h.b16 %v5325
    %v5787 = vunpack.c.l.b16 %v5326
    %v5788 = vunpack.c.h.b16 %v5326
    %v5789 = vunpack.c.l.b16 %v5327
    %v5790 = vunpack.c.h.b16 %v5327
    %v5791 = vunpack.c.l.b16 %v5328
    %v5792 = vunpack.c.h.b16 %v5328
    %v5793 = vunpack.c.l.b16 %v5329
    %v5794 = vunpack.c.h.b16 %v5329
    %v5795 = vunpack.c.l.b16 %v5330
    %v5796 = vunpack.c.h.b16 %v5330
    %v5797 = vunpack.c.l.b16 %v5331
    %v5798 = vunpack.c.h.b16 %v5331
    %v5799 = vunpack.c.l.b16 %v5332
    %v5800 = vunpack.c.h.b16 %v5332
    %v5801 = vunpack.c.l.b16 %v5333
    %v5802 = vunpack.c.h.b16 %v5333
    %v5803 = vunpack.c.l.b16 %v5334
    %v5804 = vunpack.c.h.b16 %v5334
    %v5805 = vunpack.c.l.b16 %v5335
    %v5806 = vunpack.c.h.b16 %v5335
    %v5807 = vunpack.c.l.b16 %v5336
    %v5808 = vunpack.c.h.b16 %v5336
    %v5809 = vunpack.c.l.b16 %v5337
    %v5810 = vunpack.c.h.b16 %v5337
    %v5811 = vunpack.c.l.b16 %v5338
    %v5812 = vunpack.c.h.b16 %v5338
    %v5813 = vunpack.c.l.b16 %v5339
    %v5814 = vunpack.c.h.b16 %v5339
    %v5815 = vunpack.c.l.b16 %v5340
    %v5816 = vunpack.c.h.b16 %v5340
    %v5817 = vunpack.c.l.b16 %v5341
    %v5818 = vunpack.c.h.b16 %v5341
    %v5819 = vunpack.c.l.b16 %v5342
    %v5820 = vunpack.c.h.b16 %v5342
    %v5821 = vunpack.c.l.b16 %v5343
    %v5822 = vunpack.c.h.b16 %v5343
    %v5823 = vunpack.c.l.b16 %v5344
    %v5824 = vunpack.c.h.b16 %v5344
    %v5825 = vunpack.c.l.b16 %v5345
    %v5826 = vunpack.c.h.b16 %v5345
    %v5827 = vunpack.c.l.b16 %v5346
    %v5828 = vunpack.c.h.b16 %v5346
    %v5829 = vunpack.c.l.b16 %v5347
    %v5830 = vunpack.c.h.b16 %v5347
    %v5831 = vunpack.c.l.b16 %v5348
    %v5832 = vunpack.c.h.b16 %v5348
    %v5833 = vunpack.c.l.b16 %v5349
    %v5834 = vunpack.c.h.b16 %v5349
    %v5835 = vunpack.c.l.b16 %v5350
    %v5836 = vunpack.c.h.b16 %v5350
    %v5837 = vunpack.c.l.b16 %v5351
    %v5838 = vunpack.c.h.b16 %v5351
    %v5839 = vunpack.c.l.b16 %v5352
    %v5840 = vunpack.c.h.b16 %v5352
    %v5841 = vunpack.c.l.b16 %v5353
    %v5842 = vunpack.c.h.b16 %v5353
    %v5843 = vunpack.c.l.b16 %v5354
    %v5844 = vunpack.c.h.b16 %v5354
    %v5845 = vunpack.c.l.b16 %v5355
    %v5846 = vunpack.c.h.b16 %v5355
    %v5847 = vunpack.c.l.b16 %v5356
    %v5848 = vunpack.c.h.b16 %v5356
    %v5849 = vunpack.c.l.b16 %v5357
    %v5850 = vunpack.c.h.b16 %v5357
    %v5851 = vunpack.c.l.b16 %v5358
    %v5852 = vunpack.c.h.b16 %v5358
    %v5853 = vunpack.c.l.b16 %v5359
    %v5854 = vunpack.c.h.b16 %v5359
    %v5855 = vunpack.c.l.b16 %v5360
    %v5856 = vunpack.c.h.b16 %v5360
    %v5857 = vunpack.c.l.b16 %v5361
    %v5858 = vunpack.c.h.b16 %v5361
    %v5859 = vunpack.c.l.b16 %v5362
    %v5860 = vunpack.c.h.b16 %v5362
    %v5861 = vunpack.c.l.b16 %v5363
    %v5862 = vunpack.c.h.b16 %v5363
    %v5863 = vunpack.c.l.b16 %v5364
    %v5864 = vunpack.c.h.b16 %v5364
    %v5865 = vunpack.c.l.b16 %v5365
    %v5866 = vunpack.c.h.b16 %v5365
    %v5867 = vunpack.c.l.b16 %v5366
    %v5868 = vunpack.c.h.b16 %v5366
    %v5869 = vunpack.c.l.b16 %v5367
    %v5870 = vunpack.c.h.b16 %v5367
    %v5871 = vunpack.c.l.b16 %v5368
    %v5872 = vunpack.c.h.b16 %v5368
    %v5873 = vunpack.c.l.b16 %v5369
    %v5874 = vunpack.c.h.b16 %v5369
    %v5875 = vunpack.c.l.b16 %v5370
    %v5876 = vunpack.c.h.b16 %v5370
    %v5877 = vunpack.c.l.b16 %v5371
    %v5878 = vunpack.c.h.b16 %v5371
    %v5879 = vunpack.c.l.b16 %v5372
    %v5880 = vunpack.c.h.b16 %v5372
    %v5881 = vunpack.c.l.b16 %v5373
    %v5882 = vunpack.c.h.b16 %v5373
    %v5883 = vunpack.c.l.b16 %v5374
    %v5884 = vunpack.c.h.b16 %v5374
    %v5885 = vunpack.c.l.b16 %v5375
    %v5886 = vunpack.c.h.b16 %v5375
    %v5887 = vunpack.c.l.b16 %v5376
    %v5888 = vunpack.c.h.b16 %v5376
    %v5889 = vunpack.c.l.b16 %v5377
    %v5890 = vunpack.c.h.b16 %v5377
    %v5891 = vunpack.c.l.b16 %v5378
    %v5892 = vunpack.c.h.b16 %v5378
    %v5893 = vunpack.c.l.b16 %v5379
    %v5894 = vunpack.c.h.b16 %v5379
    %v5895 = vunpack.c.l.b16 %v5380
    %v5896 = vunpack.c.h.b16 %v5380
    %v5897 = vunpack.c.l.b16 %v5381
    %v5898 = vunpack.c.h.b16 %v5381
    %v5899 = vunpack.c.l.b16 %v5382
    %v5900 = vunpack.c.h.b16 %v5382
    %v5901 = vunpack.c.l.b16 %v5383
    %v5902 = vunpack.c.h.b16 %v5383
    %v5903 = vunpack.c.l.b16 %v5384
    %v5904 = vunpack.c.h.b16 %v5384
    %v5905 = vunpack.c.l.b16 %v5385
    %v5906 = vunpack.c.h.b16 %v5385
    %v5907 = vunpack.c.l.b16 %v5386
    %v5908 = vunpack.c.h.b16 %v5386
    %v5909 = vunpack.c.l.b16 %v5387
    %v5910 = vunpack.c.h.b16 %v5387
    %v5911 = vunpack.c.l.b16 %v5388
    %v5912 = vunpack.c.h.b16 %v5388
    %v5913 = vunpack.c.l.b16 %v5389
    %v5914 = vunpack.c.h.b16 %v5389
    %v5915 = vunpack.c.l.b16 %v5390
    %v5916 = vunpack.c.h.b16 %v5390
    %v5917 = vunpack.c.l.b16 %v5391
    %v5918 = vunpack.c.h.b16 %v5391
    %v5919 = vunpack.c.l.b16 %v5392
    %v5920 = vunpack.c.h.b16 %v5392
    %v5921 = vunpack.c.l.b16 %v5393
    %v5922 = vunpack.c.h.b16 %v5393
    %v5923 = vunpack.c.l.b16 %v5394
    %v5924 = vunpack.c.h.b16 %v5394
    %v5925 = vunpack.c.l.b16 %v5395
    %v5926 = vunpack.c.h.b16 %v5395
    %v5927 = vunpack.c.l.b16 %v5396
    %v5928 = vunpack.c.h.b16 %v5396
    %v5929 = vunpack.c.l.b16 %v5397
    %v5930 = vunpack.c.h.b16 %v5397
    %v5931 = vunpack.c.l.b16 %v5398
    %v5932 = vunpack.c.h.b16 %v5398
    %v5933 = vunpack.c.l.b16 %v5399
    %v5934 = vunpack.c.h.b16 %v5399
    %v5935 = vunpack.c.l.b16 %v5400
    %v5936 = vunpack.c.h.b16 %v5400
    %v5937 = vunpack.c.l.b16 %v5401
    %v5938 = vunpack.c.h.b16 %v5401
    %v5939 = vunpack.c.l.b16 %v5402
    %v5940 = vunpack.c.h.b16 %v5402
    %v5941 = vunpack.c.l.b16 %v5403
    %v5942 = vunpack.c.h.b16 %v5403
    %v5943 = vunpack.c.l.b16 %v5404
    %v5944 = vunpack.c.h.b16 %v5404
    %v5945 = vunpack.c.l.b16 %v5405
    %v5946 = vunpack.c.h.b16 %v5405
    %v5947 = vunpack.c.l.b16 %v5406
    %v5948 = vunpack.c.h.b16 %v5406
    %v5949 = vunpack.c.l.b16 %v5407
    %v5950 = vunpack.c.h.b16 %v5407
    %v5951 = vunpack.c.l.b16 %v5408
    %v5952 = vunpack.c.h.b16 %v5408
    %v5953 = vunpack.c.l.b16 %v5409
    %v5954 = vunpack.c.h.b16 %v5409
    %v5955 = vunpack.c.l.b16 %v5410
    %v5956 = vunpack.c.h.b16 %v5410
    %v5957 = vunpack.c.l.b16 %v5411
    %v5958 = vunpack.c.h.b16 %v5411
    %v5959 = vunpack.c.l.b16 %v5412
    %v5960 = vunpack.c.h.b16 %v5412
    %v5961 = vunpack.c.l.b16 %v5413
    %v5962 = vunpack.c.h.b16 %v5413
    %v5963 = vunpack.c.l.b16 %v5414
    %v5964 = vunpack.c.h.b16 %v5414
    %v5965 = vunpack.c.l.b16 %v5415
    %v5966 = vunpack.c.h.b16 %v5415
    %v5967 = vunpack.c.l.b16 %v5416
    %v5968 = vunpack.c.h.b16 %v5416
    %v5969 = vunpack.c.l.b16 %v5417
    %v5970 = vunpack.c.h.b16 %v5417
    %v5971 = vunpack.c.l.b16 %v5418
    %v5972 = vunpack.c.h.b16 %v5418
    %v5973 = vunpack.c.l.b16 %v5419
    %v5974 = vunpack.c.h.b16 %v5419
    %v5975 = vunpack.c.l.b16 %v5420
    %v5976 = vunpack.c.h.b16 %v5420
    %v5977 = vunpack.c.l.b16 %v5421
    %v5978 = vunpack.c.h.b16 %v5421
    %v5979 = vunpack.c.l.b16 %v5422
    %v5980 = vunpack.c.h.b16 %v5422
    %v5981 = vunpack.c.l.b16 %v5423
    %v5982 = vunpack.c.h.b16 %v5423
    %v5983 = vunpack.c.l.b16 %v5424
    %v5984 = vunpack.c.h.b16 %v5424
    %v5985 = vunpack.c.l.b16 %v5425
    %v5986 = vunpack.c.h.b16 %v5425
    %v5987 = vunpack.c.l.b16 %v5426
    %v5988 = vunpack.c.h.b16 %v5426
    %v5989 = vunpack.c.l.b16 %v5427
    %v5990 = vunpack.c.h.b16 %v5427
    %v5991 = vunpack.c.l.b16 %v5428
    %v5992 = vunpack.c.h.b16 %v5428
    %v5993 = vunpack.c.l.b16 %v5429
    %v5994 = vunpack.c.h.b16 %v5429
    %v5995 = vunpack.c.l.b16 %v5430
    %v5996 = vunpack.c.h.b16 %v5430
    %v5997 = vunpack.c.l.b16 %v5431
    %v5998 = vunpack.c.h.b16 %v5431
    %v5999 = vunpack.c.l.b16 %v5432
    %v6000 = vunpack.c.h.b16 %v5432
    %v6001 = vunpack.c.l.b16 %v5433
    %v6002 = vunpack.c.h.b16 %v5433
    %v6003 = vunpack.c.l.b16 %v5434
    %v6004 = vunpack.c.h.b16 %v5434
    %v6005 = vunpack.c.l.b16 %v5435
    %v6006 = vunpack.c.h.b16 %v5435
    %v6007 = vunpack.c.l.b16 %v5436
    %v6008 = vunpack.c.h.b16 %v5436
    %v6009 = vunpack.c.l.b16 %v5437
    %v6010 = vunpack.c.h.b16 %v5437
    %v6011 = vunpack.c.l.b16 %v5438
    %v6012 = vunpack.c.h.b16 %v5438
    %v6013 = vunpack.c.l.b16 %v5439
    %v6014 = vunpack.c.h.b16 %v5439
    %v6015 = vunpack.c.l.b16 %v5440
    %v6016 = vunpack.c.h.b16 %v5440
    %v6017 = vpack.c.b16 %v5637, %v5633
    %v6018 = vpack.c.b16 %v5638, %v5634
    %v6019 = vpack.c.b16 %v5639, %v5635
    %v6020 = vpack.c.b16 %v5640, %v5636
    %v6021 = vpack.c.b16 %v5645, %v5641
    %v6022 = vpack.c.b16 %v5646, %v5642
    %v6023 = vpack.c.b16 %v5647, %v5643
    %v6024 = vpack.c.b16 %v5648, %v5644
    %v6025 = vpack.c.b16 %v5653, %v5649
    %v6026 = vpack.c.b16 %v5654, %v5650
    %v6027 = vpack.c.b16 %v5655, %v5651
    %v6028 = vpack.c.b16 %v5656, %v5652
    %v6029 = vpack.c.b16 %v5661, %v5657
    %v6030 = vpack.c.b16 %v5662, %v5658
    %v6031 = vpack.c.b16 %v5663, %v5659
    %v6032 = vpack.c.b16 %v5664, %v5660
    %v6033 = vpack.c.b16 %v5669, %v5665
    %v6034 = vpack.c.b16 %v5670, %v5666
    %v6035 = vpack.c.b16 %v5671, %v5667
    %v6036 = vpack.c.b16 %v5672, %v5668
    %v6037 = vpack.c.b16 %v5677, %v5673
    %v6038 = vpack.c.b16 %v5678, %v5674
    %v6039 = vpack.c.b16 %v5679, %v5675
    %v6040 = vpack.c.b16 %v5680, %v5676
    %v6041 = vpack.c.b16 %v5685, %v5681
    %v6042 = vpack.c.b16 %v5686, %v5682
    %v6043 = vpack.c.b16 %v5687, %v5683
    %v6044 = vpack.c.b16 %v5688, %v5684
    %v6045 = vpack.c.b16 %v5693, %v5689
    %v6046 = vpack.c.b16 %v5694, %v5690
    %v6047 = vpack.c.b16 %v5695, %v5691
    %v6048 = vpack.c.b16 %v5696, %v5692
    %v6049 = vpack.c.b16 %v5701, %v5697
    %v6050 = vpack.c.b16 %v5702, %v5698
    %v6051 = vpack.c.b16 %v5703, %v5699
    %v6052 = vpack.c.b16 %v5704, %v5700
    %v6053 = vpack.c.b16 %v5709, %v5705
    %v6054 = vpack.c.b16 %v5710, %v5706
    %v6055 = vpack.c.b16 %v5711, %v5707
    %v6056 = vpack.c.b16 %v5712, %v5708
    %v6057 = vpack.c.b16 %v5717, %v5713
    %v6058 = vpack.c.b16 %v5718, %v5714
    %v6059 = vpack.c.b16 %v5719, %v5715
    %v6060 = vpack.c.b16 %v5720, %v5716
    %v6061 = vpack.c.b16 %v5725, %v5721
    %v6062 = vpack.c.b16 %v5726, %v5722
    %v6063 = vpack.c.b16 %v5727, %v5723
    %v6064 = vpack.c.b16 %v5728, %v5724
    %v6065 = vpack.c.b16 %v5733, %v5729
    %v6066 = vpack.c.b16 %v5734, %v5730
    %v6067 = vpack.c.b16 %v5735, %v5731
    %v6068 = vpack.c.b16 %v5736, %v5732
    %v6069 = vpack.c.b16 %v5741, %v5737
    %v6070 = vpack.c.b16 %v5742, %v5738
    %v6071 = vpack.c.b16 %v5743, %v5739
    %v6072 = vpack.c.b16 %v5744, %v5740
    %v6073 = vpack.c.b16 %v5749, %v5745
    %v6074 = vpack.c.b16 %v5750, %v5746
    %v6075 = vpack.c.b16 %v5751, %v5747
    %v6076 = vpack.c.b16 %v5752, %v5748
    %v6077 = vpack.c.b16 %v5757, %v5753
    %v6078 = vpack.c.b16 %v5758, %v5754
    %v6079 = vpack.c.b16 %v5759, %v5755
    %v6080 = vpack.c.b16 %v5760, %v5756
    %v6081 = vpack.c.b16 %v5765, %v5761
    %v6082 = vpack.c.b16 %v5766, %v5762
    %v6083 = vpack.c.b16 %v5767, %v5763
    %v6084 = vpack.c.b16 %v5768, %v5764
    %v6085 = vpack.c.b16 %v5773, %v5769
    %v6086 = vpack.c.b16 %v5774, %v5770
    %v6087 = vpack.c.b16 %v5775, %v5771
    %v6088 = vpack.c.b16 %v5776, %v5772
    %v6089 = vpack.c.b16 %v5781, %v5777
    %v6090 = vpack.c.b16 %v5782, %v5778
    %v6091 = vpack.c.b16 %v5783, %v5779
    %v6092 = vpack.c.b16 %v5784, %v5780
    %v6093 = vpack.c.b16 %v5789, %v5785
    %v6094 = vpack.c.b16 %v5790, %v5786
    %v6095 = vpack.c.b16 %v5791, %v5787
    %v6096 = vpack.c.b16 %v5792, %v5788
    %v6097 = vpack.c.b16 %v5797, %v5793
    %v6098 = vpack.c.b16 %v5798, %v5794
    %v6099 = vpack.c.b16 %v5799, %v5795
    %v6100 = vpack.c.b16 %v5800, %v5796
    %v6101 = vpack.c.b16 %v5805, %v5801
    %v6102 = vpack.c.b16 %v5806, %v5802
    %v6103 = vpack.c.b16 %v5807, %v5803
    %v6104 = vpack.c.b16 %v5808, %v5804
    %v6105 = vpack.c.b16 %v5813, %v5809
    %v6106 = vpack.c.b16 %v5814, %v5810
    %v6107 = vpack.c.b16 %v5815, %v5811
    %v6108 = vpack.c.b16 %v5816, %v5812
    %v6109 = vpack.c.b16 %v5821, %v5817
    %v6110 = vpack.c.b16 %v5822, %v5818
    %v6111 = vpack.c.b16 %v5823, %v5819
    %v6112 = vpack.c.b16 %v5824, %v5820
    %v6113 = vpack.c.b16 %v5829, %v5825
    %v6114 = vpack.c.b16 %v5830, %v5826
    %v6115 = vpack.c.b16 %v5831, %v5827
    %v6116 = vpack.c.b16 %v5832, %v5828
    %v6117 = vpack.c.b16 %v5837, %v5833
    %v6118 = vpack.c.b16 %v5838, %v5834
    %v6119 = vpack.c.b16 %v5839, %v5835
    %v6120 = vpack.c.b16 %v5840, %v5836
    %v6121 = vpack.c.b16 %v5845, %v5841
    %v6122 = vpack.c.b16 %v5846, %v5842
    %v6123 = vpack.c.b16 %v5847, %v5843
    %v6124 = vpack.c.b16 %v5848, %v5844
    %v6125 = vpack.c.b16 %v5853, %v5849
    %v6126 = vpack.c.b16 %v5854, %v5850
    %v6127 = vpack.c.b16 %v5855, %v5851
    %v6128 = vpack.c.b16 %v5856, %v5852
    %v6129 = vpack.c.b16 %v5861, %v5857
    %v6130 = vpack.c.b16 %v5862, %v5858
    %v6131 = vpack.c.b16 %v5863, %v5859
    %v6132 = vpack.c.b16 %v5864, %v5860
    %v6133 = vpack.c.b16 %v5869, %v5865
    %v6134 = vpack.c.b16 %v5870, %v5866
    %v6135 = vpack.c.b16 %v5871, %v5867
    %v6136 = vpack.c.b16 %v5872, %v5868
    %v6137 = vpack.c.b16 %v5877, %v5873
    %v6138 = vpack.c.b16 %v5878, %v5874
    %v6139 = vpack.c.b16 %v5879, %v5875
    %v6140 = vpack.c.b16 %v5880, %v5876
    %v6141 = vpack.c.b16 %v5885, %v5881
    %v6142 = vpack.c.b16 %v5886, %v5882
    %v6143 = vpack.c.b16 %v5887, %v5883
    %v6144 = vpack.c.b16 %v5888, %v5884
    %v6145 = vpack.c.b16 %v5893, %v5889
    %v6146 = vpack.c.b16 %v5894, %v5890
    %v6147 = vpack.c.b16 %v5895, %v5891
    %v6148 = vpack.c.b16 %v5896, %v5892
    %v6149 = vpack.c.b16 %v5901, %v5897
    %v6150 = vpack.c.b16 %v5902, %v5898
    %v6151 = vpack.c.b16 %v5903, %v5899
    %v6152 = vpack.c.b16 %v5904, %v5900
    %v6153 = vpack.c.b16 %v5909, %v5905
    %v6154 = vpack.c.b16 %v5910, %v5906
    %v6155 = vpack.c.b16 %v5911, %v5907
    %v6156 = vpack.c.b16 %v5912, %v5908
    %v6157 = vpack.c.b16 %v5917, %v5913
    %v6158 = vpack.c.b16 %v5918, %v5914
    %v6159 = vpack.c.b16 %v5919, %v5915
    %v6160 = vpack.c.b16 %v5920, %v5916
    %v6161 = vpack.c.b16 %v5925, %v5921
    %v6162 = vpack.c.b16 %v5926, %v5922
    %v6163 = vpack.c.b16 %v5927, %v5923
    %v6164 = vpack.c.b16 %v5928, %v5924
    %v6165 = vpack.c.b16 %v5933, %v5929
    %v6166 = vpack.c.b16 %v5934, %v5930
    %v6167 = vpack.c.b16 %v5935, %v5931
    %v6168 = vpack.c.b16 %v5936, %v5932
    %v6169 = vpack.c.b16 %v5941, %v5937
    %v6170 = vpack.c.b16 %v5942, %v5938
    %v6171 = vpack.c.b16 %v5943, %v5939
    %v6172 = vpack.c.b16 %v5944, %v5940
    %v6173 = vpack.c.b16 %v5949, %v5945
    %v6174 = vpack.c.b16 %v5950, %v5946
    %v6175 = vpack.c.b16 %v5951, %v5947
    %v6176 = vpack.c.b16 %v5952, %v5948
    %v6177 = vpack.c.b16 %v5957, %v5953
    %v6178 = vpack.c.b16 %v5958, %v5954
    %v6179 = vpack.c.b16 %v5959, %v5955
    %v6180 = vpack.c.b16 %v5960, %v5956
    %v6181 = vpack.c.b16 %v5965, %v5961
    %v6182 = vpack.c.b16 %v5966, %v5962
    %v6183 = vpack.c.b16 %v5967, %v5963
    %v6184 = vpack.c.b16 %v5968, %v5964
    %v6185 = vpack.c.b16 %v5973, %v5969
    %v6186 = vpack.c.b16 %v5974, %v5970
    %v6187 = vpack.c.b16 %v5975, %v5971
    %v6188 = vpack.c.b16 %v5976, %v5972
    %v6189 = vpack.c.b16 %v5981, %v5977
    %v6190 = vpack.c.b16 %v5982, %v5978
    %v6191 = vpack.c.b16 %v5983, %v5979
    %v6192 = vpack.c.b16 %v5984, %v5980
    %v6193 = vpack.c.b16 %v5989, %v5985
    %v6194 = vpack.c.b16 %v5990, %v5986
    %v6195 = vpack.c.b16 %v5991, %v5987
    %v6196 = vpack.c.b16 %v5992, %v5988
    %v6197 = vpack.c.b16 %v5997, %v5993
    %v6198 = vpack.c.b16 %v5998, %v5994
    %v6199 = vpack.c.b16 %v5999, %v5995
    %v6200 = vpack.c.b16 %v6000, %v5996
    %v6201 = vpack.c.b16 %v6005, %v6001
    %v6202 = vpack.c.b16 %v6006, %v6002
    %v6203 = vpack.c.b16 %v6007, %v6003
    %v6204 = vpack.c.b16 %v6008, %v6004
    %v6205 = vpack.c.b16 %v6013, %v6009
    %v6206 = vpack.c.b16 %v6014, %v6010
    %v6207 = vpack.c.b16 %v6015, %v6011
    %v6208 = vpack.c.b16 %v6016, %v6012
    %6401 = vmatpush.bf16.msra.mxu0 %v6045
    %6402 = vmatpush.bf16.msra.mxu0 %v6041
    %6403 = vmatpush.bf16.msra.mxu0 %v6037
    %6404 = vmatpush.bf16.msra.mxu0 %v6033
    %6405 = vmatpush.bf16.msra.mxu0 %v6029
    %6406 = vmatpush.bf16.msra.mxu0 %v6025
    %6407 = vmatpush.bf16.msra.mxu0 %v6021
    %6408 = vmatpush.bf16.msra.mxu0 %v6017
    %6409 = vmatmul.bf16.gmra.mxu0 %v5169
    %v6410 = vpop.f32.mrf.mxu0
    %v6411 = vadd.f32 0.0, %v6410
    %v6412 = vpop.f32.mrf.mxu0
    %v6413 = vadd.f32 0.0, %v6412
    %6414 = vmatmul.bf16.gmra.mxu0 %v5177
    %v6415 = vpop.f32.mrf.mxu0
    %v6416 = vadd.f32 0.0, %v6415
    %v6417 = vpop.f32.mrf.mxu0
    %v6418 = vadd.f32 0.0, %v6417
    %6419 = vdwg.mxu0
    %6420 = vmatpush.bf16.msra.mxu0 %v6077
    %6421 = vmatpush.bf16.msra.mxu0 %v6073
    %6422 = vmatpush.bf16.msra.mxu0 %v6069
    %6423 = vmatpush.bf16.msra.mxu0 %v6065
    %6424 = vmatpush.bf16.msra.mxu0 %v6061
    %6425 = vmatpush.bf16.msra.mxu0 %v6057
    %6426 = vmatpush.bf16.msra.mxu0 %v6053
    %6427 = vmatpush.bf16.msra.mxu0 %v6049
    %6428 = vmatmul.bf16.gmra.mxu0 %v5173
    %v6429 = vpop.f32.mrf.mxu0
    %v6430 = vadd.f32 %v6411, %v6429
    %v6431 = vpop.f32.mrf.mxu0
    %v6432 = vadd.f32 %v6413, %v6431
    %6433 = vmatmul.bf16.gmra.mxu0 %v5181
    %v6434 = vpop.f32.mrf.mxu0
    %v6435 = vadd.f32 %v6416, %v6434
    %v6436 = vpop.f32.mrf.mxu0
    %v6437 = vadd.f32 %v6418, %v6436
    %6438 = vdwg.mxu0
    %6439 = vmatpush.bf16.msra.mxu0 %v6109
    %6440 = vmatpush.bf16.msra.mxu0 %v6105
    %6441 = vmatpush.bf16.msra.mxu0 %v6101
    %6442 = vmatpush.bf16.msra.mxu0 %v6097
    %6443 = vmatpush.bf16.msra.mxu0 %v6093
    %6444 = vmatpush.bf16.msra.mxu0 %v6089
    %6445 = vmatpush.bf16.msra.mxu0 %v6085
    %6446 = vmatpush.bf16.msra.mxu0 %v6081
    %6447 = vmatmul.bf16.gmra.mxu0 %v5210
    %v6448 = vpop.f32.mrf.mxu0
    %v6449 = vadd.f32 %v6430, %v6448
    %v6450 = vpop.f32.mrf.mxu0
    %v6451 = vadd.f32 %v6432, %v6450
    %6452 = vmatmul.bf16.gmra.mxu0 %v5218
    %v6453 = vpop.f32.mrf.mxu0
    %v6454 = vadd.f32 %v6435, %v6453
    %v6455 = vpop.f32.mrf.mxu0
    %v6456 = vadd.f32 %v6437, %v6455
    %6457 = vdwg.mxu0
    %6458 = vmatpush.bf16.msra.mxu0 %v6141
    %6459 = vmatpush.bf16.msra.mxu0 %v6137
    %6460 = vmatpush.bf16.msra.mxu0 %v6133
    %6461 = vmatpush.bf16.msra.mxu0 %v6129
    %6462 = vmatpush.bf16.msra.mxu0 %v6125
    %6463 = vmatpush.bf16.msra.mxu0 %v6121
    %6464 = vmatpush.bf16.msra.mxu0 %v6117
    %6465 = vmatpush.bf16.msra.mxu0 %v6113
    %6466 = vmatmul.bf16.gmra.mxu0 %v5214
    %v6467 = vpop.f32.mrf.mxu0
    %v6468 = vadd.f32 %v6449, %v6467
    %v6469 = vpop.f32.mrf.mxu0
    %v6470 = vadd.f32 %v6451, %v6469
    %6471 = vmatmul.bf16.gmra.mxu0 %v5222
    %v6472 = vpop.f32.mrf.mxu0
    %v6473 = vadd.f32 %v6454, %v6472
    %v6474 = vpop.f32.mrf.mxu0
    %v6475 = vadd.f32 %v6456, %v6474
    %6476 = vdwg.mxu0
    %6477 = vmatpush.bf16.msra.mxu0 %v6173
    %6478 = vmatpush.bf16.msra.mxu0 %v6169
    %6479 = vmatpush.bf16.msra.mxu0 %v6165
    %6480 = vmatpush.bf16.msra.mxu0 %v6161
    %6481 = vmatpush.bf16.msra.mxu0 %v6157
    %6482 = vmatpush.bf16.msra.mxu0 %v6153
    %6483 = vmatpush.bf16.msra.mxu0 %v6149
    %6484 = vmatpush.bf16.msra.mxu0 %v6145
    %6485 = vmatmul.bf16.gmra.mxu0 %v5238
    %v6486 = vpop.f32.mrf.mxu0
    %v6487 = vadd.f32 %v6468, %v6486
    %v6488 = vpop.f32.mrf.mxu0
    %v6489 = vadd.f32 %v6470, %v6488
    %6490 = vmatmul.bf16.gmra.mxu0 %v5244
    %v6491 = vpop.f32.mrf.mxu0
    %v6492 = vadd.f32 %v6473, %v6491
    %v6493 = vpop.f32.mrf.mxu0
    %v6494 = vadd.f32 %v6475, %v6493
    %6495 = vdwg.mxu0
    %6496 = vmatpush.bf16.msra.mxu0 %v6205
    %6497 = vmatpush.bf16.msra.mxu0 %v6201
    %6498 = vmatpush.bf16.msra.mxu0 %v6197
    %6499 = vmatpush.bf16.msra.mxu0 %v6193
    %6500 = vmatpush.bf16.msra.mxu0 %v6189
    %6501 = vmatpush.bf16.msra.mxu0 %v6185
    %6502 = vmatpush.bf16.msra.mxu0 %v6181
    %6503 = vmatpush.bf16.msra.mxu0 %v6177
    %6504 = vmatmul.bf16.gmra.mxu0 %v5241
    %v6505 = vpop.f32.mrf.mxu0
    %v6506 = vadd.f32 %v6487, %v6505
    %v6507 = vpop.f32.mrf.mxu0
    %v6508 = vadd.f32 %v6489, %v6507
    %6509 = vmatmul.bf16.gmra.mxu0 %v5247
    %v6510 = vpop.f32.mrf.mxu0
    %v6511 = vadd.f32 %v6492, %v6510
    %v6512 = vpop.f32.mrf.mxu0
    %v6513 = vadd.f32 %v6494, %v6512
    %6514 = vdwg.mxu0
    %6515 = vmatpush.bf16.msra.mxu0 %v6046
    %6516 = vmatpush.bf16.msra.mxu0 %v6042
    %6517 = vmatpush.bf16.msra.mxu0 %v6038
    %6518 = vmatpush.bf16.msra.mxu0 %v6034
    %6519 = vmatpush.bf16.msra.mxu0 %v6030
    %6520 = vmatpush.bf16.msra.mxu0 %v6026
    %6521 = vmatpush.bf16.msra.mxu0 %v6022
    %6522 = vmatpush.bf16.msra.mxu0 %v6018
    %6523 = vmatmul.bf16.gmra.mxu0 %v5169
    %v6524 = vpop.f32.mrf.mxu0
    %v6525 = vadd.f32 0.0, %v6524
    %v6526 = vpop.f32.mrf.mxu0
    %v6527 = vadd.f32 0.0, %v6526
    %6528 = vmatmul.bf16.gmra.mxu0 %v5177
    %v6529 = vpop.f32.mrf.mxu0
    %v6530 = vadd.f32 0.0, %v6529
    %v6531 = vpop.f32.mrf.mxu0
    %v6532 = vadd.f32 0.0, %v6531
    %6533 = vdwg.mxu0
    %6534 = vmatpush.bf16.msra.mxu0 %v6078
    %6535 = vmatpush.bf16.msra.mxu0 %v6074
    %6536 = vmatpush.bf16.msra.mxu0 %v6070
    %6537 = vmatpush.bf16.msra.mxu0 %v6066
    %6538 = vmatpush.bf16.msra.mxu0 %v6062
    %6539 = vmatpush.bf16.msra.mxu0 %v6058
    %6540 = vmatpush.bf16.msra.mxu0 %v6054
    %6541 = vmatpush.bf16.msra.mxu0 %v6050
    %6542 = vmatmul.bf16.gmra.mxu0 %v5173
    %v6543 = vpop.f32.mrf.mxu0
    %v6544 = vadd.f32 %v6525, %v6543
    %v6545 = vpop.f32.mrf.mxu0
    %v6546 = vadd.f32 %v6527, %v6545
    %6547 = vmatmul.bf16.gmra.mxu0 %v5181
    %v6548 = vpop.f32.mrf.mxu0
    %v6549 = vadd.f32 %v6530, %v6548
    %v6550 = vpop.f32.mrf.mxu0
    %v6551 = vadd.f32 %v6532, %v6550
    %6552 = vdwg.mxu0
    %6553 = vmatpush.bf16.msra.mxu0 %v6110
    %6554 = vmatpush.bf16.msra.mxu0 %v6106
    %6555 = vmatpush.bf16.msra.mxu0 %v6102
    %6556 = vmatpush.bf16.msra.mxu0 %v6098
    %6557 = vmatpush.bf16.msra.mxu0 %v6094
    %6558 = vmatpush.bf16.msra.mxu0 %v6090
    %6559 = vmatpush.bf16.msra.mxu0 %v6086
    %6560 = vmatpush.bf16.msra.mxu0 %v6082
    %6561 = vmatmul.bf16.gmra.mxu0 %v5210
    %v6562 = vpop.f32.mrf.mxu0
    %v6563 = vadd.f32 %v6544, %v6562
    %v6564 = vpop.f32.mrf.mxu0
    %v6565 = vadd.f32 %v6546, %v6564
    %6566 = vmatmul.bf16.gmra.mxu0 %v5218
    %v6567 = vpop.f32.mrf.mxu0
    %v6568 = vadd.f32 %v6549, %v6567
    %v6569 = vpop.f32.mrf.mxu0
    %v6570 = vadd.f32 %v6551, %v6569
    %6571 = vdwg.mxu0
    %6572 = vmatpush.bf16.msra.mxu0 %v6142
    %6573 = vmatpush.bf16.msra.mxu0 %v6138
    %6574 = vmatpush.bf16.msra.mxu0 %v6134
    %6575 = vmatpush.bf16.msra.mxu0 %v6130
    %6576 = vmatpush.bf16.msra.mxu0 %v6126
    %6577 = vmatpush.bf16.msra.mxu0 %v6122
    %6578 = vmatpush.bf16.msra.mxu0 %v6118
    %6579 = vmatpush.bf16.msra.mxu0 %v6114
    %6580 = vmatmul.bf16.gmra.mxu0 %v5214
    %v6581 = vpop.f32.mrf.mxu0
    %v6582 = vadd.f32 %v6563, %v6581
    %v6583 = vpop.f32.mrf.mxu0
    %v6584 = vadd.f32 %v6565, %v6583
    %6585 = vmatmul.bf16.gmra.mxu0 %v5222
    %v6586 = vpop.f32.mrf.mxu0
    %v6587 = vadd.f32 %v6568, %v6586
    %v6588 = vpop.f32.mrf.mxu0
    %v6589 = vadd.f32 %v6570, %v6588
    %6590 = vdwg.mxu0
    %6591 = vmatpush.bf16.msra.mxu0 %v6174
    %6592 = vmatpush.bf16.msra.mxu0 %v6170
    %6593 = vmatpush.bf16.msra.mxu0 %v6166
    %6594 = vmatpush.bf16.msra.mxu0 %v6162
    %6595 = vmatpush.bf16.msra.mxu0 %v6158
    %6596 = vmatpush.bf16.msra.mxu0 %v6154
    %6597 = vmatpush.bf16.msra.mxu0 %v6150
    %6598 = vmatpush.bf16.msra.mxu0 %v6146
    %6599 = vmatmul.bf16.gmra.mxu0 %v5238
    %v6600 = vpop.f32.mrf.mxu0
    %v6601 = vadd.f32 %v6582, %v6600
    %v6602 = vpop.f32.mrf.mxu0
    %v6603 = vadd.f32 %v6584, %v6602
    %6604 = vmatmul.bf16.gmra.mxu0 %v5244
    %v6605 = vpop.f32.mrf.mxu0
    %v6606 = vadd.f32 %v6587, %v6605
    %v6607 = vpop.f32.mrf.mxu0
    %v6608 = vadd.f32 %v6589, %v6607
    %6609 = vdwg.mxu0
    %6610 = vmatpush.bf16.msra.mxu0 %v6206
    %6611 = vmatpush.bf16.msra.mxu0 %v6202
    %6612 = vmatpush.bf16.msra.mxu0 %v6198
    %6613 = vmatpush.bf16.msra.mxu0 %v6194
    %6614 = vmatpush.bf16.msra.mxu0 %v6190
    %6615 = vmatpush.bf16.msra.mxu0 %v6186
    %6616 = vmatpush.bf16.msra.mxu0 %v6182
    %6617 = vmatpush.bf16.msra.mxu0 %v6178
    %6618 = vmatmul.bf16.gmra.mxu0 %v5241
    %v6619 = vpop.f32.mrf.mxu0
    %v6620 = vadd.f32 %v6601, %v6619
    %v6621 = vpop.f32.mrf.mxu0
    %v6622 = vadd.f32 %v6603, %v6621
    %6623 = vmatmul.bf16.gmra.mxu0 %v5247
    %v6624 = vpop.f32.mrf.mxu0
    %v6625 = vadd.f32 %v6606, %v6624
    %v6626 = vpop.f32.mrf.mxu0
    %v6627 = vadd.f32 %v6608, %v6626
    %6628 = vdwg.mxu0
    %6629 = vmatpush.bf16.msra.mxu0 %v6047
    %6630 = vmatpush.bf16.msra.mxu0 %v6043
    %6631 = vmatpush.bf16.msra.mxu0 %v6039
    %6632 = vmatpush.bf16.msra.mxu0 %v6035
    %6633 = vmatpush.bf16.msra.mxu0 %v6031
    %6634 = vmatpush.bf16.msra.mxu0 %v6027
    %6635 = vmatpush.bf16.msra.mxu0 %v6023
    %6636 = vmatpush.bf16.msra.mxu0 %v6019
    %6637 = vmatmul.bf16.gmra.mxu0 %v5169
    %v6638 = vpop.f32.mrf.mxu0
    %v6639 = vadd.f32 0.0, %v6638
    %v6640 = vpop.f32.mrf.mxu0
    %v6641 = vadd.f32 0.0, %v6640
    %6642 = vmatmul.bf16.gmra.mxu0 %v5177
    %v6643 = vpop.f32.mrf.mxu0
    %v6644 = vadd.f32 0.0, %v6643
    %v6645 = vpop.f32.mrf.mxu0
    %v6646 = vadd.f32 0.0, %v6645
    %6647 = vdwg.mxu0
    %6648 = vmatpush.bf16.msra.mxu0 %v6079
    %6649 = vmatpush.bf16.msra.mxu0 %v6075
    %6650 = vmatpush.bf16.msra.mxu0 %v6071
    %6651 = vmatpush.bf16.msra.mxu0 %v6067
    %6652 = vmatpush.bf16.msra.mxu0 %v6063
    %6653 = vmatpush.bf16.msra.mxu0 %v6059
    %6654 = vmatpush.bf16.msra.mxu0 %v6055
    %6655 = vmatpush.bf16.msra.mxu0 %v6051
    %6656 = vmatmul.bf16.gmra.mxu0 %v5173
    %v6657 = vpop.f32.mrf.mxu0
    %v6658 = vadd.f32 %v6639, %v6657
    %v6659 = vpop.f32.mrf.mxu0
    %v6660 = vadd.f32 %v6641, %v6659
    %6661 = vmatmul.bf16.gmra.mxu0 %v5181
    %v6662 = vpop.f32.mrf.mxu0
    %v6663 = vadd.f32 %v6644, %v6662
    %v6664 = vpop.f32.mrf.mxu0
    %v6665 = vadd.f32 %v6646, %v6664
    %6666 = vdwg.mxu0
    %6667 = vmatpush.bf16.msra.mxu0 %v6111
    %6668 = vmatpush.bf16.msra.mxu0 %v6107
    %6669 = vmatpush.bf16.msra.mxu0 %v6103
    %6670 = vmatpush.bf16.msra.mxu0 %v6099
    %6671 = vmatpush.bf16.msra.mxu0 %v6095
    %6672 = vmatpush.bf16.msra.mxu0 %v6091
    %6673 = vmatpush.bf16.msra.mxu0 %v6087
    %6674 = vmatpush.bf16.msra.mxu0 %v6083
    %6675 = vmatmul.bf16.gmra.mxu0 %v5210
    %v6676 = vpop.f32.mrf.mxu0
    %v6677 = vadd.f32 %v6658, %v6676
    %v6678 = vpop.f32.mrf.mxu0
    %v6679 = vadd.f32 %v6660, %v6678
    %6680 = vmatmul.bf16.gmra.mxu0 %v5218
    %v6681 = vpop.f32.mrf.mxu0
    %v6682 = vadd.f32 %v6663, %v6681
    %v6683 = vpop.f32.mrf.mxu0
    %v6684 = vadd.f32 %v6665, %v6683
    %6685 = vdwg.mxu0
    %6686 = vmatpush.bf16.msra.mxu0 %v6143
    %6687 = vmatpush.bf16.msra.mxu0 %v6139
    %6688 = vmatpush.bf16.msra.mxu0 %v6135
    %6689 = vmatpush.bf16.msra.mxu0 %v6131
    %6690 = vmatpush.bf16.msra.mxu0 %v6127
    %6691 = vmatpush.bf16.msra.mxu0 %v6123
    %6692 = vmatpush.bf16.msra.mxu0 %v6119
    %6693 = vmatpush.bf16.msra.mxu0 %v6115
    %6694 = vmatmul.bf16.gmra.mxu0 %v5214
    %v6695 = vpop.f32.mrf.mxu0
    %v6696 = vadd.f32 %v6677, %v6695
    %v6697 = vpop.f32.mrf.mxu0
    %v6698 = vadd.f32 %v6679, %v6697
    %6699 = vmatmul.bf16.gmra.mxu0 %v5222
    %v6700 = vpop.f32.mrf.mxu0
    %v6701 = vadd.f32 %v6682, %v6700
    %v6702 = vpop.f32.mrf.mxu0
    %v6703 = vadd.f32 %v6684, %v6702
    %6704 = vdwg.mxu0
    %6705 = vmatpush.bf16.msra.mxu0 %v6175
    %6706 = vmatpush.bf16.msra.mxu0 %v6171
    %6707 = vmatpush.bf16.msra.mxu0 %v6167
    %6708 = vmatpush.bf16.msra.mxu0 %v6163
    %6709 = vmatpush.bf16.msra.mxu0 %v6159
    %6710 = vmatpush.bf16.msra.mxu0 %v6155
    %6711 = vmatpush.bf16.msra.mxu0 %v6151
    %6712 = vmatpush.bf16.msra.mxu0 %v6147
    %6713 = vmatmul.bf16.gmra.mxu0 %v5238
    %v6714 = vpop.f32.mrf.mxu0
    %v6715 = vadd.f32 %v6696, %v6714
    %v6716 = vpop.f32.mrf.mxu0
    %v6717 = vadd.f32 %v6698, %v6716
    %6718 = vmatmul.bf16.gmra.mxu0 %v5244
    %v6719 = vpop.f32.mrf.mxu0
    %v6720 = vadd.f32 %v6701, %v6719
    %v6721 = vpop.f32.mrf.mxu0
    %v6722 = vadd.f32 %v6703, %v6721
    %6723 = vdwg.mxu0
    %6724 = vmatpush.bf16.msra.mxu0 %v6207
    %6725 = vmatpush.bf16.msra.mxu0 %v6203
    %6726 = vmatpush.bf16.msra.mxu0 %v6199
    %6727 = vmatpush.bf16.msra.mxu0 %v6195
    %6728 = vmatpush.bf16.msra.mxu0 %v6191
    %6729 = vmatpush.bf16.msra.mxu0 %v6187
    %6730 = vmatpush.bf16.msra.mxu0 %v6183
    %6731 = vmatpush.bf16.msra.mxu0 %v6179
    %6732 = vmatmul.bf16.gmra.mxu0 %v5241
    %v6733 = vpop.f32.mrf.mxu0
    %v6734 = vadd.f32 %v6715, %v6733
    %v6735 = vpop.f32.mrf.mxu0
    %v6736 = vadd.f32 %v6717, %v6735
    %6737 = vmatmul.bf16.gmra.mxu0 %v5247
    %v6738 = vpop.f32.mrf.mxu0
    %v6739 = vadd.f32 %v6720, %v6738
    %v6740 = vpop.f32.mrf.mxu0
    %v6741 = vadd.f32 %v6722, %v6740
    %6742 = vdwg.mxu0
    %6743 = vmatpush.bf16.msra.mxu0 %v6048
    %6744 = vmatpush.bf16.msra.mxu0 %v6044
    %6745 = vmatpush.bf16.msra.mxu0 %v6040
    %6746 = vmatpush.bf16.msra.mxu0 %v6036
    %6747 = vmatpush.bf16.msra.mxu0 %v6032
    %6748 = vmatpush.bf16.msra.mxu0 %v6028
    %6749 = vmatpush.bf16.msra.mxu0 %v6024
    %6750 = vmatpush.bf16.msra.mxu0 %v6020
    %6751 = vmatmul.bf16.gmra.mxu0 %v5169
    %v6752 = vpop.f32.mrf.mxu0
    %v6753 = vadd.f32 0.0, %v6752
    %v6754 = vpop.f32.mrf.mxu0
    %v6755 = vadd.f32 0.0, %v6754
    %6756 = vmatmul.bf16.gmra.mxu0 %v5177
    %v6757 = vpop.f32.mrf.mxu0
    %v6758 = vadd.f32 0.0, %v6757
    %v6759 = vpop.f32.mrf.mxu0
    %v6760 = vadd.f32 0.0, %v6759
    %6761 = vdwg.mxu0
    %6762 = vmatpush.bf16.msra.mxu0 %v6080
    %6763 = vmatpush.bf16.msra.mxu0 %v6076
    %6764 = vmatpush.bf16.msra.mxu0 %v6072
    %6765 = vmatpush.bf16.msra.mxu0 %v6068
    %6766 = vmatpush.bf16.msra.mxu0 %v6064
    %6767 = vmatpush.bf16.msra.mxu0 %v6060
    %6768 = vmatpush.bf16.msra.mxu0 %v6056
    %6769 = vmatpush.bf16.msra.mxu0 %v6052
    %6770 = vmatmul.bf16.gmra.mxu0 %v5173
    %v6771 = vpop.f32.mrf.mxu0
    %v6772 = vadd.f32 %v6753, %v6771
    %v6773 = vpop.f32.mrf.mxu0
    %v6774 = vadd.f32 %v6755, %v6773
    %6775 = vmatmul.bf16.gmra.mxu0 %v5181
    %v6776 = vpop.f32.mrf.mxu0
    %v6777 = vadd.f32 %v6758, %v6776
    %v6778 = vpop.f32.mrf.mxu0
    %v6779 = vadd.f32 %v6760, %v6778
    %6780 = vdwg.mxu0
    %6781 = vmatpush.bf16.msra.mxu0 %v6112
    %6782 = vmatpush.bf16.msra.mxu0 %v6108
    %6783 = vmatpush.bf16.msra.mxu0 %v6104
    %6784 = vmatpush.bf16.msra.mxu0 %v6100
    %6785 = vmatpush.bf16.msra.mxu0 %v6096
    %6786 = vmatpush.bf16.msra.mxu0 %v6092
    %6787 = vmatpush.bf16.msra.mxu0 %v6088
    %6788 = vmatpush.bf16.msra.mxu0 %v6084
    %6789 = vmatmul.bf16.gmra.mxu0 %v5210
    %v6790 = vpop.f32.mrf.mxu0
    %v6791 = vadd.f32 %v6772, %v6790
    %v6792 = vpop.f32.mrf.mxu0
    %v6793 = vadd.f32 %v6774, %v6792
    %6794 = vmatmul.bf16.gmra.mxu0 %v5218
    %v6795 = vpop.f32.mrf.mxu0
    %v6796 = vadd.f32 %v6777, %v6795
    %v6797 = vpop.f32.mrf.mxu0
    %v6798 = vadd.f32 %v6779, %v6797
    %6799 = vdwg.mxu0
    %6800 = vmatpush.bf16.msra.mxu0 %v6144
    %6801 = vmatpush.bf16.msra.mxu0 %v6140
    %6802 = vmatpush.bf16.msra.mxu0 %v6136
    %6803 = vmatpush.bf16.msra.mxu0 %v6132
    %6804 = vmatpush.bf16.msra.mxu0 %v6128
    %6805 = vmatpush.bf16.msra.mxu0 %v6124
    %6806 = vmatpush.bf16.msra.mxu0 %v6120
    %6807 = vmatpush.bf16.msra.mxu0 %v6116
    %6808 = vmatmul.bf16.gmra.mxu0 %v5214
    %v6809 = vpop.f32.mrf.mxu0
    %v6810 = vadd.f32 %v6791, %v6809
    %v6811 = vpop.f32.mrf.mxu0
    %v6812 = vadd.f32 %v6793, %v6811
    %6813 = vmatmul.bf16.gmra.mxu0 %v5222
    %v6814 = vpop.f32.mrf.mxu0
    %v6815 = vadd.f32 %v6796, %v6814
    %v6816 = vpop.f32.mrf.mxu0
    %v6817 = vadd.f32 %v6798, %v6816
    %6818 = vdwg.mxu0
    %6819 = vmatpush.bf16.msra.mxu0 %v6176
    %6820 = vmatpush.bf16.msra.mxu0 %v6172
    %6821 = vmatpush.bf16.msra.mxu0 %v6168
    %6822 = vmatpush.bf16.msra.mxu0 %v6164
    %6823 = vmatpush.bf16.msra.mxu0 %v6160
    %6824 = vmatpush.bf16.msra.mxu0 %v6156
    %6825 = vmatpush.bf16.msra.mxu0 %v6152
    %6826 = vmatpush.bf16.msra.mxu0 %v6148
    %6827 = vmatmul.bf16.gmra.mxu0 %v5238
    %v6828 = vpop.f32.mrf.mxu0
    %v6829 = vadd.f32 %v6810, %v6828
    %v6830 = vpop.f32.mrf.mxu0
    %v6831 = vadd.f32 %v6812, %v6830
    %6832 = vmatmul.bf16.gmra.mxu0 %v5244
    %v6833 = vpop.f32.mrf.mxu0
    %v6834 = vadd.f32 %v6815, %v6833
    %v6835 = vpop.f32.mrf.mxu0
    %v6836 = vadd.f32 %v6817, %v6835
    %6837 = vdwg.mxu0
    %6838 = vmatpush.bf16.msra.mxu0 %v6208
    %6839 = vmatpush.bf16.msra.mxu0 %v6204
    %6840 = vmatpush.bf16.msra.mxu0 %v6200
    %6841 = vmatpush.bf16.msra.mxu0 %v6196
    %6842 = vmatpush.bf16.msra.mxu0 %v6192
    %6843 = vmatpush.bf16.msra.mxu0 %v6188
    %6844 = vmatpush.bf16.msra.mxu0 %v6184
    %6845 = vmatpush.bf16.msra.mxu0 %v6180
    %6846 = vmatmul.bf16.gmra.mxu0 %v5241
    %v6847 = vpop.f32.mrf.mxu0
    %v6848 = vadd.f32 %v6829, %v6847
    %v6849 = vpop.f32.mrf.mxu0
    %v6850 = vadd.f32 %v6831, %v6849
    %6851 = vmatmul.bf16.gmra.mxu0 %v5247
    %v6852 = vpop.f32.mrf.mxu0
    %v6853 = vadd.f32 %v6834, %v6852
    %v6854 = vpop.f32.mrf.mxu0
    %v6855 = vadd.f32 %v6836, %v6854
    %6856 = vdwg.mxu0
    %v6857 = vadd.f32 %v4788, %v6506
    %v6858 = vadd.f32 %v4902, %v6620
    %v6859 = vadd.f32 %v5016, %v6734
    %v6860 = vadd.f32 %v5130, %v6848
    %v6861 = vadd.f32 %v4790, %v6508
    %v6862 = vadd.f32 %v4904, %v6622
    %v6863 = vadd.f32 %v5018, %v6736
    %v6864 = vadd.f32 %v5132, %v6850
    %v6865 = vadd.f32 %v4793, %v6511
    %v6866 = vadd.f32 %v4907, %v6625
    %v6867 = vadd.f32 %v5021, %v6739
    %v6868 = vadd.f32 %v5135, %v6853
    %v6869 = vadd.f32 %v4795, %v6513
    %v6870 = vadd.f32 %v4909, %v6627
    %v6871 = vadd.f32 %v5023, %v6741
    %v6872 = vadd.f32 %v5137, %v6855
    %v6873 = vld [vmem:[%s2] sm:$0xf]
    %v6875 = vperm.slane %v6873, 0
    %v6876 = vperm.slane %v6873, 1
    %v6877 = vperm.slane %v6873, 2
    %v6878 = vperm.slane %v6873, 3
    %v6883 = vmul.f32 %v6857, %v6875
    %v6884 = vmul.f32 %v6858, %v6876
    %v6885 = vmul.f32 %v6859, %v6877
    %v6886 = vmul.f32 %v6860, %v6878
    %v6887 = vmul.f32 %v6861, %v6875
    %v6888 = vmul.f32 %v6862, %v6876
    %v6889 = vmul.f32 %v6863, %v6877
    %v6890 = vmul.f32 %v6864, %v6878
    %v6891 = vmul.f32 %v6865, %v6875
    %v6892 = vmul.f32 %v6866, %v6876
    %v6893 = vmul.f32 %v6867, %v6877
    %v6894 = vmul.f32 %v6868, %v6878
    %v6895 = vmul.f32 %v6869, %v6875
    %v6896 = vmul.f32 %v6870, %v6876
    %v6897 = vmul.f32 %v6871, %v6877
    %v6898 = vmul.f32 %v6872, %v6878
    %v6899 = vld [vmem:[%s3] sm:$0xf]
    %v6901 = vperm.slane %v6899, 0
    %v6902 = vperm.slane %v6899, 1
    %v6903 = vperm.slane %v6899, 2
    %v6904 = vperm.slane %v6899, 3
    %v6909 = vadd.f32 %v6883, %v6901
    %v6910 = vadd.f32 %v6884, %v6902
    %v6911 = vadd.f32 %v6885, %v6903
    %v6912 = vadd.f32 %v6886, %v6904
    %v6913 = vadd.f32 %v6887, %v6901
    %v6914 = vadd.f32 %v6888, %v6902
    %v6915 = vadd.f32 %v6889, %v6903
    %v6916 = vadd.f32 %v6890, %v6904
    %v6917 = vadd.f32 %v6891, %v6901
    %v6918 = vadd.f32 %v6892, %v6902
    %v6919 = vadd.f32 %v6893, %v6903
    %v6920 = vadd.f32 %v6894, %v6904
    %v6921 = vadd.f32 %v6895, %v6901
    %v6922 = vadd.f32 %v6896, %v6902
    %v6923 = vadd.f32 %v6897, %v6903
    %v6924 = vadd.f32 %v6898, %v6904
    %v6925 = vmax.f32 %v6909, 0.0
    %v6926 = vmax.f32 %v6910, 0.0
    %v6927 = vmax.f32 %v6911, 0.0
    %v6928 = vmax.f32 %v6912, 0.0
    %v6929 = vmax.f32 %v6913, 0.0
    %v6930 = vmax.f32 %v6914, 0.0
    %v6931 = vmax.f32 %v6915, 0.0
    %v6932 = vmax.f32 %v6916, 0.0
    %v6933 = vmax.f32 %v6917, 0.0
    %v6934 = vmax.f32 %v6918, 0.0
    %v6935 = vmax.f32 %v6919, 0.0
    %v6936 = vmax.f32 %v6920, 0.0
    %v6937 = vmax.f32 %v6921, 0.0
    %v6938 = vmax.f32 %v6922, 0.0
    %v6939 = vmax.f32 %v6923, 0.0
    %v6940 = vmax.f32 %v6924, 0.0
    %v6941 = vadd.f32 %v6925, %v6929
    %v6942 = vadd.f32 %v6926, %v6930
    %v6943 = vadd.f32 %v6927, %v6931
    %v6944 = vadd.f32 %v6928, %v6932
    %v6945 = vadd.f32 %v6941, %v6933
    %v6946 = vadd.f32 %v6942, %v6934
    %v6947 = vadd.f32 %v6943, %v6935
    %v6948 = vadd.f32 %v6944, %v6936
    %v6949 = vadd.f32 %v6945, %v6937
    %v6950 = vadd.f32 %v6946, %v6938
    %v6951 = vadd.f32 %v6947, %v6939
    %v6952 = vadd.f32 %v6948, %v6940
    %v6953 = vmul.f32 %v6949, 0.25
    %v6954 = vmul.f32 %v6950, 0.25
    %v6955 = vmul.f32 %v6951, 0.25
    %v6956 = vmul.f32 %v6952, 0.25
    %v6957 = vpack.c.bf16 %v6953, %v6953
    %v6958 = vpack.c.bf16 %v6954, %v6954
    %v6959 = vpack.c.bf16 %v6955, %v6955
    %v6960 = vpack.c.bf16 %v6956, %v6956
    %v6961 = vld [vmem:[%s4] sm:$0xf]
    %v6962 = vld [vmem:[%s4 + $0x4] sm:$0xf]
    %v6963 = vld [vmem:[%s4 + $0x8] sm:$0xf]
    %v6964 = vld [vmem:[%s4 + $0xc] sm:$0xf]
    %v6965 = vld [vmem:[%s4 + $0x10] sm:$0xf]
    %v6966 = vld [vmem:[%s4 + $0x14] sm:$0xf]
    %v6967 = vld [vmem:[%s4 + $0x18] sm:$0xf]
    %v6968 = vld [vmem:[%s4 + $0x1c] sm:$0xf]
    %v6969 = vld [vmem:[%s4 + $0x20] sm:$0xf]
    %v6970 = vld [vmem:[%s4 + $0x24] sm:$0xf]
    %v6971 = vld [vmem:[%s4 + $0x28] sm:$0xf]
    %v6972 = vld [vmem:[%s4 + $0x2c] sm:$0xf]
    %v6973 = vld [vmem:[%s4 + $0x30] sm:$0xf]
    %v6974 = vld [vmem:[%s4 + $0x34] sm:$0xf]
    %v6975 = vld [vmem:[%s4 + $0x38] sm:$0xf]
    %v6976 = vld [vmem:[%s4 + $0x3c] sm:$0xf]
    %v6977 = vld [vmem:[%s4 + $0x40] sm:$0xf]
    %v6978 = vld [vmem:[%s4 + $0x44] sm:$0xf]
    %v6979 = vld [vmem:[%s4 + $0x48] sm:$0xf]
    %v6980 = vld [vmem:[%s4 + $0x4c] sm:$0xf]
    %v6981 = vld [vmem:[%s4 + $0x50] sm:$0xf]
    %v6982 = vld [vmem:[%s4 + $0x54] sm:$0xf]
    %v6983 = vld [vmem:[%s4 + $0x58] sm:$0xf]
    %v6984 = vld [vmem:[%s4 + $0x5c] sm:$0xf]
    %v6985 = vld [vmem:[%s4 + $0x60] sm:$0xf]
    %v6986 = vld [vmem:[%s4 + $0x64] sm:$0xf]
    %v6987 = vld [vmem:[%s4 + $0x68] sm:$0xf]
    %v6988 = vld [vmem:[%s4 + $0x6c] sm:$0xf]
    %v6989 = vld [vmem:[%s4 + $0x70] sm:$0xf]
    %v6990 = vld [vmem:[%s4 + $0x74] sm:$0xf]
    %v6991 = vld [vmem:[%s4 + $0x78] sm:$0xf]
    %v6992 = vld [vmem:[%s4 + $0x7c] sm:$0xf]
    %v6993 = vld [vmem:[%s4 + $0x80] sm:$0xf]
    %v6994 = vld [vmem:[%s4 + $0x84] sm:$0xf]
    %v6995 = vld [vmem:[%s4 + $0x88] sm:$0xf]
    %v6996 = vld [vmem:[%s4 + $0x8c] sm:$0xf]
    %v6997 = vld [vmem:[%s4 + $0x90] sm:$0xf]
    %v6998 = vld [vmem:[%s4 + $0x94] sm:$0xf]
    %v6999 = vld [vmem:[%s4 + $0x98] sm:$0xf]
    %v7000 = vld [vmem:[%s4 + $0x9c] sm:$0xf]
    %v7001 = vld [vmem:[%s4 + $0xa0] sm:$0xf]
    %v7002 = vld [vmem:[%s4 + $0xa4] sm:$0xf]
    %v7003 = vld [vmem:[%s4 + $0xa8] sm:$0xf]
    %v7004 = vld [vmem:[%s4 + $0xac] sm:$0xf]
    %v7005 = vld [vmem:[%s4 + $0xb0] sm:$0xf]
    %v7006 = vld [vmem:[%s4 + $0xb4] sm:$0xf]
    %v7007 = vld [vmem:[%s4 + $0xb8] sm:$0xf]
    %v7008 = vld [vmem:[%s4 + $0xbc] sm:$0xf]
    %v7009 = vld [vmem:[%s4 + $0xc0] sm:$0xf]
    %v7010 = vld [vmem:[%s4 + $0xc4] sm:$0xf]
    %v7011 = vld [vmem:[%s4 + $0xc8] sm:$0xf]
    %v7012 = vld [vmem:[%s4 + $0xcc] sm:$0xf]
    %v7013 = vld [vmem:[%s4 + $0xd0] sm:$0xf]
    %v7014 = vld [vmem:[%s4 + $0xd4] sm:$0xf]
    %v7015 = vld [vmem:[%s4 + $0xd8] sm:$0xf]
    %v7016 = vld [vmem:[%s4 + $0xdc] sm:$0xf]
    %v7017 = vld [vmem:[%s4 + $0xe0] sm:$0xf]
    %v7018 = vld [vmem:[%s4 + $0xe4] sm:$0xf]
    %v7019 = vld [vmem:[%s4 + $0xe8] sm:$0xf]
    %v7020 = vld [vmem:[%s4 + $0xec] sm:$0xf]
    %v7021 = vld [vmem:[%s4 + $0xf0] sm:$0xf]
    %v7022 = vld [vmem:[%s4 + $0xf4] sm:$0xf]
    %v7023 = vld [vmem:[%s4 + $0xf8] sm:$0xf]
    %v7024 = vld [vmem:[%s4 + $0xfc] sm:$0xf]
    %v7025 = vld [vmem:[%s5] sm:$0x1]
    %v7027 = vperm.slane %v7025, 0
    %v7093 = vunpack.c.l.b16 %v6961
    %v7094 = vunpack.c.l.b16 %v6962
    %v7095 = vunpack.c.l.b16 %v6963
    %v7096 = vunpack.c.l.b16 %v6964
    %v7097 = vunpack.c.l.b16 %v6965
    %v7098 = vunpack.c.l.b16 %v6966
    %v7099 = vunpack.c.l.b16 %v6967
    %v7100 = vunpack.c.l.b16 %v6968
    %v7101 = vunpack.c.l.b16 %v6969
    %v7102 = vunpack.c.l.b16 %v6970
    %v7103 = vunpack.c.l.b16 %v6971
    %v7104 = vunpack.c.l.b16 %v6972
    %v7105 = vunpack.c.l.b16 %v6973
    %v7106 = vunpack.c.l.b16 %v6974
    %v7107 = vunpack.c.l.b16 %v6975
    %v7108 = vunpack.c.l.b16 %v6976
    %v7109 = vunpack.c.l.b16 %v6977
    %v7110 = vunpack.c.l.b16 %v6978
    %v7111 = vunpack.c.l.b16 %v6979
    %v7112 = vunpack.c.l.b16 %v6980
    %v7113 = vunpack.c.l.b16 %v6981
    %v7114 = vunpack.c.l.b16 %v6982
    %v7115 = vunpack.c.l.b16 %v6983
    %v7116 = vunpack.c.l.b16 %v6984
    %v7117 = vunpack.c.l.b16 %v6985
    %v7118 = vunpack.c.l.b16 %v6986
    %v7119 = vunpack.c.l.b16 %v6987
    %v7120 = vunpack.c.l.b16 %v6988
    %v7121 = vunpack.c.l.b16 %v6989
    %v7122 = vunpack.c.l.b16 %v6990
    %v7123 = vunpack.c.l.b16 %v6991
    %v7124 = vunpack.c.l.b16 %v6992
    %v7125 = vunpack.c.l.b16 %v6993
    %v7126 = vunpack.c.l.b16 %v6994
    %v7127 = vunpack.c.l.b16 %v6995
    %v7128 = vunpack.c.l.b16 %v6996
    %v7129 = vunpack.c.l.b16 %v6997
    %v7130 = vunpack.c.l.b16 %v6998
    %v7131 = vunpack.c.l.b16 %v6999
    %v7132 = vunpack.c.l.b16 %v7000
    %v7133 = vunpack.c.l.b16 %v7001
    %v7134 = vunpack.c.l.b16 %v7002
    %v7135 = vunpack.c.l.b16 %v7003
    %v7136 = vunpack.c.l.b16 %v7004
    %v7137 = vunpack.c.l.b16 %v7005
    %v7138 = vunpack.c.l.b16 %v7006
    %v7139 = vunpack.c.l.b16 %v7007
    %v7140 = vunpack.c.l.b16 %v7008
    %v7141 = vunpack.c.l.b16 %v7009
    %v7142 = vunpack.c.l.b16 %v7010
    %v7143 = vunpack.c.l.b16 %v7011
    %v7144 = vunpack.c.l.b16 %v7012
    %v7145 = vunpack.c.l.b16 %v7013
    %v7146 = vunpack.c.l.b16 %v7014
    %v7147 = vunpack.c.l.b16 %v7015
    %v7148 = vunpack.c.l.b16 %v7016
    %v7149 = vunpack.c.l.b16 %v7017
    %v7150 = vunpack.c.l.b16 %v7018
    %v7151 = vunpack.c.l.b16 %v7019
    %v7152 = vunpack.c.l.b16 %v7020
    %v7153 = vunpack.c.l.b16 %v7021
    %v7154 = vunpack.c.l.b16 %v7022
    %v7155 = vunpack.c.l.b16 %v7023
    %v7156 = vunpack.c.l.b16 %v7024
    %v7157 = vpack.c.b16 %v7094, %v7093
    %v7158 = vpack.c.b16 %v7096, %v7095
    %v7159 = vpack.c.b16 %v7098, %v7097
    %v7160 = vpack.c.b16 %v7100, %v7099
    %v7161 = vpack.c.b16 %v7102, %v7101
    %v7162 = vpack.c.b16 %v7104, %v7103
    %v7163 = vpack.c.b16 %v7106, %v7105
    %v7164 = vpack.c.b16 %v7108, %v7107
    %v7165 = vpack.c.b16 %v7110, %v7109
    %v7166 = vpack.c.b16 %v7112, %v7111
    %v7167 = vpack.c.b16 %v7114, %v7113
    %v7168 = vpack.c.b16 %v7116, %v7115
    %v7169 = vpack.c.b16 %v7118, %v7117
    %v7170 = vpack.c.b16 %v7120, %v7119
    %v7171 = vpack.c.b16 %v7122, %v7121
    %v7172 = vpack.c.b16 %v7124, %v7123
    %v7173 = vpack.c.b16 %v7126, %v7125
    %v7174 = vpack.c.b16 %v7128, %v7127
    %v7175 = vpack.c.b16 %v7130, %v7129
    %v7176 = vpack.c.b16 %v7132, %v7131
    %v7177 = vpack.c.b16 %v7134, %v7133
    %v7178 = vpack.c.b16 %v7136, %v7135
    %v7179 = vpack.c.b16 %v7138, %v7137
    %v7180 = vpack.c.b16 %v7140, %v7139
    %v7181 = vpack.c.b16 %v7142, %v7141
    %v7182 = vpack.c.b16 %v7144, %v7143
    %v7183 = vpack.c.b16 %v7146, %v7145
    %v7184 = vpack.c.b16 %v7148, %v7147
    %v7185 = vpack.c.b16 %v7150, %v7149
    %v7186 = vpack.c.b16 %v7152, %v7151
    %v7187 = vpack.c.b16 %v7154, %v7153
    %v7188 = vpack.c.b16 %v7156, %v7155
    %7221 = vmatpush.bf16.msra.mxu0 %v7164
    %7222 = vmatpush.bf16.msra.mxu0 %v7163
    %7223 = vmatpush.bf16.msra.mxu0 %v7162
    %7224 = vmatpush.bf16.msra.mxu0 %v7161
    %7225 = vmatpush.bf16.msra.mxu0 %v7160
    %7226 = vmatpush.bf16.msra.mxu0 %v7159
    %7227 = vmatpush.bf16.msra.mxu0 %v7158
    %7228 = vmatpush.bf16.msra.mxu0 %v7157
    %7229 = vmatmul.bf16.gmra.mxu0 %v6957
    %v7230 = vpop.f32.mrf.mxu0
    %v7231 = vadd.f32 %v7027, %v7230
    %v7232 = vpop.f32.mrf.mxu0
    %7233 = vdwg.mxu0
    %7234 = vmatpush.bf16.msra.mxu0 %v7172
    %7235 = vmatpush.bf16.msra.mxu0 %v7171
    %7236 = vmatpush.bf16.msra.mxu0 %v7170
    %7237 = vmatpush.bf16.msra.mxu0 %v7169
    %7238 = vmatpush.bf16.msra.mxu0 %v7168
    %7239 = vmatpush.bf16.msra.mxu0 %v7167
    %7240 = vmatpush.bf16.msra.mxu0 %v7166
    %7241 = vmatpush.bf16.msra.mxu0 %v7165
    %7242 = vmatmul.bf16.gmra.mxu0 %v6958
    %v7243 = vpop.f32.mrf.mxu0
    %v7244 = vadd.f32 %v7231, %v7243
    %v7245 = vpop.f32.mrf.mxu0
    %7246 = vdwg.mxu0
    %7247 = vmatpush.bf16.msra.mxu0 %v7180
    %7248 = vmatpush.bf16.msra.mxu0 %v7179
    %7249 = vmatpush.bf16.msra.mxu0 %v7178
    %7250 = vmatpush.bf16.msra.mxu0 %v7177
    %7251 = vmatpush.bf16.msra.mxu0 %v7176
    %7252 = vmatpush.bf16.msra.mxu0 %v7175
    %7253 = vmatpush.bf16.msra.mxu0 %v7174
    %7254 = vmatpush.bf16.msra.mxu0 %v7173
    %7255 = vmatmul.bf16.gmra.mxu0 %v6959
    %v7256 = vpop.f32.mrf.mxu0
    %v7257 = vadd.f32 %v7244, %v7256
    %v7258 = vpop.f32.mrf.mxu0
    %7259 = vdwg.mxu0
    %7260 = vmatpush.bf16.msra.mxu0 %v7188
    %7261 = vmatpush.bf16.msra.mxu0 %v7187
    %7262 = vmatpush.bf16.msra.mxu0 %v7186
    %7263 = vmatpush.bf16.msra.mxu0 %v7185
    %7264 = vmatpush.bf16.msra.mxu0 %v7184
    %7265 = vmatpush.bf16.msra.mxu0 %v7183
    %7266 = vmatpush.bf16.msra.mxu0 %v7182
    %7267 = vmatpush.bf16.msra.mxu0 %v7181
    %7268 = vmatmul.bf16.gmra.mxu0 %v6960
    %v7269 = vpop.f32.mrf.mxu0
    %v7270 = vadd.f32 %v7257, %v7269
    %v7271 = vpop.f32.mrf.mxu0
    %7272 = vdwg.mxu0
    %v7273 = vmax.f32 %v7270, 0.0
    %v7274 = vld [vmem:[%s6] sm:$0x1]
    %v7276 = vperm.slane %v7274, 0
    %v7278 = vmul.f32 %v7273, %v7276
    %v7279 = vld [vmem:[%s7] sm:$0x1]
    %v7281 = vperm.slane %v7279, 0
    %v7283 = vadd.f32 %v7278, %v7281
    %v7284 = vpack.c.bf16 %v7283, %v7283
    %v7285 = vld [vmem:[%s8] sm:$0xf]
    %v7286 = vld [vmem:[%s8 + $0x4] sm:$0xf]
    %v7287 = vld [vmem:[%s8 + $0x8] sm:$0xf]
    %v7288 = vld [vmem:[%s8 + $0xc] sm:$0xf]
    %v7289 = vld [vmem:[%s8 + $0x10] sm:$0xf]
    %v7290 = vld [vmem:[%s8 + $0x14] sm:$0xf]
    %v7291 = vld [vmem:[%s8 + $0x18] sm:$0xf]
    %v7292 = vld [vmem:[%s8 + $0x1c] sm:$0xf]
    %v7293 = vld [vmem:[%s8 + $0x20] sm:$0xf]
    %v7294 = vld [vmem:[%s8 + $0x24] sm:$0xf]
    %v7295 = vld [vmem:[%s8 + $0x28] sm:$0xf]
    %v7296 = vld [vmem:[%s8 + $0x2c] sm:$0xf]
    %v7297 = vld [vmem:[%s8 + $0x30] sm:$0xf]
    %v7298 = vld [vmem:[%s8 + $0x34] sm:$0xf]
    %v7299 = vld [vmem:[%s8 + $0x38] sm:$0xf]
    %v7300 = vld [vmem:[%s8 + $0x3c] sm:$0xf]
    %v7301 = vld [vmem:[%s9] sm:$0x1]
    %v7303 = vperm.slane %v7301, 0
    %v7321 = vunpack.c.l.b16 %v7285
    %v7322 = vunpack.c.l.b16 %v7286
    %v7323 = vunpack.c.l.b16 %v7287
    %v7324 = vunpack.c.l.b16 %v7288
    %v7325 = vunpack.c.l.b16 %v7289
    %v7326 = vunpack.c.l.b16 %v7290
    %v7327 = vunpack.c.l.b16 %v7291
    %v7328 = vunpack.c.l.b16 %v7292
    %v7329 = vunpack.c.l.b16 %v7293
    %v7330 = vunpack.c.l.b16 %v7294
    %v7331 = vunpack.c.l.b16 %v7295
    %v7332 = vunpack.c.l.b16 %v7296
    %v7333 = vunpack.c.l.b16 %v7297
    %v7334 = vunpack.c.l.b16 %v7298
    %v7335 = vunpack.c.l.b16 %v7299
    %v7336 = vunpack.c.l.b16 %v7300
    %v7337 = vpack.c.b16 %v7322, %v7321
    %v7338 = vpack.c.b16 %v7324, %v7323
    %v7339 = vpack.c.b16 %v7326, %v7325
    %v7340 = vpack.c.b16 %v7328, %v7327
    %v7341 = vpack.c.b16 %v7330, %v7329
    %v7342 = vpack.c.b16 %v7332, %v7331
    %v7343 = vpack.c.b16 %v7334, %v7333
    %v7344 = vpack.c.b16 %v7336, %v7335
    %7353 = vmatpush.bf16.msra.mxu0 %v7344
    %7354 = vmatpush.bf16.msra.mxu0 %v7343
    %7355 = vmatpush.bf16.msra.mxu0 %v7342
    %7356 = vmatpush.bf16.msra.mxu0 %v7341
    %7357 = vmatpush.bf16.msra.mxu0 %v7340
    %7358 = vmatpush.bf16.msra.mxu0 %v7339
    %7359 = vmatpush.bf16.msra.mxu0 %v7338
    %7360 = vmatpush.bf16.msra.mxu0 %v7337
    %7361 = vmatmul.bf16.gmra.mxu0 %v7284
    %v7362 = vpop.f32.mrf.mxu0
    %v7363 = vadd.f32 %v7303, %v7362
    %v7364 = vpop.f32.mrf.mxu0
    %7365 = vdwg.mxu0
    %vm7366 = vcmask 80896
    %7367 = vst.msk [vmem:[#allocation5] sm:$0xff] %vm7366, %v7363
    // Predicated region
    $region95: #{vgg_tinyserver_forward.1} parent=1 // pred_check
      _
    $region96: #{vgg_tinyserver_forward.1} parent=1 // pred_check_branch
      %7369 = sbr.rel (0) target = $region98
    $region97: #{vgg_tinyserver_forward.1} parent=1 // pred_region
      %7371 = vsyncadd [#allocation6], 0
      %s7373 = sshll.u32 [#allocation5], 4
      %s7374 = int_to_ptr.vmem [resolvable:$true] %s7373
      %s7375 = sshll.u32 %s10, 4
      %s7376 = int_to_ptr.hbm [resolvable:$true] %s7375
      %7378 = dma.vmem_to_hbm [thread:$0]  %s7374, 128, %s7376, [#allocation6]
    $region98: #{vgg_tinyserver_forward.1} parent=1 // pred_fallthru
      _
    // Predicated region
    $region99: #{vgg_tinyserver_forward.1} parent=1 // pred_check
      _
    $region100: #{vgg_tinyserver_forward.1} parent=1 // pred_check_branch
      %7380 = sbr.rel (0) target = $region102
    $region101: #{vgg_tinyserver_forward.1} parent=1 // pred_region
      %7382 = dma.done [#allocation6], 128
    $region102: #{vgg_tinyserver_forward.1} parent=1 // pred_fallthru
      _
    %7383 = vsyncpa [#allocation6], 1
  %7384 = vsyncmov [#allocation4]
  %s7385 = vpop.sfrf %7384
  %p7386 = scmp.eq.s32.totalorder %s7385, 0
  %p7387 = pneg %p7386
  %7389 = shalt.err (%p7387)
  %s7390 = scalar_lea.sflag [#allocation4], 1
  %7391 = vsyncmov %s7390
  %s7392 = vpop.sfrf %7391
  %p7393 = scmp.eq.s32.totalorder %s7392, 0
  %p7394 = pneg %p7393
  %7396 = shalt.err (%p7394)

</llo_original>
